<compile_context>
chip_gen: v5e
topology: v5e:2x2
jax: 0.10.0
libtpu: 0.0.40
codegen_flags: <defaults>
</compile_context>

<pallas_src>
import functools

import jax
import jax.numpy as jnp
from jax.experimental import pallas as pl
from jax.experimental.pallas import tpu as pltpu


def _round_up(v, m):
    return (v + m - 1) // m * m


def _residual_block_kernel(x_ref, m1_ref, b1_ref, m2_ref, b2_ref, mask_ref,   # inputs (VMEM)
                           out_ref,                                            # output (VMEM)
                           *, K, pad, Wp, OFF, LOUT, LSRC, NC, scale):
    x_slab = x_ref[...]                       # (NC, LSRC), loaded once
    mask = mask_ref[...]                      # (NC, LOUT)

    def conv(slab, m_ref, bias_ref):
        # KxK conv as K*K x (lane roll -> aligned slice -> block-diag channel-mix matmul).
        acc = bias_ref[...]                   # (NC, LOUT) pre-splatted bias
        t = 0
        for ky in range(K):
            for kx in range(K):
                d = (ky - pad) * Wp + (kx - pad)          # static lane shift of this tap
                if d != 0:
                    shifted = pltpu.roll(slab, shift=(-d) % LSRC, axis=1)
                else:
                    shifted = slab
                win = shifted[:, OFF:OFF + LOUT]          # lane-aligned static slice
                acc = acc + jnp.dot(m_ref[t], win,
                                    preferred_element_type=jnp.float32,
                                    precision=jax.lax.Precision.HIGHEST)
                t += 1
        return acc

    # conv1 + bias + ReLU.  The mask zeroes the halo / round-up tail lanes so they act as
    # conv2's zero padding (those lanes are never part of the final cropped output).
    h = jnp.maximum(conv(x_slab, m1_ref, b1_ref), 0.0) * mask

    # Re-embed h between zero guard bands.  OFF, LOUT, LSRC are multiples of 128, so this
    # concatenate lands on vreg boundaries (no scratch, no memset, no store/reload).
    parts = []
    if OFF:
        parts.append(jnp.zeros((NC, OFF), jnp.float32))
    parts.append(h)
    trail = LSRC - OFF - LOUT
    if trail:
        parts.append(jnp.zeros((NC, trail), jnp.float32))
    h_slab = jnp.concatenate(parts, axis=1)

    # conv2 + bias + scaled identity shortcut + final ReLU, stored lane-dense (unmasked vst).
    res = x_slab[:, OFF:OFF + LOUT]
    out_ref[...] = jnp.maximum(conv(h_slab, m2_ref, b2_ref) + scale * res, 0.0)


def residual_block(x, w1, b1, w2, b2, *, scaling_factor=1.0):
    """x: (N, C, H, W) f32; w*: (C, C, K, K) f32 (PyTorch OIHW); b*: (C,) f32."""
    N, C, H, W = x.shape
    C1o, C1i, K, Kb = w1.shape
    C2o, C2i, Kc, Kd = w2.shape
    assert K == Kb == Kc == Kd
    assert C1o == C1i == C2o == C2i == C, \
        "stride-1 identity-shortcut ResidualBlock requires equal in/out channels"

    pad = (K - 1) // 2
    Hp, Wp = H + 2 * pad, W + 2 * pad
    NC = N * C
    LOUT = _round_up(Hp * Wp, 128)                 # lane-dense flat padded spatial extent
    OFF = _round_up(pad * Wp + pad, 128)           # aligned data offset; every tap read >= 0
    LSRC = _round_up(OFF + LOUT + pad * Wp + pad, 128)   # slab extent covering all tap reads

    f32 = jnp.float32

    # Lane-dense padded input slab: padded pixel (py, px) of (n, c) lives at lane
    # OFF + py*Wp + px of sublane row n*C + c; zero guard bands on both sides.
    x_pad = jnp.pad(x.astype(f32), ((0, 0), (0, 0), (pad, pad), (pad, pad)))
    x_slab = jnp.zeros((NC, LSRC), f32).at[:, OFF:OFF + Hp * Wp].set(
        x_pad.reshape(NC, Hp * Wp))

    # Per-tap block-diagonal channel-mixing matrices:
    #   m[t, n*C+co, n'*C+ci] = delta(n, n') * w[co, ci, ky, kx],   t = ky*K + kx.
    eye_n = jnp.eye(N, dtype=f32)

    def mix(w):
        w_t = w.astype(f32).reshape(C, C, K * K).transpose(2, 0, 1)     # (K*K, co, ci)
        return jnp.einsum("tab,nm->tnamb", w_t, eye_n).reshape(K * K, NC, NC)

    m1, m2 = mix(w1), mix(w2)

    # Bias pre-splatted to the (NC, LOUT) accumulator shape (row n*C+co = b[co]).
    def splat_bias(b):
        return jnp.broadcast_to(jnp.tile(b.astype(f32), N)[:, None], (NC, LOUT))

    b1v, b2v = splat_bias(b1), splat_bias(b2)

    # Interior mask over flat padded coordinates (0 on halo and on the LOUT round-up tail),
    # pre-splatted so the kernel performs no broadcasts.
    yy = jnp.arange(Hp)[:, None]
    xx = jnp.arange(Wp)[None, :]
    inner = ((yy >= pad) & (yy < pad + H) & (xx >= pad) & (xx < pad + W))
    mask_row = jnp.zeros((LOUT,), f32).at[:Hp * Wp].set(inner.reshape(-1).astype(f32))
    maskv = jnp.broadcast_to(mask_row[None, :], (NC, LOUT))

    kernel = functools.partial(
        _residual_block_kernel,
        K=K, pad=pad, Wp=Wp, OFF=OFF, LOUT=LOUT, LSRC=LSRC, NC=NC,
        scale=float(scaling_factor))

    vmem = lambda: pl.BlockSpec(memory_space=pltpu.MemorySpace.VMEM)
    out_slab = pl.pallas_call(
        kernel,
        out_shape=jax.ShapeDtypeStruct((NC, LOUT), f32),
        in_specs=[vmem() for _ in range(6)],
        out_specs=vmem(),
    )(x_slab, m1, b1v, m2, b2v, maskv)

    # Interior crop + NCHW reshape: pure layout plumbing, done by XLA outside the kernel.
    return out_slab[:, :Hp * Wp].reshape(N, C, Hp, Wp)[:, :, pad:pad + H, pad:pad + W]


def _reference(x, w1, b1, w2, b2, scaling_factor=1.0):
    dn = jax.lax.conv_dimension_numbers(x.shape, w1.shape, ("NCHW", "OIHW", "NCHW"))
    h = jax.lax.conv_general_dilated(x, w1, (1, 1), [(1, 1), (1, 1)],
                                     dimension_numbers=dn,
                                     precision=jax.lax.Precision.HIGHEST)
    h = jnp.maximum(h + b1[None, :, None, None], 0.0)
    y = jax.lax.conv_general_dilated(h, w2, (1, 1), [(1, 1), (1, 1)],
                                     dimension_numbers=dn,
                                     precision=jax.lax.Precision.HIGHEST)
    y = y + b2[None, :, None, None]
    return jnp.maximum(y + scaling_factor * x, 0.0)


if __name__ == "__main__":
    key = jax.random.PRNGKey(0)
    N, C, H, W, K = 2, 4, 16, 16, 3
    k1, k2, k3, k4, kx = jax.random.split(key, 5)

    fan_in = C * K * K
    # conv1: kaiming-style init; conv2: init=None in the module -> small deterministic init
    w1 = jax.random.normal(k1, (C, C, K, K), jnp.float32) * jnp.sqrt(2.0 / fan_in)
    b1 = jax.random.normal(k2, (C,), jnp.float32) * 0.1
    w2 = jax.random.normal(k3, (C, C, K, K), jnp.float32) * (1.0 / jnp.sqrt(fan_in))
    b2 = jax.random.normal(k4, (C,), jnp.float32) * 0.1
    x = jax.random.normal(kx, (N, C, H, W), jnp.float32)

    out = residual_block(x, w1, b1, w2, b2, scaling_factor=1.0)
    out = jax.block_until_ready(out)

    ref = _reference(x, w1, b1, w2, b2, 1.0)
    assert out.shape == ref.shape == (N, C, H, W)
    max_err = float(jnp.max(jnp.abs(out - ref)))
    assert jnp.allclose(out, ref, atol=1e-3, rtol=1e-3), f"max_err={max_err}"
    print("KERNEL_OK")
</pallas_src>

<mosaic_0001>
module attributes {stable_mosaic.version = 11 : i64} {
  func.func @_residual_block_kernel(%arg0: memref<8x640xf32, #tpu.memory_space<vmem>>, %arg1: memref<9x8x8xf32, #tpu.memory_space<vmem>>, %arg2: memref<8x384xf32, #tpu.memory_space<vmem>>, %arg3: memref<9x8x8xf32, #tpu.memory_space<vmem>>, %arg4: memref<8x384xf32, #tpu.memory_space<vmem>>, %arg5: memref<8x384xf32, #tpu.memory_space<vmem>>, %arg6: memref<8x384xf32, #tpu.memory_space<vmem>>) attributes {dimension_semantics = [], scalar_prefetch = 0 : i64, scratch_operands = 0 : i64, tpu.core_type = #tpu.core_type<tc>} {
    %c0 = arith.constant 0 : index
    %c0_0 = arith.constant 0 : index
    %0 = vector.load %arg0[%c0, %c0_0] : memref<8x640xf32, #tpu.memory_space<vmem>>, vector<8x640xf32>
    %c0_1 = arith.constant 0 : index
    %c0_2 = arith.constant 0 : index
    %1 = vector.load %arg5[%c0_1, %c0_2] : memref<8x384xf32, #tpu.memory_space<vmem>>, vector<8x384xf32>
    %c0_3 = arith.constant 0 : index
    %c0_4 = arith.constant 0 : index
    %2 = vector.load %arg2[%c0_3, %c0_4] : memref<8x384xf32, #tpu.memory_space<vmem>>, vector<8x384xf32>
    %c19_i32 = arith.constant 19 : i32
    %3 = tpu.dynamic_rotate %0 by %c19_i32 dim 1 : vector<8x640xf32>, i32 -> vector<8x640xf32>
    %4 = vector.extract_strided_slice %3 {offsets = [0, 128], sizes = [8, 384], strides = [1, 1]} : vector<8x640xf32> to vector<8x384xf32>
    %c0_5 = arith.constant 0 : index
    %c0_6 = arith.constant 0 : index
    %c0_7 = arith.constant 0 : index
    %5 = vector.load %arg1[%c0_5, %c0_6, %c0_7] : memref<9x8x8xf32, #tpu.memory_space<vmem>>, vector<1x8x8xf32>
    %6 = vector.shape_cast %5 : vector<1x8x8xf32> to vector<8x8xf32>
    %cst = arith.constant dense<0.000000e+00> : vector<8x384xf32>
    %7 = tpu.matmul %6, %4, %cst {dimension_numbers = #tpu.dot_dimension_numbers<[1], [0], [0], [1], [0, 0, 1, 1], [], []>, precision = #tpu.contract_precision<fp32>} : vector<8x8xf32>, vector<8x384xf32>, vector<8x384xf32> -> vector<8x384xf32>
    %8 = arith.addf %2, %7 : vector<8x384xf32>
    %c18_i32 = arith.constant 18 : i32
    %9 = tpu.dynamic_rotate %0 by %c18_i32 dim 1 : vector<8x640xf32>, i32 -> vector<8x640xf32>
    %10 = vector.extract_strided_slice %9 {offsets = [0, 128], sizes = [8, 384], strides = [1, 1]} : vector<8x640xf32> to vector<8x384xf32>
    %c1 = arith.constant 1 : index
    %c0_8 = arith.constant 0 : index
    %c0_9 = arith.constant 0 : index
    %11 = vector.load %arg1[%c1, %c0_8, %c0_9] : memref<9x8x8xf32, #tpu.memory_space<vmem>>, vector<1x8x8xf32>
    %12 = vector.shape_cast %11 : vector<1x8x8xf32> to vector<8x8xf32>
    %cst_10 = arith.constant dense<0.000000e+00> : vector<8x384xf32>
    %13 = tpu.matmul %12, %10, %cst_10 {dimension_numbers = #tpu.dot_dimension_numbers<[1], [0], [0], [1], [0, 0, 1, 1], [], []>, precision = #tpu.contract_precision<fp32>} : vector<8x8xf32>, vector<8x384xf32>, vector<8x384xf32> -> vector<8x384xf32>
    %14 = arith.addf %8, %13 : vector<8x384xf32>
    %c17_i32 = arith.constant 17 : i32
    %15 = tpu.dynamic_rotate %0 by %c17_i32 dim 1 : vector<8x640xf32>, i32 -> vector<8x640xf32>
    %16 = vector.extract_strided_slice %15 {offsets = [0, 128], sizes = [8, 384], strides = [1, 1]} : vector<8x640xf32> to vector<8x384xf32>
    %c2 = arith.constant 2 : index
    %c0_11 = arith.constant 0 : index
    %c0_12 = arith.constant 0 : index
    %17 = vector.load %arg1[%c2, %c0_11, %c0_12] : memref<9x8x8xf32, #tpu.memory_space<vmem>>, vector<1x8x8xf32>
    %18 = vector.shape_cast %17 : vector<1x8x8xf32> to vector<8x8xf32>
    %cst_13 = arith.constant dense<0.000000e+00> : vector<8x384xf32>
    %19 = tpu.matmul %18, %16, %cst_13 {dimension_numbers = #tpu.dot_dimension_numbers<[1], [0], [0], [1], [0, 0, 1, 1], [], []>, precision = #tpu.contract_precision<fp32>} : vector<8x8xf32>, vector<8x384xf32>, vector<8x384xf32> -> vector<8x384xf32>
    %20 = arith.addf %14, %19 : vector<8x384xf32>
    %c1_i32 = arith.constant 1 : i32
    %21 = tpu.dynamic_rotate %0 by %c1_i32 dim 1 : vector<8x640xf32>, i32 -> vector<8x640xf32>
    %22 = vector.extract_strided_slice %21 {offsets = [0, 128], sizes = [8, 384], strides = [1, 1]} : vector<8x640xf32> to vector<8x384xf32>
    %c3 = arith.constant 3 : index
    %c0_14 = arith.constant 0 : index
    %c0_15 = arith.constant 0 : index
    %23 = vector.load %arg1[%c3, %c0_14, %c0_15] : memref<9x8x8xf32, #tpu.memory_space<vmem>>, vector<1x8x8xf32>
    %24 = vector.shape_cast %23 : vector<1x8x8xf32> to vector<8x8xf32>
    %cst_16 = arith.constant dense<0.000000e+00> : vector<8x384xf32>
    %25 = tpu.matmul %24, %22, %cst_16 {dimension_numbers = #tpu.dot_dimension_numbers<[1], [0], [0], [1], [0, 0, 1, 1], [], []>, precision = #tpu.contract_precision<fp32>} : vector<8x8xf32>, vector<8x384xf32>, vector<8x384xf32> -> vector<8x384xf32>
    %26 = arith.addf %20, %25 : vector<8x384xf32>
    %27 = vector.extract_strided_slice %0 {offsets = [0, 128], sizes = [8, 384], strides = [1, 1]} : vector<8x640xf32> to vector<8x384xf32>
    %c4 = arith.constant 4 : index
    %c0_17 = arith.constant 0 : index
    %c0_18 = arith.constant 0 : index
    %28 = vector.load %arg1[%c4, %c0_17, %c0_18] : memref<9x8x8xf32, #tpu.memory_space<vmem>>, vector<1x8x8xf32>
    %29 = vector.shape_cast %28 : vector<1x8x8xf32> to vector<8x8xf32>
    %cst_19 = arith.constant dense<0.000000e+00> : vector<8x384xf32>
    %30 = tpu.matmul %29, %27, %cst_19 {dimension_numbers = #tpu.dot_dimension_numbers<[1], [0], [0], [1], [0, 0, 1, 1], [], []>, precision = #tpu.contract_precision<fp32>} : vector<8x8xf32>, vector<8x384xf32>, vector<8x384xf32> -> vector<8x384xf32>
    %31 = arith.addf %26, %30 : vector<8x384xf32>
    %c639_i32 = arith.constant 639 : i32
    %32 = tpu.dynamic_rotate %0 by %c639_i32 dim 1 : vector<8x640xf32>, i32 -> vector<8x640xf32>
    %33 = vector.extract_strided_slice %32 {offsets = [0, 128], sizes = [8, 384], strides = [1, 1]} : vector<8x640xf32> to vector<8x384xf32>
    %c5 = arith.constant 5 : index
    %c0_20 = arith.constant 0 : index
    %c0_21 = arith.constant 0 : index
    %34 = vector.load %arg1[%c5, %c0_20, %c0_21] : memref<9x8x8xf32, #tpu.memory_space<vmem>>, vector<1x8x8xf32>
    %35 = vector.shape_cast %34 : vector<1x8x8xf32> to vector<8x8xf32>
    %cst_22 = arith.constant dense<0.000000e+00> : vector<8x384xf32>
    %36 = tpu.matmul %35, %33, %cst_22 {dimension_numbers = #tpu.dot_dimension_numbers<[1], [0], [0], [1], [0, 0, 1, 1], [], []>, precision = #tpu.contract_precision<fp32>} : vector<8x8xf32>, vector<8x384xf32>, vector<8x384xf32> -> vector<8x384xf32>
    %37 = arith.addf %31, %36 : vector<8x384xf32>
    %c623_i32 = arith.constant 623 : i32
    %38 = tpu.dynamic_rotate %0 by %c623_i32 dim 1 : vector<8x640xf32>, i32 -> vector<8x640xf32>
    %39 = vector.extract_strided_slice %38 {offsets = [0, 128], sizes = [8, 384], strides = [1, 1]} : vector<8x640xf32> to vector<8x384xf32>
    %c6 = arith.constant 6 : index
    %c0_23 = arith.constant 0 : index
    %c0_24 = arith.constant 0 : index
    %40 = vector.load %arg1[%c6, %c0_23, %c0_24] : memref<9x8x8xf32, #tpu.memory_space<vmem>>, vector<1x8x8xf32>
    %41 = vector.shape_cast %40 : vector<1x8x8xf32> to vector<8x8xf32>
    %cst_25 = arith.constant dense<0.000000e+00> : vector<8x384xf32>
    %42 = tpu.matmul %41, %39, %cst_25 {dimension_numbers = #tpu.dot_dimension_numbers<[1], [0], [0], [1], [0, 0, 1, 1], [], []>, precision = #tpu.contract_precision<fp32>} : vector<8x8xf32>, vector<8x384xf32>, vector<8x384xf32> -> vector<8x384xf32>
    %43 = arith.addf %37, %42 : vector<8x384xf32>
    %c622_i32 = arith.constant 622 : i32
    %44 = tpu.dynamic_rotate %0 by %c622_i32 dim 1 : vector<8x640xf32>, i32 -> vector<8x640xf32>
    %45 = vector.extract_strided_slice %44 {offsets = [0, 128], sizes = [8, 384], strides = [1, 1]} : vector<8x640xf32> to vector<8x384xf32>
    %c7 = arith.constant 7 : index
    %c0_26 = arith.constant 0 : index
    %c0_27 = arith.constant 0 : index
    %46 = vector.load %arg1[%c7, %c0_26, %c0_27] : memref<9x8x8xf32, #tpu.memory_space<vmem>>, vector<1x8x8xf32>
    %47 = vector.shape_cast %46 : vector<1x8x8xf32> to vector<8x8xf32>
    %cst_28 = arith.constant dense<0.000000e+00> : vector<8x384xf32>
    %48 = tpu.matmul %47, %45, %cst_28 {dimension_numbers = #tpu.dot_dimension_numbers<[1], [0], [0], [1], [0, 0, 1, 1], [], []>, precision = #tpu.contract_precision<fp32>} : vector<8x8xf32>, vector<8x384xf32>, vector<8x384xf32> -> vector<8x384xf32>
    %49 = arith.addf %43, %48 : vector<8x384xf32>
    %c621_i32 = arith.constant 621 : i32
    %50 = tpu.dynamic_rotate %0 by %c621_i32 dim 1 : vector<8x640xf32>, i32 -> vector<8x640xf32>
    %51 = vector.extract_strided_slice %50 {offsets = [0, 128], sizes = [8, 384], strides = [1, 1]} : vector<8x640xf32> to vector<8x384xf32>
    %c8 = arith.constant 8 : index
    %c0_29 = arith.constant 0 : index
    %c0_30 = arith.constant 0 : index
    %52 = vector.load %arg1[%c8, %c0_29, %c0_30] : memref<9x8x8xf32, #tpu.memory_space<vmem>>, vector<1x8x8xf32>
    %53 = vector.shape_cast %52 : vector<1x8x8xf32> to vector<8x8xf32>
    %cst_31 = arith.constant dense<0.000000e+00> : vector<8x384xf32>
    %54 = tpu.matmul %53, %51, %cst_31 {dimension_numbers = #tpu.dot_dimension_numbers<[1], [0], [0], [1], [0, 0, 1, 1], [], []>, precision = #tpu.contract_precision<fp32>} : vector<8x8xf32>, vector<8x384xf32>, vector<8x384xf32> -> vector<8x384xf32>
    %55 = arith.addf %49, %54 : vector<8x384xf32>
    %cst_32 = arith.constant 0.000000e+00 : f32
    %56 = vector.broadcast %cst_32 : f32 to vector<8x384xf32>
    %57 = arith.maximumf %55, %56 : vector<8x384xf32>
    %58 = arith.mulf %57, %1 : vector<8x384xf32>
    %cst_33 = arith.constant 0.000000e+00 : f32
    %59 = vector.broadcast %cst_33 : f32 to vector<8x128xf32>
    %cst_34 = arith.constant 0.000000e+00 : f32
    %60 = vector.broadcast %cst_34 : f32 to vector<8x128xf32>
    %61 = tpu.concatenate %59, %58, %60 in 1 : vector<8x128xf32>, vector<8x384xf32>, vector<8x128xf32> -> vector<8x640xf32>
    %62 = vector.extract_strided_slice %0 {offsets = [0, 128], sizes = [8, 384], strides = [1, 1]} : vector<8x640xf32> to vector<8x384xf32>
    %c0_35 = arith.constant 0 : index
    %c0_36 = arith.constant 0 : index
    %63 = vector.load %arg4[%c0_35, %c0_36] : memref<8x384xf32, #tpu.memory_space<vmem>>, vector<8x384xf32>
    %c19_i32_37 = arith.constant 19 : i32
    %64 = tpu.dynamic_rotate %61 by %c19_i32_37 dim 1 : vector<8x640xf32>, i32 -> vector<8x640xf32>
    %65 = vector.extract_strided_slice %64 {offsets = [0, 128], sizes = [8, 384], strides = [1, 1]} : vector<8x640xf32> to vector<8x384xf32>
    %c0_38 = arith.constant 0 : index
    %c0_39 = arith.constant 0 : index
    %c0_40 = arith.constant 0 : index
    %66 = vector.load %arg3[%c0_38, %c0_39, %c0_40] : memref<9x8x8xf32, #tpu.memory_space<vmem>>, vector<1x8x8xf32>
    %67 = vector.shape_cast %66 : vector<1x8x8xf32> to vector<8x8xf32>
    %cst_41 = arith.constant dense<0.000000e+00> : vector<8x384xf32>
    %68 = tpu.matmul %67, %65, %cst_41 {dimension_numbers = #tpu.dot_dimension_numbers<[1], [0], [0], [1], [0, 0, 1, 1], [], []>, precision = #tpu.contract_precision<fp32>} : vector<8x8xf32>, vector<8x384xf32>, vector<8x384xf32> -> vector<8x384xf32>
    %69 = arith.addf %63, %68 : vector<8x384xf32>
    %c18_i32_42 = arith.constant 18 : i32
    %70 = tpu.dynamic_rotate %61 by %c18_i32_42 dim 1 : vector<8x640xf32>, i32 -> vector<8x640xf32>
    %71 = vector.extract_strided_slice %70 {offsets = [0, 128], sizes = [8, 384], strides = [1, 1]} : vector<8x640xf32> to vector<8x384xf32>
    %c1_43 = arith.constant 1 : index
    %c0_44 = arith.constant 0 : index
    %c0_45 = arith.constant 0 : index
    %72 = vector.load %arg3[%c1_43, %c0_44, %c0_45] : memref<9x8x8xf32, #tpu.memory_space<vmem>>, vector<1x8x8xf32>
    %73 = vector.shape_cast %72 : vector<1x8x8xf32> to vector<8x8xf32>
    %cst_46 = arith.constant dense<0.000000e+00> : vector<8x384xf32>
    %74 = tpu.matmul %73, %71, %cst_46 {dimension_numbers = #tpu.dot_dimension_numbers<[1], [0], [0], [1], [0, 0, 1, 1], [], []>, precision = #tpu.contract_precision<fp32>} : vector<8x8xf32>, vector<8x384xf32>, vector<8x384xf32> -> vector<8x384xf32>
    %75 = arith.addf %69, %74 : vector<8x384xf32>
    %c17_i32_47 = arith.constant 17 : i32
    %76 = tpu.dynamic_rotate %61 by %c17_i32_47 dim 1 : vector<8x640xf32>, i32 -> vector<8x640xf32>
    %77 = vector.extract_strided_slice %76 {offsets = [0, 128], sizes = [8, 384], strides = [1, 1]} : vector<8x640xf32> to vector<8x384xf32>
    %c2_48 = arith.constant 2 : index
    %c0_49 = arith.constant 0 : index
    %c0_50 = arith.constant 0 : index
    %78 = vector.load %arg3[%c2_48, %c0_49, %c0_50] : memref<9x8x8xf32, #tpu.memory_space<vmem>>, vector<1x8x8xf32>
    %79 = vector.shape_cast %78 : vector<1x8x8xf32> to vector<8x8xf32>
    %cst_51 = arith.constant dense<0.000000e+00> : vector<8x384xf32>
    %80 = tpu.matmul %79, %77, %cst_51 {dimension_numbers = #tpu.dot_dimension_numbers<[1], [0], [0], [1], [0, 0, 1, 1], [], []>, precision = #tpu.contract_precision<fp32>} : vector<8x8xf32>, vector<8x384xf32>, vector<8x384xf32> -> vector<8x384xf32>
    %81 = arith.addf %75, %80 : vector<8x384xf32>
    %c1_i32_52 = arith.constant 1 : i32
    %82 = tpu.dynamic_rotate %61 by %c1_i32_52 dim 1 : vector<8x640xf32>, i32 -> vector<8x640xf32>
    %83 = vector.extract_strided_slice %82 {offsets = [0, 128], sizes = [8, 384], strides = [1, 1]} : vector<8x640xf32> to vector<8x384xf32>
    %c3_53 = arith.constant 3 : index
    %c0_54 = arith.constant 0 : index
    %c0_55 = arith.constant 0 : index
    %84 = vector.load %arg3[%c3_53, %c0_54, %c0_55] : memref<9x8x8xf32, #tpu.memory_space<vmem>>, vector<1x8x8xf32>
    %85 = vector.shape_cast %84 : vector<1x8x8xf32> to vector<8x8xf32>
    %cst_56 = arith.constant dense<0.000000e+00> : vector<8x384xf32>
    %86 = tpu.matmul %85, %83, %cst_56 {dimension_numbers = #tpu.dot_dimension_numbers<[1], [0], [0], [1], [0, 0, 1, 1], [], []>, precision = #tpu.contract_precision<fp32>} : vector<8x8xf32>, vector<8x384xf32>, vector<8x384xf32> -> vector<8x384xf32>
    %87 = arith.addf %81, %86 : vector<8x384xf32>
    %88 = vector.extract_strided_slice %61 {offsets = [0, 128], sizes = [8, 384], strides = [1, 1]} : vector<8x640xf32> to vector<8x384xf32>
    %c4_57 = arith.constant 4 : index
    %c0_58 = arith.constant 0 : index
    %c0_59 = arith.constant 0 : index
    %89 = vector.load %arg3[%c4_57, %c0_58, %c0_59] : memref<9x8x8xf32, #tpu.memory_space<vmem>>, vector<1x8x8xf32>
    %90 = vector.shape_cast %89 : vector<1x8x8xf32> to vector<8x8xf32>
    %cst_60 = arith.constant dense<0.000000e+00> : vector<8x384xf32>
    %91 = tpu.matmul %90, %88, %cst_60 {dimension_numbers = #tpu.dot_dimension_numbers<[1], [0], [0], [1], [0, 0, 1, 1], [], []>, precision = #tpu.contract_precision<fp32>} : vector<8x8xf32>, vector<8x384xf32>, vector<8x384xf32> -> vector<8x384xf32>
    %92 = arith.addf %87, %91 : vector<8x384xf32>
    %c639_i32_61 = arith.constant 639 : i32
    %93 = tpu.dynamic_rotate %61 by %c639_i32_61 dim 1 : vector<8x640xf32>, i32 -> vector<8x640xf32>
    %94 = vector.extract_strided_slice %93 {offsets = [0, 128], sizes = [8, 384], strides = [1, 1]} : vector<8x640xf32> to vector<8x384xf32>
    %c5_62 = arith.constant 5 : index
    %c0_63 = arith.constant 0 : index
    %c0_64 = arith.constant 0 : index
    %95 = vector.load %arg3[%c5_62, %c0_63, %c0_64] : memref<9x8x8xf32, #tpu.memory_space<vmem>>, vector<1x8x8xf32>
    %96 = vector.shape_cast %95 : vector<1x8x8xf32> to vector<8x8xf32>
    %cst_65 = arith.constant dense<0.000000e+00> : vector<8x384xf32>
    %97 = tpu.matmul %96, %94, %cst_65 {dimension_numbers = #tpu.dot_dimension_numbers<[1], [0], [0], [1], [0, 0, 1, 1], [], []>, precision = #tpu.contract_precision<fp32>} : vector<8x8xf32>, vector<8x384xf32>, vector<8x384xf32> -> vector<8x384xf32>
    %98 = arith.addf %92, %97 : vector<8x384xf32>
    %c623_i32_66 = arith.constant 623 : i32
    %99 = tpu.dynamic_rotate %61 by %c623_i32_66 dim 1 : vector<8x640xf32>, i32 -> vector<8x640xf32>
    %100 = vector.extract_strided_slice %99 {offsets = [0, 128], sizes = [8, 384], strides = [1, 1]} : vector<8x640xf32> to vector<8x384xf32>
    %c6_67 = arith.constant 6 : index
    %c0_68 = arith.constant 0 : index
    %c0_69 = arith.constant 0 : index
    %101 = vector.load %arg3[%c6_67, %c0_68, %c0_69] : memref<9x8x8xf32, #tpu.memory_space<vmem>>, vector<1x8x8xf32>
    %102 = vector.shape_cast %101 : vector<1x8x8xf32> to vector<8x8xf32>
    %cst_70 = arith.constant dense<0.000000e+00> : vector<8x384xf32>
    %103 = tpu.matmul %102, %100, %cst_70 {dimension_numbers = #tpu.dot_dimension_numbers<[1], [0], [0], [1], [0, 0, 1, 1], [], []>, precision = #tpu.contract_precision<fp32>} : vector<8x8xf32>, vector<8x384xf32>, vector<8x384xf32> -> vector<8x384xf32>
    %104 = arith.addf %98, %103 : vector<8x384xf32>
    %c622_i32_71 = arith.constant 622 : i32
    %105 = tpu.dynamic_rotate %61 by %c622_i32_71 dim 1 : vector<8x640xf32>, i32 -> vector<8x640xf32>
    %106 = vector.extract_strided_slice %105 {offsets = [0, 128], sizes = [8, 384], strides = [1, 1]} : vector<8x640xf32> to vector<8x384xf32>
    %c7_72 = arith.constant 7 : index
    %c0_73 = arith.constant 0 : index
    %c0_74 = arith.constant 0 : index
    %107 = vector.load %arg3[%c7_72, %c0_73, %c0_74] : memref<9x8x8xf32, #tpu.memory_space<vmem>>, vector<1x8x8xf32>
    %108 = vector.shape_cast %107 : vector<1x8x8xf32> to vector<8x8xf32>
    %cst_75 = arith.constant dense<0.000000e+00> : vector<8x384xf32>
    %109 = tpu.matmul %108, %106, %cst_75 {dimension_numbers = #tpu.dot_dimension_numbers<[1], [0], [0], [1], [0, 0, 1, 1], [], []>, precision = #tpu.contract_precision<fp32>} : vector<8x8xf32>, vector<8x384xf32>, vector<8x384xf32> -> vector<8x384xf32>
    %110 = arith.addf %104, %109 : vector<8x384xf32>
    %c621_i32_76 = arith.constant 621 : i32
    %111 = tpu.dynamic_rotate %61 by %c621_i32_76 dim 1 : vector<8x640xf32>, i32 -> vector<8x640xf32>
    %112 = vector.extract_strided_slice %111 {offsets = [0, 128], sizes = [8, 384], strides = [1, 1]} : vector<8x640xf32> to vector<8x384xf32>
    %c8_77 = arith.constant 8 : index
    %c0_78 = arith.constant 0 : index
    %c0_79 = arith.constant 0 : index
    %113 = vector.load %arg3[%c8_77, %c0_78, %c0_79] : memref<9x8x8xf32, #tpu.memory_space<vmem>>, vector<1x8x8xf32>
    %114 = vector.shape_cast %113 : vector<1x8x8xf32> to vector<8x8xf32>
    %cst_80 = arith.constant dense<0.000000e+00> : vector<8x384xf32>
    %115 = tpu.matmul %114, %112, %cst_80 {dimension_numbers = #tpu.dot_dimension_numbers<[1], [0], [0], [1], [0, 0, 1, 1], [], []>, precision = #tpu.contract_precision<fp32>} : vector<8x8xf32>, vector<8x384xf32>, vector<8x384xf32> -> vector<8x384xf32>
    %116 = arith.addf %110, %115 : vector<8x384xf32>
    %cst_81 = arith.constant 1.000000e+00 : f32
    %117 = vector.broadcast %cst_81 : f32 to vector<8x384xf32>
    %118 = arith.mulf %117, %62 : vector<8x384xf32>
    %119 = arith.addf %116, %118 : vector<8x384xf32>
    %cst_82 = arith.constant 0.000000e+00 : f32
    %120 = vector.broadcast %cst_82 : f32 to vector<8x384xf32>
    %121 = arith.maximumf %119, %120 : vector<8x384xf32>
    %c0_83 = arith.constant 0 : index
    %c0_84 = arith.constant 0 : index
    %122 = vector.load %arg6[%c0_83, %c0_84] : memref<8x384xf32, #tpu.memory_space<vmem>>, vector<8x384xf32>
    tpu.vector_store %arg6[%c0_83, %c0_84], %121 {strides = array<i32>} : memref<8x384xf32, #tpu.memory_space<vmem>>, vector<8x384xf32>,
    return
  }
}

</mosaic_0001>

<llo_original>
// kernel: tpu_custom_call.1
$region0: #{tpu_custom_call.1}
  #allocation0 [shape = 'u32[]', space=smem, size = 0x4, offset = 0x4, fixed_abs, tag = 'smem constant byte address 0x4 - core index']
  #allocation1 [shape = 'u32[72,128]{1,0:T(1,128)}', space=vmem, size = 0x9000, scoped, tag = 'internal scratch']
  %s0 = inlined_call_operand.vmem [shape: f32[8,640], index: 0, kind: input, shape index: {}]
  %s1 = inlined_call_operand.vmem [shape: f32[9,8,8], index: 1, kind: input, shape index: {}]
  %s2 = inlined_call_operand.vmem [shape: f32[8,384], index: 2, kind: input, shape index: {}]
  %s3 = inlined_call_operand.vmem [shape: f32[9,8,8], index: 3, kind: input, shape index: {}]
  %s4 = inlined_call_operand.vmem [shape: f32[8,384], index: 4, kind: input, shape index: {}]
  %s5 = inlined_call_operand.vmem [shape: f32[8,384], index: 5, kind: input, shape index: {}]
  %s6 = inlined_call_operand.hbm [shape: f32[8,384], index: 6, kind: output, shape index: {}]
  %s7 = sld [smem:[#allocation0]]
  $region34: #{tpu_custom_call.1} parent=0
    _
  %s9 = ssub.s32 1, %s7
  %s10 = scalar_select 0, %s9, %s7
  $region1: #{tpu_custom_call.1} parent=0
    #allocation2 [shape = 'u8[12288]{0}', space=vmem, size = 0x3000, scoped, tag = 'output window, operand 0, single buffered']
    #allocation3 [shape = 's32[1]{0}', space=sflag, size = 0x4, scoped, tag = 'scoped memory for tpu_custom_call.1']
    %11 = vsyncpa [#allocation3], 0
    // Predicated region
    $region2: #{tpu_custom_call.1} parent=1 // pred_check
      _
    $region3: #{tpu_custom_call.1} parent=1 // pred_check_branch
      %13 = sbr.rel (0) target = $region5
    $region4: #{tpu_custom_call.1} parent=1 // pred_region
      _
    $region5: #{tpu_custom_call.1} parent=1 // pred_fallthru
      _
    // Predicated region
    $region6: #{tpu_custom_call.1} parent=1 // pred_check
      _
    $region7: #{tpu_custom_call.1} parent=1 // pred_check_branch
      %15 = sbr.rel (0) target = $region9
    $region8: #{tpu_custom_call.1} parent=1 // pred_region
      _
    $region9: #{tpu_custom_call.1} parent=1 // pred_fallthru
      _
    // Predicated region
    $region10: #{tpu_custom_call.1} parent=1 // pred_check
      _
    $region11: #{tpu_custom_call.1} parent=1 // pred_check_branch
      %17 = sbr.rel (0) target = $region13
    $region12: #{tpu_custom_call.1} parent=1 // pred_region
      _
    $region13: #{tpu_custom_call.1} parent=1 // pred_fallthru
      _
    // Predicated region
    $region14: #{tpu_custom_call.1} parent=1 // pred_check
      _
    $region15: #{tpu_custom_call.1} parent=1 // pred_check_branch
      %19 = sbr.rel (0) target = $region17
    $region16: #{tpu_custom_call.1} parent=1 // pred_region
      _
    $region17: #{tpu_custom_call.1} parent=1 // pred_fallthru
      _
    // Predicated region
    $region18: #{tpu_custom_call.1} parent=1 // pred_check
      _
    $region19: #{tpu_custom_call.1} parent=1 // pred_check_branch
      %21 = sbr.rel (0) target = $region21
    $region20: #{tpu_custom_call.1} parent=1 // pred_region
      _
    $region21: #{tpu_custom_call.1} parent=1 // pred_fallthru
      _
    // Predicated region
    $region22: #{tpu_custom_call.1} parent=1 // pred_check
      _
    $region23: #{tpu_custom_call.1} parent=1 // pred_check_branch
      %23 = sbr.rel (0) target = $region25
    $region24: #{tpu_custom_call.1} parent=1 // pred_region
      _
    $region25: #{tpu_custom_call.1} parent=1 // pred_fallthru
      _
    %v24 = vld [vmem:[%s0] sm:$0xff]
    %v25 = vld [vmem:[%s0 + $0x8] sm:$0xff]
    %v26 = vld [vmem:[%s0 + $0x10] sm:$0xff]
    %v27 = vld [vmem:[%s0 + $0x18] sm:$0xff]
    %v28 = vld [vmem:[%s0 + $0x20] sm:$0xff]
    %v29 = vld [vmem:[%s5] sm:$0xff]
    %v30 = vld [vmem:[%s5 + $0x8] sm:$0xff]
    %v31 = vld [vmem:[%s5 + $0x10] sm:$0xff]
    %v32 = vld [vmem:[%s2] sm:$0xff]
    %v33 = vld [vmem:[%s2 + $0x8] sm:$0xff]
    %v34 = vld [vmem:[%s2 + $0x10] sm:$0xff]
    %35 = vrot.lane.b32.xlu0 %v24, 19
    %v36 = vpop.permute.xlu0 %35
    %37 = vrot.lane.b32.xlu0 %v25, 19
    %v38 = vpop.permute.xlu0 %37
    %39 = vrot.lane.b32.xlu0 %v26, 19
    %v40 = vpop.permute.xlu0 %39
    %41 = vrot.lane.b32.xlu0 %v27, 19
    %v42 = vpop.permute.xlu0 %41
    %v43 = vlaneseq
    %v44 = vand.u32 %v43, 127
    %vm45 = vcmp.lt.s32.totalorder %v44, 19
    %v46 = vsel %vm45, %v40, %v42
    %v47 = vsel %vm45, %v38, %v40
    %v48 = vsel %vm45, %v36, %v38
    %v49 = vld [vmem:[%s1] sm:$0xff]
    %vm50 = vcmask 64512
    %v52 = vsel %vm50, %v49, 0
    %54 = vmatpush.msra.mxu0 0.0
    %55 = vmatpush.msra.mxu0 0.0
    %56 = vmatpush.msra.mxu0 0.0
    %57 = vmatpush.msra.mxu0 0.0
    %58 = vmatpush.msra.mxu0 0.0
    %59 = vmatpush.msra.mxu0 0.0
    %60 = vmatpush.msra.mxu0 0.0
    %61 = vmatpush.msra.mxu0 0.0
    %62 = vmatpush.msra.mxu0 0.0
    %63 = vmatpush.msra.mxu0 0.0
    %64 = vmatpush.msra.mxu0 0.0
    %65 = vmatpush.msra.mxu0 0.0
    %66 = vmatpush.msra.mxu0 0.0
    %67 = vmatpush.msra.mxu0 0.0
    %68 = vmatpush.msra.mxu0 0.0
    %v69 = vand.u32 %v48, 4294901760
    %70 = vmatpush.msra.mxu0 %v69
    %v71 = vand.u32 %v52, 4294901760
    %v72 = vsub.f32 %v52, %v71
    %v73 = vand.u32 %v72, 4294901760
    %v74 = vsub.f32 %v72, %v73
    %v75 = vand.u32 %v74, 4294901760
    %76 = vmatmul.f32.gmra.mxu0 %v75
    %v77 = vpop.f32.mrf.mxu0
    %v78 = vadd.f32 0.0, %v77
    %79 = vdwg.mxu0
    %80 = vmatpush.msra.mxu0 0.0
    %81 = vmatpush.msra.mxu0 0.0
    %82 = vmatpush.msra.mxu0 0.0
    %83 = vmatpush.msra.mxu0 0.0
    %84 = vmatpush.msra.mxu0 0.0
    %85 = vmatpush.msra.mxu0 0.0
    %86 = vmatpush.msra.mxu0 0.0
    %87 = vmatpush.msra.mxu0 0.0
    %88 = vmatpush.msra.mxu0 0.0
    %89 = vmatpush.msra.mxu0 0.0
    %90 = vmatpush.msra.mxu0 0.0
    %91 = vmatpush.msra.mxu0 0.0
    %92 = vmatpush.msra.mxu0 0.0
    %93 = vmatpush.msra.mxu0 0.0
    %94 = vmatpush.msra.mxu0 0.0
    %v95 = vand.u32 %v48, 4294901760
    %v96 = vsub.f32 %v48, %v95
    %v97 = vand.u32 %v96, 4294901760
    %v98 = vsub.f32 %v96, %v97
    %v99 = vand.u32 %v98, 4294901760
    %100 = vmatpush.msra.mxu0 %v99
    %v101 = vand.u32 %v52, 4294901760
    %102 = vmatmul.f32.gmra.mxu0 %v101
    %v103 = vpop.f32.mrf.mxu0
    %v104 = vadd.f32 %v78, %v103
    %105 = vdwg.mxu0
    %106 = vmatpush.msra.mxu0 0.0
    %107 = vmatpush.msra.mxu0 0.0
    %108 = vmatpush.msra.mxu0 0.0
    %109 = vmatpush.msra.mxu0 0.0
    %110 = vmatpush.msra.mxu0 0.0
    %111 = vmatpush.msra.mxu0 0.0
    %112 = vmatpush.msra.mxu0 0.0
    %113 = vmatpush.msra.mxu0 0.0
    %114 = vmatpush.msra.mxu0 0.0
    %115 = vmatpush.msra.mxu0 0.0
    %116 = vmatpush.msra.mxu0 0.0
    %117 = vmatpush.msra.mxu0 0.0
    %118 = vmatpush.msra.mxu0 0.0
    %119 = vmatpush.msra.mxu0 0.0
    %120 = vmatpush.msra.mxu0 0.0
    %v121 = vand.u32 %v48, 4294901760
    %v122 = vsub.f32 %v48, %v121
    %123 = vmatpush.msra.mxu0 %v122
    %v124 = vand.u32 %v52, 4294901760
    %v125 = vsub.f32 %v52, %v124
    %126 = vmatmul.f32.gmra.mxu0 %v125
    %v127 = vpop.f32.mrf.mxu0
    %v128 = vadd.f32 %v104, %v127
    %129 = vdwg.mxu0
    %130 = vmatpush.msra.mxu0 0.0
    %131 = vmatpush.msra.mxu0 0.0
    %132 = vmatpush.msra.mxu0 0.0
    %133 = vmatpush.msra.mxu0 0.0
    %134 = vmatpush.msra.mxu0 0.0
    %135 = vmatpush.msra.mxu0 0.0
    %136 = vmatpush.msra.mxu0 0.0
    %137 = vmatpush.msra.mxu0 0.0
    %138 = vmatpush.msra.mxu0 0.0
    %139 = vmatpush.msra.mxu0 0.0
    %140 = vmatpush.msra.mxu0 0.0
    %141 = vmatpush.msra.mxu0 0.0
    %142 = vmatpush.msra.mxu0 0.0
    %143 = vmatpush.msra.mxu0 0.0
    %144 = vmatpush.msra.mxu0 0.0
    %v145 = vand.u32 %v48, 4294901760
    %146 = vmatpush.msra.mxu0 %v145
    %v147 = vand.u32 %v52, 4294901760
    %v148 = vsub.f32 %v52, %v147
    %v149 = vand.u32 %v148, 4294901760
    %150 = vmatmul.f32.gmra.mxu0 %v149
    %v151 = vpop.f32.mrf.mxu0
    %v152 = vadd.f32 %v128, %v151
    %153 = vdwg.mxu0
    %154 = vmatpush.msra.mxu0 0.0
    %155 = vmatpush.msra.mxu0 0.0
    %156 = vmatpush.msra.mxu0 0.0
    %157 = vmatpush.msra.mxu0 0.0
    %158 = vmatpush.msra.mxu0 0.0
    %159 = vmatpush.msra.mxu0 0.0
    %160 = vmatpush.msra.mxu0 0.0
    %161 = vmatpush.msra.mxu0 0.0
    %162 = vmatpush.msra.mxu0 0.0
    %163 = vmatpush.msra.mxu0 0.0
    %164 = vmatpush.msra.mxu0 0.0
    %165 = vmatpush.msra.mxu0 0.0
    %166 = vmatpush.msra.mxu0 0.0
    %167 = vmatpush.msra.mxu0 0.0
    %168 = vmatpush.msra.mxu0 0.0
    %v169 = vand.u32 %v48, 4294901760
    %v170 = vsub.f32 %v48, %v169
    %v171 = vand.u32 %v170, 4294901760
    %172 = vmatpush.msra.mxu0 %v171
    %v173 = vand.u32 %v52, 4294901760
    %174 = vmatmul.f32.gmra.mxu0 %v173
    %v175 = vpop.f32.mrf.mxu0
    %v176 = vadd.f32 %v152, %v175
    %177 = vdwg.mxu0
    %178 = vmatpush.msra.mxu0 0.0
    %179 = vmatpush.msra.mxu0 0.0
    %180 = vmatpush.msra.mxu0 0.0
    %181 = vmatpush.msra.mxu0 0.0
    %182 = vmatpush.msra.mxu0 0.0
    %183 = vmatpush.msra.mxu0 0.0
    %184 = vmatpush.msra.mxu0 0.0
    %185 = vmatpush.msra.mxu0 0.0
    %186 = vmatpush.msra.mxu0 0.0
    %187 = vmatpush.msra.mxu0 0.0
    %188 = vmatpush.msra.mxu0 0.0
    %189 = vmatpush.msra.mxu0 0.0
    %190 = vmatpush.msra.mxu0 0.0
    %191 = vmatpush.msra.mxu0 0.0
    %192 = vmatpush.msra.mxu0 0.0
    %v193 = vand.u32 %v48, 4294901760
    %194 = vmatpush.msra.mxu0 %v193
    %v195 = vand.u32 %v52, 4294901760
    %196 = vmatmul.f32.gmra.mxu0 %v195
    %v197 = vpop.f32.mrf.mxu0
    %v198 = vadd.f32 %v176, %v197
    %199 = vdwg.mxu0
    %200 = vmatpush.msra.mxu0 0.0
    %201 = vmatpush.msra.mxu0 0.0
    %202 = vmatpush.msra.mxu0 0.0
    %203 = vmatpush.msra.mxu0 0.0
    %204 = vmatpush.msra.mxu0 0.0
    %205 = vmatpush.msra.mxu0 0.0
    %206 = vmatpush.msra.mxu0 0.0
    %207 = vmatpush.msra.mxu0 0.0
    %208 = vmatpush.msra.mxu0 0.0
    %209 = vmatpush.msra.mxu0 0.0
    %210 = vmatpush.msra.mxu0 0.0
    %211 = vmatpush.msra.mxu0 0.0
    %212 = vmatpush.msra.mxu0 0.0
    %213 = vmatpush.msra.mxu0 0.0
    %214 = vmatpush.msra.mxu0 0.0
    %v215 = vand.u32 %v47, 4294901760
    %216 = vmatpush.msra.mxu0 %v215
    %v217 = vand.u32 %v52, 4294901760
    %v218 = vsub.f32 %v52, %v217
    %v219 = vand.u32 %v218, 4294901760
    %v220 = vsub.f32 %v218, %v219
    %v221 = vand.u32 %v220, 4294901760
    %222 = vmatmul.f32.gmra.mxu0 %v221
    %v223 = vpop.f32.mrf.mxu0
    %v224 = vadd.f32 0.0, %v223
    %225 = vdwg.mxu0
    %226 = vmatpush.msra.mxu0 0.0
    %227 = vmatpush.msra.mxu0 0.0
    %228 = vmatpush.msra.mxu0 0.0
    %229 = vmatpush.msra.mxu0 0.0
    %230 = vmatpush.msra.mxu0 0.0
    %231 = vmatpush.msra.mxu0 0.0
    %232 = vmatpush.msra.mxu0 0.0
    %233 = vmatpush.msra.mxu0 0.0
    %234 = vmatpush.msra.mxu0 0.0
    %235 = vmatpush.msra.mxu0 0.0
    %236 = vmatpush.msra.mxu0 0.0
    %237 = vmatpush.msra.mxu0 0.0
    %238 = vmatpush.msra.mxu0 0.0
    %239 = vmatpush.msra.mxu0 0.0
    %240 = vmatpush.msra.mxu0 0.0
    %v241 = vand.u32 %v47, 4294901760
    %v242 = vsub.f32 %v47, %v241
    %v243 = vand.u32 %v242, 4294901760
    %v244 = vsub.f32 %v242, %v243
    %v245 = vand.u32 %v244, 4294901760
    %246 = vmatpush.msra.mxu0 %v245
    %v247 = vand.u32 %v52, 4294901760
    %248 = vmatmul.f32.gmra.mxu0 %v247
    %v249 = vpop.f32.mrf.mxu0
    %v250 = vadd.f32 %v224, %v249
    %251 = vdwg.mxu0
    %252 = vmatpush.msra.mxu0 0.0
    %253 = vmatpush.msra.mxu0 0.0
    %254 = vmatpush.msra.mxu0 0.0
    %255 = vmatpush.msra.mxu0 0.0
    %256 = vmatpush.msra.mxu0 0.0
    %257 = vmatpush.msra.mxu0 0.0
    %258 = vmatpush.msra.mxu0 0.0
    %259 = vmatpush.msra.mxu0 0.0
    %260 = vmatpush.msra.mxu0 0.0
    %261 = vmatpush.msra.mxu0 0.0
    %262 = vmatpush.msra.mxu0 0.0
    %263 = vmatpush.msra.mxu0 0.0
    %264 = vmatpush.msra.mxu0 0.0
    %265 = vmatpush.msra.mxu0 0.0
    %266 = vmatpush.msra.mxu0 0.0
    %v267 = vand.u32 %v47, 4294901760
    %v268 = vsub.f32 %v47, %v267
    %269 = vmatpush.msra.mxu0 %v268
    %v270 = vand.u32 %v52, 4294901760
    %v271 = vsub.f32 %v52, %v270
    %272 = vmatmul.f32.gmra.mxu0 %v271
    %v273 = vpop.f32.mrf.mxu0
    %v274 = vadd.f32 %v250, %v273
    %275 = vdwg.mxu0
    %276 = vmatpush.msra.mxu0 0.0
    %277 = vmatpush.msra.mxu0 0.0
    %278 = vmatpush.msra.mxu0 0.0
    %279 = vmatpush.msra.mxu0 0.0
    %280 = vmatpush.msra.mxu0 0.0
    %281 = vmatpush.msra.mxu0 0.0
    %282 = vmatpush.msra.mxu0 0.0
    %283 = vmatpush.msra.mxu0 0.0
    %284 = vmatpush.msra.mxu0 0.0
    %285 = vmatpush.msra.mxu0 0.0
    %286 = vmatpush.msra.mxu0 0.0
    %287 = vmatpush.msra.mxu0 0.0
    %288 = vmatpush.msra.mxu0 0.0
    %289 = vmatpush.msra.mxu0 0.0
    %290 = vmatpush.msra.mxu0 0.0
    %v291 = vand.u32 %v47, 4294901760
    %292 = vmatpush.msra.mxu0 %v291
    %v293 = vand.u32 %v52, 4294901760
    %v294 = vsub.f32 %v52, %v293
    %v295 = vand.u32 %v294, 4294901760
    %296 = vmatmul.f32.gmra.mxu0 %v295
    %v297 = vpop.f32.mrf.mxu0
    %v298 = vadd.f32 %v274, %v297
    %299 = vdwg.mxu0
    %300 = vmatpush.msra.mxu0 0.0
    %301 = vmatpush.msra.mxu0 0.0
    %302 = vmatpush.msra.mxu0 0.0
    %303 = vmatpush.msra.mxu0 0.0
    %304 = vmatpush.msra.mxu0 0.0
    %305 = vmatpush.msra.mxu0 0.0
    %306 = vmatpush.msra.mxu0 0.0
    %307 = vmatpush.msra.mxu0 0.0
    %308 = vmatpush.msra.mxu0 0.0
    %309 = vmatpush.msra.mxu0 0.0
    %310 = vmatpush.msra.mxu0 0.0
    %311 = vmatpush.msra.mxu0 0.0
    %312 = vmatpush.msra.mxu0 0.0
    %313 = vmatpush.msra.mxu0 0.0
    %314 = vmatpush.msra.mxu0 0.0
    %v315 = vand.u32 %v47, 4294901760
    %v316 = vsub.f32 %v47, %v315
    %v317 = vand.u32 %v316, 4294901760
    %318 = vmatpush.msra.mxu0 %v317
    %v319 = vand.u32 %v52, 4294901760
    %320 = vmatmul.f32.gmra.mxu0 %v319
    %v321 = vpop.f32.mrf.mxu0
    %v322 = vadd.f32 %v298, %v321
    %323 = vdwg.mxu0
    %324 = vmatpush.msra.mxu0 0.0
    %325 = vmatpush.msra.mxu0 0.0
    %326 = vmatpush.msra.mxu0 0.0
    %327 = vmatpush.msra.mxu0 0.0
    %328 = vmatpush.msra.mxu0 0.0
    %329 = vmatpush.msra.mxu0 0.0
    %330 = vmatpush.msra.mxu0 0.0
    %331 = vmatpush.msra.mxu0 0.0
    %332 = vmatpush.msra.mxu0 0.0
    %333 = vmatpush.msra.mxu0 0.0
    %334 = vmatpush.msra.mxu0 0.0
    %335 = vmatpush.msra.mxu0 0.0
    %336 = vmatpush.msra.mxu0 0.0
    %337 = vmatpush.msra.mxu0 0.0
    %338 = vmatpush.msra.mxu0 0.0
    %v339 = vand.u32 %v47, 4294901760
    %340 = vmatpush.msra.mxu0 %v339
    %v341 = vand.u32 %v52, 4294901760
    %342 = vmatmul.f32.gmra.mxu0 %v341
    %v343 = vpop.f32.mrf.mxu0
    %v344 = vadd.f32 %v322, %v343
    %345 = vdwg.mxu0
    %346 = vmatpush.msra.mxu0 0.0
    %347 = vmatpush.msra.mxu0 0.0
    %348 = vmatpush.msra.mxu0 0.0
    %349 = vmatpush.msra.mxu0 0.0
    %350 = vmatpush.msra.mxu0 0.0
    %351 = vmatpush.msra.mxu0 0.0
    %352 = vmatpush.msra.mxu0 0.0
    %353 = vmatpush.msra.mxu0 0.0
    %354 = vmatpush.msra.mxu0 0.0
    %355 = vmatpush.msra.mxu0 0.0
    %356 = vmatpush.msra.mxu0 0.0
    %357 = vmatpush.msra.mxu0 0.0
    %358 = vmatpush.msra.mxu0 0.0
    %359 = vmatpush.msra.mxu0 0.0
    %360 = vmatpush.msra.mxu0 0.0
    %v361 = vand.u32 %v46, 4294901760
    %362 = vmatpush.msra.mxu0 %v361
    %v363 = vand.u32 %v52, 4294901760
    %v364 = vsub.f32 %v52, %v363
    %v365 = vand.u32 %v364, 4294901760
    %v366 = vsub.f32 %v364, %v365
    %v367 = vand.u32 %v366, 4294901760
    %368 = vmatmul.f32.gmra.mxu0 %v367
    %v369 = vpop.f32.mrf.mxu0
    %v370 = vadd.f32 0.0, %v369
    %371 = vdwg.mxu0
    %372 = vmatpush.msra.mxu0 0.0
    %373 = vmatpush.msra.mxu0 0.0
    %374 = vmatpush.msra.mxu0 0.0
    %375 = vmatpush.msra.mxu0 0.0
    %376 = vmatpush.msra.mxu0 0.0
    %377 = vmatpush.msra.mxu0 0.0
    %378 = vmatpush.msra.mxu0 0.0
    %379 = vmatpush.msra.mxu0 0.0
    %380 = vmatpush.msra.mxu0 0.0
    %381 = vmatpush.msra.mxu0 0.0
    %382 = vmatpush.msra.mxu0 0.0
    %383 = vmatpush.msra.mxu0 0.0
    %384 = vmatpush.msra.mxu0 0.0
    %385 = vmatpush.msra.mxu0 0.0
    %386 = vmatpush.msra.mxu0 0.0
    %v387 = vand.u32 %v46, 4294901760
    %v388 = vsub.f32 %v46, %v387
    %v389 = vand.u32 %v388, 4294901760
    %v390 = vsub.f32 %v388, %v389
    %v391 = vand.u32 %v390, 4294901760
    %392 = vmatpush.msra.mxu0 %v391
    %v393 = vand.u32 %v52, 4294901760
    %394 = vmatmul.f32.gmra.mxu0 %v393
    %v395 = vpop.f32.mrf.mxu0
    %v396 = vadd.f32 %v370, %v395
    %397 = vdwg.mxu0
    %398 = vmatpush.msra.mxu0 0.0
    %399 = vmatpush.msra.mxu0 0.0
    %400 = vmatpush.msra.mxu0 0.0
    %401 = vmatpush.msra.mxu0 0.0
    %402 = vmatpush.msra.mxu0 0.0
    %403 = vmatpush.msra.mxu0 0.0
    %404 = vmatpush.msra.mxu0 0.0
    %405 = vmatpush.msra.mxu0 0.0
    %406 = vmatpush.msra.mxu0 0.0
    %407 = vmatpush.msra.mxu0 0.0
    %408 = vmatpush.msra.mxu0 0.0
    %409 = vmatpush.msra.mxu0 0.0
    %410 = vmatpush.msra.mxu0 0.0
    %411 = vmatpush.msra.mxu0 0.0
    %412 = vmatpush.msra.mxu0 0.0
    %v413 = vand.u32 %v46, 4294901760
    %v414 = vsub.f32 %v46, %v413
    %415 = vmatpush.msra.mxu0 %v414
    %v416 = vand.u32 %v52, 4294901760
    %v417 = vsub.f32 %v52, %v416
    %418 = vmatmul.f32.gmra.mxu0 %v417
    %v419 = vpop.f32.mrf.mxu0
    %v420 = vadd.f32 %v396, %v419
    %421 = vdwg.mxu0
    %422 = vmatpush.msra.mxu0 0.0
    %423 = vmatpush.msra.mxu0 0.0
    %424 = vmatpush.msra.mxu0 0.0
    %425 = vmatpush.msra.mxu0 0.0
    %426 = vmatpush.msra.mxu0 0.0
    %427 = vmatpush.msra.mxu0 0.0
    %428 = vmatpush.msra.mxu0 0.0
    %429 = vmatpush.msra.mxu0 0.0
    %430 = vmatpush.msra.mxu0 0.0
    %431 = vmatpush.msra.mxu0 0.0
    %432 = vmatpush.msra.mxu0 0.0
    %433 = vmatpush.msra.mxu0 0.0
    %434 = vmatpush.msra.mxu0 0.0
    %435 = vmatpush.msra.mxu0 0.0
    %436 = vmatpush.msra.mxu0 0.0
    %v437 = vand.u32 %v46, 4294901760
    %438 = vmatpush.msra.mxu0 %v437
    %v439 = vand.u32 %v52, 4294901760
    %v440 = vsub.f32 %v52, %v439
    %v441 = vand.u32 %v440, 4294901760
    %442 = vmatmul.f32.gmra.mxu0 %v441
    %v443 = vpop.f32.mrf.mxu0
    %v444 = vadd.f32 %v420, %v443
    %445 = vdwg.mxu0
    %446 = vmatpush.msra.mxu0 0.0
    %447 = vmatpush.msra.mxu0 0.0
    %448 = vmatpush.msra.mxu0 0.0
    %449 = vmatpush.msra.mxu0 0.0
    %450 = vmatpush.msra.mxu0 0.0
    %451 = vmatpush.msra.mxu0 0.0
    %452 = vmatpush.msra.mxu0 0.0
    %453 = vmatpush.msra.mxu0 0.0
    %454 = vmatpush.msra.mxu0 0.0
    %455 = vmatpush.msra.mxu0 0.0
    %456 = vmatpush.msra.mxu0 0.0
    %457 = vmatpush.msra.mxu0 0.0
    %458 = vmatpush.msra.mxu0 0.0
    %459 = vmatpush.msra.mxu0 0.0
    %460 = vmatpush.msra.mxu0 0.0
    %v461 = vand.u32 %v46, 4294901760
    %v462 = vsub.f32 %v46, %v461
    %v463 = vand.u32 %v462, 4294901760
    %464 = vmatpush.msra.mxu0 %v463
    %v465 = vand.u32 %v52, 4294901760
    %466 = vmatmul.f32.gmra.mxu0 %v465
    %v467 = vpop.f32.mrf.mxu0
    %v468 = vadd.f32 %v444, %v467
    %469 = vdwg.mxu0
    %470 = vmatpush.msra.mxu0 0.0
    %471 = vmatpush.msra.mxu0 0.0
    %472 = vmatpush.msra.mxu0 0.0
    %473 = vmatpush.msra.mxu0 0.0
    %474 = vmatpush.msra.mxu0 0.0
    %475 = vmatpush.msra.mxu0 0.0
    %476 = vmatpush.msra.mxu0 0.0
    %477 = vmatpush.msra.mxu0 0.0
    %478 = vmatpush.msra.mxu0 0.0
    %479 = vmatpush.msra.mxu0 0.0
    %480 = vmatpush.msra.mxu0 0.0
    %481 = vmatpush.msra.mxu0 0.0
    %482 = vmatpush.msra.mxu0 0.0
    %483 = vmatpush.msra.mxu0 0.0
    %484 = vmatpush.msra.mxu0 0.0
    %v485 = vand.u32 %v46, 4294901760
    %486 = vmatpush.msra.mxu0 %v485
    %v487 = vand.u32 %v52, 4294901760
    %488 = vmatmul.f32.gmra.mxu0 %v487
    %v489 = vpop.f32.mrf.mxu0
    %v490 = vadd.f32 %v468, %v489
    %491 = vdwg.mxu0
    %v492 = vadd.f32 %v32, %v198
    %v493 = vadd.f32 %v33, %v344
    %v494 = vadd.f32 %v34, %v490
    %495 = vrot.lane.b32.xlu0 %v24, 18
    %v496 = vpop.permute.xlu0 %495
    %497 = vrot.lane.b32.xlu0 %v25, 18
    %v498 = vpop.permute.xlu0 %497
    %499 = vrot.lane.b32.xlu0 %v26, 18
    %v500 = vpop.permute.xlu0 %499
    %501 = vrot.lane.b32.xlu0 %v27, 18
    %v502 = vpop.permute.xlu0 %501
    %vm503 = vcmp.lt.s32.totalorder %v44, 18
    %v504 = vsel %vm503, %v500, %v502
    %v505 = vsel %vm503, %v498, %v500
    %v506 = vsel %vm503, %v496, %v498
    %s507 = scalar_lea.vmem %s1, 8
    %v508 = vld [vmem:[%s507] sm:$0xff]
    %v510 = vsel %vm50, %v508, 0
    %512 = vmatpush.msra.mxu0 0.0
    %513 = vmatpush.msra.mxu0 0.0
    %514 = vmatpush.msra.mxu0 0.0
    %515 = vmatpush.msra.mxu0 0.0
    %516 = vmatpush.msra.mxu0 0.0
    %517 = vmatpush.msra.mxu0 0.0
    %518 = vmatpush.msra.mxu0 0.0
    %519 = vmatpush.msra.mxu0 0.0
    %520 = vmatpush.msra.mxu0 0.0
    %521 = vmatpush.msra.mxu0 0.0
    %522 = vmatpush.msra.mxu0 0.0
    %523 = vmatpush.msra.mxu0 0.0
    %524 = vmatpush.msra.mxu0 0.0
    %525 = vmatpush.msra.mxu0 0.0
    %526 = vmatpush.msra.mxu0 0.0
    %v527 = vand.u32 %v506, 4294901760
    %528 = vmatpush.msra.mxu0 %v527
    %v529 = vand.u32 %v510, 4294901760
    %v530 = vsub.f32 %v510, %v529
    %v531 = vand.u32 %v530, 4294901760
    %v532 = vsub.f32 %v530, %v531
    %v533 = vand.u32 %v532, 4294901760
    %534 = vmatmul.f32.gmra.mxu0 %v533
    %v535 = vpop.f32.mrf.mxu0
    %v536 = vadd.f32 0.0, %v535
    %537 = vdwg.mxu0
    %538 = vmatpush.msra.mxu0 0.0
    %539 = vmatpush.msra.mxu0 0.0
    %540 = vmatpush.msra.mxu0 0.0
    %541 = vmatpush.msra.mxu0 0.0
    %542 = vmatpush.msra.mxu0 0.0
    %543 = vmatpush.msra.mxu0 0.0
    %544 = vmatpush.msra.mxu0 0.0
    %545 = vmatpush.msra.mxu0 0.0
    %546 = vmatpush.msra.mxu0 0.0
    %547 = vmatpush.msra.mxu0 0.0
    %548 = vmatpush.msra.mxu0 0.0
    %549 = vmatpush.msra.mxu0 0.0
    %550 = vmatpush.msra.mxu0 0.0
    %551 = vmatpush.msra.mxu0 0.0
    %552 = vmatpush.msra.mxu0 0.0
    %v553 = vand.u32 %v506, 4294901760
    %v554 = vsub.f32 %v506, %v553
    %v555 = vand.u32 %v554, 4294901760
    %v556 = vsub.f32 %v554, %v555
    %v557 = vand.u32 %v556, 4294901760
    %558 = vmatpush.msra.mxu0 %v557
    %v559 = vand.u32 %v510, 4294901760
    %560 = vmatmul.f32.gmra.mxu0 %v559
    %v561 = vpop.f32.mrf.mxu0
    %v562 = vadd.f32 %v536, %v561
    %563 = vdwg.mxu0
    %564 = vmatpush.msra.mxu0 0.0
    %565 = vmatpush.msra.mxu0 0.0
    %566 = vmatpush.msra.mxu0 0.0
    %567 = vmatpush.msra.mxu0 0.0
    %568 = vmatpush.msra.mxu0 0.0
    %569 = vmatpush.msra.mxu0 0.0
    %570 = vmatpush.msra.mxu0 0.0
    %571 = vmatpush.msra.mxu0 0.0
    %572 = vmatpush.msra.mxu0 0.0
    %573 = vmatpush.msra.mxu0 0.0
    %574 = vmatpush.msra.mxu0 0.0
    %575 = vmatpush.msra.mxu0 0.0
    %576 = vmatpush.msra.mxu0 0.0
    %577 = vmatpush.msra.mxu0 0.0
    %578 = vmatpush.msra.mxu0 0.0
    %v579 = vand.u32 %v506, 4294901760
    %v580 = vsub.f32 %v506, %v579
    %581 = vmatpush.msra.mxu0 %v580
    %v582 = vand.u32 %v510, 4294901760
    %v583 = vsub.f32 %v510, %v582
    %584 = vmatmul.f32.gmra.mxu0 %v583
    %v585 = vpop.f32.mrf.mxu0
    %v586 = vadd.f32 %v562, %v585
    %587 = vdwg.mxu0
    %588 = vmatpush.msra.mxu0 0.0
    %589 = vmatpush.msra.mxu0 0.0
    %590 = vmatpush.msra.mxu0 0.0
    %591 = vmatpush.msra.mxu0 0.0
    %592 = vmatpush.msra.mxu0 0.0
    %593 = vmatpush.msra.mxu0 0.0
    %594 = vmatpush.msra.mxu0 0.0
    %595 = vmatpush.msra.mxu0 0.0
    %596 = vmatpush.msra.mxu0 0.0
    %597 = vmatpush.msra.mxu0 0.0
    %598 = vmatpush.msra.mxu0 0.0
    %599 = vmatpush.msra.mxu0 0.0
    %600 = vmatpush.msra.mxu0 0.0
    %601 = vmatpush.msra.mxu0 0.0
    %602 = vmatpush.msra.mxu0 0.0
    %v603 = vand.u32 %v506, 4294901760
    %604 = vmatpush.msra.mxu0 %v603
    %v605 = vand.u32 %v510, 4294901760
    %v606 = vsub.f32 %v510, %v605
    %v607 = vand.u32 %v606, 4294901760
    %608 = vmatmul.f32.gmra.mxu0 %v607
    %v609 = vpop.f32.mrf.mxu0
    %v610 = vadd.f32 %v586, %v609
    %611 = vdwg.mxu0
    %612 = vmatpush.msra.mxu0 0.0
    %613 = vmatpush.msra.mxu0 0.0
    %614 = vmatpush.msra.mxu0 0.0
    %615 = vmatpush.msra.mxu0 0.0
    %616 = vmatpush.msra.mxu0 0.0
    %617 = vmatpush.msra.mxu0 0.0
    %618 = vmatpush.msra.mxu0 0.0
    %619 = vmatpush.msra.mxu0 0.0
    %620 = vmatpush.msra.mxu0 0.0
    %621 = vmatpush.msra.mxu0 0.0
    %622 = vmatpush.msra.mxu0 0.0
    %623 = vmatpush.msra.mxu0 0.0
    %624 = vmatpush.msra.mxu0 0.0
    %625 = vmatpush.msra.mxu0 0.0
    %626 = vmatpush.msra.mxu0 0.0
    %v627 = vand.u32 %v506, 4294901760
    %v628 = vsub.f32 %v506, %v627
    %v629 = vand.u32 %v628, 4294901760
    %630 = vmatpush.msra.mxu0 %v629
    %v631 = vand.u32 %v510, 4294901760
    %632 = vmatmul.f32.gmra.mxu0 %v631
    %v633 = vpop.f32.mrf.mxu0
    %v634 = vadd.f32 %v610, %v633
    %635 = vdwg.mxu0
    %636 = vmatpush.msra.mxu0 0.0
    %637 = vmatpush.msra.mxu0 0.0
    %638 = vmatpush.msra.mxu0 0.0
    %639 = vmatpush.msra.mxu0 0.0
    %640 = vmatpush.msra.mxu0 0.0
    %641 = vmatpush.msra.mxu0 0.0
    %642 = vmatpush.msra.mxu0 0.0
    %643 = vmatpush.msra.mxu0 0.0
    %644 = vmatpush.msra.mxu0 0.0
    %645 = vmatpush.msra.mxu0 0.0
    %646 = vmatpush.msra.mxu0 0.0
    %647 = vmatpush.msra.mxu0 0.0
    %648 = vmatpush.msra.mxu0 0.0
    %649 = vmatpush.msra.mxu0 0.0
    %650 = vmatpush.msra.mxu0 0.0
    %v651 = vand.u32 %v506, 4294901760
    %652 = vmatpush.msra.mxu0 %v651
    %v653 = vand.u32 %v510, 4294901760
    %654 = vmatmul.f32.gmra.mxu0 %v653
    %v655 = vpop.f32.mrf.mxu0
    %v656 = vadd.f32 %v634, %v655
    %657 = vdwg.mxu0
    %658 = vmatpush.msra.mxu0 0.0
    %659 = vmatpush.msra.mxu0 0.0
    %660 = vmatpush.msra.mxu0 0.0
    %661 = vmatpush.msra.mxu0 0.0
    %662 = vmatpush.msra.mxu0 0.0
    %663 = vmatpush.msra.mxu0 0.0
    %664 = vmatpush.msra.mxu0 0.0
    %665 = vmatpush.msra.mxu0 0.0
    %666 = vmatpush.msra.mxu0 0.0
    %667 = vmatpush.msra.mxu0 0.0
    %668 = vmatpush.msra.mxu0 0.0
    %669 = vmatpush.msra.mxu0 0.0
    %670 = vmatpush.msra.mxu0 0.0
    %671 = vmatpush.msra.mxu0 0.0
    %672 = vmatpush.msra.mxu0 0.0
    %v673 = vand.u32 %v505, 4294901760
    %674 = vmatpush.msra.mxu0 %v673
    %v675 = vand.u32 %v510, 4294901760
    %v676 = vsub.f32 %v510, %v675
    %v677 = vand.u32 %v676, 4294901760
    %v678 = vsub.f32 %v676, %v677
    %v679 = vand.u32 %v678, 4294901760
    %680 = vmatmul.f32.gmra.mxu0 %v679
    %v681 = vpop.f32.mrf.mxu0
    %v682 = vadd.f32 0.0, %v681
    %683 = vdwg.mxu0
    %684 = vmatpush.msra.mxu0 0.0
    %685 = vmatpush.msra.mxu0 0.0
    %686 = vmatpush.msra.mxu0 0.0
    %687 = vmatpush.msra.mxu0 0.0
    %688 = vmatpush.msra.mxu0 0.0
    %689 = vmatpush.msra.mxu0 0.0
    %690 = vmatpush.msra.mxu0 0.0
    %691 = vmatpush.msra.mxu0 0.0
    %692 = vmatpush.msra.mxu0 0.0
    %693 = vmatpush.msra.mxu0 0.0
    %694 = vmatpush.msra.mxu0 0.0
    %695 = vmatpush.msra.mxu0 0.0
    %696 = vmatpush.msra.mxu0 0.0
    %697 = vmatpush.msra.mxu0 0.0
    %698 = vmatpush.msra.mxu0 0.0
    %v699 = vand.u32 %v505, 4294901760
    %v700 = vsub.f32 %v505, %v699
    %v701 = vand.u32 %v700, 4294901760
    %v702 = vsub.f32 %v700, %v701
    %v703 = vand.u32 %v702, 4294901760
    %704 = vmatpush.msra.mxu0 %v703
    %v705 = vand.u32 %v510, 4294901760
    %706 = vmatmul.f32.gmra.mxu0 %v705
    %v707 = vpop.f32.mrf.mxu0
    %v708 = vadd.f32 %v682, %v707
    %709 = vdwg.mxu0
    %710 = vmatpush.msra.mxu0 0.0
    %711 = vmatpush.msra.mxu0 0.0
    %712 = vmatpush.msra.mxu0 0.0
    %713 = vmatpush.msra.mxu0 0.0
    %714 = vmatpush.msra.mxu0 0.0
    %715 = vmatpush.msra.mxu0 0.0
    %716 = vmatpush.msra.mxu0 0.0
    %717 = vmatpush.msra.mxu0 0.0
    %718 = vmatpush.msra.mxu0 0.0
    %719 = vmatpush.msra.mxu0 0.0
    %720 = vmatpush.msra.mxu0 0.0
    %721 = vmatpush.msra.mxu0 0.0
    %722 = vmatpush.msra.mxu0 0.0
    %723 = vmatpush.msra.mxu0 0.0
    %724 = vmatpush.msra.mxu0 0.0
    %v725 = vand.u32 %v505, 4294901760
    %v726 = vsub.f32 %v505, %v725
    %727 = vmatpush.msra.mxu0 %v726
    %v728 = vand.u32 %v510, 4294901760
    %v729 = vsub.f32 %v510, %v728
    %730 = vmatmul.f32.gmra.mxu0 %v729
    %v731 = vpop.f32.mrf.mxu0
    %v732 = vadd.f32 %v708, %v731
    %733 = vdwg.mxu0
    %734 = vmatpush.msra.mxu0 0.0
    %735 = vmatpush.msra.mxu0 0.0
    %736 = vmatpush.msra.mxu0 0.0
    %737 = vmatpush.msra.mxu0 0.0
    %738 = vmatpush.msra.mxu0 0.0
    %739 = vmatpush.msra.mxu0 0.0
    %740 = vmatpush.msra.mxu0 0.0
    %741 = vmatpush.msra.mxu0 0.0
    %742 = vmatpush.msra.mxu0 0.0
    %743 = vmatpush.msra.mxu0 0.0
    %744 = vmatpush.msra.mxu0 0.0
    %745 = vmatpush.msra.mxu0 0.0
    %746 = vmatpush.msra.mxu0 0.0
    %747 = vmatpush.msra.mxu0 0.0
    %748 = vmatpush.msra.mxu0 0.0
    %v749 = vand.u32 %v505, 4294901760
    %750 = vmatpush.msra.mxu0 %v749
    %v751 = vand.u32 %v510, 4294901760
    %v752 = vsub.f32 %v510, %v751
    %v753 = vand.u32 %v752, 4294901760
    %754 = vmatmul.f32.gmra.mxu0 %v753
    %v755 = vpop.f32.mrf.mxu0
    %v756 = vadd.f32 %v732, %v755
    %757 = vdwg.mxu0
    %758 = vmatpush.msra.mxu0 0.0
    %759 = vmatpush.msra.mxu0 0.0
    %760 = vmatpush.msra.mxu0 0.0
    %761 = vmatpush.msra.mxu0 0.0
    %762 = vmatpush.msra.mxu0 0.0
    %763 = vmatpush.msra.mxu0 0.0
    %764 = vmatpush.msra.mxu0 0.0
    %765 = vmatpush.msra.mxu0 0.0
    %766 = vmatpush.msra.mxu0 0.0
    %767 = vmatpush.msra.mxu0 0.0
    %768 = vmatpush.msra.mxu0 0.0
    %769 = vmatpush.msra.mxu0 0.0
    %770 = vmatpush.msra.mxu0 0.0
    %771 = vmatpush.msra.mxu0 0.0
    %772 = vmatpush.msra.mxu0 0.0
    %v773 = vand.u32 %v505, 4294901760
    %v774 = vsub.f32 %v505, %v773
    %v775 = vand.u32 %v774, 4294901760
    %776 = vmatpush.msra.mxu0 %v775
    %v777 = vand.u32 %v510, 4294901760
    %778 = vmatmul.f32.gmra.mxu0 %v777
    %v779 = vpop.f32.mrf.mxu0
    %v780 = vadd.f32 %v756, %v779
    %781 = vdwg.mxu0
    %782 = vmatpush.msra.mxu0 0.0
    %783 = vmatpush.msra.mxu0 0.0
    %784 = vmatpush.msra.mxu0 0.0
    %785 = vmatpush.msra.mxu0 0.0
    %786 = vmatpush.msra.mxu0 0.0
    %787 = vmatpush.msra.mxu0 0.0
    %788 = vmatpush.msra.mxu0 0.0
    %789 = vmatpush.msra.mxu0 0.0
    %790 = vmatpush.msra.mxu0 0.0
    %791 = vmatpush.msra.mxu0 0.0
    %792 = vmatpush.msra.mxu0 0.0
    %793 = vmatpush.msra.mxu0 0.0
    %794 = vmatpush.msra.mxu0 0.0
    %795 = vmatpush.msra.mxu0 0.0
    %796 = vmatpush.msra.mxu0 0.0
    %v797 = vand.u32 %v505, 4294901760
    %798 = vmatpush.msra.mxu0 %v797
    %v799 = vand.u32 %v510, 4294901760
    %800 = vmatmul.f32.gmra.mxu0 %v799
    %v801 = vpop.f32.mrf.mxu0
    %v802 = vadd.f32 %v780, %v801
    %803 = vdwg.mxu0
    %804 = vmatpush.msra.mxu0 0.0
    %805 = vmatpush.msra.mxu0 0.0
    %806 = vmatpush.msra.mxu0 0.0
    %807 = vmatpush.msra.mxu0 0.0
    %808 = vmatpush.msra.mxu0 0.0
    %809 = vmatpush.msra.mxu0 0.0
    %810 = vmatpush.msra.mxu0 0.0
    %811 = vmatpush.msra.mxu0 0.0
    %812 = vmatpush.msra.mxu0 0.0
    %813 = vmatpush.msra.mxu0 0.0
    %814 = vmatpush.msra.mxu0 0.0
    %815 = vmatpush.msra.mxu0 0.0
    %816 = vmatpush.msra.mxu0 0.0
    %817 = vmatpush.msra.mxu0 0.0
    %818 = vmatpush.msra.mxu0 0.0
    %v819 = vand.u32 %v504, 4294901760
    %820 = vmatpush.msra.mxu0 %v819
    %v821 = vand.u32 %v510, 4294901760
    %v822 = vsub.f32 %v510, %v821
    %v823 = vand.u32 %v822, 4294901760
    %v824 = vsub.f32 %v822, %v823
    %v825 = vand.u32 %v824, 4294901760
    %826 = vmatmul.f32.gmra.mxu0 %v825
    %v827 = vpop.f32.mrf.mxu0
    %v828 = vadd.f32 0.0, %v827
    %829 = vdwg.mxu0
    %830 = vmatpush.msra.mxu0 0.0
    %831 = vmatpush.msra.mxu0 0.0
    %832 = vmatpush.msra.mxu0 0.0
    %833 = vmatpush.msra.mxu0 0.0
    %834 = vmatpush.msra.mxu0 0.0
    %835 = vmatpush.msra.mxu0 0.0
    %836 = vmatpush.msra.mxu0 0.0
    %837 = vmatpush.msra.mxu0 0.0
    %838 = vmatpush.msra.mxu0 0.0
    %839 = vmatpush.msra.mxu0 0.0
    %840 = vmatpush.msra.mxu0 0.0
    %841 = vmatpush.msra.mxu0 0.0
    %842 = vmatpush.msra.mxu0 0.0
    %843 = vmatpush.msra.mxu0 0.0
    %844 = vmatpush.msra.mxu0 0.0
    %v845 = vand.u32 %v504, 4294901760
    %v846 = vsub.f32 %v504, %v845
    %v847 = vand.u32 %v846, 4294901760
    %v848 = vsub.f32 %v846, %v847
    %v849 = vand.u32 %v848, 4294901760
    %850 = vmatpush.msra.mxu0 %v849
    %v851 = vand.u32 %v510, 4294901760
    %852 = vmatmul.f32.gmra.mxu0 %v851
    %v853 = vpop.f32.mrf.mxu0
    %v854 = vadd.f32 %v828, %v853
    %855 = vdwg.mxu0
    %856 = vmatpush.msra.mxu0 0.0
    %857 = vmatpush.msra.mxu0 0.0
    %858 = vmatpush.msra.mxu0 0.0
    %859 = vmatpush.msra.mxu0 0.0
    %860 = vmatpush.msra.mxu0 0.0
    %861 = vmatpush.msra.mxu0 0.0
    %862 = vmatpush.msra.mxu0 0.0
    %863 = vmatpush.msra.mxu0 0.0
    %864 = vmatpush.msra.mxu0 0.0
    %865 = vmatpush.msra.mxu0 0.0
    %866 = vmatpush.msra.mxu0 0.0
    %867 = vmatpush.msra.mxu0 0.0
    %868 = vmatpush.msra.mxu0 0.0
    %869 = vmatpush.msra.mxu0 0.0
    %870 = vmatpush.msra.mxu0 0.0
    %v871 = vand.u32 %v504, 4294901760
    %v872 = vsub.f32 %v504, %v871
    %873 = vmatpush.msra.mxu0 %v872
    %v874 = vand.u32 %v510, 4294901760
    %v875 = vsub.f32 %v510, %v874
    %876 = vmatmul.f32.gmra.mxu0 %v875
    %v877 = vpop.f32.mrf.mxu0
    %v878 = vadd.f32 %v854, %v877
    %879 = vdwg.mxu0
    %880 = vmatpush.msra.mxu0 0.0
    %881 = vmatpush.msra.mxu0 0.0
    %882 = vmatpush.msra.mxu0 0.0
    %883 = vmatpush.msra.mxu0 0.0
    %884 = vmatpush.msra.mxu0 0.0
    %885 = vmatpush.msra.mxu0 0.0
    %886 = vmatpush.msra.mxu0 0.0
    %887 = vmatpush.msra.mxu0 0.0
    %888 = vmatpush.msra.mxu0 0.0
    %889 = vmatpush.msra.mxu0 0.0
    %890 = vmatpush.msra.mxu0 0.0
    %891 = vmatpush.msra.mxu0 0.0
    %892 = vmatpush.msra.mxu0 0.0
    %893 = vmatpush.msra.mxu0 0.0
    %894 = vmatpush.msra.mxu0 0.0
    %v895 = vand.u32 %v504, 4294901760
    %896 = vmatpush.msra.mxu0 %v895
    %v897 = vand.u32 %v510, 4294901760
    %v898 = vsub.f32 %v510, %v897
    %v899 = vand.u32 %v898, 4294901760
    %900 = vmatmul.f32.gmra.mxu0 %v899
    %v901 = vpop.f32.mrf.mxu0
    %v902 = vadd.f32 %v878, %v901
    %903 = vdwg.mxu0
    %904 = vmatpush.msra.mxu0 0.0
    %905 = vmatpush.msra.mxu0 0.0
    %906 = vmatpush.msra.mxu0 0.0
    %907 = vmatpush.msra.mxu0 0.0
    %908 = vmatpush.msra.mxu0 0.0
    %909 = vmatpush.msra.mxu0 0.0
    %910 = vmatpush.msra.mxu0 0.0
    %911 = vmatpush.msra.mxu0 0.0
    %912 = vmatpush.msra.mxu0 0.0
    %913 = vmatpush.msra.mxu0 0.0
    %914 = vmatpush.msra.mxu0 0.0
    %915 = vmatpush.msra.mxu0 0.0
    %916 = vmatpush.msra.mxu0 0.0
    %917 = vmatpush.msra.mxu0 0.0
    %918 = vmatpush.msra.mxu0 0.0
    %v919 = vand.u32 %v504, 4294901760
    %v920 = vsub.f32 %v504, %v919
    %v921 = vand.u32 %v920, 4294901760
    %922 = vmatpush.msra.mxu0 %v921
    %v923 = vand.u32 %v510, 4294901760
    %924 = vmatmul.f32.gmra.mxu0 %v923
    %v925 = vpop.f32.mrf.mxu0
    %v926 = vadd.f32 %v902, %v925
    %927 = vdwg.mxu0
    %928 = vmatpush.msra.mxu0 0.0
    %929 = vmatpush.msra.mxu0 0.0
    %930 = vmatpush.msra.mxu0 0.0
    %931 = vmatpush.msra.mxu0 0.0
    %932 = vmatpush.msra.mxu0 0.0
    %933 = vmatpush.msra.mxu0 0.0
    %934 = vmatpush.msra.mxu0 0.0
    %935 = vmatpush.msra.mxu0 0.0
    %936 = vmatpush.msra.mxu0 0.0
    %937 = vmatpush.msra.mxu0 0.0
    %938 = vmatpush.msra.mxu0 0.0
    %939 = vmatpush.msra.mxu0 0.0
    %940 = vmatpush.msra.mxu0 0.0
    %941 = vmatpush.msra.mxu0 0.0
    %942 = vmatpush.msra.mxu0 0.0
    %v943 = vand.u32 %v504, 4294901760
    %944 = vmatpush.msra.mxu0 %v943
    %v945 = vand.u32 %v510, 4294901760
    %946 = vmatmul.f32.gmra.mxu0 %v945
    %v947 = vpop.f32.mrf.mxu0
    %v948 = vadd.f32 %v926, %v947
    %949 = vdwg.mxu0
    %v950 = vadd.f32 %v492, %v656
    %v951 = vadd.f32 %v493, %v802
    %v952 = vadd.f32 %v494, %v948
    %953 = vrot.lane.b32.xlu0 %v24, 17
    %v954 = vpop.permute.xlu0 %953
    %955 = vrot.lane.b32.xlu0 %v25, 17
    %v956 = vpop.permute.xlu0 %955
    %957 = vrot.lane.b32.xlu0 %v26, 17
    %v958 = vpop.permute.xlu0 %957
    %959 = vrot.lane.b32.xlu0 %v27, 17
    %v960 = vpop.permute.xlu0 %959
    %vm961 = vcmp.lt.s32.totalorder %v44, 17
    %v962 = vsel %vm961, %v958, %v960
    %v963 = vsel %vm961, %v956, %v958
    %v964 = vsel %vm961, %v954, %v956
    %s965 = scalar_lea.vmem %s1, 16
    %v966 = vld [vmem:[%s965] sm:$0xff]
    %v968 = vsel %vm50, %v966, 0
    %970 = vmatpush.msra.mxu0 0.0
    %971 = vmatpush.msra.mxu0 0.0
    %972 = vmatpush.msra.mxu0 0.0
    %973 = vmatpush.msra.mxu0 0.0
    %974 = vmatpush.msra.mxu0 0.0
    %975 = vmatpush.msra.mxu0 0.0
    %976 = vmatpush.msra.mxu0 0.0
    %977 = vmatpush.msra.mxu0 0.0
    %978 = vmatpush.msra.mxu0 0.0
    %979 = vmatpush.msra.mxu0 0.0
    %980 = vmatpush.msra.mxu0 0.0
    %981 = vmatpush.msra.mxu0 0.0
    %982 = vmatpush.msra.mxu0 0.0
    %983 = vmatpush.msra.mxu0 0.0
    %984 = vmatpush.msra.mxu0 0.0
    %v985 = vand.u32 %v964, 4294901760
    %986 = vmatpush.msra.mxu0 %v985
    %v987 = vand.u32 %v968, 4294901760
    %v988 = vsub.f32 %v968, %v987
    %v989 = vand.u32 %v988, 4294901760
    %v990 = vsub.f32 %v988, %v989
    %v991 = vand.u32 %v990, 4294901760
    %992 = vmatmul.f32.gmra.mxu0 %v991
    %v993 = vpop.f32.mrf.mxu0
    %v994 = vadd.f32 0.0, %v993
    %995 = vdwg.mxu0
    %996 = vmatpush.msra.mxu0 0.0
    %997 = vmatpush.msra.mxu0 0.0
    %998 = vmatpush.msra.mxu0 0.0
    %999 = vmatpush.msra.mxu0 0.0
    %1000 = vmatpush.msra.mxu0 0.0
    %1001 = vmatpush.msra.mxu0 0.0
    %1002 = vmatpush.msra.mxu0 0.0
    %1003 = vmatpush.msra.mxu0 0.0
    %1004 = vmatpush.msra.mxu0 0.0
    %1005 = vmatpush.msra.mxu0 0.0
    %1006 = vmatpush.msra.mxu0 0.0
    %1007 = vmatpush.msra.mxu0 0.0
    %1008 = vmatpush.msra.mxu0 0.0
    %1009 = vmatpush.msra.mxu0 0.0
    %1010 = vmatpush.msra.mxu0 0.0
    %v1011 = vand.u32 %v964, 4294901760
    %v1012 = vsub.f32 %v964, %v1011
    %v1013 = vand.u32 %v1012, 4294901760
    %v1014 = vsub.f32 %v1012, %v1013
    %v1015 = vand.u32 %v1014, 4294901760
    %1016 = vmatpush.msra.mxu0 %v1015
    %v1017 = vand.u32 %v968, 4294901760
    %1018 = vmatmul.f32.gmra.mxu0 %v1017
    %v1019 = vpop.f32.mrf.mxu0
    %v1020 = vadd.f32 %v994, %v1019
    %1021 = vdwg.mxu0
    %1022 = vmatpush.msra.mxu0 0.0
    %1023 = vmatpush.msra.mxu0 0.0
    %1024 = vmatpush.msra.mxu0 0.0
    %1025 = vmatpush.msra.mxu0 0.0
    %1026 = vmatpush.msra.mxu0 0.0
    %1027 = vmatpush.msra.mxu0 0.0
    %1028 = vmatpush.msra.mxu0 0.0
    %1029 = vmatpush.msra.mxu0 0.0
    %1030 = vmatpush.msra.mxu0 0.0
    %1031 = vmatpush.msra.mxu0 0.0
    %1032 = vmatpush.msra.mxu0 0.0
    %1033 = vmatpush.msra.mxu0 0.0
    %1034 = vmatpush.msra.mxu0 0.0
    %1035 = vmatpush.msra.mxu0 0.0
    %1036 = vmatpush.msra.mxu0 0.0
    %v1037 = vand.u32 %v964, 4294901760
    %v1038 = vsub.f32 %v964, %v1037
    %1039 = vmatpush.msra.mxu0 %v1038
    %v1040 = vand.u32 %v968, 4294901760
    %v1041 = vsub.f32 %v968, %v1040
    %1042 = vmatmul.f32.gmra.mxu0 %v1041
    %v1043 = vpop.f32.mrf.mxu0
    %v1044 = vadd.f32 %v1020, %v1043
    %1045 = vdwg.mxu0
    %1046 = vmatpush.msra.mxu0 0.0
    %1047 = vmatpush.msra.mxu0 0.0
    %1048 = vmatpush.msra.mxu0 0.0
    %1049 = vmatpush.msra.mxu0 0.0
    %1050 = vmatpush.msra.mxu0 0.0
    %1051 = vmatpush.msra.mxu0 0.0
    %1052 = vmatpush.msra.mxu0 0.0
    %1053 = vmatpush.msra.mxu0 0.0
    %1054 = vmatpush.msra.mxu0 0.0
    %1055 = vmatpush.msra.mxu0 0.0
    %1056 = vmatpush.msra.mxu0 0.0
    %1057 = vmatpush.msra.mxu0 0.0
    %1058 = vmatpush.msra.mxu0 0.0
    %1059 = vmatpush.msra.mxu0 0.0
    %1060 = vmatpush.msra.mxu0 0.0
    %v1061 = vand.u32 %v964, 4294901760
    %1062 = vmatpush.msra.mxu0 %v1061
    %v1063 = vand.u32 %v968, 4294901760
    %v1064 = vsub.f32 %v968, %v1063
    %v1065 = vand.u32 %v1064, 4294901760
    %1066 = vmatmul.f32.gmra.mxu0 %v1065
    %v1067 = vpop.f32.mrf.mxu0
    %v1068 = vadd.f32 %v1044, %v1067
    %1069 = vdwg.mxu0
    %1070 = vmatpush.msra.mxu0 0.0
    %1071 = vmatpush.msra.mxu0 0.0
    %1072 = vmatpush.msra.mxu0 0.0
    %1073 = vmatpush.msra.mxu0 0.0
    %1074 = vmatpush.msra.mxu0 0.0
    %1075 = vmatpush.msra.mxu0 0.0
    %1076 = vmatpush.msra.mxu0 0.0
    %1077 = vmatpush.msra.mxu0 0.0
    %1078 = vmatpush.msra.mxu0 0.0
    %1079 = vmatpush.msra.mxu0 0.0
    %1080 = vmatpush.msra.mxu0 0.0
    %1081 = vmatpush.msra.mxu0 0.0
    %1082 = vmatpush.msra.mxu0 0.0
    %1083 = vmatpush.msra.mxu0 0.0
    %1084 = vmatpush.msra.mxu0 0.0
    %v1085 = vand.u32 %v964, 4294901760
    %v1086 = vsub.f32 %v964, %v1085
    %v1087 = vand.u32 %v1086, 4294901760
    %1088 = vmatpush.msra.mxu0 %v1087
    %v1089 = vand.u32 %v968, 4294901760
    %1090 = vmatmul.f32.gmra.mxu0 %v1089
    %v1091 = vpop.f32.mrf.mxu0
    %v1092 = vadd.f32 %v1068, %v1091
    %1093 = vdwg.mxu0
    %1094 = vmatpush.msra.mxu0 0.0
    %1095 = vmatpush.msra.mxu0 0.0
    %1096 = vmatpush.msra.mxu0 0.0
    %1097 = vmatpush.msra.mxu0 0.0
    %1098 = vmatpush.msra.mxu0 0.0
    %1099 = vmatpush.msra.mxu0 0.0
    %1100 = vmatpush.msra.mxu0 0.0
    %1101 = vmatpush.msra.mxu0 0.0
    %1102 = vmatpush.msra.mxu0 0.0
    %1103 = vmatpush.msra.mxu0 0.0
    %1104 = vmatpush.msra.mxu0 0.0
    %1105 = vmatpush.msra.mxu0 0.0
    %1106 = vmatpush.msra.mxu0 0.0
    %1107 = vmatpush.msra.mxu0 0.0
    %1108 = vmatpush.msra.mxu0 0.0
    %v1109 = vand.u32 %v964, 4294901760
    %1110 = vmatpush.msra.mxu0 %v1109
    %v1111 = vand.u32 %v968, 4294901760
    %1112 = vmatmul.f32.gmra.mxu0 %v1111
    %v1113 = vpop.f32.mrf.mxu0
    %v1114 = vadd.f32 %v1092, %v1113
    %1115 = vdwg.mxu0
    %1116 = vmatpush.msra.mxu0 0.0
    %1117 = vmatpush.msra.mxu0 0.0
    %1118 = vmatpush.msra.mxu0 0.0
    %1119 = vmatpush.msra.mxu0 0.0
    %1120 = vmatpush.msra.mxu0 0.0
    %1121 = vmatpush.msra.mxu0 0.0
    %1122 = vmatpush.msra.mxu0 0.0
    %1123 = vmatpush.msra.mxu0 0.0
    %1124 = vmatpush.msra.mxu0 0.0
    %1125 = vmatpush.msra.mxu0 0.0
    %1126 = vmatpush.msra.mxu0 0.0
    %1127 = vmatpush.msra.mxu0 0.0
    %1128 = vmatpush.msra.mxu0 0.0
    %1129 = vmatpush.msra.mxu0 0.0
    %1130 = vmatpush.msra.mxu0 0.0
    %v1131 = vand.u32 %v963, 4294901760
    %1132 = vmatpush.msra.mxu0 %v1131
    %v1133 = vand.u32 %v968, 4294901760
    %v1134 = vsub.f32 %v968, %v1133
    %v1135 = vand.u32 %v1134, 4294901760
    %v1136 = vsub.f32 %v1134, %v1135
    %v1137 = vand.u32 %v1136, 4294901760
    %1138 = vmatmul.f32.gmra.mxu0 %v1137
    %v1139 = vpop.f32.mrf.mxu0
    %v1140 = vadd.f32 0.0, %v1139
    %1141 = vdwg.mxu0
    %1142 = vmatpush.msra.mxu0 0.0
    %1143 = vmatpush.msra.mxu0 0.0
    %1144 = vmatpush.msra.mxu0 0.0
    %1145 = vmatpush.msra.mxu0 0.0
    %1146 = vmatpush.msra.mxu0 0.0
    %1147 = vmatpush.msra.mxu0 0.0
    %1148 = vmatpush.msra.mxu0 0.0
    %1149 = vmatpush.msra.mxu0 0.0
    %1150 = vmatpush.msra.mxu0 0.0
    %1151 = vmatpush.msra.mxu0 0.0
    %1152 = vmatpush.msra.mxu0 0.0
    %1153 = vmatpush.msra.mxu0 0.0
    %1154 = vmatpush.msra.mxu0 0.0
    %1155 = vmatpush.msra.mxu0 0.0
    %1156 = vmatpush.msra.mxu0 0.0
    %v1157 = vand.u32 %v963, 4294901760
    %v1158 = vsub.f32 %v963, %v1157
    %v1159 = vand.u32 %v1158, 4294901760
    %v1160 = vsub.f32 %v1158, %v1159
    %v1161 = vand.u32 %v1160, 4294901760
    %1162 = vmatpush.msra.mxu0 %v1161
    %v1163 = vand.u32 %v968, 4294901760
    %1164 = vmatmul.f32.gmra.mxu0 %v1163
    %v1165 = vpop.f32.mrf.mxu0
    %v1166 = vadd.f32 %v1140, %v1165
    %1167 = vdwg.mxu0
    %1168 = vmatpush.msra.mxu0 0.0
    %1169 = vmatpush.msra.mxu0 0.0
    %1170 = vmatpush.msra.mxu0 0.0
    %1171 = vmatpush.msra.mxu0 0.0
    %1172 = vmatpush.msra.mxu0 0.0
    %1173 = vmatpush.msra.mxu0 0.0
    %1174 = vmatpush.msra.mxu0 0.0
    %1175 = vmatpush.msra.mxu0 0.0
    %1176 = vmatpush.msra.mxu0 0.0
    %1177 = vmatpush.msra.mxu0 0.0
    %1178 = vmatpush.msra.mxu0 0.0
    %1179 = vmatpush.msra.mxu0 0.0
    %1180 = vmatpush.msra.mxu0 0.0
    %1181 = vmatpush.msra.mxu0 0.0
    %1182 = vmatpush.msra.mxu0 0.0
    %v1183 = vand.u32 %v963, 4294901760
    %v1184 = vsub.f32 %v963, %v1183
    %1185 = vmatpush.msra.mxu0 %v1184
    %v1186 = vand.u32 %v968, 4294901760
    %v1187 = vsub.f32 %v968, %v1186
    %1188 = vmatmul.f32.gmra.mxu0 %v1187
    %v1189 = vpop.f32.mrf.mxu0
    %v1190 = vadd.f32 %v1166, %v1189
    %1191 = vdwg.mxu0
    %1192 = vmatpush.msra.mxu0 0.0
    %1193 = vmatpush.msra.mxu0 0.0
    %1194 = vmatpush.msra.mxu0 0.0
    %1195 = vmatpush.msra.mxu0 0.0
    %1196 = vmatpush.msra.mxu0 0.0
    %1197 = vmatpush.msra.mxu0 0.0
    %1198 = vmatpush.msra.mxu0 0.0
    %1199 = vmatpush.msra.mxu0 0.0
    %1200 = vmatpush.msra.mxu0 0.0
    %1201 = vmatpush.msra.mxu0 0.0
    %1202 = vmatpush.msra.mxu0 0.0
    %1203 = vmatpush.msra.mxu0 0.0
    %1204 = vmatpush.msra.mxu0 0.0
    %1205 = vmatpush.msra.mxu0 0.0
    %1206 = vmatpush.msra.mxu0 0.0
    %v1207 = vand.u32 %v963, 4294901760
    %1208 = vmatpush.msra.mxu0 %v1207
    %v1209 = vand.u32 %v968, 4294901760
    %v1210 = vsub.f32 %v968, %v1209
    %v1211 = vand.u32 %v1210, 4294901760
    %1212 = vmatmul.f32.gmra.mxu0 %v1211
    %v1213 = vpop.f32.mrf.mxu0
    %v1214 = vadd.f32 %v1190, %v1213
    %1215 = vdwg.mxu0
    %1216 = vmatpush.msra.mxu0 0.0
    %1217 = vmatpush.msra.mxu0 0.0
    %1218 = vmatpush.msra.mxu0 0.0
    %1219 = vmatpush.msra.mxu0 0.0
    %1220 = vmatpush.msra.mxu0 0.0
    %1221 = vmatpush.msra.mxu0 0.0
    %1222 = vmatpush.msra.mxu0 0.0
    %1223 = vmatpush.msra.mxu0 0.0
    %1224 = vmatpush.msra.mxu0 0.0
    %1225 = vmatpush.msra.mxu0 0.0
    %1226 = vmatpush.msra.mxu0 0.0
    %1227 = vmatpush.msra.mxu0 0.0
    %1228 = vmatpush.msra.mxu0 0.0
    %1229 = vmatpush.msra.mxu0 0.0
    %1230 = vmatpush.msra.mxu0 0.0
    %v1231 = vand.u32 %v963, 4294901760
    %v1232 = vsub.f32 %v963, %v1231
    %v1233 = vand.u32 %v1232, 4294901760
    %1234 = vmatpush.msra.mxu0 %v1233
    %v1235 = vand.u32 %v968, 4294901760
    %1236 = vmatmul.f32.gmra.mxu0 %v1235
    %v1237 = vpop.f32.mrf.mxu0
    %v1238 = vadd.f32 %v1214, %v1237
    %1239 = vdwg.mxu0
    %1240 = vmatpush.msra.mxu0 0.0
    %1241 = vmatpush.msra.mxu0 0.0
    %1242 = vmatpush.msra.mxu0 0.0
    %1243 = vmatpush.msra.mxu0 0.0
    %1244 = vmatpush.msra.mxu0 0.0
    %1245 = vmatpush.msra.mxu0 0.0
    %1246 = vmatpush.msra.mxu0 0.0
    %1247 = vmatpush.msra.mxu0 0.0
    %1248 = vmatpush.msra.mxu0 0.0
    %1249 = vmatpush.msra.mxu0 0.0
    %1250 = vmatpush.msra.mxu0 0.0
    %1251 = vmatpush.msra.mxu0 0.0
    %1252 = vmatpush.msra.mxu0 0.0
    %1253 = vmatpush.msra.mxu0 0.0
    %1254 = vmatpush.msra.mxu0 0.0
    %v1255 = vand.u32 %v963, 4294901760
    %1256 = vmatpush.msra.mxu0 %v1255
    %v1257 = vand.u32 %v968, 4294901760
    %1258 = vmatmul.f32.gmra.mxu0 %v1257
    %v1259 = vpop.f32.mrf.mxu0
    %v1260 = vadd.f32 %v1238, %v1259
    %1261 = vdwg.mxu0
    %1262 = vmatpush.msra.mxu0 0.0
    %1263 = vmatpush.msra.mxu0 0.0
    %1264 = vmatpush.msra.mxu0 0.0
    %1265 = vmatpush.msra.mxu0 0.0
    %1266 = vmatpush.msra.mxu0 0.0
    %1267 = vmatpush.msra.mxu0 0.0
    %1268 = vmatpush.msra.mxu0 0.0
    %1269 = vmatpush.msra.mxu0 0.0
    %1270 = vmatpush.msra.mxu0 0.0
    %1271 = vmatpush.msra.mxu0 0.0
    %1272 = vmatpush.msra.mxu0 0.0
    %1273 = vmatpush.msra.mxu0 0.0
    %1274 = vmatpush.msra.mxu0 0.0
    %1275 = vmatpush.msra.mxu0 0.0
    %1276 = vmatpush.msra.mxu0 0.0
    %v1277 = vand.u32 %v962, 4294901760
    %1278 = vmatpush.msra.mxu0 %v1277
    %v1279 = vand.u32 %v968, 4294901760
    %v1280 = vsub.f32 %v968, %v1279
    %v1281 = vand.u32 %v1280, 4294901760
    %v1282 = vsub.f32 %v1280, %v1281
    %v1283 = vand.u32 %v1282, 4294901760
    %1284 = vmatmul.f32.gmra.mxu0 %v1283
    %v1285 = vpop.f32.mrf.mxu0
    %v1286 = vadd.f32 0.0, %v1285
    %1287 = vdwg.mxu0
    %1288 = vmatpush.msra.mxu0 0.0
    %1289 = vmatpush.msra.mxu0 0.0
    %1290 = vmatpush.msra.mxu0 0.0
    %1291 = vmatpush.msra.mxu0 0.0
    %1292 = vmatpush.msra.mxu0 0.0
    %1293 = vmatpush.msra.mxu0 0.0
    %1294 = vmatpush.msra.mxu0 0.0
    %1295 = vmatpush.msra.mxu0 0.0
    %1296 = vmatpush.msra.mxu0 0.0
    %1297 = vmatpush.msra.mxu0 0.0
    %1298 = vmatpush.msra.mxu0 0.0
    %1299 = vmatpush.msra.mxu0 0.0
    %1300 = vmatpush.msra.mxu0 0.0
    %1301 = vmatpush.msra.mxu0 0.0
    %1302 = vmatpush.msra.mxu0 0.0
    %v1303 = vand.u32 %v962, 4294901760
    %v1304 = vsub.f32 %v962, %v1303
    %v1305 = vand.u32 %v1304, 4294901760
    %v1306 = vsub.f32 %v1304, %v1305
    %v1307 = vand.u32 %v1306, 4294901760
    %1308 = vmatpush.msra.mxu0 %v1307
    %v1309 = vand.u32 %v968, 4294901760
    %1310 = vmatmul.f32.gmra.mxu0 %v1309
    %v1311 = vpop.f32.mrf.mxu0
    %v1312 = vadd.f32 %v1286, %v1311
    %1313 = vdwg.mxu0
    %1314 = vmatpush.msra.mxu0 0.0
    %1315 = vmatpush.msra.mxu0 0.0
    %1316 = vmatpush.msra.mxu0 0.0
    %1317 = vmatpush.msra.mxu0 0.0
    %1318 = vmatpush.msra.mxu0 0.0
    %1319 = vmatpush.msra.mxu0 0.0
    %1320 = vmatpush.msra.mxu0 0.0
    %1321 = vmatpush.msra.mxu0 0.0
    %1322 = vmatpush.msra.mxu0 0.0
    %1323 = vmatpush.msra.mxu0 0.0
    %1324 = vmatpush.msra.mxu0 0.0
    %1325 = vmatpush.msra.mxu0 0.0
    %1326 = vmatpush.msra.mxu0 0.0
    %1327 = vmatpush.msra.mxu0 0.0
    %1328 = vmatpush.msra.mxu0 0.0
    %v1329 = vand.u32 %v962, 4294901760
    %v1330 = vsub.f32 %v962, %v1329
    %1331 = vmatpush.msra.mxu0 %v1330
    %v1332 = vand.u32 %v968, 4294901760
    %v1333 = vsub.f32 %v968, %v1332
    %1334 = vmatmul.f32.gmra.mxu0 %v1333
    %v1335 = vpop.f32.mrf.mxu0
    %v1336 = vadd.f32 %v1312, %v1335
    %1337 = vdwg.mxu0
    %1338 = vmatpush.msra.mxu0 0.0
    %1339 = vmatpush.msra.mxu0 0.0
    %1340 = vmatpush.msra.mxu0 0.0
    %1341 = vmatpush.msra.mxu0 0.0
    %1342 = vmatpush.msra.mxu0 0.0
    %1343 = vmatpush.msra.mxu0 0.0
    %1344 = vmatpush.msra.mxu0 0.0
    %1345 = vmatpush.msra.mxu0 0.0
    %1346 = vmatpush.msra.mxu0 0.0
    %1347 = vmatpush.msra.mxu0 0.0
    %1348 = vmatpush.msra.mxu0 0.0
    %1349 = vmatpush.msra.mxu0 0.0
    %1350 = vmatpush.msra.mxu0 0.0
    %1351 = vmatpush.msra.mxu0 0.0
    %1352 = vmatpush.msra.mxu0 0.0
    %v1353 = vand.u32 %v962, 4294901760
    %1354 = vmatpush.msra.mxu0 %v1353
    %v1355 = vand.u32 %v968, 4294901760
    %v1356 = vsub.f32 %v968, %v1355
    %v1357 = vand.u32 %v1356, 4294901760
    %1358 = vmatmul.f32.gmra.mxu0 %v1357
    %v1359 = vpop.f32.mrf.mxu0
    %v1360 = vadd.f32 %v1336, %v1359
    %1361 = vdwg.mxu0
    %1362 = vmatpush.msra.mxu0 0.0
    %1363 = vmatpush.msra.mxu0 0.0
    %1364 = vmatpush.msra.mxu0 0.0
    %1365 = vmatpush.msra.mxu0 0.0
    %1366 = vmatpush.msra.mxu0 0.0
    %1367 = vmatpush.msra.mxu0 0.0
    %1368 = vmatpush.msra.mxu0 0.0
    %1369 = vmatpush.msra.mxu0 0.0
    %1370 = vmatpush.msra.mxu0 0.0
    %1371 = vmatpush.msra.mxu0 0.0
    %1372 = vmatpush.msra.mxu0 0.0
    %1373 = vmatpush.msra.mxu0 0.0
    %1374 = vmatpush.msra.mxu0 0.0
    %1375 = vmatpush.msra.mxu0 0.0
    %1376 = vmatpush.msra.mxu0 0.0
    %v1377 = vand.u32 %v962, 4294901760
    %v1378 = vsub.f32 %v962, %v1377
    %v1379 = vand.u32 %v1378, 4294901760
    %1380 = vmatpush.msra.mxu0 %v1379
    %v1381 = vand.u32 %v968, 4294901760
    %1382 = vmatmul.f32.gmra.mxu0 %v1381
    %v1383 = vpop.f32.mrf.mxu0
    %v1384 = vadd.f32 %v1360, %v1383
    %1385 = vdwg.mxu0
    %1386 = vmatpush.msra.mxu0 0.0
    %1387 = vmatpush.msra.mxu0 0.0
    %1388 = vmatpush.msra.mxu0 0.0
    %1389 = vmatpush.msra.mxu0 0.0
    %1390 = vmatpush.msra.mxu0 0.0
    %1391 = vmatpush.msra.mxu0 0.0
    %1392 = vmatpush.msra.mxu0 0.0
    %1393 = vmatpush.msra.mxu0 0.0
    %1394 = vmatpush.msra.mxu0 0.0
    %1395 = vmatpush.msra.mxu0 0.0
    %1396 = vmatpush.msra.mxu0 0.0
    %1397 = vmatpush.msra.mxu0 0.0
    %1398 = vmatpush.msra.mxu0 0.0
    %1399 = vmatpush.msra.mxu0 0.0
    %1400 = vmatpush.msra.mxu0 0.0
    %v1401 = vand.u32 %v962, 4294901760
    %1402 = vmatpush.msra.mxu0 %v1401
    %v1403 = vand.u32 %v968, 4294901760
    %1404 = vmatmul.f32.gmra.mxu0 %v1403
    %v1405 = vpop.f32.mrf.mxu0
    %v1406 = vadd.f32 %v1384, %v1405
    %1407 = vdwg.mxu0
    %v1408 = vadd.f32 %v950, %v1114
    %v1409 = vadd.f32 %v951, %v1260
    %v1410 = vadd.f32 %v952, %v1406
    %1411 = vrot.lane.b32.xlu0 %v24, 1
    %v1412 = vpop.permute.xlu0 %1411
    %1413 = vrot.lane.b32.xlu0 %v25, 1
    %v1414 = vpop.permute.xlu0 %1413
    %1415 = vrot.lane.b32.xlu0 %v26, 1
    %v1416 = vpop.permute.xlu0 %1415
    %1417 = vrot.lane.b32.xlu0 %v27, 1
    %v1418 = vpop.permute.xlu0 %1417
    %vm1419 = vcmp.lt.s32.totalorder %v44, 1
    %v1420 = vsel %vm1419, %v1416, %v1418
    %v1421 = vsel %vm1419, %v1414, %v1416
    %v1422 = vsel %vm1419, %v1412, %v1414
    %s1423 = scalar_lea.vmem %s1, 24
    %v1424 = vld [vmem:[%s1423] sm:$0xff]
    %v1426 = vsel %vm50, %v1424, 0
    %1428 = vmatpush.msra.mxu0 0.0
    %1429 = vmatpush.msra.mxu0 0.0
    %1430 = vmatpush.msra.mxu0 0.0
    %1431 = vmatpush.msra.mxu0 0.0
    %1432 = vmatpush.msra.mxu0 0.0
    %1433 = vmatpush.msra.mxu0 0.0
    %1434 = vmatpush.msra.mxu0 0.0
    %1435 = vmatpush.msra.mxu0 0.0
    %1436 = vmatpush.msra.mxu0 0.0
    %1437 = vmatpush.msra.mxu0 0.0
    %1438 = vmatpush.msra.mxu0 0.0
    %1439 = vmatpush.msra.mxu0 0.0
    %1440 = vmatpush.msra.mxu0 0.0
    %1441 = vmatpush.msra.mxu0 0.0
    %1442 = vmatpush.msra.mxu0 0.0
    %v1443 = vand.u32 %v1422, 4294901760
    %1444 = vmatpush.msra.mxu0 %v1443
    %v1445 = vand.u32 %v1426, 4294901760
    %v1446 = vsub.f32 %v1426, %v1445
    %v1447 = vand.u32 %v1446, 4294901760
    %v1448 = vsub.f32 %v1446, %v1447
    %v1449 = vand.u32 %v1448, 4294901760
    %1450 = vmatmul.f32.gmra.mxu0 %v1449
    %v1451 = vpop.f32.mrf.mxu0
    %v1452 = vadd.f32 0.0, %v1451
    %1453 = vdwg.mxu0
    %1454 = vmatpush.msra.mxu0 0.0
    %1455 = vmatpush.msra.mxu0 0.0
    %1456 = vmatpush.msra.mxu0 0.0
    %1457 = vmatpush.msra.mxu0 0.0
    %1458 = vmatpush.msra.mxu0 0.0
    %1459 = vmatpush.msra.mxu0 0.0
    %1460 = vmatpush.msra.mxu0 0.0
    %1461 = vmatpush.msra.mxu0 0.0
    %1462 = vmatpush.msra.mxu0 0.0
    %1463 = vmatpush.msra.mxu0 0.0
    %1464 = vmatpush.msra.mxu0 0.0
    %1465 = vmatpush.msra.mxu0 0.0
    %1466 = vmatpush.msra.mxu0 0.0
    %1467 = vmatpush.msra.mxu0 0.0
    %1468 = vmatpush.msra.mxu0 0.0
    %v1469 = vand.u32 %v1422, 4294901760
    %v1470 = vsub.f32 %v1422, %v1469
    %v1471 = vand.u32 %v1470, 4294901760
    %v1472 = vsub.f32 %v1470, %v1471
    %v1473 = vand.u32 %v1472, 4294901760
    %1474 = vmatpush.msra.mxu0 %v1473
    %v1475 = vand.u32 %v1426, 4294901760
    %1476 = vmatmul.f32.gmra.mxu0 %v1475
    %v1477 = vpop.f32.mrf.mxu0
    %v1478 = vadd.f32 %v1452, %v1477
    %1479 = vdwg.mxu0
    %1480 = vmatpush.msra.mxu0 0.0
    %1481 = vmatpush.msra.mxu0 0.0
    %1482 = vmatpush.msra.mxu0 0.0
    %1483 = vmatpush.msra.mxu0 0.0
    %1484 = vmatpush.msra.mxu0 0.0
    %1485 = vmatpush.msra.mxu0 0.0
    %1486 = vmatpush.msra.mxu0 0.0
    %1487 = vmatpush.msra.mxu0 0.0
    %1488 = vmatpush.msra.mxu0 0.0
    %1489 = vmatpush.msra.mxu0 0.0
    %1490 = vmatpush.msra.mxu0 0.0
    %1491 = vmatpush.msra.mxu0 0.0
    %1492 = vmatpush.msra.mxu0 0.0
    %1493 = vmatpush.msra.mxu0 0.0
    %1494 = vmatpush.msra.mxu0 0.0
    %v1495 = vand.u32 %v1422, 4294901760
    %v1496 = vsub.f32 %v1422, %v1495
    %1497 = vmatpush.msra.mxu0 %v1496
    %v1498 = vand.u32 %v1426, 4294901760
    %v1499 = vsub.f32 %v1426, %v1498
    %1500 = vmatmul.f32.gmra.mxu0 %v1499
    %v1501 = vpop.f32.mrf.mxu0
    %v1502 = vadd.f32 %v1478, %v1501
    %1503 = vdwg.mxu0
    %1504 = vmatpush.msra.mxu0 0.0
    %1505 = vmatpush.msra.mxu0 0.0
    %1506 = vmatpush.msra.mxu0 0.0
    %1507 = vmatpush.msra.mxu0 0.0
    %1508 = vmatpush.msra.mxu0 0.0
    %1509 = vmatpush.msra.mxu0 0.0
    %1510 = vmatpush.msra.mxu0 0.0
    %1511 = vmatpush.msra.mxu0 0.0
    %1512 = vmatpush.msra.mxu0 0.0
    %1513 = vmatpush.msra.mxu0 0.0
    %1514 = vmatpush.msra.mxu0 0.0
    %1515 = vmatpush.msra.mxu0 0.0
    %1516 = vmatpush.msra.mxu0 0.0
    %1517 = vmatpush.msra.mxu0 0.0
    %1518 = vmatpush.msra.mxu0 0.0
    %v1519 = vand.u32 %v1422, 4294901760
    %1520 = vmatpush.msra.mxu0 %v1519
    %v1521 = vand.u32 %v1426, 4294901760
    %v1522 = vsub.f32 %v1426, %v1521
    %v1523 = vand.u32 %v1522, 4294901760
    %1524 = vmatmul.f32.gmra.mxu0 %v1523
    %v1525 = vpop.f32.mrf.mxu0
    %v1526 = vadd.f32 %v1502, %v1525
    %1527 = vdwg.mxu0
    %1528 = vmatpush.msra.mxu0 0.0
    %1529 = vmatpush.msra.mxu0 0.0
    %1530 = vmatpush.msra.mxu0 0.0
    %1531 = vmatpush.msra.mxu0 0.0
    %1532 = vmatpush.msra.mxu0 0.0
    %1533 = vmatpush.msra.mxu0 0.0
    %1534 = vmatpush.msra.mxu0 0.0
    %1535 = vmatpush.msra.mxu0 0.0
    %1536 = vmatpush.msra.mxu0 0.0
    %1537 = vmatpush.msra.mxu0 0.0
    %1538 = vmatpush.msra.mxu0 0.0
    %1539 = vmatpush.msra.mxu0 0.0
    %1540 = vmatpush.msra.mxu0 0.0
    %1541 = vmatpush.msra.mxu0 0.0
    %1542 = vmatpush.msra.mxu0 0.0
    %v1543 = vand.u32 %v1422, 4294901760
    %v1544 = vsub.f32 %v1422, %v1543
    %v1545 = vand.u32 %v1544, 4294901760
    %1546 = vmatpush.msra.mxu0 %v1545
    %v1547 = vand.u32 %v1426, 4294901760
    %1548 = vmatmul.f32.gmra.mxu0 %v1547
    %v1549 = vpop.f32.mrf.mxu0
    %v1550 = vadd.f32 %v1526, %v1549
    %1551 = vdwg.mxu0
    %1552 = vmatpush.msra.mxu0 0.0
    %1553 = vmatpush.msra.mxu0 0.0
    %1554 = vmatpush.msra.mxu0 0.0
    %1555 = vmatpush.msra.mxu0 0.0
    %1556 = vmatpush.msra.mxu0 0.0
    %1557 = vmatpush.msra.mxu0 0.0
    %1558 = vmatpush.msra.mxu0 0.0
    %1559 = vmatpush.msra.mxu0 0.0
    %1560 = vmatpush.msra.mxu0 0.0
    %1561 = vmatpush.msra.mxu0 0.0
    %1562 = vmatpush.msra.mxu0 0.0
    %1563 = vmatpush.msra.mxu0 0.0
    %1564 = vmatpush.msra.mxu0 0.0
    %1565 = vmatpush.msra.mxu0 0.0
    %1566 = vmatpush.msra.mxu0 0.0
    %v1567 = vand.u32 %v1422, 4294901760
    %1568 = vmatpush.msra.mxu0 %v1567
    %v1569 = vand.u32 %v1426, 4294901760
    %1570 = vmatmul.f32.gmra.mxu0 %v1569
    %v1571 = vpop.f32.mrf.mxu0
    %v1572 = vadd.f32 %v1550, %v1571
    %1573 = vdwg.mxu0
    %1574 = vmatpush.msra.mxu0 0.0
    %1575 = vmatpush.msra.mxu0 0.0
    %1576 = vmatpush.msra.mxu0 0.0
    %1577 = vmatpush.msra.mxu0 0.0
    %1578 = vmatpush.msra.mxu0 0.0
    %1579 = vmatpush.msra.mxu0 0.0
    %1580 = vmatpush.msra.mxu0 0.0
    %1581 = vmatpush.msra.mxu0 0.0
    %1582 = vmatpush.msra.mxu0 0.0
    %1583 = vmatpush.msra.mxu0 0.0
    %1584 = vmatpush.msra.mxu0 0.0
    %1585 = vmatpush.msra.mxu0 0.0
    %1586 = vmatpush.msra.mxu0 0.0
    %1587 = vmatpush.msra.mxu0 0.0
    %1588 = vmatpush.msra.mxu0 0.0
    %v1589 = vand.u32 %v1421, 4294901760
    %1590 = vmatpush.msra.mxu0 %v1589
    %v1591 = vand.u32 %v1426, 4294901760
    %v1592 = vsub.f32 %v1426, %v1591
    %v1593 = vand.u32 %v1592, 4294901760
    %v1594 = vsub.f32 %v1592, %v1593
    %v1595 = vand.u32 %v1594, 4294901760
    %1596 = vmatmul.f32.gmra.mxu0 %v1595
    %v1597 = vpop.f32.mrf.mxu0
    %v1598 = vadd.f32 0.0, %v1597
    %1599 = vdwg.mxu0
    %1600 = vmatpush.msra.mxu0 0.0
    %1601 = vmatpush.msra.mxu0 0.0
    %1602 = vmatpush.msra.mxu0 0.0
    %1603 = vmatpush.msra.mxu0 0.0
    %1604 = vmatpush.msra.mxu0 0.0
    %1605 = vmatpush.msra.mxu0 0.0
    %1606 = vmatpush.msra.mxu0 0.0
    %1607 = vmatpush.msra.mxu0 0.0
    %1608 = vmatpush.msra.mxu0 0.0
    %1609 = vmatpush.msra.mxu0 0.0
    %1610 = vmatpush.msra.mxu0 0.0
    %1611 = vmatpush.msra.mxu0 0.0
    %1612 = vmatpush.msra.mxu0 0.0
    %1613 = vmatpush.msra.mxu0 0.0
    %1614 = vmatpush.msra.mxu0 0.0
    %v1615 = vand.u32 %v1421, 4294901760
    %v1616 = vsub.f32 %v1421, %v1615
    %v1617 = vand.u32 %v1616, 4294901760
    %v1618 = vsub.f32 %v1616, %v1617
    %v1619 = vand.u32 %v1618, 4294901760
    %1620 = vmatpush.msra.mxu0 %v1619
    %v1621 = vand.u32 %v1426, 4294901760
    %1622 = vmatmul.f32.gmra.mxu0 %v1621
    %v1623 = vpop.f32.mrf.mxu0
    %v1624 = vadd.f32 %v1598, %v1623
    %1625 = vdwg.mxu0
    %1626 = vmatpush.msra.mxu0 0.0
    %1627 = vmatpush.msra.mxu0 0.0
    %1628 = vmatpush.msra.mxu0 0.0
    %1629 = vmatpush.msra.mxu0 0.0
    %1630 = vmatpush.msra.mxu0 0.0
    %1631 = vmatpush.msra.mxu0 0.0
    %1632 = vmatpush.msra.mxu0 0.0
    %1633 = vmatpush.msra.mxu0 0.0
    %1634 = vmatpush.msra.mxu0 0.0
    %1635 = vmatpush.msra.mxu0 0.0
    %1636 = vmatpush.msra.mxu0 0.0
    %1637 = vmatpush.msra.mxu0 0.0
    %1638 = vmatpush.msra.mxu0 0.0
    %1639 = vmatpush.msra.mxu0 0.0
    %1640 = vmatpush.msra.mxu0 0.0
    %v1641 = vand.u32 %v1421, 4294901760
    %v1642 = vsub.f32 %v1421, %v1641
    %1643 = vmatpush.msra.mxu0 %v1642
    %v1644 = vand.u32 %v1426, 4294901760
    %v1645 = vsub.f32 %v1426, %v1644
    %1646 = vmatmul.f32.gmra.mxu0 %v1645
    %v1647 = vpop.f32.mrf.mxu0
    %v1648 = vadd.f32 %v1624, %v1647
    %1649 = vdwg.mxu0
    %1650 = vmatpush.msra.mxu0 0.0
    %1651 = vmatpush.msra.mxu0 0.0
    %1652 = vmatpush.msra.mxu0 0.0
    %1653 = vmatpush.msra.mxu0 0.0
    %1654 = vmatpush.msra.mxu0 0.0
    %1655 = vmatpush.msra.mxu0 0.0
    %1656 = vmatpush.msra.mxu0 0.0
    %1657 = vmatpush.msra.mxu0 0.0
    %1658 = vmatpush.msra.mxu0 0.0
    %1659 = vmatpush.msra.mxu0 0.0
    %1660 = vmatpush.msra.mxu0 0.0
    %1661 = vmatpush.msra.mxu0 0.0
    %1662 = vmatpush.msra.mxu0 0.0
    %1663 = vmatpush.msra.mxu0 0.0
    %1664 = vmatpush.msra.mxu0 0.0
    %v1665 = vand.u32 %v1421, 4294901760
    %1666 = vmatpush.msra.mxu0 %v1665
    %v1667 = vand.u32 %v1426, 4294901760
    %v1668 = vsub.f32 %v1426, %v1667
    %v1669 = vand.u32 %v1668, 4294901760
    %1670 = vmatmul.f32.gmra.mxu0 %v1669
    %v1671 = vpop.f32.mrf.mxu0
    %v1672 = vadd.f32 %v1648, %v1671
    %1673 = vdwg.mxu0
    %1674 = vmatpush.msra.mxu0 0.0
    %1675 = vmatpush.msra.mxu0 0.0
    %1676 = vmatpush.msra.mxu0 0.0
    %1677 = vmatpush.msra.mxu0 0.0
    %1678 = vmatpush.msra.mxu0 0.0
    %1679 = vmatpush.msra.mxu0 0.0
    %1680 = vmatpush.msra.mxu0 0.0
    %1681 = vmatpush.msra.mxu0 0.0
    %1682 = vmatpush.msra.mxu0 0.0
    %1683 = vmatpush.msra.mxu0 0.0
    %1684 = vmatpush.msra.mxu0 0.0
    %1685 = vmatpush.msra.mxu0 0.0
    %1686 = vmatpush.msra.mxu0 0.0
    %1687 = vmatpush.msra.mxu0 0.0
    %1688 = vmatpush.msra.mxu0 0.0
    %v1689 = vand.u32 %v1421, 4294901760
    %v1690 = vsub.f32 %v1421, %v1689
    %v1691 = vand.u32 %v1690, 4294901760
    %1692 = vmatpush.msra.mxu0 %v1691
    %v1693 = vand.u32 %v1426, 4294901760
    %1694 = vmatmul.f32.gmra.mxu0 %v1693
    %v1695 = vpop.f32.mrf.mxu0
    %v1696 = vadd.f32 %v1672, %v1695
    %1697 = vdwg.mxu0
    %1698 = vmatpush.msra.mxu0 0.0
    %1699 = vmatpush.msra.mxu0 0.0
    %1700 = vmatpush.msra.mxu0 0.0
    %1701 = vmatpush.msra.mxu0 0.0
    %1702 = vmatpush.msra.mxu0 0.0
    %1703 = vmatpush.msra.mxu0 0.0
    %1704 = vmatpush.msra.mxu0 0.0
    %1705 = vmatpush.msra.mxu0 0.0
    %1706 = vmatpush.msra.mxu0 0.0
    %1707 = vmatpush.msra.mxu0 0.0
    %1708 = vmatpush.msra.mxu0 0.0
    %1709 = vmatpush.msra.mxu0 0.0
    %1710 = vmatpush.msra.mxu0 0.0
    %1711 = vmatpush.msra.mxu0 0.0
    %1712 = vmatpush.msra.mxu0 0.0
    %v1713 = vand.u32 %v1421, 4294901760
    %1714 = vmatpush.msra.mxu0 %v1713
    %v1715 = vand.u32 %v1426, 4294901760
    %1716 = vmatmul.f32.gmra.mxu0 %v1715
    %v1717 = vpop.f32.mrf.mxu0
    %v1718 = vadd.f32 %v1696, %v1717
    %1719 = vdwg.mxu0
    %1720 = vmatpush.msra.mxu0 0.0
    %1721 = vmatpush.msra.mxu0 0.0
    %1722 = vmatpush.msra.mxu0 0.0
    %1723 = vmatpush.msra.mxu0 0.0
    %1724 = vmatpush.msra.mxu0 0.0
    %1725 = vmatpush.msra.mxu0 0.0
    %1726 = vmatpush.msra.mxu0 0.0
    %1727 = vmatpush.msra.mxu0 0.0
    %1728 = vmatpush.msra.mxu0 0.0
    %1729 = vmatpush.msra.mxu0 0.0
    %1730 = vmatpush.msra.mxu0 0.0
    %1731 = vmatpush.msra.mxu0 0.0
    %1732 = vmatpush.msra.mxu0 0.0
    %1733 = vmatpush.msra.mxu0 0.0
    %1734 = vmatpush.msra.mxu0 0.0
    %v1735 = vand.u32 %v1420, 4294901760
    %1736 = vmatpush.msra.mxu0 %v1735
    %v1737 = vand.u32 %v1426, 4294901760
    %v1738 = vsub.f32 %v1426, %v1737
    %v1739 = vand.u32 %v1738, 4294901760
    %v1740 = vsub.f32 %v1738, %v1739
    %v1741 = vand.u32 %v1740, 4294901760
    %1742 = vmatmul.f32.gmra.mxu0 %v1741
    %v1743 = vpop.f32.mrf.mxu0
    %v1744 = vadd.f32 0.0, %v1743
    %1745 = vdwg.mxu0
    %1746 = vmatpush.msra.mxu0 0.0
    %1747 = vmatpush.msra.mxu0 0.0
    %1748 = vmatpush.msra.mxu0 0.0
    %1749 = vmatpush.msra.mxu0 0.0
    %1750 = vmatpush.msra.mxu0 0.0
    %1751 = vmatpush.msra.mxu0 0.0
    %1752 = vmatpush.msra.mxu0 0.0
    %1753 = vmatpush.msra.mxu0 0.0
    %1754 = vmatpush.msra.mxu0 0.0
    %1755 = vmatpush.msra.mxu0 0.0
    %1756 = vmatpush.msra.mxu0 0.0
    %1757 = vmatpush.msra.mxu0 0.0
    %1758 = vmatpush.msra.mxu0 0.0
    %1759 = vmatpush.msra.mxu0 0.0
    %1760 = vmatpush.msra.mxu0 0.0
    %v1761 = vand.u32 %v1420, 4294901760
    %v1762 = vsub.f32 %v1420, %v1761
    %v1763 = vand.u32 %v1762, 4294901760
    %v1764 = vsub.f32 %v1762, %v1763
    %v1765 = vand.u32 %v1764, 4294901760
    %1766 = vmatpush.msra.mxu0 %v1765
    %v1767 = vand.u32 %v1426, 4294901760
    %1768 = vmatmul.f32.gmra.mxu0 %v1767
    %v1769 = vpop.f32.mrf.mxu0
    %v1770 = vadd.f32 %v1744, %v1769
    %1771 = vdwg.mxu0
    %1772 = vmatpush.msra.mxu0 0.0
    %1773 = vmatpush.msra.mxu0 0.0
    %1774 = vmatpush.msra.mxu0 0.0
    %1775 = vmatpush.msra.mxu0 0.0
    %1776 = vmatpush.msra.mxu0 0.0
    %1777 = vmatpush.msra.mxu0 0.0
    %1778 = vmatpush.msra.mxu0 0.0
    %1779 = vmatpush.msra.mxu0 0.0
    %1780 = vmatpush.msra.mxu0 0.0
    %1781 = vmatpush.msra.mxu0 0.0
    %1782 = vmatpush.msra.mxu0 0.0
    %1783 = vmatpush.msra.mxu0 0.0
    %1784 = vmatpush.msra.mxu0 0.0
    %1785 = vmatpush.msra.mxu0 0.0
    %1786 = vmatpush.msra.mxu0 0.0
    %v1787 = vand.u32 %v1420, 4294901760
    %v1788 = vsub.f32 %v1420, %v1787
    %1789 = vmatpush.msra.mxu0 %v1788
    %v1790 = vand.u32 %v1426, 4294901760
    %v1791 = vsub.f32 %v1426, %v1790
    %1792 = vmatmul.f32.gmra.mxu0 %v1791
    %v1793 = vpop.f32.mrf.mxu0
    %v1794 = vadd.f32 %v1770, %v1793
    %1795 = vdwg.mxu0
    %1796 = vmatpush.msra.mxu0 0.0
    %1797 = vmatpush.msra.mxu0 0.0
    %1798 = vmatpush.msra.mxu0 0.0
    %1799 = vmatpush.msra.mxu0 0.0
    %1800 = vmatpush.msra.mxu0 0.0
    %1801 = vmatpush.msra.mxu0 0.0
    %1802 = vmatpush.msra.mxu0 0.0
    %1803 = vmatpush.msra.mxu0 0.0
    %1804 = vmatpush.msra.mxu0 0.0
    %1805 = vmatpush.msra.mxu0 0.0
    %1806 = vmatpush.msra.mxu0 0.0
    %1807 = vmatpush.msra.mxu0 0.0
    %1808 = vmatpush.msra.mxu0 0.0
    %1809 = vmatpush.msra.mxu0 0.0
    %1810 = vmatpush.msra.mxu0 0.0
    %v1811 = vand.u32 %v1420, 4294901760
    %1812 = vmatpush.msra.mxu0 %v1811
    %v1813 = vand.u32 %v1426, 4294901760
    %v1814 = vsub.f32 %v1426, %v1813
    %v1815 = vand.u32 %v1814, 4294901760
    %1816 = vmatmul.f32.gmra.mxu0 %v1815
    %v1817 = vpop.f32.mrf.mxu0
    %v1818 = vadd.f32 %v1794, %v1817
    %1819 = vdwg.mxu0
    %1820 = vmatpush.msra.mxu0 0.0
    %1821 = vmatpush.msra.mxu0 0.0
    %1822 = vmatpush.msra.mxu0 0.0
    %1823 = vmatpush.msra.mxu0 0.0
    %1824 = vmatpush.msra.mxu0 0.0
    %1825 = vmatpush.msra.mxu0 0.0
    %1826 = vmatpush.msra.mxu0 0.0
    %1827 = vmatpush.msra.mxu0 0.0
    %1828 = vmatpush.msra.mxu0 0.0
    %1829 = vmatpush.msra.mxu0 0.0
    %1830 = vmatpush.msra.mxu0 0.0
    %1831 = vmatpush.msra.mxu0 0.0
    %1832 = vmatpush.msra.mxu0 0.0
    %1833 = vmatpush.msra.mxu0 0.0
    %1834 = vmatpush.msra.mxu0 0.0
    %v1835 = vand.u32 %v1420, 4294901760
    %v1836 = vsub.f32 %v1420, %v1835
    %v1837 = vand.u32 %v1836, 4294901760
    %1838 = vmatpush.msra.mxu0 %v1837
    %v1839 = vand.u32 %v1426, 4294901760
    %1840 = vmatmul.f32.gmra.mxu0 %v1839
    %v1841 = vpop.f32.mrf.mxu0
    %v1842 = vadd.f32 %v1818, %v1841
    %1843 = vdwg.mxu0
    %1844 = vmatpush.msra.mxu0 0.0
    %1845 = vmatpush.msra.mxu0 0.0
    %1846 = vmatpush.msra.mxu0 0.0
    %1847 = vmatpush.msra.mxu0 0.0
    %1848 = vmatpush.msra.mxu0 0.0
    %1849 = vmatpush.msra.mxu0 0.0
    %1850 = vmatpush.msra.mxu0 0.0
    %1851 = vmatpush.msra.mxu0 0.0
    %1852 = vmatpush.msra.mxu0 0.0
    %1853 = vmatpush.msra.mxu0 0.0
    %1854 = vmatpush.msra.mxu0 0.0
    %1855 = vmatpush.msra.mxu0 0.0
    %1856 = vmatpush.msra.mxu0 0.0
    %1857 = vmatpush.msra.mxu0 0.0
    %1858 = vmatpush.msra.mxu0 0.0
    %v1859 = vand.u32 %v1420, 4294901760
    %1860 = vmatpush.msra.mxu0 %v1859
    %v1861 = vand.u32 %v1426, 4294901760
    %1862 = vmatmul.f32.gmra.mxu0 %v1861
    %v1863 = vpop.f32.mrf.mxu0
    %v1864 = vadd.f32 %v1842, %v1863
    %1865 = vdwg.mxu0
    %v1866 = vadd.f32 %v1408, %v1572
    %v1867 = vadd.f32 %v1409, %v1718
    %v1868 = vadd.f32 %v1410, %v1864
    %s1869 = scalar_lea.vmem %s1, 32
    %v1870 = vld [vmem:[%s1869] sm:$0xff]
    %v1872 = vsel %vm50, %v1870, 0
    %1874 = vmatpush.msra.mxu0 0.0
    %1875 = vmatpush.msra.mxu0 0.0
    %1876 = vmatpush.msra.mxu0 0.0
    %1877 = vmatpush.msra.mxu0 0.0
    %1878 = vmatpush.msra.mxu0 0.0
    %1879 = vmatpush.msra.mxu0 0.0
    %1880 = vmatpush.msra.mxu0 0.0
    %1881 = vmatpush.msra.mxu0 0.0
    %1882 = vmatpush.msra.mxu0 0.0
    %1883 = vmatpush.msra.mxu0 0.0
    %1884 = vmatpush.msra.mxu0 0.0
    %1885 = vmatpush.msra.mxu0 0.0
    %1886 = vmatpush.msra.mxu0 0.0
    %1887 = vmatpush.msra.mxu0 0.0
    %1888 = vmatpush.msra.mxu0 0.0
    %v1889 = vand.u32 %v25, 4294901760
    %1890 = vmatpush.msra.mxu0 %v1889
    %v1891 = vand.u32 %v1872, 4294901760
    %v1892 = vsub.f32 %v1872, %v1891
    %v1893 = vand.u32 %v1892, 4294901760
    %v1894 = vsub.f32 %v1892, %v1893
    %v1895 = vand.u32 %v1894, 4294901760
    %1896 = vmatmul.f32.gmra.mxu0 %v1895
    %v1897 = vpop.f32.mrf.mxu0
    %v1898 = vadd.f32 0.0, %v1897
    %1899 = vdwg.mxu0
    %1900 = vmatpush.msra.mxu0 0.0
    %1901 = vmatpush.msra.mxu0 0.0
    %1902 = vmatpush.msra.mxu0 0.0
    %1903 = vmatpush.msra.mxu0 0.0
    %1904 = vmatpush.msra.mxu0 0.0
    %1905 = vmatpush.msra.mxu0 0.0
    %1906 = vmatpush.msra.mxu0 0.0
    %1907 = vmatpush.msra.mxu0 0.0
    %1908 = vmatpush.msra.mxu0 0.0
    %1909 = vmatpush.msra.mxu0 0.0
    %1910 = vmatpush.msra.mxu0 0.0
    %1911 = vmatpush.msra.mxu0 0.0
    %1912 = vmatpush.msra.mxu0 0.0
    %1913 = vmatpush.msra.mxu0 0.0
    %1914 = vmatpush.msra.mxu0 0.0
    %v1915 = vand.u32 %v25, 4294901760
    %v1916 = vsub.f32 %v25, %v1915
    %v1917 = vand.u32 %v1916, 4294901760
    %v1918 = vsub.f32 %v1916, %v1917
    %v1919 = vand.u32 %v1918, 4294901760
    %1920 = vmatpush.msra.mxu0 %v1919
    %v1921 = vand.u32 %v1872, 4294901760
    %1922 = vmatmul.f32.gmra.mxu0 %v1921
    %v1923 = vpop.f32.mrf.mxu0
    %v1924 = vadd.f32 %v1898, %v1923
    %1925 = vdwg.mxu0
    %1926 = vmatpush.msra.mxu0 0.0
    %1927 = vmatpush.msra.mxu0 0.0
    %1928 = vmatpush.msra.mxu0 0.0
    %1929 = vmatpush.msra.mxu0 0.0
    %1930 = vmatpush.msra.mxu0 0.0
    %1931 = vmatpush.msra.mxu0 0.0
    %1932 = vmatpush.msra.mxu0 0.0
    %1933 = vmatpush.msra.mxu0 0.0
    %1934 = vmatpush.msra.mxu0 0.0
    %1935 = vmatpush.msra.mxu0 0.0
    %1936 = vmatpush.msra.mxu0 0.0
    %1937 = vmatpush.msra.mxu0 0.0
    %1938 = vmatpush.msra.mxu0 0.0
    %1939 = vmatpush.msra.mxu0 0.0
    %1940 = vmatpush.msra.mxu0 0.0
    %v1941 = vand.u32 %v25, 4294901760
    %v1942 = vsub.f32 %v25, %v1941
    %1943 = vmatpush.msra.mxu0 %v1942
    %v1944 = vand.u32 %v1872, 4294901760
    %v1945 = vsub.f32 %v1872, %v1944
    %1946 = vmatmul.f32.gmra.mxu0 %v1945
    %v1947 = vpop.f32.mrf.mxu0
    %v1948 = vadd.f32 %v1924, %v1947
    %1949 = vdwg.mxu0
    %1950 = vmatpush.msra.mxu0 0.0
    %1951 = vmatpush.msra.mxu0 0.0
    %1952 = vmatpush.msra.mxu0 0.0
    %1953 = vmatpush.msra.mxu0 0.0
    %1954 = vmatpush.msra.mxu0 0.0
    %1955 = vmatpush.msra.mxu0 0.0
    %1956 = vmatpush.msra.mxu0 0.0
    %1957 = vmatpush.msra.mxu0 0.0
    %1958 = vmatpush.msra.mxu0 0.0
    %1959 = vmatpush.msra.mxu0 0.0
    %1960 = vmatpush.msra.mxu0 0.0
    %1961 = vmatpush.msra.mxu0 0.0
    %1962 = vmatpush.msra.mxu0 0.0
    %1963 = vmatpush.msra.mxu0 0.0
    %1964 = vmatpush.msra.mxu0 0.0
    %v1965 = vand.u32 %v25, 4294901760
    %1966 = vmatpush.msra.mxu0 %v1965
    %v1967 = vand.u32 %v1872, 4294901760
    %v1968 = vsub.f32 %v1872, %v1967
    %v1969 = vand.u32 %v1968, 4294901760
    %1970 = vmatmul.f32.gmra.mxu0 %v1969
    %v1971 = vpop.f32.mrf.mxu0
    %v1972 = vadd.f32 %v1948, %v1971
    %1973 = vdwg.mxu0
    %1974 = vmatpush.msra.mxu0 0.0
    %1975 = vmatpush.msra.mxu0 0.0
    %1976 = vmatpush.msra.mxu0 0.0
    %1977 = vmatpush.msra.mxu0 0.0
    %1978 = vmatpush.msra.mxu0 0.0
    %1979 = vmatpush.msra.mxu0 0.0
    %1980 = vmatpush.msra.mxu0 0.0
    %1981 = vmatpush.msra.mxu0 0.0
    %1982 = vmatpush.msra.mxu0 0.0
    %1983 = vmatpush.msra.mxu0 0.0
    %1984 = vmatpush.msra.mxu0 0.0
    %1985 = vmatpush.msra.mxu0 0.0
    %1986 = vmatpush.msra.mxu0 0.0
    %1987 = vmatpush.msra.mxu0 0.0
    %1988 = vmatpush.msra.mxu0 0.0
    %v1989 = vand.u32 %v25, 4294901760
    %v1990 = vsub.f32 %v25, %v1989
    %v1991 = vand.u32 %v1990, 4294901760
    %1992 = vmatpush.msra.mxu0 %v1991
    %v1993 = vand.u32 %v1872, 4294901760
    %1994 = vmatmul.f32.gmra.mxu0 %v1993
    %v1995 = vpop.f32.mrf.mxu0
    %v1996 = vadd.f32 %v1972, %v1995
    %1997 = vdwg.mxu0
    %1998 = vmatpush.msra.mxu0 0.0
    %1999 = vmatpush.msra.mxu0 0.0
    %2000 = vmatpush.msra.mxu0 0.0
    %2001 = vmatpush.msra.mxu0 0.0
    %2002 = vmatpush.msra.mxu0 0.0
    %2003 = vmatpush.msra.mxu0 0.0
    %2004 = vmatpush.msra.mxu0 0.0
    %2005 = vmatpush.msra.mxu0 0.0
    %2006 = vmatpush.msra.mxu0 0.0
    %2007 = vmatpush.msra.mxu0 0.0
    %2008 = vmatpush.msra.mxu0 0.0
    %2009 = vmatpush.msra.mxu0 0.0
    %2010 = vmatpush.msra.mxu0 0.0
    %2011 = vmatpush.msra.mxu0 0.0
    %2012 = vmatpush.msra.mxu0 0.0
    %v2013 = vand.u32 %v25, 4294901760
    %2014 = vmatpush.msra.mxu0 %v2013
    %v2015 = vand.u32 %v1872, 4294901760
    %2016 = vmatmul.f32.gmra.mxu0 %v2015
    %v2017 = vpop.f32.mrf.mxu0
    %v2018 = vadd.f32 %v1996, %v2017
    %2019 = vdwg.mxu0
    %2020 = vmatpush.msra.mxu0 0.0
    %2021 = vmatpush.msra.mxu0 0.0
    %2022 = vmatpush.msra.mxu0 0.0
    %2023 = vmatpush.msra.mxu0 0.0
    %2024 = vmatpush.msra.mxu0 0.0
    %2025 = vmatpush.msra.mxu0 0.0
    %2026 = vmatpush.msra.mxu0 0.0
    %2027 = vmatpush.msra.mxu0 0.0
    %2028 = vmatpush.msra.mxu0 0.0
    %2029 = vmatpush.msra.mxu0 0.0
    %2030 = vmatpush.msra.mxu0 0.0
    %2031 = vmatpush.msra.mxu0 0.0
    %2032 = vmatpush.msra.mxu0 0.0
    %2033 = vmatpush.msra.mxu0 0.0
    %2034 = vmatpush.msra.mxu0 0.0
    %v2035 = vand.u32 %v26, 4294901760
    %2036 = vmatpush.msra.mxu0 %v2035
    %v2037 = vand.u32 %v1872, 4294901760
    %v2038 = vsub.f32 %v1872, %v2037
    %v2039 = vand.u32 %v2038, 4294901760
    %v2040 = vsub.f32 %v2038, %v2039
    %v2041 = vand.u32 %v2040, 4294901760
    %2042 = vmatmul.f32.gmra.mxu0 %v2041
    %v2043 = vpop.f32.mrf.mxu0
    %v2044 = vadd.f32 0.0, %v2043
    %2045 = vdwg.mxu0
    %2046 = vmatpush.msra.mxu0 0.0
    %2047 = vmatpush.msra.mxu0 0.0
    %2048 = vmatpush.msra.mxu0 0.0
    %2049 = vmatpush.msra.mxu0 0.0
    %2050 = vmatpush.msra.mxu0 0.0
    %2051 = vmatpush.msra.mxu0 0.0
    %2052 = vmatpush.msra.mxu0 0.0
    %2053 = vmatpush.msra.mxu0 0.0
    %2054 = vmatpush.msra.mxu0 0.0
    %2055 = vmatpush.msra.mxu0 0.0
    %2056 = vmatpush.msra.mxu0 0.0
    %2057 = vmatpush.msra.mxu0 0.0
    %2058 = vmatpush.msra.mxu0 0.0
    %2059 = vmatpush.msra.mxu0 0.0
    %2060 = vmatpush.msra.mxu0 0.0
    %v2061 = vand.u32 %v26, 4294901760
    %v2062 = vsub.f32 %v26, %v2061
    %v2063 = vand.u32 %v2062, 4294901760
    %v2064 = vsub.f32 %v2062, %v2063
    %v2065 = vand.u32 %v2064, 4294901760
    %2066 = vmatpush.msra.mxu0 %v2065
    %v2067 = vand.u32 %v1872, 4294901760
    %2068 = vmatmul.f32.gmra.mxu0 %v2067
    %v2069 = vpop.f32.mrf.mxu0
    %v2070 = vadd.f32 %v2044, %v2069
    %2071 = vdwg.mxu0
    %2072 = vmatpush.msra.mxu0 0.0
    %2073 = vmatpush.msra.mxu0 0.0
    %2074 = vmatpush.msra.mxu0 0.0
    %2075 = vmatpush.msra.mxu0 0.0
    %2076 = vmatpush.msra.mxu0 0.0
    %2077 = vmatpush.msra.mxu0 0.0
    %2078 = vmatpush.msra.mxu0 0.0
    %2079 = vmatpush.msra.mxu0 0.0
    %2080 = vmatpush.msra.mxu0 0.0
    %2081 = vmatpush.msra.mxu0 0.0
    %2082 = vmatpush.msra.mxu0 0.0
    %2083 = vmatpush.msra.mxu0 0.0
    %2084 = vmatpush.msra.mxu0 0.0
    %2085 = vmatpush.msra.mxu0 0.0
    %2086 = vmatpush.msra.mxu0 0.0
    %v2087 = vand.u32 %v26, 4294901760
    %v2088 = vsub.f32 %v26, %v2087
    %2089 = vmatpush.msra.mxu0 %v2088
    %v2090 = vand.u32 %v1872, 4294901760
    %v2091 = vsub.f32 %v1872, %v2090
    %2092 = vmatmul.f32.gmra.mxu0 %v2091
    %v2093 = vpop.f32.mrf.mxu0
    %v2094 = vadd.f32 %v2070, %v2093
    %2095 = vdwg.mxu0
    %2096 = vmatpush.msra.mxu0 0.0
    %2097 = vmatpush.msra.mxu0 0.0
    %2098 = vmatpush.msra.mxu0 0.0
    %2099 = vmatpush.msra.mxu0 0.0
    %2100 = vmatpush.msra.mxu0 0.0
    %2101 = vmatpush.msra.mxu0 0.0
    %2102 = vmatpush.msra.mxu0 0.0
    %2103 = vmatpush.msra.mxu0 0.0
    %2104 = vmatpush.msra.mxu0 0.0
    %2105 = vmatpush.msra.mxu0 0.0
    %2106 = vmatpush.msra.mxu0 0.0
    %2107 = vmatpush.msra.mxu0 0.0
    %2108 = vmatpush.msra.mxu0 0.0
    %2109 = vmatpush.msra.mxu0 0.0
    %2110 = vmatpush.msra.mxu0 0.0
    %v2111 = vand.u32 %v26, 4294901760
    %2112 = vmatpush.msra.mxu0 %v2111
    %v2113 = vand.u32 %v1872, 4294901760
    %v2114 = vsub.f32 %v1872, %v2113
    %v2115 = vand.u32 %v2114, 4294901760
    %2116 = vmatmul.f32.gmra.mxu0 %v2115
    %v2117 = vpop.f32.mrf.mxu0
    %v2118 = vadd.f32 %v2094, %v2117
    %2119 = vdwg.mxu0
    %2120 = vmatpush.msra.mxu0 0.0
    %2121 = vmatpush.msra.mxu0 0.0
    %2122 = vmatpush.msra.mxu0 0.0
    %2123 = vmatpush.msra.mxu0 0.0
    %2124 = vmatpush.msra.mxu0 0.0
    %2125 = vmatpush.msra.mxu0 0.0
    %2126 = vmatpush.msra.mxu0 0.0
    %2127 = vmatpush.msra.mxu0 0.0
    %2128 = vmatpush.msra.mxu0 0.0
    %2129 = vmatpush.msra.mxu0 0.0
    %2130 = vmatpush.msra.mxu0 0.0
    %2131 = vmatpush.msra.mxu0 0.0
    %2132 = vmatpush.msra.mxu0 0.0
    %2133 = vmatpush.msra.mxu0 0.0
    %2134 = vmatpush.msra.mxu0 0.0
    %v2135 = vand.u32 %v26, 4294901760
    %v2136 = vsub.f32 %v26, %v2135
    %v2137 = vand.u32 %v2136, 4294901760
    %2138 = vmatpush.msra.mxu0 %v2137
    %v2139 = vand.u32 %v1872, 4294901760
    %2140 = vmatmul.f32.gmra.mxu0 %v2139
    %v2141 = vpop.f32.mrf.mxu0
    %v2142 = vadd.f32 %v2118, %v2141
    %2143 = vdwg.mxu0
    %2144 = vmatpush.msra.mxu0 0.0
    %2145 = vmatpush.msra.mxu0 0.0
    %2146 = vmatpush.msra.mxu0 0.0
    %2147 = vmatpush.msra.mxu0 0.0
    %2148 = vmatpush.msra.mxu0 0.0
    %2149 = vmatpush.msra.mxu0 0.0
    %2150 = vmatpush.msra.mxu0 0.0
    %2151 = vmatpush.msra.mxu0 0.0
    %2152 = vmatpush.msra.mxu0 0.0
    %2153 = vmatpush.msra.mxu0 0.0
    %2154 = vmatpush.msra.mxu0 0.0
    %2155 = vmatpush.msra.mxu0 0.0
    %2156 = vmatpush.msra.mxu0 0.0
    %2157 = vmatpush.msra.mxu0 0.0
    %2158 = vmatpush.msra.mxu0 0.0
    %v2159 = vand.u32 %v26, 4294901760
    %2160 = vmatpush.msra.mxu0 %v2159
    %v2161 = vand.u32 %v1872, 4294901760
    %2162 = vmatmul.f32.gmra.mxu0 %v2161
    %v2163 = vpop.f32.mrf.mxu0
    %v2164 = vadd.f32 %v2142, %v2163
    %2165 = vdwg.mxu0
    %2166 = vmatpush.msra.mxu0 0.0
    %2167 = vmatpush.msra.mxu0 0.0
    %2168 = vmatpush.msra.mxu0 0.0
    %2169 = vmatpush.msra.mxu0 0.0
    %2170 = vmatpush.msra.mxu0 0.0
    %2171 = vmatpush.msra.mxu0 0.0
    %2172 = vmatpush.msra.mxu0 0.0
    %2173 = vmatpush.msra.mxu0 0.0
    %2174 = vmatpush.msra.mxu0 0.0
    %2175 = vmatpush.msra.mxu0 0.0
    %2176 = vmatpush.msra.mxu0 0.0
    %2177 = vmatpush.msra.mxu0 0.0
    %2178 = vmatpush.msra.mxu0 0.0
    %2179 = vmatpush.msra.mxu0 0.0
    %2180 = vmatpush.msra.mxu0 0.0
    %v2181 = vand.u32 %v27, 4294901760
    %2182 = vmatpush.msra.mxu0 %v2181
    %v2183 = vand.u32 %v1872, 4294901760
    %v2184 = vsub.f32 %v1872, %v2183
    %v2185 = vand.u32 %v2184, 4294901760
    %v2186 = vsub.f32 %v2184, %v2185
    %v2187 = vand.u32 %v2186, 4294901760
    %2188 = vmatmul.f32.gmra.mxu0 %v2187
    %v2189 = vpop.f32.mrf.mxu0
    %v2190 = vadd.f32 0.0, %v2189
    %2191 = vdwg.mxu0
    %2192 = vmatpush.msra.mxu0 0.0
    %2193 = vmatpush.msra.mxu0 0.0
    %2194 = vmatpush.msra.mxu0 0.0
    %2195 = vmatpush.msra.mxu0 0.0
    %2196 = vmatpush.msra.mxu0 0.0
    %2197 = vmatpush.msra.mxu0 0.0
    %2198 = vmatpush.msra.mxu0 0.0
    %2199 = vmatpush.msra.mxu0 0.0
    %2200 = vmatpush.msra.mxu0 0.0
    %2201 = vmatpush.msra.mxu0 0.0
    %2202 = vmatpush.msra.mxu0 0.0
    %2203 = vmatpush.msra.mxu0 0.0
    %2204 = vmatpush.msra.mxu0 0.0
    %2205 = vmatpush.msra.mxu0 0.0
    %2206 = vmatpush.msra.mxu0 0.0
    %v2207 = vand.u32 %v27, 4294901760
    %v2208 = vsub.f32 %v27, %v2207
    %v2209 = vand.u32 %v2208, 4294901760
    %v2210 = vsub.f32 %v2208, %v2209
    %v2211 = vand.u32 %v2210, 4294901760
    %2212 = vmatpush.msra.mxu0 %v2211
    %v2213 = vand.u32 %v1872, 4294901760
    %2214 = vmatmul.f32.gmra.mxu0 %v2213
    %v2215 = vpop.f32.mrf.mxu0
    %v2216 = vadd.f32 %v2190, %v2215
    %2217 = vdwg.mxu0
    %2218 = vmatpush.msra.mxu0 0.0
    %2219 = vmatpush.msra.mxu0 0.0
    %2220 = vmatpush.msra.mxu0 0.0
    %2221 = vmatpush.msra.mxu0 0.0
    %2222 = vmatpush.msra.mxu0 0.0
    %2223 = vmatpush.msra.mxu0 0.0
    %2224 = vmatpush.msra.mxu0 0.0
    %2225 = vmatpush.msra.mxu0 0.0
    %2226 = vmatpush.msra.mxu0 0.0
    %2227 = vmatpush.msra.mxu0 0.0
    %2228 = vmatpush.msra.mxu0 0.0
    %2229 = vmatpush.msra.mxu0 0.0
    %2230 = vmatpush.msra.mxu0 0.0
    %2231 = vmatpush.msra.mxu0 0.0
    %2232 = vmatpush.msra.mxu0 0.0
    %v2233 = vand.u32 %v27, 4294901760
    %v2234 = vsub.f32 %v27, %v2233
    %2235 = vmatpush.msra.mxu0 %v2234
    %v2236 = vand.u32 %v1872, 4294901760
    %v2237 = vsub.f32 %v1872, %v2236
    %2238 = vmatmul.f32.gmra.mxu0 %v2237
    %v2239 = vpop.f32.mrf.mxu0
    %v2240 = vadd.f32 %v2216, %v2239
    %2241 = vdwg.mxu0
    %2242 = vmatpush.msra.mxu0 0.0
    %2243 = vmatpush.msra.mxu0 0.0
    %2244 = vmatpush.msra.mxu0 0.0
    %2245 = vmatpush.msra.mxu0 0.0
    %2246 = vmatpush.msra.mxu0 0.0
    %2247 = vmatpush.msra.mxu0 0.0
    %2248 = vmatpush.msra.mxu0 0.0
    %2249 = vmatpush.msra.mxu0 0.0
    %2250 = vmatpush.msra.mxu0 0.0
    %2251 = vmatpush.msra.mxu0 0.0
    %2252 = vmatpush.msra.mxu0 0.0
    %2253 = vmatpush.msra.mxu0 0.0
    %2254 = vmatpush.msra.mxu0 0.0
    %2255 = vmatpush.msra.mxu0 0.0
    %2256 = vmatpush.msra.mxu0 0.0
    %v2257 = vand.u32 %v27, 4294901760
    %2258 = vmatpush.msra.mxu0 %v2257
    %v2259 = vand.u32 %v1872, 4294901760
    %v2260 = vsub.f32 %v1872, %v2259
    %v2261 = vand.u32 %v2260, 4294901760
    %2262 = vmatmul.f32.gmra.mxu0 %v2261
    %v2263 = vpop.f32.mrf.mxu0
    %v2264 = vadd.f32 %v2240, %v2263
    %2265 = vdwg.mxu0
    %2266 = vmatpush.msra.mxu0 0.0
    %2267 = vmatpush.msra.mxu0 0.0
    %2268 = vmatpush.msra.mxu0 0.0
    %2269 = vmatpush.msra.mxu0 0.0
    %2270 = vmatpush.msra.mxu0 0.0
    %2271 = vmatpush.msra.mxu0 0.0
    %2272 = vmatpush.msra.mxu0 0.0
    %2273 = vmatpush.msra.mxu0 0.0
    %2274 = vmatpush.msra.mxu0 0.0
    %2275 = vmatpush.msra.mxu0 0.0
    %2276 = vmatpush.msra.mxu0 0.0
    %2277 = vmatpush.msra.mxu0 0.0
    %2278 = vmatpush.msra.mxu0 0.0
    %2279 = vmatpush.msra.mxu0 0.0
    %2280 = vmatpush.msra.mxu0 0.0
    %v2281 = vand.u32 %v27, 4294901760
    %v2282 = vsub.f32 %v27, %v2281
    %v2283 = vand.u32 %v2282, 4294901760
    %2284 = vmatpush.msra.mxu0 %v2283
    %v2285 = vand.u32 %v1872, 4294901760
    %2286 = vmatmul.f32.gmra.mxu0 %v2285
    %v2287 = vpop.f32.mrf.mxu0
    %v2288 = vadd.f32 %v2264, %v2287
    %2289 = vdwg.mxu0
    %2290 = vmatpush.msra.mxu0 0.0
    %2291 = vmatpush.msra.mxu0 0.0
    %2292 = vmatpush.msra.mxu0 0.0
    %2293 = vmatpush.msra.mxu0 0.0
    %2294 = vmatpush.msra.mxu0 0.0
    %2295 = vmatpush.msra.mxu0 0.0
    %2296 = vmatpush.msra.mxu0 0.0
    %2297 = vmatpush.msra.mxu0 0.0
    %2298 = vmatpush.msra.mxu0 0.0
    %2299 = vmatpush.msra.mxu0 0.0
    %2300 = vmatpush.msra.mxu0 0.0
    %2301 = vmatpush.msra.mxu0 0.0
    %2302 = vmatpush.msra.mxu0 0.0
    %2303 = vmatpush.msra.mxu0 0.0
    %2304 = vmatpush.msra.mxu0 0.0
    %v2305 = vand.u32 %v27, 4294901760
    %2306 = vmatpush.msra.mxu0 %v2305
    %v2307 = vand.u32 %v1872, 4294901760
    %2308 = vmatmul.f32.gmra.mxu0 %v2307
    %v2309 = vpop.f32.mrf.mxu0
    %v2310 = vadd.f32 %v2288, %v2309
    %2311 = vdwg.mxu0
    %v2312 = vadd.f32 %v1866, %v2018
    %v2313 = vadd.f32 %v1867, %v2164
    %v2314 = vadd.f32 %v1868, %v2310
    %2315 = vrot.lane.b32.xlu0 %v25, 127
    %v2316 = vpop.permute.xlu0 %2315
    %2317 = vrot.lane.b32.xlu0 %v26, 127
    %v2318 = vpop.permute.xlu0 %2317
    %2319 = vrot.lane.b32.xlu0 %v27, 127
    %v2320 = vpop.permute.xlu0 %2319
    %2321 = vrot.lane.b32.xlu0 %v28, 127
    %v2322 = vpop.permute.xlu0 %2321
    %vm2323 = vcmp.lt.s32.totalorder %v44, 127
    %v2324 = vsel %vm2323, %v2320, %v2322
    %v2325 = vsel %vm2323, %v2318, %v2320
    %v2326 = vsel %vm2323, %v2316, %v2318
    %s2327 = scalar_lea.vmem %s1, 40
    %v2328 = vld [vmem:[%s2327] sm:$0xff]
    %v2330 = vsel %vm50, %v2328, 0
    %2332 = vmatpush.msra.mxu0 0.0
    %2333 = vmatpush.msra.mxu0 0.0
    %2334 = vmatpush.msra.mxu0 0.0
    %2335 = vmatpush.msra.mxu0 0.0
    %2336 = vmatpush.msra.mxu0 0.0
    %2337 = vmatpush.msra.mxu0 0.0
    %2338 = vmatpush.msra.mxu0 0.0
    %2339 = vmatpush.msra.mxu0 0.0
    %2340 = vmatpush.msra.mxu0 0.0
    %2341 = vmatpush.msra.mxu0 0.0
    %2342 = vmatpush.msra.mxu0 0.0
    %2343 = vmatpush.msra.mxu0 0.0
    %2344 = vmatpush.msra.mxu0 0.0
    %2345 = vmatpush.msra.mxu0 0.0
    %2346 = vmatpush.msra.mxu0 0.0
    %v2347 = vand.u32 %v2326, 4294901760
    %2348 = vmatpush.msra.mxu0 %v2347
    %v2349 = vand.u32 %v2330, 4294901760
    %v2350 = vsub.f32 %v2330, %v2349
    %v2351 = vand.u32 %v2350, 4294901760
    %v2352 = vsub.f32 %v2350, %v2351
    %v2353 = vand.u32 %v2352, 4294901760
    %2354 = vmatmul.f32.gmra.mxu0 %v2353
    %v2355 = vpop.f32.mrf.mxu0
    %v2356 = vadd.f32 0.0, %v2355
    %2357 = vdwg.mxu0
    %2358 = vmatpush.msra.mxu0 0.0
    %2359 = vmatpush.msra.mxu0 0.0
    %2360 = vmatpush.msra.mxu0 0.0
    %2361 = vmatpush.msra.mxu0 0.0
    %2362 = vmatpush.msra.mxu0 0.0
    %2363 = vmatpush.msra.mxu0 0.0
    %2364 = vmatpush.msra.mxu0 0.0
    %2365 = vmatpush.msra.mxu0 0.0
    %2366 = vmatpush.msra.mxu0 0.0
    %2367 = vmatpush.msra.mxu0 0.0
    %2368 = vmatpush.msra.mxu0 0.0
    %2369 = vmatpush.msra.mxu0 0.0
    %2370 = vmatpush.msra.mxu0 0.0
    %2371 = vmatpush.msra.mxu0 0.0
    %2372 = vmatpush.msra.mxu0 0.0
    %v2373 = vand.u32 %v2326, 4294901760
    %v2374 = vsub.f32 %v2326, %v2373
    %v2375 = vand.u32 %v2374, 4294901760
    %v2376 = vsub.f32 %v2374, %v2375
    %v2377 = vand.u32 %v2376, 4294901760
    %2378 = vmatpush.msra.mxu0 %v2377
    %v2379 = vand.u32 %v2330, 4294901760
    %2380 = vmatmul.f32.gmra.mxu0 %v2379
    %v2381 = vpop.f32.mrf.mxu0
    %v2382 = vadd.f32 %v2356, %v2381
    %2383 = vdwg.mxu0
    %2384 = vmatpush.msra.mxu0 0.0
    %2385 = vmatpush.msra.mxu0 0.0
    %2386 = vmatpush.msra.mxu0 0.0
    %2387 = vmatpush.msra.mxu0 0.0
    %2388 = vmatpush.msra.mxu0 0.0
    %2389 = vmatpush.msra.mxu0 0.0
    %2390 = vmatpush.msra.mxu0 0.0
    %2391 = vmatpush.msra.mxu0 0.0
    %2392 = vmatpush.msra.mxu0 0.0
    %2393 = vmatpush.msra.mxu0 0.0
    %2394 = vmatpush.msra.mxu0 0.0
    %2395 = vmatpush.msra.mxu0 0.0
    %2396 = vmatpush.msra.mxu0 0.0
    %2397 = vmatpush.msra.mxu0 0.0
    %2398 = vmatpush.msra.mxu0 0.0
    %v2399 = vand.u32 %v2326, 4294901760
    %v2400 = vsub.f32 %v2326, %v2399
    %2401 = vmatpush.msra.mxu0 %v2400
    %v2402 = vand.u32 %v2330, 4294901760
    %v2403 = vsub.f32 %v2330, %v2402
    %2404 = vmatmul.f32.gmra.mxu0 %v2403
    %v2405 = vpop.f32.mrf.mxu0
    %v2406 = vadd.f32 %v2382, %v2405
    %2407 = vdwg.mxu0
    %2408 = vmatpush.msra.mxu0 0.0
    %2409 = vmatpush.msra.mxu0 0.0
    %2410 = vmatpush.msra.mxu0 0.0
    %2411 = vmatpush.msra.mxu0 0.0
    %2412 = vmatpush.msra.mxu0 0.0
    %2413 = vmatpush.msra.mxu0 0.0
    %2414 = vmatpush.msra.mxu0 0.0
    %2415 = vmatpush.msra.mxu0 0.0
    %2416 = vmatpush.msra.mxu0 0.0
    %2417 = vmatpush.msra.mxu0 0.0
    %2418 = vmatpush.msra.mxu0 0.0
    %2419 = vmatpush.msra.mxu0 0.0
    %2420 = vmatpush.msra.mxu0 0.0
    %2421 = vmatpush.msra.mxu0 0.0
    %2422 = vmatpush.msra.mxu0 0.0
    %v2423 = vand.u32 %v2326, 4294901760
    %2424 = vmatpush.msra.mxu0 %v2423
    %v2425 = vand.u32 %v2330, 4294901760
    %v2426 = vsub.f32 %v2330, %v2425
    %v2427 = vand.u32 %v2426, 4294901760
    %2428 = vmatmul.f32.gmra.mxu0 %v2427
    %v2429 = vpop.f32.mrf.mxu0
    %v2430 = vadd.f32 %v2406, %v2429
    %2431 = vdwg.mxu0
    %2432 = vmatpush.msra.mxu0 0.0
    %2433 = vmatpush.msra.mxu0 0.0
    %2434 = vmatpush.msra.mxu0 0.0
    %2435 = vmatpush.msra.mxu0 0.0
    %2436 = vmatpush.msra.mxu0 0.0
    %2437 = vmatpush.msra.mxu0 0.0
    %2438 = vmatpush.msra.mxu0 0.0
    %2439 = vmatpush.msra.mxu0 0.0
    %2440 = vmatpush.msra.mxu0 0.0
    %2441 = vmatpush.msra.mxu0 0.0
    %2442 = vmatpush.msra.mxu0 0.0
    %2443 = vmatpush.msra.mxu0 0.0
    %2444 = vmatpush.msra.mxu0 0.0
    %2445 = vmatpush.msra.mxu0 0.0
    %2446 = vmatpush.msra.mxu0 0.0
    %v2447 = vand.u32 %v2326, 4294901760
    %v2448 = vsub.f32 %v2326, %v2447
    %v2449 = vand.u32 %v2448, 4294901760
    %2450 = vmatpush.msra.mxu0 %v2449
    %v2451 = vand.u32 %v2330, 4294901760
    %2452 = vmatmul.f32.gmra.mxu0 %v2451
    %v2453 = vpop.f32.mrf.mxu0
    %v2454 = vadd.f32 %v2430, %v2453
    %2455 = vdwg.mxu0
    %2456 = vmatpush.msra.mxu0 0.0
    %2457 = vmatpush.msra.mxu0 0.0
    %2458 = vmatpush.msra.mxu0 0.0
    %2459 = vmatpush.msra.mxu0 0.0
    %2460 = vmatpush.msra.mxu0 0.0
    %2461 = vmatpush.msra.mxu0 0.0
    %2462 = vmatpush.msra.mxu0 0.0
    %2463 = vmatpush.msra.mxu0 0.0
    %2464 = vmatpush.msra.mxu0 0.0
    %2465 = vmatpush.msra.mxu0 0.0
    %2466 = vmatpush.msra.mxu0 0.0
    %2467 = vmatpush.msra.mxu0 0.0
    %2468 = vmatpush.msra.mxu0 0.0
    %2469 = vmatpush.msra.mxu0 0.0
    %2470 = vmatpush.msra.mxu0 0.0
    %v2471 = vand.u32 %v2326, 4294901760
    %2472 = vmatpush.msra.mxu0 %v2471
    %v2473 = vand.u32 %v2330, 4294901760
    %2474 = vmatmul.f32.gmra.mxu0 %v2473
    %v2475 = vpop.f32.mrf.mxu0
    %v2476 = vadd.f32 %v2454, %v2475
    %2477 = vdwg.mxu0
    %2478 = vmatpush.msra.mxu0 0.0
    %2479 = vmatpush.msra.mxu0 0.0
    %2480 = vmatpush.msra.mxu0 0.0
    %2481 = vmatpush.msra.mxu0 0.0
    %2482 = vmatpush.msra.mxu0 0.0
    %2483 = vmatpush.msra.mxu0 0.0
    %2484 = vmatpush.msra.mxu0 0.0
    %2485 = vmatpush.msra.mxu0 0.0
    %2486 = vmatpush.msra.mxu0 0.0
    %2487 = vmatpush.msra.mxu0 0.0
    %2488 = vmatpush.msra.mxu0 0.0
    %2489 = vmatpush.msra.mxu0 0.0
    %2490 = vmatpush.msra.mxu0 0.0
    %2491 = vmatpush.msra.mxu0 0.0
    %2492 = vmatpush.msra.mxu0 0.0
    %v2493 = vand.u32 %v2325, 4294901760
    %2494 = vmatpush.msra.mxu0 %v2493
    %v2495 = vand.u32 %v2330, 4294901760
    %v2496 = vsub.f32 %v2330, %v2495
    %v2497 = vand.u32 %v2496, 4294901760
    %v2498 = vsub.f32 %v2496, %v2497
    %v2499 = vand.u32 %v2498, 4294901760
    %2500 = vmatmul.f32.gmra.mxu0 %v2499
    %v2501 = vpop.f32.mrf.mxu0
    %v2502 = vadd.f32 0.0, %v2501
    %2503 = vdwg.mxu0
    %2504 = vmatpush.msra.mxu0 0.0
    %2505 = vmatpush.msra.mxu0 0.0
    %2506 = vmatpush.msra.mxu0 0.0
    %2507 = vmatpush.msra.mxu0 0.0
    %2508 = vmatpush.msra.mxu0 0.0
    %2509 = vmatpush.msra.mxu0 0.0
    %2510 = vmatpush.msra.mxu0 0.0
    %2511 = vmatpush.msra.mxu0 0.0
    %2512 = vmatpush.msra.mxu0 0.0
    %2513 = vmatpush.msra.mxu0 0.0
    %2514 = vmatpush.msra.mxu0 0.0
    %2515 = vmatpush.msra.mxu0 0.0
    %2516 = vmatpush.msra.mxu0 0.0
    %2517 = vmatpush.msra.mxu0 0.0
    %2518 = vmatpush.msra.mxu0 0.0
    %v2519 = vand.u32 %v2325, 4294901760
    %v2520 = vsub.f32 %v2325, %v2519
    %v2521 = vand.u32 %v2520, 4294901760
    %v2522 = vsub.f32 %v2520, %v2521
    %v2523 = vand.u32 %v2522, 4294901760
    %2524 = vmatpush.msra.mxu0 %v2523
    %v2525 = vand.u32 %v2330, 4294901760
    %2526 = vmatmul.f32.gmra.mxu0 %v2525
    %v2527 = vpop.f32.mrf.mxu0
    %v2528 = vadd.f32 %v2502, %v2527
    %2529 = vdwg.mxu0
    %2530 = vmatpush.msra.mxu0 0.0
    %2531 = vmatpush.msra.mxu0 0.0
    %2532 = vmatpush.msra.mxu0 0.0
    %2533 = vmatpush.msra.mxu0 0.0
    %2534 = vmatpush.msra.mxu0 0.0
    %2535 = vmatpush.msra.mxu0 0.0
    %2536 = vmatpush.msra.mxu0 0.0
    %2537 = vmatpush.msra.mxu0 0.0
    %2538 = vmatpush.msra.mxu0 0.0
    %2539 = vmatpush.msra.mxu0 0.0
    %2540 = vmatpush.msra.mxu0 0.0
    %2541 = vmatpush.msra.mxu0 0.0
    %2542 = vmatpush.msra.mxu0 0.0
    %2543 = vmatpush.msra.mxu0 0.0
    %2544 = vmatpush.msra.mxu0 0.0
    %v2545 = vand.u32 %v2325, 4294901760
    %v2546 = vsub.f32 %v2325, %v2545
    %2547 = vmatpush.msra.mxu0 %v2546
    %v2548 = vand.u32 %v2330, 4294901760
    %v2549 = vsub.f32 %v2330, %v2548
    %2550 = vmatmul.f32.gmra.mxu0 %v2549
    %v2551 = vpop.f32.mrf.mxu0
    %v2552 = vadd.f32 %v2528, %v2551
    %2553 = vdwg.mxu0
    %2554 = vmatpush.msra.mxu0 0.0
    %2555 = vmatpush.msra.mxu0 0.0
    %2556 = vmatpush.msra.mxu0 0.0
    %2557 = vmatpush.msra.mxu0 0.0
    %2558 = vmatpush.msra.mxu0 0.0
    %2559 = vmatpush.msra.mxu0 0.0
    %2560 = vmatpush.msra.mxu0 0.0
    %2561 = vmatpush.msra.mxu0 0.0
    %2562 = vmatpush.msra.mxu0 0.0
    %2563 = vmatpush.msra.mxu0 0.0
    %2564 = vmatpush.msra.mxu0 0.0
    %2565 = vmatpush.msra.mxu0 0.0
    %2566 = vmatpush.msra.mxu0 0.0
    %2567 = vmatpush.msra.mxu0 0.0
    %2568 = vmatpush.msra.mxu0 0.0
    %v2569 = vand.u32 %v2325, 4294901760
    %2570 = vmatpush.msra.mxu0 %v2569
    %v2571 = vand.u32 %v2330, 4294901760
    %v2572 = vsub.f32 %v2330, %v2571
    %v2573 = vand.u32 %v2572, 4294901760
    %2574 = vmatmul.f32.gmra.mxu0 %v2573
    %v2575 = vpop.f32.mrf.mxu0
    %v2576 = vadd.f32 %v2552, %v2575
    %2577 = vdwg.mxu0
    %2578 = vmatpush.msra.mxu0 0.0
    %2579 = vmatpush.msra.mxu0 0.0
    %2580 = vmatpush.msra.mxu0 0.0
    %2581 = vmatpush.msra.mxu0 0.0
    %2582 = vmatpush.msra.mxu0 0.0
    %2583 = vmatpush.msra.mxu0 0.0
    %2584 = vmatpush.msra.mxu0 0.0
    %2585 = vmatpush.msra.mxu0 0.0
    %2586 = vmatpush.msra.mxu0 0.0
    %2587 = vmatpush.msra.mxu0 0.0
    %2588 = vmatpush.msra.mxu0 0.0
    %2589 = vmatpush.msra.mxu0 0.0
    %2590 = vmatpush.msra.mxu0 0.0
    %2591 = vmatpush.msra.mxu0 0.0
    %2592 = vmatpush.msra.mxu0 0.0
    %v2593 = vand.u32 %v2325, 4294901760
    %v2594 = vsub.f32 %v2325, %v2593
    %v2595 = vand.u32 %v2594, 4294901760
    %2596 = vmatpush.msra.mxu0 %v2595
    %v2597 = vand.u32 %v2330, 4294901760
    %2598 = vmatmul.f32.gmra.mxu0 %v2597
    %v2599 = vpop.f32.mrf.mxu0
    %v2600 = vadd.f32 %v2576, %v2599
    %2601 = vdwg.mxu0
    %2602 = vmatpush.msra.mxu0 0.0
    %2603 = vmatpush.msra.mxu0 0.0
    %2604 = vmatpush.msra.mxu0 0.0
    %2605 = vmatpush.msra.mxu0 0.0
    %2606 = vmatpush.msra.mxu0 0.0
    %2607 = vmatpush.msra.mxu0 0.0
    %2608 = vmatpush.msra.mxu0 0.0
    %2609 = vmatpush.msra.mxu0 0.0
    %2610 = vmatpush.msra.mxu0 0.0
    %2611 = vmatpush.msra.mxu0 0.0
    %2612 = vmatpush.msra.mxu0 0.0
    %2613 = vmatpush.msra.mxu0 0.0
    %2614 = vmatpush.msra.mxu0 0.0
    %2615 = vmatpush.msra.mxu0 0.0
    %2616 = vmatpush.msra.mxu0 0.0
    %v2617 = vand.u32 %v2325, 4294901760
    %2618 = vmatpush.msra.mxu0 %v2617
    %v2619 = vand.u32 %v2330, 4294901760
    %2620 = vmatmul.f32.gmra.mxu0 %v2619
    %v2621 = vpop.f32.mrf.mxu0
    %v2622 = vadd.f32 %v2600, %v2621
    %2623 = vdwg.mxu0
    %2624 = vmatpush.msra.mxu0 0.0
    %2625 = vmatpush.msra.mxu0 0.0
    %2626 = vmatpush.msra.mxu0 0.0
    %2627 = vmatpush.msra.mxu0 0.0
    %2628 = vmatpush.msra.mxu0 0.0
    %2629 = vmatpush.msra.mxu0 0.0
    %2630 = vmatpush.msra.mxu0 0.0
    %2631 = vmatpush.msra.mxu0 0.0
    %2632 = vmatpush.msra.mxu0 0.0
    %2633 = vmatpush.msra.mxu0 0.0
    %2634 = vmatpush.msra.mxu0 0.0
    %2635 = vmatpush.msra.mxu0 0.0
    %2636 = vmatpush.msra.mxu0 0.0
    %2637 = vmatpush.msra.mxu0 0.0
    %2638 = vmatpush.msra.mxu0 0.0
    %v2639 = vand.u32 %v2324, 4294901760
    %2640 = vmatpush.msra.mxu0 %v2639
    %v2641 = vand.u32 %v2330, 4294901760
    %v2642 = vsub.f32 %v2330, %v2641
    %v2643 = vand.u32 %v2642, 4294901760
    %v2644 = vsub.f32 %v2642, %v2643
    %v2645 = vand.u32 %v2644, 4294901760
    %2646 = vmatmul.f32.gmra.mxu0 %v2645
    %v2647 = vpop.f32.mrf.mxu0
    %v2648 = vadd.f32 0.0, %v2647
    %2649 = vdwg.mxu0
    %2650 = vmatpush.msra.mxu0 0.0
    %2651 = vmatpush.msra.mxu0 0.0
    %2652 = vmatpush.msra.mxu0 0.0
    %2653 = vmatpush.msra.mxu0 0.0
    %2654 = vmatpush.msra.mxu0 0.0
    %2655 = vmatpush.msra.mxu0 0.0
    %2656 = vmatpush.msra.mxu0 0.0
    %2657 = vmatpush.msra.mxu0 0.0
    %2658 = vmatpush.msra.mxu0 0.0
    %2659 = vmatpush.msra.mxu0 0.0
    %2660 = vmatpush.msra.mxu0 0.0
    %2661 = vmatpush.msra.mxu0 0.0
    %2662 = vmatpush.msra.mxu0 0.0
    %2663 = vmatpush.msra.mxu0 0.0
    %2664 = vmatpush.msra.mxu0 0.0
    %v2665 = vand.u32 %v2324, 4294901760
    %v2666 = vsub.f32 %v2324, %v2665
    %v2667 = vand.u32 %v2666, 4294901760
    %v2668 = vsub.f32 %v2666, %v2667
    %v2669 = vand.u32 %v2668, 4294901760
    %2670 = vmatpush.msra.mxu0 %v2669
    %v2671 = vand.u32 %v2330, 4294901760
    %2672 = vmatmul.f32.gmra.mxu0 %v2671
    %v2673 = vpop.f32.mrf.mxu0
    %v2674 = vadd.f32 %v2648, %v2673
    %2675 = vdwg.mxu0
    %2676 = vmatpush.msra.mxu0 0.0
    %2677 = vmatpush.msra.mxu0 0.0
    %2678 = vmatpush.msra.mxu0 0.0
    %2679 = vmatpush.msra.mxu0 0.0
    %2680 = vmatpush.msra.mxu0 0.0
    %2681 = vmatpush.msra.mxu0 0.0
    %2682 = vmatpush.msra.mxu0 0.0
    %2683 = vmatpush.msra.mxu0 0.0
    %2684 = vmatpush.msra.mxu0 0.0
    %2685 = vmatpush.msra.mxu0 0.0
    %2686 = vmatpush.msra.mxu0 0.0
    %2687 = vmatpush.msra.mxu0 0.0
    %2688 = vmatpush.msra.mxu0 0.0
    %2689 = vmatpush.msra.mxu0 0.0
    %2690 = vmatpush.msra.mxu0 0.0
    %v2691 = vand.u32 %v2324, 4294901760
    %v2692 = vsub.f32 %v2324, %v2691
    %2693 = vmatpush.msra.mxu0 %v2692
    %v2694 = vand.u32 %v2330, 4294901760
    %v2695 = vsub.f32 %v2330, %v2694
    %2696 = vmatmul.f32.gmra.mxu0 %v2695
    %v2697 = vpop.f32.mrf.mxu0
    %v2698 = vadd.f32 %v2674, %v2697
    %2699 = vdwg.mxu0
    %2700 = vmatpush.msra.mxu0 0.0
    %2701 = vmatpush.msra.mxu0 0.0
    %2702 = vmatpush.msra.mxu0 0.0
    %2703 = vmatpush.msra.mxu0 0.0
    %2704 = vmatpush.msra.mxu0 0.0
    %2705 = vmatpush.msra.mxu0 0.0
    %2706 = vmatpush.msra.mxu0 0.0
    %2707 = vmatpush.msra.mxu0 0.0
    %2708 = vmatpush.msra.mxu0 0.0
    %2709 = vmatpush.msra.mxu0 0.0
    %2710 = vmatpush.msra.mxu0 0.0
    %2711 = vmatpush.msra.mxu0 0.0
    %2712 = vmatpush.msra.mxu0 0.0
    %2713 = vmatpush.msra.mxu0 0.0
    %2714 = vmatpush.msra.mxu0 0.0
    %v2715 = vand.u32 %v2324, 4294901760
    %2716 = vmatpush.msra.mxu0 %v2715
    %v2717 = vand.u32 %v2330, 4294901760
    %v2718 = vsub.f32 %v2330, %v2717
    %v2719 = vand.u32 %v2718, 4294901760
    %2720 = vmatmul.f32.gmra.mxu0 %v2719
    %v2721 = vpop.f32.mrf.mxu0
    %v2722 = vadd.f32 %v2698, %v2721
    %2723 = vdwg.mxu0
    %2724 = vmatpush.msra.mxu0 0.0
    %2725 = vmatpush.msra.mxu0 0.0
    %2726 = vmatpush.msra.mxu0 0.0
    %2727 = vmatpush.msra.mxu0 0.0
    %2728 = vmatpush.msra.mxu0 0.0
    %2729 = vmatpush.msra.mxu0 0.0
    %2730 = vmatpush.msra.mxu0 0.0
    %2731 = vmatpush.msra.mxu0 0.0
    %2732 = vmatpush.msra.mxu0 0.0
    %2733 = vmatpush.msra.mxu0 0.0
    %2734 = vmatpush.msra.mxu0 0.0
    %2735 = vmatpush.msra.mxu0 0.0
    %2736 = vmatpush.msra.mxu0 0.0
    %2737 = vmatpush.msra.mxu0 0.0
    %2738 = vmatpush.msra.mxu0 0.0
    %v2739 = vand.u32 %v2324, 4294901760
    %v2740 = vsub.f32 %v2324, %v2739
    %v2741 = vand.u32 %v2740, 4294901760
    %2742 = vmatpush.msra.mxu0 %v2741
    %v2743 = vand.u32 %v2330, 4294901760
    %2744 = vmatmul.f32.gmra.mxu0 %v2743
    %v2745 = vpop.f32.mrf.mxu0
    %v2746 = vadd.f32 %v2722, %v2745
    %2747 = vdwg.mxu0
    %2748 = vmatpush.msra.mxu0 0.0
    %2749 = vmatpush.msra.mxu0 0.0
    %2750 = vmatpush.msra.mxu0 0.0
    %2751 = vmatpush.msra.mxu0 0.0
    %2752 = vmatpush.msra.mxu0 0.0
    %2753 = vmatpush.msra.mxu0 0.0
    %2754 = vmatpush.msra.mxu0 0.0
    %2755 = vmatpush.msra.mxu0 0.0
    %2756 = vmatpush.msra.mxu0 0.0
    %2757 = vmatpush.msra.mxu0 0.0
    %2758 = vmatpush.msra.mxu0 0.0
    %2759 = vmatpush.msra.mxu0 0.0
    %2760 = vmatpush.msra.mxu0 0.0
    %2761 = vmatpush.msra.mxu0 0.0
    %2762 = vmatpush.msra.mxu0 0.0
    %v2763 = vand.u32 %v2324, 4294901760
    %2764 = vmatpush.msra.mxu0 %v2763
    %v2765 = vand.u32 %v2330, 4294901760
    %2766 = vmatmul.f32.gmra.mxu0 %v2765
    %v2767 = vpop.f32.mrf.mxu0
    %v2768 = vadd.f32 %v2746, %v2767
    %2769 = vdwg.mxu0
    %v2770 = vadd.f32 %v2312, %v2476
    %v2771 = vadd.f32 %v2313, %v2622
    %v2772 = vadd.f32 %v2314, %v2768
    %2773 = vrot.lane.b32.xlu0 %v25, 111
    %v2774 = vpop.permute.xlu0 %2773
    %2775 = vrot.lane.b32.xlu0 %v26, 111
    %v2776 = vpop.permute.xlu0 %2775
    %2777 = vrot.lane.b32.xlu0 %v27, 111
    %v2778 = vpop.permute.xlu0 %2777
    %2779 = vrot.lane.b32.xlu0 %v28, 111
    %v2780 = vpop.permute.xlu0 %2779
    %vm2781 = vcmp.lt.s32.totalorder %v44, 111
    %v2782 = vsel %vm2781, %v2778, %v2780
    %v2783 = vsel %vm2781, %v2776, %v2778
    %v2784 = vsel %vm2781, %v2774, %v2776
    %s2785 = scalar_lea.vmem %s1, 48
    %v2786 = vld [vmem:[%s2785] sm:$0xff]
    %v2788 = vsel %vm50, %v2786, 0
    %2790 = vmatpush.msra.mxu0 0.0
    %2791 = vmatpush.msra.mxu0 0.0
    %2792 = vmatpush.msra.mxu0 0.0
    %2793 = vmatpush.msra.mxu0 0.0
    %2794 = vmatpush.msra.mxu0 0.0
    %2795 = vmatpush.msra.mxu0 0.0
    %2796 = vmatpush.msra.mxu0 0.0
    %2797 = vmatpush.msra.mxu0 0.0
    %2798 = vmatpush.msra.mxu0 0.0
    %2799 = vmatpush.msra.mxu0 0.0
    %2800 = vmatpush.msra.mxu0 0.0
    %2801 = vmatpush.msra.mxu0 0.0
    %2802 = vmatpush.msra.mxu0 0.0
    %2803 = vmatpush.msra.mxu0 0.0
    %2804 = vmatpush.msra.mxu0 0.0
    %v2805 = vand.u32 %v2784, 4294901760
    %2806 = vmatpush.msra.mxu0 %v2805
    %v2807 = vand.u32 %v2788, 4294901760
    %v2808 = vsub.f32 %v2788, %v2807
    %v2809 = vand.u32 %v2808, 4294901760
    %v2810 = vsub.f32 %v2808, %v2809
    %v2811 = vand.u32 %v2810, 4294901760
    %2812 = vmatmul.f32.gmra.mxu0 %v2811
    %v2813 = vpop.f32.mrf.mxu0
    %v2814 = vadd.f32 0.0, %v2813
    %2815 = vdwg.mxu0
    %2816 = vmatpush.msra.mxu0 0.0
    %2817 = vmatpush.msra.mxu0 0.0
    %2818 = vmatpush.msra.mxu0 0.0
    %2819 = vmatpush.msra.mxu0 0.0
    %2820 = vmatpush.msra.mxu0 0.0
    %2821 = vmatpush.msra.mxu0 0.0
    %2822 = vmatpush.msra.mxu0 0.0
    %2823 = vmatpush.msra.mxu0 0.0
    %2824 = vmatpush.msra.mxu0 0.0
    %2825 = vmatpush.msra.mxu0 0.0
    %2826 = vmatpush.msra.mxu0 0.0
    %2827 = vmatpush.msra.mxu0 0.0
    %2828 = vmatpush.msra.mxu0 0.0
    %2829 = vmatpush.msra.mxu0 0.0
    %2830 = vmatpush.msra.mxu0 0.0
    %v2831 = vand.u32 %v2784, 4294901760
    %v2832 = vsub.f32 %v2784, %v2831
    %v2833 = vand.u32 %v2832, 4294901760
    %v2834 = vsub.f32 %v2832, %v2833
    %v2835 = vand.u32 %v2834, 4294901760
    %2836 = vmatpush.msra.mxu0 %v2835
    %v2837 = vand.u32 %v2788, 4294901760
    %2838 = vmatmul.f32.gmra.mxu0 %v2837
    %v2839 = vpop.f32.mrf.mxu0
    %v2840 = vadd.f32 %v2814, %v2839
    %2841 = vdwg.mxu0
    %2842 = vmatpush.msra.mxu0 0.0
    %2843 = vmatpush.msra.mxu0 0.0
    %2844 = vmatpush.msra.mxu0 0.0
    %2845 = vmatpush.msra.mxu0 0.0
    %2846 = vmatpush.msra.mxu0 0.0
    %2847 = vmatpush.msra.mxu0 0.0
    %2848 = vmatpush.msra.mxu0 0.0
    %2849 = vmatpush.msra.mxu0 0.0
    %2850 = vmatpush.msra.mxu0 0.0
    %2851 = vmatpush.msra.mxu0 0.0
    %2852 = vmatpush.msra.mxu0 0.0
    %2853 = vmatpush.msra.mxu0 0.0
    %2854 = vmatpush.msra.mxu0 0.0
    %2855 = vmatpush.msra.mxu0 0.0
    %2856 = vmatpush.msra.mxu0 0.0
    %v2857 = vand.u32 %v2784, 4294901760
    %v2858 = vsub.f32 %v2784, %v2857
    %2859 = vmatpush.msra.mxu0 %v2858
    %v2860 = vand.u32 %v2788, 4294901760
    %v2861 = vsub.f32 %v2788, %v2860
    %2862 = vmatmul.f32.gmra.mxu0 %v2861
    %v2863 = vpop.f32.mrf.mxu0
    %v2864 = vadd.f32 %v2840, %v2863
    %2865 = vdwg.mxu0
    %2866 = vmatpush.msra.mxu0 0.0
    %2867 = vmatpush.msra.mxu0 0.0
    %2868 = vmatpush.msra.mxu0 0.0
    %2869 = vmatpush.msra.mxu0 0.0
    %2870 = vmatpush.msra.mxu0 0.0
    %2871 = vmatpush.msra.mxu0 0.0
    %2872 = vmatpush.msra.mxu0 0.0
    %2873 = vmatpush.msra.mxu0 0.0
    %2874 = vmatpush.msra.mxu0 0.0
    %2875 = vmatpush.msra.mxu0 0.0
    %2876 = vmatpush.msra.mxu0 0.0
    %2877 = vmatpush.msra.mxu0 0.0
    %2878 = vmatpush.msra.mxu0 0.0
    %2879 = vmatpush.msra.mxu0 0.0
    %2880 = vmatpush.msra.mxu0 0.0
    %v2881 = vand.u32 %v2784, 4294901760
    %2882 = vmatpush.msra.mxu0 %v2881
    %v2883 = vand.u32 %v2788, 4294901760
    %v2884 = vsub.f32 %v2788, %v2883
    %v2885 = vand.u32 %v2884, 4294901760
    %2886 = vmatmul.f32.gmra.mxu0 %v2885
    %v2887 = vpop.f32.mrf.mxu0
    %v2888 = vadd.f32 %v2864, %v2887
    %2889 = vdwg.mxu0
    %2890 = vmatpush.msra.mxu0 0.0
    %2891 = vmatpush.msra.mxu0 0.0
    %2892 = vmatpush.msra.mxu0 0.0
    %2893 = vmatpush.msra.mxu0 0.0
    %2894 = vmatpush.msra.mxu0 0.0
    %2895 = vmatpush.msra.mxu0 0.0
    %2896 = vmatpush.msra.mxu0 0.0
    %2897 = vmatpush.msra.mxu0 0.0
    %2898 = vmatpush.msra.mxu0 0.0
    %2899 = vmatpush.msra.mxu0 0.0
    %2900 = vmatpush.msra.mxu0 0.0
    %2901 = vmatpush.msra.mxu0 0.0
    %2902 = vmatpush.msra.mxu0 0.0
    %2903 = vmatpush.msra.mxu0 0.0
    %2904 = vmatpush.msra.mxu0 0.0
    %v2905 = vand.u32 %v2784, 4294901760
    %v2906 = vsub.f32 %v2784, %v2905
    %v2907 = vand.u32 %v2906, 4294901760
    %2908 = vmatpush.msra.mxu0 %v2907
    %v2909 = vand.u32 %v2788, 4294901760
    %2910 = vmatmul.f32.gmra.mxu0 %v2909
    %v2911 = vpop.f32.mrf.mxu0
    %v2912 = vadd.f32 %v2888, %v2911
    %2913 = vdwg.mxu0
    %2914 = vmatpush.msra.mxu0 0.0
    %2915 = vmatpush.msra.mxu0 0.0
    %2916 = vmatpush.msra.mxu0 0.0
    %2917 = vmatpush.msra.mxu0 0.0
    %2918 = vmatpush.msra.mxu0 0.0
    %2919 = vmatpush.msra.mxu0 0.0
    %2920 = vmatpush.msra.mxu0 0.0
    %2921 = vmatpush.msra.mxu0 0.0
    %2922 = vmatpush.msra.mxu0 0.0
    %2923 = vmatpush.msra.mxu0 0.0
    %2924 = vmatpush.msra.mxu0 0.0
    %2925 = vmatpush.msra.mxu0 0.0
    %2926 = vmatpush.msra.mxu0 0.0
    %2927 = vmatpush.msra.mxu0 0.0
    %2928 = vmatpush.msra.mxu0 0.0
    %v2929 = vand.u32 %v2784, 4294901760
    %2930 = vmatpush.msra.mxu0 %v2929
    %v2931 = vand.u32 %v2788, 4294901760
    %2932 = vmatmul.f32.gmra.mxu0 %v2931
    %v2933 = vpop.f32.mrf.mxu0
    %v2934 = vadd.f32 %v2912, %v2933
    %2935 = vdwg.mxu0
    %2936 = vmatpush.msra.mxu0 0.0
    %2937 = vmatpush.msra.mxu0 0.0
    %2938 = vmatpush.msra.mxu0 0.0
    %2939 = vmatpush.msra.mxu0 0.0
    %2940 = vmatpush.msra.mxu0 0.0
    %2941 = vmatpush.msra.mxu0 0.0
    %2942 = vmatpush.msra.mxu0 0.0
    %2943 = vmatpush.msra.mxu0 0.0
    %2944 = vmatpush.msra.mxu0 0.0
    %2945 = vmatpush.msra.mxu0 0.0
    %2946 = vmatpush.msra.mxu0 0.0
    %2947 = vmatpush.msra.mxu0 0.0
    %2948 = vmatpush.msra.mxu0 0.0
    %2949 = vmatpush.msra.mxu0 0.0
    %2950 = vmatpush.msra.mxu0 0.0
    %v2951 = vand.u32 %v2783, 4294901760
    %2952 = vmatpush.msra.mxu0 %v2951
    %v2953 = vand.u32 %v2788, 4294901760
    %v2954 = vsub.f32 %v2788, %v2953
    %v2955 = vand.u32 %v2954, 4294901760
    %v2956 = vsub.f32 %v2954, %v2955
    %v2957 = vand.u32 %v2956, 4294901760
    %2958 = vmatmul.f32.gmra.mxu0 %v2957
    %v2959 = vpop.f32.mrf.mxu0
    %v2960 = vadd.f32 0.0, %v2959
    %2961 = vdwg.mxu0
    %2962 = vmatpush.msra.mxu0 0.0
    %2963 = vmatpush.msra.mxu0 0.0
    %2964 = vmatpush.msra.mxu0 0.0
    %2965 = vmatpush.msra.mxu0 0.0
    %2966 = vmatpush.msra.mxu0 0.0
    %2967 = vmatpush.msra.mxu0 0.0
    %2968 = vmatpush.msra.mxu0 0.0
    %2969 = vmatpush.msra.mxu0 0.0
    %2970 = vmatpush.msra.mxu0 0.0
    %2971 = vmatpush.msra.mxu0 0.0
    %2972 = vmatpush.msra.mxu0 0.0
    %2973 = vmatpush.msra.mxu0 0.0
    %2974 = vmatpush.msra.mxu0 0.0
    %2975 = vmatpush.msra.mxu0 0.0
    %2976 = vmatpush.msra.mxu0 0.0
    %v2977 = vand.u32 %v2783, 4294901760
    %v2978 = vsub.f32 %v2783, %v2977
    %v2979 = vand.u32 %v2978, 4294901760
    %v2980 = vsub.f32 %v2978, %v2979
    %v2981 = vand.u32 %v2980, 4294901760
    %2982 = vmatpush.msra.mxu0 %v2981
    %v2983 = vand.u32 %v2788, 4294901760
    %2984 = vmatmul.f32.gmra.mxu0 %v2983
    %v2985 = vpop.f32.mrf.mxu0
    %v2986 = vadd.f32 %v2960, %v2985
    %2987 = vdwg.mxu0
    %2988 = vmatpush.msra.mxu0 0.0
    %2989 = vmatpush.msra.mxu0 0.0
    %2990 = vmatpush.msra.mxu0 0.0
    %2991 = vmatpush.msra.mxu0 0.0
    %2992 = vmatpush.msra.mxu0 0.0
    %2993 = vmatpush.msra.mxu0 0.0
    %2994 = vmatpush.msra.mxu0 0.0
    %2995 = vmatpush.msra.mxu0 0.0
    %2996 = vmatpush.msra.mxu0 0.0
    %2997 = vmatpush.msra.mxu0 0.0
    %2998 = vmatpush.msra.mxu0 0.0
    %2999 = vmatpush.msra.mxu0 0.0
    %3000 = vmatpush.msra.mxu0 0.0
    %3001 = vmatpush.msra.mxu0 0.0
    %3002 = vmatpush.msra.mxu0 0.0
    %v3003 = vand.u32 %v2783, 4294901760
    %v3004 = vsub.f32 %v2783, %v3003
    %3005 = vmatpush.msra.mxu0 %v3004
    %v3006 = vand.u32 %v2788, 4294901760
    %v3007 = vsub.f32 %v2788, %v3006
    %3008 = vmatmul.f32.gmra.mxu0 %v3007
    %v3009 = vpop.f32.mrf.mxu0
    %v3010 = vadd.f32 %v2986, %v3009
    %3011 = vdwg.mxu0
    %3012 = vmatpush.msra.mxu0 0.0
    %3013 = vmatpush.msra.mxu0 0.0
    %3014 = vmatpush.msra.mxu0 0.0
    %3015 = vmatpush.msra.mxu0 0.0
    %3016 = vmatpush.msra.mxu0 0.0
    %3017 = vmatpush.msra.mxu0 0.0
    %3018 = vmatpush.msra.mxu0 0.0
    %3019 = vmatpush.msra.mxu0 0.0
    %3020 = vmatpush.msra.mxu0 0.0
    %3021 = vmatpush.msra.mxu0 0.0
    %3022 = vmatpush.msra.mxu0 0.0
    %3023 = vmatpush.msra.mxu0 0.0
    %3024 = vmatpush.msra.mxu0 0.0
    %3025 = vmatpush.msra.mxu0 0.0
    %3026 = vmatpush.msra.mxu0 0.0
    %v3027 = vand.u32 %v2783, 4294901760
    %3028 = vmatpush.msra.mxu0 %v3027
    %v3029 = vand.u32 %v2788, 4294901760
    %v3030 = vsub.f32 %v2788, %v3029
    %v3031 = vand.u32 %v3030, 4294901760
    %3032 = vmatmul.f32.gmra.mxu0 %v3031
    %v3033 = vpop.f32.mrf.mxu0
    %v3034 = vadd.f32 %v3010, %v3033
    %3035 = vdwg.mxu0
    %3036 = vmatpush.msra.mxu0 0.0
    %3037 = vmatpush.msra.mxu0 0.0
    %3038 = vmatpush.msra.mxu0 0.0
    %3039 = vmatpush.msra.mxu0 0.0
    %3040 = vmatpush.msra.mxu0 0.0
    %3041 = vmatpush.msra.mxu0 0.0
    %3042 = vmatpush.msra.mxu0 0.0
    %3043 = vmatpush.msra.mxu0 0.0
    %3044 = vmatpush.msra.mxu0 0.0
    %3045 = vmatpush.msra.mxu0 0.0
    %3046 = vmatpush.msra.mxu0 0.0
    %3047 = vmatpush.msra.mxu0 0.0
    %3048 = vmatpush.msra.mxu0 0.0
    %3049 = vmatpush.msra.mxu0 0.0
    %3050 = vmatpush.msra.mxu0 0.0
    %v3051 = vand.u32 %v2783, 4294901760
    %v3052 = vsub.f32 %v2783, %v3051
    %v3053 = vand.u32 %v3052, 4294901760
    %3054 = vmatpush.msra.mxu0 %v3053
    %v3055 = vand.u32 %v2788, 4294901760
    %3056 = vmatmul.f32.gmra.mxu0 %v3055
    %v3057 = vpop.f32.mrf.mxu0
    %v3058 = vadd.f32 %v3034, %v3057
    %3059 = vdwg.mxu0
    %3060 = vmatpush.msra.mxu0 0.0
    %3061 = vmatpush.msra.mxu0 0.0
    %3062 = vmatpush.msra.mxu0 0.0
    %3063 = vmatpush.msra.mxu0 0.0
    %3064 = vmatpush.msra.mxu0 0.0
    %3065 = vmatpush.msra.mxu0 0.0
    %3066 = vmatpush.msra.mxu0 0.0
    %3067 = vmatpush.msra.mxu0 0.0
    %3068 = vmatpush.msra.mxu0 0.0
    %3069 = vmatpush.msra.mxu0 0.0
    %3070 = vmatpush.msra.mxu0 0.0
    %3071 = vmatpush.msra.mxu0 0.0
    %3072 = vmatpush.msra.mxu0 0.0
    %3073 = vmatpush.msra.mxu0 0.0
    %3074 = vmatpush.msra.mxu0 0.0
    %v3075 = vand.u32 %v2783, 4294901760
    %3076 = vmatpush.msra.mxu0 %v3075
    %v3077 = vand.u32 %v2788, 4294901760
    %3078 = vmatmul.f32.gmra.mxu0 %v3077
    %v3079 = vpop.f32.mrf.mxu0
    %v3080 = vadd.f32 %v3058, %v3079
    %3081 = vdwg.mxu0
    %3082 = vmatpush.msra.mxu0 0.0
    %3083 = vmatpush.msra.mxu0 0.0
    %3084 = vmatpush.msra.mxu0 0.0
    %3085 = vmatpush.msra.mxu0 0.0
    %3086 = vmatpush.msra.mxu0 0.0
    %3087 = vmatpush.msra.mxu0 0.0
    %3088 = vmatpush.msra.mxu0 0.0
    %3089 = vmatpush.msra.mxu0 0.0
    %3090 = vmatpush.msra.mxu0 0.0
    %3091 = vmatpush.msra.mxu0 0.0
    %3092 = vmatpush.msra.mxu0 0.0
    %3093 = vmatpush.msra.mxu0 0.0
    %3094 = vmatpush.msra.mxu0 0.0
    %3095 = vmatpush.msra.mxu0 0.0
    %3096 = vmatpush.msra.mxu0 0.0
    %v3097 = vand.u32 %v2782, 4294901760
    %3098 = vmatpush.msra.mxu0 %v3097
    %v3099 = vand.u32 %v2788, 4294901760
    %v3100 = vsub.f32 %v2788, %v3099
    %v3101 = vand.u32 %v3100, 4294901760
    %v3102 = vsub.f32 %v3100, %v3101
    %v3103 = vand.u32 %v3102, 4294901760
    %3104 = vmatmul.f32.gmra.mxu0 %v3103
    %v3105 = vpop.f32.mrf.mxu0
    %v3106 = vadd.f32 0.0, %v3105
    %3107 = vdwg.mxu0
    %3108 = vmatpush.msra.mxu0 0.0
    %3109 = vmatpush.msra.mxu0 0.0
    %3110 = vmatpush.msra.mxu0 0.0
    %3111 = vmatpush.msra.mxu0 0.0
    %3112 = vmatpush.msra.mxu0 0.0
    %3113 = vmatpush.msra.mxu0 0.0
    %3114 = vmatpush.msra.mxu0 0.0
    %3115 = vmatpush.msra.mxu0 0.0
    %3116 = vmatpush.msra.mxu0 0.0
    %3117 = vmatpush.msra.mxu0 0.0
    %3118 = vmatpush.msra.mxu0 0.0
    %3119 = vmatpush.msra.mxu0 0.0
    %3120 = vmatpush.msra.mxu0 0.0
    %3121 = vmatpush.msra.mxu0 0.0
    %3122 = vmatpush.msra.mxu0 0.0
    %v3123 = vand.u32 %v2782, 4294901760
    %v3124 = vsub.f32 %v2782, %v3123
    %v3125 = vand.u32 %v3124, 4294901760
    %v3126 = vsub.f32 %v3124, %v3125
    %v3127 = vand.u32 %v3126, 4294901760
    %3128 = vmatpush.msra.mxu0 %v3127
    %v3129 = vand.u32 %v2788, 4294901760
    %3130 = vmatmul.f32.gmra.mxu0 %v3129
    %v3131 = vpop.f32.mrf.mxu0
    %v3132 = vadd.f32 %v3106, %v3131
    %3133 = vdwg.mxu0
    %3134 = vmatpush.msra.mxu0 0.0
    %3135 = vmatpush.msra.mxu0 0.0
    %3136 = vmatpush.msra.mxu0 0.0
    %3137 = vmatpush.msra.mxu0 0.0
    %3138 = vmatpush.msra.mxu0 0.0
    %3139 = vmatpush.msra.mxu0 0.0
    %3140 = vmatpush.msra.mxu0 0.0
    %3141 = vmatpush.msra.mxu0 0.0
    %3142 = vmatpush.msra.mxu0 0.0
    %3143 = vmatpush.msra.mxu0 0.0
    %3144 = vmatpush.msra.mxu0 0.0
    %3145 = vmatpush.msra.mxu0 0.0
    %3146 = vmatpush.msra.mxu0 0.0
    %3147 = vmatpush.msra.mxu0 0.0
    %3148 = vmatpush.msra.mxu0 0.0
    %v3149 = vand.u32 %v2782, 4294901760
    %v3150 = vsub.f32 %v2782, %v3149
    %3151 = vmatpush.msra.mxu0 %v3150
    %v3152 = vand.u32 %v2788, 4294901760
    %v3153 = vsub.f32 %v2788, %v3152
    %3154 = vmatmul.f32.gmra.mxu0 %v3153
    %v3155 = vpop.f32.mrf.mxu0
    %v3156 = vadd.f32 %v3132, %v3155
    %3157 = vdwg.mxu0
    %3158 = vmatpush.msra.mxu0 0.0
    %3159 = vmatpush.msra.mxu0 0.0
    %3160 = vmatpush.msra.mxu0 0.0
    %3161 = vmatpush.msra.mxu0 0.0
    %3162 = vmatpush.msra.mxu0 0.0
    %3163 = vmatpush.msra.mxu0 0.0
    %3164 = vmatpush.msra.mxu0 0.0
    %3165 = vmatpush.msra.mxu0 0.0
    %3166 = vmatpush.msra.mxu0 0.0
    %3167 = vmatpush.msra.mxu0 0.0
    %3168 = vmatpush.msra.mxu0 0.0
    %3169 = vmatpush.msra.mxu0 0.0
    %3170 = vmatpush.msra.mxu0 0.0
    %3171 = vmatpush.msra.mxu0 0.0
    %3172 = vmatpush.msra.mxu0 0.0
    %v3173 = vand.u32 %v2782, 4294901760
    %3174 = vmatpush.msra.mxu0 %v3173
    %v3175 = vand.u32 %v2788, 4294901760
    %v3176 = vsub.f32 %v2788, %v3175
    %v3177 = vand.u32 %v3176, 4294901760
    %3178 = vmatmul.f32.gmra.mxu0 %v3177
    %v3179 = vpop.f32.mrf.mxu0
    %v3180 = vadd.f32 %v3156, %v3179
    %3181 = vdwg.mxu0
    %3182 = vmatpush.msra.mxu0 0.0
    %3183 = vmatpush.msra.mxu0 0.0
    %3184 = vmatpush.msra.mxu0 0.0
    %3185 = vmatpush.msra.mxu0 0.0
    %3186 = vmatpush.msra.mxu0 0.0
    %3187 = vmatpush.msra.mxu0 0.0
    %3188 = vmatpush.msra.mxu0 0.0
    %3189 = vmatpush.msra.mxu0 0.0
    %3190 = vmatpush.msra.mxu0 0.0
    %3191 = vmatpush.msra.mxu0 0.0
    %3192 = vmatpush.msra.mxu0 0.0
    %3193 = vmatpush.msra.mxu0 0.0
    %3194 = vmatpush.msra.mxu0 0.0
    %3195 = vmatpush.msra.mxu0 0.0
    %3196 = vmatpush.msra.mxu0 0.0
    %v3197 = vand.u32 %v2782, 4294901760
    %v3198 = vsub.f32 %v2782, %v3197
    %v3199 = vand.u32 %v3198, 4294901760
    %3200 = vmatpush.msra.mxu0 %v3199
    %v3201 = vand.u32 %v2788, 4294901760
    %3202 = vmatmul.f32.gmra.mxu0 %v3201
    %v3203 = vpop.f32.mrf.mxu0
    %v3204 = vadd.f32 %v3180, %v3203
    %3205 = vdwg.mxu0
    %3206 = vmatpush.msra.mxu0 0.0
    %3207 = vmatpush.msra.mxu0 0.0
    %3208 = vmatpush.msra.mxu0 0.0
    %3209 = vmatpush.msra.mxu0 0.0
    %3210 = vmatpush.msra.mxu0 0.0
    %3211 = vmatpush.msra.mxu0 0.0
    %3212 = vmatpush.msra.mxu0 0.0
    %3213 = vmatpush.msra.mxu0 0.0
    %3214 = vmatpush.msra.mxu0 0.0
    %3215 = vmatpush.msra.mxu0 0.0
    %3216 = vmatpush.msra.mxu0 0.0
    %3217 = vmatpush.msra.mxu0 0.0
    %3218 = vmatpush.msra.mxu0 0.0
    %3219 = vmatpush.msra.mxu0 0.0
    %3220 = vmatpush.msra.mxu0 0.0
    %v3221 = vand.u32 %v2782, 4294901760
    %3222 = vmatpush.msra.mxu0 %v3221
    %v3223 = vand.u32 %v2788, 4294901760
    %3224 = vmatmul.f32.gmra.mxu0 %v3223
    %v3225 = vpop.f32.mrf.mxu0
    %v3226 = vadd.f32 %v3204, %v3225
    %3227 = vdwg.mxu0
    %v3228 = vadd.f32 %v2770, %v2934
    %v3229 = vadd.f32 %v2771, %v3080
    %v3230 = vadd.f32 %v2772, %v3226
    %3231 = vrot.lane.b32.xlu0 %v25, 110
    %v3232 = vpop.permute.xlu0 %3231
    %3233 = vrot.lane.b32.xlu0 %v26, 110
    %v3234 = vpop.permute.xlu0 %3233
    %3235 = vrot.lane.b32.xlu0 %v27, 110
    %v3236 = vpop.permute.xlu0 %3235
    %3237 = vrot.lane.b32.xlu0 %v28, 110
    %v3238 = vpop.permute.xlu0 %3237
    %vm3239 = vcmp.lt.s32.totalorder %v44, 110
    %v3240 = vsel %vm3239, %v3236, %v3238
    %v3241 = vsel %vm3239, %v3234, %v3236
    %v3242 = vsel %vm3239, %v3232, %v3234
    %s3243 = scalar_lea.vmem %s1, 56
    %v3244 = vld [vmem:[%s3243] sm:$0xff]
    %v3246 = vsel %vm50, %v3244, 0
    %3248 = vmatpush.msra.mxu0 0.0
    %3249 = vmatpush.msra.mxu0 0.0
    %3250 = vmatpush.msra.mxu0 0.0
    %3251 = vmatpush.msra.mxu0 0.0
    %3252 = vmatpush.msra.mxu0 0.0
    %3253 = vmatpush.msra.mxu0 0.0
    %3254 = vmatpush.msra.mxu0 0.0
    %3255 = vmatpush.msra.mxu0 0.0
    %3256 = vmatpush.msra.mxu0 0.0
    %3257 = vmatpush.msra.mxu0 0.0
    %3258 = vmatpush.msra.mxu0 0.0
    %3259 = vmatpush.msra.mxu0 0.0
    %3260 = vmatpush.msra.mxu0 0.0
    %3261 = vmatpush.msra.mxu0 0.0
    %3262 = vmatpush.msra.mxu0 0.0
    %v3263 = vand.u32 %v3242, 4294901760
    %3264 = vmatpush.msra.mxu0 %v3263
    %v3265 = vand.u32 %v3246, 4294901760
    %v3266 = vsub.f32 %v3246, %v3265
    %v3267 = vand.u32 %v3266, 4294901760
    %v3268 = vsub.f32 %v3266, %v3267
    %v3269 = vand.u32 %v3268, 4294901760
    %3270 = vmatmul.f32.gmra.mxu0 %v3269
    %v3271 = vpop.f32.mrf.mxu0
    %v3272 = vadd.f32 0.0, %v3271
    %3273 = vdwg.mxu0
    %3274 = vmatpush.msra.mxu0 0.0
    %3275 = vmatpush.msra.mxu0 0.0
    %3276 = vmatpush.msra.mxu0 0.0
    %3277 = vmatpush.msra.mxu0 0.0
    %3278 = vmatpush.msra.mxu0 0.0
    %3279 = vmatpush.msra.mxu0 0.0
    %3280 = vmatpush.msra.mxu0 0.0
    %3281 = vmatpush.msra.mxu0 0.0
    %3282 = vmatpush.msra.mxu0 0.0
    %3283 = vmatpush.msra.mxu0 0.0
    %3284 = vmatpush.msra.mxu0 0.0
    %3285 = vmatpush.msra.mxu0 0.0
    %3286 = vmatpush.msra.mxu0 0.0
    %3287 = vmatpush.msra.mxu0 0.0
    %3288 = vmatpush.msra.mxu0 0.0
    %v3289 = vand.u32 %v3242, 4294901760
    %v3290 = vsub.f32 %v3242, %v3289
    %v3291 = vand.u32 %v3290, 4294901760
    %v3292 = vsub.f32 %v3290, %v3291
    %v3293 = vand.u32 %v3292, 4294901760
    %3294 = vmatpush.msra.mxu0 %v3293
    %v3295 = vand.u32 %v3246, 4294901760
    %3296 = vmatmul.f32.gmra.mxu0 %v3295
    %v3297 = vpop.f32.mrf.mxu0
    %v3298 = vadd.f32 %v3272, %v3297
    %3299 = vdwg.mxu0
    %3300 = vmatpush.msra.mxu0 0.0
    %3301 = vmatpush.msra.mxu0 0.0
    %3302 = vmatpush.msra.mxu0 0.0
    %3303 = vmatpush.msra.mxu0 0.0
    %3304 = vmatpush.msra.mxu0 0.0
    %3305 = vmatpush.msra.mxu0 0.0
    %3306 = vmatpush.msra.mxu0 0.0
    %3307 = vmatpush.msra.mxu0 0.0
    %3308 = vmatpush.msra.mxu0 0.0
    %3309 = vmatpush.msra.mxu0 0.0
    %3310 = vmatpush.msra.mxu0 0.0
    %3311 = vmatpush.msra.mxu0 0.0
    %3312 = vmatpush.msra.mxu0 0.0
    %3313 = vmatpush.msra.mxu0 0.0
    %3314 = vmatpush.msra.mxu0 0.0
    %v3315 = vand.u32 %v3242, 4294901760
    %v3316 = vsub.f32 %v3242, %v3315
    %3317 = vmatpush.msra.mxu0 %v3316
    %v3318 = vand.u32 %v3246, 4294901760
    %v3319 = vsub.f32 %v3246, %v3318
    %3320 = vmatmul.f32.gmra.mxu0 %v3319
    %v3321 = vpop.f32.mrf.mxu0
    %v3322 = vadd.f32 %v3298, %v3321
    %3323 = vdwg.mxu0
    %3324 = vmatpush.msra.mxu0 0.0
    %3325 = vmatpush.msra.mxu0 0.0
    %3326 = vmatpush.msra.mxu0 0.0
    %3327 = vmatpush.msra.mxu0 0.0
    %3328 = vmatpush.msra.mxu0 0.0
    %3329 = vmatpush.msra.mxu0 0.0
    %3330 = vmatpush.msra.mxu0 0.0
    %3331 = vmatpush.msra.mxu0 0.0
    %3332 = vmatpush.msra.mxu0 0.0
    %3333 = vmatpush.msra.mxu0 0.0
    %3334 = vmatpush.msra.mxu0 0.0
    %3335 = vmatpush.msra.mxu0 0.0
    %3336 = vmatpush.msra.mxu0 0.0
    %3337 = vmatpush.msra.mxu0 0.0
    %3338 = vmatpush.msra.mxu0 0.0
    %v3339 = vand.u32 %v3242, 4294901760
    %3340 = vmatpush.msra.mxu0 %v3339
    %v3341 = vand.u32 %v3246, 4294901760
    %v3342 = vsub.f32 %v3246, %v3341
    %v3343 = vand.u32 %v3342, 4294901760
    %3344 = vmatmul.f32.gmra.mxu0 %v3343
    %v3345 = vpop.f32.mrf.mxu0
    %v3346 = vadd.f32 %v3322, %v3345
    %3347 = vdwg.mxu0
    %3348 = vmatpush.msra.mxu0 0.0
    %3349 = vmatpush.msra.mxu0 0.0
    %3350 = vmatpush.msra.mxu0 0.0
    %3351 = vmatpush.msra.mxu0 0.0
    %3352 = vmatpush.msra.mxu0 0.0
    %3353 = vmatpush.msra.mxu0 0.0
    %3354 = vmatpush.msra.mxu0 0.0
    %3355 = vmatpush.msra.mxu0 0.0
    %3356 = vmatpush.msra.mxu0 0.0
    %3357 = vmatpush.msra.mxu0 0.0
    %3358 = vmatpush.msra.mxu0 0.0
    %3359 = vmatpush.msra.mxu0 0.0
    %3360 = vmatpush.msra.mxu0 0.0
    %3361 = vmatpush.msra.mxu0 0.0
    %3362 = vmatpush.msra.mxu0 0.0
    %v3363 = vand.u32 %v3242, 4294901760
    %v3364 = vsub.f32 %v3242, %v3363
    %v3365 = vand.u32 %v3364, 4294901760
    %3366 = vmatpush.msra.mxu0 %v3365
    %v3367 = vand.u32 %v3246, 4294901760
    %3368 = vmatmul.f32.gmra.mxu0 %v3367
    %v3369 = vpop.f32.mrf.mxu0
    %v3370 = vadd.f32 %v3346, %v3369
    %3371 = vdwg.mxu0
    %3372 = vmatpush.msra.mxu0 0.0
    %3373 = vmatpush.msra.mxu0 0.0
    %3374 = vmatpush.msra.mxu0 0.0
    %3375 = vmatpush.msra.mxu0 0.0
    %3376 = vmatpush.msra.mxu0 0.0
    %3377 = vmatpush.msra.mxu0 0.0
    %3378 = vmatpush.msra.mxu0 0.0
    %3379 = vmatpush.msra.mxu0 0.0
    %3380 = vmatpush.msra.mxu0 0.0
    %3381 = vmatpush.msra.mxu0 0.0
    %3382 = vmatpush.msra.mxu0 0.0
    %3383 = vmatpush.msra.mxu0 0.0
    %3384 = vmatpush.msra.mxu0 0.0
    %3385 = vmatpush.msra.mxu0 0.0
    %3386 = vmatpush.msra.mxu0 0.0
    %v3387 = vand.u32 %v3242, 4294901760
    %3388 = vmatpush.msra.mxu0 %v3387
    %v3389 = vand.u32 %v3246, 4294901760
    %3390 = vmatmul.f32.gmra.mxu0 %v3389
    %v3391 = vpop.f32.mrf.mxu0
    %v3392 = vadd.f32 %v3370, %v3391
    %3393 = vdwg.mxu0
    %3394 = vmatpush.msra.mxu0 0.0
    %3395 = vmatpush.msra.mxu0 0.0
    %3396 = vmatpush.msra.mxu0 0.0
    %3397 = vmatpush.msra.mxu0 0.0
    %3398 = vmatpush.msra.mxu0 0.0
    %3399 = vmatpush.msra.mxu0 0.0
    %3400 = vmatpush.msra.mxu0 0.0
    %3401 = vmatpush.msra.mxu0 0.0
    %3402 = vmatpush.msra.mxu0 0.0
    %3403 = vmatpush.msra.mxu0 0.0
    %3404 = vmatpush.msra.mxu0 0.0
    %3405 = vmatpush.msra.mxu0 0.0
    %3406 = vmatpush.msra.mxu0 0.0
    %3407 = vmatpush.msra.mxu0 0.0
    %3408 = vmatpush.msra.mxu0 0.0
    %v3409 = vand.u32 %v3241, 4294901760
    %3410 = vmatpush.msra.mxu0 %v3409
    %v3411 = vand.u32 %v3246, 4294901760
    %v3412 = vsub.f32 %v3246, %v3411
    %v3413 = vand.u32 %v3412, 4294901760
    %v3414 = vsub.f32 %v3412, %v3413
    %v3415 = vand.u32 %v3414, 4294901760
    %3416 = vmatmul.f32.gmra.mxu0 %v3415
    %v3417 = vpop.f32.mrf.mxu0
    %v3418 = vadd.f32 0.0, %v3417
    %3419 = vdwg.mxu0
    %3420 = vmatpush.msra.mxu0 0.0
    %3421 = vmatpush.msra.mxu0 0.0
    %3422 = vmatpush.msra.mxu0 0.0
    %3423 = vmatpush.msra.mxu0 0.0
    %3424 = vmatpush.msra.mxu0 0.0
    %3425 = vmatpush.msra.mxu0 0.0
    %3426 = vmatpush.msra.mxu0 0.0
    %3427 = vmatpush.msra.mxu0 0.0
    %3428 = vmatpush.msra.mxu0 0.0
    %3429 = vmatpush.msra.mxu0 0.0
    %3430 = vmatpush.msra.mxu0 0.0
    %3431 = vmatpush.msra.mxu0 0.0
    %3432 = vmatpush.msra.mxu0 0.0
    %3433 = vmatpush.msra.mxu0 0.0
    %3434 = vmatpush.msra.mxu0 0.0
    %v3435 = vand.u32 %v3241, 4294901760
    %v3436 = vsub.f32 %v3241, %v3435
    %v3437 = vand.u32 %v3436, 4294901760
    %v3438 = vsub.f32 %v3436, %v3437
    %v3439 = vand.u32 %v3438, 4294901760
    %3440 = vmatpush.msra.mxu0 %v3439
    %v3441 = vand.u32 %v3246, 4294901760
    %3442 = vmatmul.f32.gmra.mxu0 %v3441
    %v3443 = vpop.f32.mrf.mxu0
    %v3444 = vadd.f32 %v3418, %v3443
    %3445 = vdwg.mxu0
    %3446 = vmatpush.msra.mxu0 0.0
    %3447 = vmatpush.msra.mxu0 0.0
    %3448 = vmatpush.msra.mxu0 0.0
    %3449 = vmatpush.msra.mxu0 0.0
    %3450 = vmatpush.msra.mxu0 0.0
    %3451 = vmatpush.msra.mxu0 0.0
    %3452 = vmatpush.msra.mxu0 0.0
    %3453 = vmatpush.msra.mxu0 0.0
    %3454 = vmatpush.msra.mxu0 0.0
    %3455 = vmatpush.msra.mxu0 0.0
    %3456 = vmatpush.msra.mxu0 0.0
    %3457 = vmatpush.msra.mxu0 0.0
    %3458 = vmatpush.msra.mxu0 0.0
    %3459 = vmatpush.msra.mxu0 0.0
    %3460 = vmatpush.msra.mxu0 0.0
    %v3461 = vand.u32 %v3241, 4294901760
    %v3462 = vsub.f32 %v3241, %v3461
    %3463 = vmatpush.msra.mxu0 %v3462
    %v3464 = vand.u32 %v3246, 4294901760
    %v3465 = vsub.f32 %v3246, %v3464
    %3466 = vmatmul.f32.gmra.mxu0 %v3465
    %v3467 = vpop.f32.mrf.mxu0
    %v3468 = vadd.f32 %v3444, %v3467
    %3469 = vdwg.mxu0
    %3470 = vmatpush.msra.mxu0 0.0
    %3471 = vmatpush.msra.mxu0 0.0
    %3472 = vmatpush.msra.mxu0 0.0
    %3473 = vmatpush.msra.mxu0 0.0
    %3474 = vmatpush.msra.mxu0 0.0
    %3475 = vmatpush.msra.mxu0 0.0
    %3476 = vmatpush.msra.mxu0 0.0
    %3477 = vmatpush.msra.mxu0 0.0
    %3478 = vmatpush.msra.mxu0 0.0
    %3479 = vmatpush.msra.mxu0 0.0
    %3480 = vmatpush.msra.mxu0 0.0
    %3481 = vmatpush.msra.mxu0 0.0
    %3482 = vmatpush.msra.mxu0 0.0
    %3483 = vmatpush.msra.mxu0 0.0
    %3484 = vmatpush.msra.mxu0 0.0
    %v3485 = vand.u32 %v3241, 4294901760
    %3486 = vmatpush.msra.mxu0 %v3485
    %v3487 = vand.u32 %v3246, 4294901760
    %v3488 = vsub.f32 %v3246, %v3487
    %v3489 = vand.u32 %v3488, 4294901760
    %3490 = vmatmul.f32.gmra.mxu0 %v3489
    %v3491 = vpop.f32.mrf.mxu0
    %v3492 = vadd.f32 %v3468, %v3491
    %3493 = vdwg.mxu0
    %3494 = vmatpush.msra.mxu0 0.0
    %3495 = vmatpush.msra.mxu0 0.0
    %3496 = vmatpush.msra.mxu0 0.0
    %3497 = vmatpush.msra.mxu0 0.0
    %3498 = vmatpush.msra.mxu0 0.0
    %3499 = vmatpush.msra.mxu0 0.0
    %3500 = vmatpush.msra.mxu0 0.0
    %3501 = vmatpush.msra.mxu0 0.0
    %3502 = vmatpush.msra.mxu0 0.0
    %3503 = vmatpush.msra.mxu0 0.0
    %3504 = vmatpush.msra.mxu0 0.0
    %3505 = vmatpush.msra.mxu0 0.0
    %3506 = vmatpush.msra.mxu0 0.0
    %3507 = vmatpush.msra.mxu0 0.0
    %3508 = vmatpush.msra.mxu0 0.0
    %v3509 = vand.u32 %v3241, 4294901760
    %v3510 = vsub.f32 %v3241, %v3509
    %v3511 = vand.u32 %v3510, 4294901760
    %3512 = vmatpush.msra.mxu0 %v3511
    %v3513 = vand.u32 %v3246, 4294901760
    %3514 = vmatmul.f32.gmra.mxu0 %v3513
    %v3515 = vpop.f32.mrf.mxu0
    %v3516 = vadd.f32 %v3492, %v3515
    %3517 = vdwg.mxu0
    %3518 = vmatpush.msra.mxu0 0.0
    %3519 = vmatpush.msra.mxu0 0.0
    %3520 = vmatpush.msra.mxu0 0.0
    %3521 = vmatpush.msra.mxu0 0.0
    %3522 = vmatpush.msra.mxu0 0.0
    %3523 = vmatpush.msra.mxu0 0.0
    %3524 = vmatpush.msra.mxu0 0.0
    %3525 = vmatpush.msra.mxu0 0.0
    %3526 = vmatpush.msra.mxu0 0.0
    %3527 = vmatpush.msra.mxu0 0.0
    %3528 = vmatpush.msra.mxu0 0.0
    %3529 = vmatpush.msra.mxu0 0.0
    %3530 = vmatpush.msra.mxu0 0.0
    %3531 = vmatpush.msra.mxu0 0.0
    %3532 = vmatpush.msra.mxu0 0.0
    %v3533 = vand.u32 %v3241, 4294901760
    %3534 = vmatpush.msra.mxu0 %v3533
    %v3535 = vand.u32 %v3246, 4294901760
    %3536 = vmatmul.f32.gmra.mxu0 %v3535
    %v3537 = vpop.f32.mrf.mxu0
    %v3538 = vadd.f32 %v3516, %v3537
    %3539 = vdwg.mxu0
    %3540 = vmatpush.msra.mxu0 0.0
    %3541 = vmatpush.msra.mxu0 0.0
    %3542 = vmatpush.msra.mxu0 0.0
    %3543 = vmatpush.msra.mxu0 0.0
    %3544 = vmatpush.msra.mxu0 0.0
    %3545 = vmatpush.msra.mxu0 0.0
    %3546 = vmatpush.msra.mxu0 0.0
    %3547 = vmatpush.msra.mxu0 0.0
    %3548 = vmatpush.msra.mxu0 0.0
    %3549 = vmatpush.msra.mxu0 0.0
    %3550 = vmatpush.msra.mxu0 0.0
    %3551 = vmatpush.msra.mxu0 0.0
    %3552 = vmatpush.msra.mxu0 0.0
    %3553 = vmatpush.msra.mxu0 0.0
    %3554 = vmatpush.msra.mxu0 0.0
    %v3555 = vand.u32 %v3240, 4294901760
    %3556 = vmatpush.msra.mxu0 %v3555
    %v3557 = vand.u32 %v3246, 4294901760
    %v3558 = vsub.f32 %v3246, %v3557
    %v3559 = vand.u32 %v3558, 4294901760
    %v3560 = vsub.f32 %v3558, %v3559
    %v3561 = vand.u32 %v3560, 4294901760
    %3562 = vmatmul.f32.gmra.mxu0 %v3561
    %v3563 = vpop.f32.mrf.mxu0
    %v3564 = vadd.f32 0.0, %v3563
    %3565 = vdwg.mxu0
    %3566 = vmatpush.msra.mxu0 0.0
    %3567 = vmatpush.msra.mxu0 0.0
    %3568 = vmatpush.msra.mxu0 0.0
    %3569 = vmatpush.msra.mxu0 0.0
    %3570 = vmatpush.msra.mxu0 0.0
    %3571 = vmatpush.msra.mxu0 0.0
    %3572 = vmatpush.msra.mxu0 0.0
    %3573 = vmatpush.msra.mxu0 0.0
    %3574 = vmatpush.msra.mxu0 0.0
    %3575 = vmatpush.msra.mxu0 0.0
    %3576 = vmatpush.msra.mxu0 0.0
    %3577 = vmatpush.msra.mxu0 0.0
    %3578 = vmatpush.msra.mxu0 0.0
    %3579 = vmatpush.msra.mxu0 0.0
    %3580 = vmatpush.msra.mxu0 0.0
    %v3581 = vand.u32 %v3240, 4294901760
    %v3582 = vsub.f32 %v3240, %v3581
    %v3583 = vand.u32 %v3582, 4294901760
    %v3584 = vsub.f32 %v3582, %v3583
    %v3585 = vand.u32 %v3584, 4294901760
    %3586 = vmatpush.msra.mxu0 %v3585
    %v3587 = vand.u32 %v3246, 4294901760
    %3588 = vmatmul.f32.gmra.mxu0 %v3587
    %v3589 = vpop.f32.mrf.mxu0
    %v3590 = vadd.f32 %v3564, %v3589
    %3591 = vdwg.mxu0
    %3592 = vmatpush.msra.mxu0 0.0
    %3593 = vmatpush.msra.mxu0 0.0
    %3594 = vmatpush.msra.mxu0 0.0
    %3595 = vmatpush.msra.mxu0 0.0
    %3596 = vmatpush.msra.mxu0 0.0
    %3597 = vmatpush.msra.mxu0 0.0
    %3598 = vmatpush.msra.mxu0 0.0
    %3599 = vmatpush.msra.mxu0 0.0
    %3600 = vmatpush.msra.mxu0 0.0
    %3601 = vmatpush.msra.mxu0 0.0
    %3602 = vmatpush.msra.mxu0 0.0
    %3603 = vmatpush.msra.mxu0 0.0
    %3604 = vmatpush.msra.mxu0 0.0
    %3605 = vmatpush.msra.mxu0 0.0
    %3606 = vmatpush.msra.mxu0 0.0
    %v3607 = vand.u32 %v3240, 4294901760
    %v3608 = vsub.f32 %v3240, %v3607
    %3609 = vmatpush.msra.mxu0 %v3608
    %v3610 = vand.u32 %v3246, 4294901760
    %v3611 = vsub.f32 %v3246, %v3610
    %3612 = vmatmul.f32.gmra.mxu0 %v3611
    %v3613 = vpop.f32.mrf.mxu0
    %v3614 = vadd.f32 %v3590, %v3613
    %3615 = vdwg.mxu0
    %3616 = vmatpush.msra.mxu0 0.0
    %3617 = vmatpush.msra.mxu0 0.0
    %3618 = vmatpush.msra.mxu0 0.0
    %3619 = vmatpush.msra.mxu0 0.0
    %3620 = vmatpush.msra.mxu0 0.0
    %3621 = vmatpush.msra.mxu0 0.0
    %3622 = vmatpush.msra.mxu0 0.0
    %3623 = vmatpush.msra.mxu0 0.0
    %3624 = vmatpush.msra.mxu0 0.0
    %3625 = vmatpush.msra.mxu0 0.0
    %3626 = vmatpush.msra.mxu0 0.0
    %3627 = vmatpush.msra.mxu0 0.0
    %3628 = vmatpush.msra.mxu0 0.0
    %3629 = vmatpush.msra.mxu0 0.0
    %3630 = vmatpush.msra.mxu0 0.0
    %v3631 = vand.u32 %v3240, 4294901760
    %3632 = vmatpush.msra.mxu0 %v3631
    %v3633 = vand.u32 %v3246, 4294901760
    %v3634 = vsub.f32 %v3246, %v3633
    %v3635 = vand.u32 %v3634, 4294901760
    %3636 = vmatmul.f32.gmra.mxu0 %v3635
    %v3637 = vpop.f32.mrf.mxu0
    %v3638 = vadd.f32 %v3614, %v3637
    %3639 = vdwg.mxu0
    %3640 = vmatpush.msra.mxu0 0.0
    %3641 = vmatpush.msra.mxu0 0.0
    %3642 = vmatpush.msra.mxu0 0.0
    %3643 = vmatpush.msra.mxu0 0.0
    %3644 = vmatpush.msra.mxu0 0.0
    %3645 = vmatpush.msra.mxu0 0.0
    %3646 = vmatpush.msra.mxu0 0.0
    %3647 = vmatpush.msra.mxu0 0.0
    %3648 = vmatpush.msra.mxu0 0.0
    %3649 = vmatpush.msra.mxu0 0.0
    %3650 = vmatpush.msra.mxu0 0.0
    %3651 = vmatpush.msra.mxu0 0.0
    %3652 = vmatpush.msra.mxu0 0.0
    %3653 = vmatpush.msra.mxu0 0.0
    %3654 = vmatpush.msra.mxu0 0.0
    %v3655 = vand.u32 %v3240, 4294901760
    %v3656 = vsub.f32 %v3240, %v3655
    %v3657 = vand.u32 %v3656, 4294901760
    %3658 = vmatpush.msra.mxu0 %v3657
    %v3659 = vand.u32 %v3246, 4294901760
    %3660 = vmatmul.f32.gmra.mxu0 %v3659
    %v3661 = vpop.f32.mrf.mxu0
    %v3662 = vadd.f32 %v3638, %v3661
    %3663 = vdwg.mxu0
    %3664 = vmatpush.msra.mxu0 0.0
    %3665 = vmatpush.msra.mxu0 0.0
    %3666 = vmatpush.msra.mxu0 0.0
    %3667 = vmatpush.msra.mxu0 0.0
    %3668 = vmatpush.msra.mxu0 0.0
    %3669 = vmatpush.msra.mxu0 0.0
    %3670 = vmatpush.msra.mxu0 0.0
    %3671 = vmatpush.msra.mxu0 0.0
    %3672 = vmatpush.msra.mxu0 0.0
    %3673 = vmatpush.msra.mxu0 0.0
    %3674 = vmatpush.msra.mxu0 0.0
    %3675 = vmatpush.msra.mxu0 0.0
    %3676 = vmatpush.msra.mxu0 0.0
    %3677 = vmatpush.msra.mxu0 0.0
    %3678 = vmatpush.msra.mxu0 0.0
    %v3679 = vand.u32 %v3240, 4294901760
    %3680 = vmatpush.msra.mxu0 %v3679
    %v3681 = vand.u32 %v3246, 4294901760
    %3682 = vmatmul.f32.gmra.mxu0 %v3681
    %v3683 = vpop.f32.mrf.mxu0
    %v3684 = vadd.f32 %v3662, %v3683
    %3685 = vdwg.mxu0
    %v3686 = vadd.f32 %v3228, %v3392
    %v3687 = vadd.f32 %v3229, %v3538
    %v3688 = vadd.f32 %v3230, %v3684
    %3689 = vrot.lane.b32.xlu0 %v25, 109
    %v3690 = vpop.permute.xlu0 %3689
    %3691 = vrot.lane.b32.xlu0 %v26, 109
    %v3692 = vpop.permute.xlu0 %3691
    %3693 = vrot.lane.b32.xlu0 %v27, 109
    %v3694 = vpop.permute.xlu0 %3693
    %3695 = vrot.lane.b32.xlu0 %v28, 109
    %v3696 = vpop.permute.xlu0 %3695
    %vm3697 = vcmp.lt.s32.totalorder %v44, 109
    %v3698 = vsel %vm3697, %v3694, %v3696
    %v3699 = vsel %vm3697, %v3692, %v3694
    %v3700 = vsel %vm3697, %v3690, %v3692
    %s3701 = scalar_lea.vmem %s1, 64
    %v3702 = vld [vmem:[%s3701] sm:$0xff]
    %v3704 = vsel %vm50, %v3702, 0
    %3706 = vmatpush.msra.mxu0 0.0
    %3707 = vmatpush.msra.mxu0 0.0
    %3708 = vmatpush.msra.mxu0 0.0
    %3709 = vmatpush.msra.mxu0 0.0
    %3710 = vmatpush.msra.mxu0 0.0
    %3711 = vmatpush.msra.mxu0 0.0
    %3712 = vmatpush.msra.mxu0 0.0
    %3713 = vmatpush.msra.mxu0 0.0
    %3714 = vmatpush.msra.mxu0 0.0
    %3715 = vmatpush.msra.mxu0 0.0
    %3716 = vmatpush.msra.mxu0 0.0
    %3717 = vmatpush.msra.mxu0 0.0
    %3718 = vmatpush.msra.mxu0 0.0
    %3719 = vmatpush.msra.mxu0 0.0
    %3720 = vmatpush.msra.mxu0 0.0
    %v3721 = vand.u32 %v3700, 4294901760
    %3722 = vmatpush.msra.mxu0 %v3721
    %v3723 = vand.u32 %v3704, 4294901760
    %v3724 = vsub.f32 %v3704, %v3723
    %v3725 = vand.u32 %v3724, 4294901760
    %v3726 = vsub.f32 %v3724, %v3725
    %v3727 = vand.u32 %v3726, 4294901760
    %3728 = vmatmul.f32.gmra.mxu0 %v3727
    %v3729 = vpop.f32.mrf.mxu0
    %v3730 = vadd.f32 0.0, %v3729
    %3731 = vdwg.mxu0
    %3732 = vmatpush.msra.mxu0 0.0
    %3733 = vmatpush.msra.mxu0 0.0
    %3734 = vmatpush.msra.mxu0 0.0
    %3735 = vmatpush.msra.mxu0 0.0
    %3736 = vmatpush.msra.mxu0 0.0
    %3737 = vmatpush.msra.mxu0 0.0
    %3738 = vmatpush.msra.mxu0 0.0
    %3739 = vmatpush.msra.mxu0 0.0
    %3740 = vmatpush.msra.mxu0 0.0
    %3741 = vmatpush.msra.mxu0 0.0
    %3742 = vmatpush.msra.mxu0 0.0
    %3743 = vmatpush.msra.mxu0 0.0
    %3744 = vmatpush.msra.mxu0 0.0
    %3745 = vmatpush.msra.mxu0 0.0
    %3746 = vmatpush.msra.mxu0 0.0
    %v3747 = vand.u32 %v3700, 4294901760
    %v3748 = vsub.f32 %v3700, %v3747
    %v3749 = vand.u32 %v3748, 4294901760
    %v3750 = vsub.f32 %v3748, %v3749
    %v3751 = vand.u32 %v3750, 4294901760
    %3752 = vmatpush.msra.mxu0 %v3751
    %v3753 = vand.u32 %v3704, 4294901760
    %3754 = vmatmul.f32.gmra.mxu0 %v3753
    %v3755 = vpop.f32.mrf.mxu0
    %v3756 = vadd.f32 %v3730, %v3755
    %3757 = vdwg.mxu0
    %3758 = vmatpush.msra.mxu0 0.0
    %3759 = vmatpush.msra.mxu0 0.0
    %3760 = vmatpush.msra.mxu0 0.0
    %3761 = vmatpush.msra.mxu0 0.0
    %3762 = vmatpush.msra.mxu0 0.0
    %3763 = vmatpush.msra.mxu0 0.0
    %3764 = vmatpush.msra.mxu0 0.0
    %3765 = vmatpush.msra.mxu0 0.0
    %3766 = vmatpush.msra.mxu0 0.0
    %3767 = vmatpush.msra.mxu0 0.0
    %3768 = vmatpush.msra.mxu0 0.0
    %3769 = vmatpush.msra.mxu0 0.0
    %3770 = vmatpush.msra.mxu0 0.0
    %3771 = vmatpush.msra.mxu0 0.0
    %3772 = vmatpush.msra.mxu0 0.0
    %v3773 = vand.u32 %v3700, 4294901760
    %v3774 = vsub.f32 %v3700, %v3773
    %3775 = vmatpush.msra.mxu0 %v3774
    %v3776 = vand.u32 %v3704, 4294901760
    %v3777 = vsub.f32 %v3704, %v3776
    %3778 = vmatmul.f32.gmra.mxu0 %v3777
    %v3779 = vpop.f32.mrf.mxu0
    %v3780 = vadd.f32 %v3756, %v3779
    %3781 = vdwg.mxu0
    %3782 = vmatpush.msra.mxu0 0.0
    %3783 = vmatpush.msra.mxu0 0.0
    %3784 = vmatpush.msra.mxu0 0.0
    %3785 = vmatpush.msra.mxu0 0.0
    %3786 = vmatpush.msra.mxu0 0.0
    %3787 = vmatpush.msra.mxu0 0.0
    %3788 = vmatpush.msra.mxu0 0.0
    %3789 = vmatpush.msra.mxu0 0.0
    %3790 = vmatpush.msra.mxu0 0.0
    %3791 = vmatpush.msra.mxu0 0.0
    %3792 = vmatpush.msra.mxu0 0.0
    %3793 = vmatpush.msra.mxu0 0.0
    %3794 = vmatpush.msra.mxu0 0.0
    %3795 = vmatpush.msra.mxu0 0.0
    %3796 = vmatpush.msra.mxu0 0.0
    %v3797 = vand.u32 %v3700, 4294901760
    %3798 = vmatpush.msra.mxu0 %v3797
    %v3799 = vand.u32 %v3704, 4294901760
    %v3800 = vsub.f32 %v3704, %v3799
    %v3801 = vand.u32 %v3800, 4294901760
    %3802 = vmatmul.f32.gmra.mxu0 %v3801
    %v3803 = vpop.f32.mrf.mxu0
    %v3804 = vadd.f32 %v3780, %v3803
    %3805 = vdwg.mxu0
    %3806 = vmatpush.msra.mxu0 0.0
    %3807 = vmatpush.msra.mxu0 0.0
    %3808 = vmatpush.msra.mxu0 0.0
    %3809 = vmatpush.msra.mxu0 0.0
    %3810 = vmatpush.msra.mxu0 0.0
    %3811 = vmatpush.msra.mxu0 0.0
    %3812 = vmatpush.msra.mxu0 0.0
    %3813 = vmatpush.msra.mxu0 0.0
    %3814 = vmatpush.msra.mxu0 0.0
    %3815 = vmatpush.msra.mxu0 0.0
    %3816 = vmatpush.msra.mxu0 0.0
    %3817 = vmatpush.msra.mxu0 0.0
    %3818 = vmatpush.msra.mxu0 0.0
    %3819 = vmatpush.msra.mxu0 0.0
    %3820 = vmatpush.msra.mxu0 0.0
    %v3821 = vand.u32 %v3700, 4294901760
    %v3822 = vsub.f32 %v3700, %v3821
    %v3823 = vand.u32 %v3822, 4294901760
    %3824 = vmatpush.msra.mxu0 %v3823
    %v3825 = vand.u32 %v3704, 4294901760
    %3826 = vmatmul.f32.gmra.mxu0 %v3825
    %v3827 = vpop.f32.mrf.mxu0
    %v3828 = vadd.f32 %v3804, %v3827
    %3829 = vdwg.mxu0
    %3830 = vmatpush.msra.mxu0 0.0
    %3831 = vmatpush.msra.mxu0 0.0
    %3832 = vmatpush.msra.mxu0 0.0
    %3833 = vmatpush.msra.mxu0 0.0
    %3834 = vmatpush.msra.mxu0 0.0
    %3835 = vmatpush.msra.mxu0 0.0
    %3836 = vmatpush.msra.mxu0 0.0
    %3837 = vmatpush.msra.mxu0 0.0
    %3838 = vmatpush.msra.mxu0 0.0
    %3839 = vmatpush.msra.mxu0 0.0
    %3840 = vmatpush.msra.mxu0 0.0
    %3841 = vmatpush.msra.mxu0 0.0
    %3842 = vmatpush.msra.mxu0 0.0
    %3843 = vmatpush.msra.mxu0 0.0
    %3844 = vmatpush.msra.mxu0 0.0
    %v3845 = vand.u32 %v3700, 4294901760
    %3846 = vmatpush.msra.mxu0 %v3845
    %v3847 = vand.u32 %v3704, 4294901760
    %3848 = vmatmul.f32.gmra.mxu0 %v3847
    %v3849 = vpop.f32.mrf.mxu0
    %v3850 = vadd.f32 %v3828, %v3849
    %3851 = vdwg.mxu0
    %3852 = vmatpush.msra.mxu0 0.0
    %3853 = vmatpush.msra.mxu0 0.0
    %3854 = vmatpush.msra.mxu0 0.0
    %3855 = vmatpush.msra.mxu0 0.0
    %3856 = vmatpush.msra.mxu0 0.0
    %3857 = vmatpush.msra.mxu0 0.0
    %3858 = vmatpush.msra.mxu0 0.0
    %3859 = vmatpush.msra.mxu0 0.0
    %3860 = vmatpush.msra.mxu0 0.0
    %3861 = vmatpush.msra.mxu0 0.0
    %3862 = vmatpush.msra.mxu0 0.0
    %3863 = vmatpush.msra.mxu0 0.0
    %3864 = vmatpush.msra.mxu0 0.0
    %3865 = vmatpush.msra.mxu0 0.0
    %3866 = vmatpush.msra.mxu0 0.0
    %v3867 = vand.u32 %v3699, 4294901760
    %3868 = vmatpush.msra.mxu0 %v3867
    %v3869 = vand.u32 %v3704, 4294901760
    %v3870 = vsub.f32 %v3704, %v3869
    %v3871 = vand.u32 %v3870, 4294901760
    %v3872 = vsub.f32 %v3870, %v3871
    %v3873 = vand.u32 %v3872, 4294901760
    %3874 = vmatmul.f32.gmra.mxu0 %v3873
    %v3875 = vpop.f32.mrf.mxu0
    %v3876 = vadd.f32 0.0, %v3875
    %3877 = vdwg.mxu0
    %3878 = vmatpush.msra.mxu0 0.0
    %3879 = vmatpush.msra.mxu0 0.0
    %3880 = vmatpush.msra.mxu0 0.0
    %3881 = vmatpush.msra.mxu0 0.0
    %3882 = vmatpush.msra.mxu0 0.0
    %3883 = vmatpush.msra.mxu0 0.0
    %3884 = vmatpush.msra.mxu0 0.0
    %3885 = vmatpush.msra.mxu0 0.0
    %3886 = vmatpush.msra.mxu0 0.0
    %3887 = vmatpush.msra.mxu0 0.0
    %3888 = vmatpush.msra.mxu0 0.0
    %3889 = vmatpush.msra.mxu0 0.0
    %3890 = vmatpush.msra.mxu0 0.0
    %3891 = vmatpush.msra.mxu0 0.0
    %3892 = vmatpush.msra.mxu0 0.0
    %v3893 = vand.u32 %v3699, 4294901760
    %v3894 = vsub.f32 %v3699, %v3893
    %v3895 = vand.u32 %v3894, 4294901760
    %v3896 = vsub.f32 %v3894, %v3895
    %v3897 = vand.u32 %v3896, 4294901760
    %3898 = vmatpush.msra.mxu0 %v3897
    %v3899 = vand.u32 %v3704, 4294901760
    %3900 = vmatmul.f32.gmra.mxu0 %v3899
    %v3901 = vpop.f32.mrf.mxu0
    %v3902 = vadd.f32 %v3876, %v3901
    %3903 = vdwg.mxu0
    %3904 = vmatpush.msra.mxu0 0.0
    %3905 = vmatpush.msra.mxu0 0.0
    %3906 = vmatpush.msra.mxu0 0.0
    %3907 = vmatpush.msra.mxu0 0.0
    %3908 = vmatpush.msra.mxu0 0.0
    %3909 = vmatpush.msra.mxu0 0.0
    %3910 = vmatpush.msra.mxu0 0.0
    %3911 = vmatpush.msra.mxu0 0.0
    %3912 = vmatpush.msra.mxu0 0.0
    %3913 = vmatpush.msra.mxu0 0.0
    %3914 = vmatpush.msra.mxu0 0.0
    %3915 = vmatpush.msra.mxu0 0.0
    %3916 = vmatpush.msra.mxu0 0.0
    %3917 = vmatpush.msra.mxu0 0.0
    %3918 = vmatpush.msra.mxu0 0.0
    %v3919 = vand.u32 %v3699, 4294901760
    %v3920 = vsub.f32 %v3699, %v3919
    %3921 = vmatpush.msra.mxu0 %v3920
    %v3922 = vand.u32 %v3704, 4294901760
    %v3923 = vsub.f32 %v3704, %v3922
    %3924 = vmatmul.f32.gmra.mxu0 %v3923
    %v3925 = vpop.f32.mrf.mxu0
    %v3926 = vadd.f32 %v3902, %v3925
    %3927 = vdwg.mxu0
    %3928 = vmatpush.msra.mxu0 0.0
    %3929 = vmatpush.msra.mxu0 0.0
    %3930 = vmatpush.msra.mxu0 0.0
    %3931 = vmatpush.msra.mxu0 0.0
    %3932 = vmatpush.msra.mxu0 0.0
    %3933 = vmatpush.msra.mxu0 0.0
    %3934 = vmatpush.msra.mxu0 0.0
    %3935 = vmatpush.msra.mxu0 0.0
    %3936 = vmatpush.msra.mxu0 0.0
    %3937 = vmatpush.msra.mxu0 0.0
    %3938 = vmatpush.msra.mxu0 0.0
    %3939 = vmatpush.msra.mxu0 0.0
    %3940 = vmatpush.msra.mxu0 0.0
    %3941 = vmatpush.msra.mxu0 0.0
    %3942 = vmatpush.msra.mxu0 0.0
    %v3943 = vand.u32 %v3699, 4294901760
    %3944 = vmatpush.msra.mxu0 %v3943
    %v3945 = vand.u32 %v3704, 4294901760
    %v3946 = vsub.f32 %v3704, %v3945
    %v3947 = vand.u32 %v3946, 4294901760
    %3948 = vmatmul.f32.gmra.mxu0 %v3947
    %v3949 = vpop.f32.mrf.mxu0
    %v3950 = vadd.f32 %v3926, %v3949
    %3951 = vdwg.mxu0
    %3952 = vmatpush.msra.mxu0 0.0
    %3953 = vmatpush.msra.mxu0 0.0
    %3954 = vmatpush.msra.mxu0 0.0
    %3955 = vmatpush.msra.mxu0 0.0
    %3956 = vmatpush.msra.mxu0 0.0
    %3957 = vmatpush.msra.mxu0 0.0
    %3958 = vmatpush.msra.mxu0 0.0
    %3959 = vmatpush.msra.mxu0 0.0
    %3960 = vmatpush.msra.mxu0 0.0
    %3961 = vmatpush.msra.mxu0 0.0
    %3962 = vmatpush.msra.mxu0 0.0
    %3963 = vmatpush.msra.mxu0 0.0
    %3964 = vmatpush.msra.mxu0 0.0
    %3965 = vmatpush.msra.mxu0 0.0
    %3966 = vmatpush.msra.mxu0 0.0
    %v3967 = vand.u32 %v3699, 4294901760
    %v3968 = vsub.f32 %v3699, %v3967
    %v3969 = vand.u32 %v3968, 4294901760
    %3970 = vmatpush.msra.mxu0 %v3969
    %v3971 = vand.u32 %v3704, 4294901760
    %3972 = vmatmul.f32.gmra.mxu0 %v3971
    %v3973 = vpop.f32.mrf.mxu0
    %v3974 = vadd.f32 %v3950, %v3973
    %3975 = vdwg.mxu0
    %3976 = vmatpush.msra.mxu0 0.0
    %3977 = vmatpush.msra.mxu0 0.0
    %3978 = vmatpush.msra.mxu0 0.0
    %3979 = vmatpush.msra.mxu0 0.0
    %3980 = vmatpush.msra.mxu0 0.0
    %3981 = vmatpush.msra.mxu0 0.0
    %3982 = vmatpush.msra.mxu0 0.0
    %3983 = vmatpush.msra.mxu0 0.0
    %3984 = vmatpush.msra.mxu0 0.0
    %3985 = vmatpush.msra.mxu0 0.0
    %3986 = vmatpush.msra.mxu0 0.0
    %3987 = vmatpush.msra.mxu0 0.0
    %3988 = vmatpush.msra.mxu0 0.0
    %3989 = vmatpush.msra.mxu0 0.0
    %3990 = vmatpush.msra.mxu0 0.0
    %v3991 = vand.u32 %v3699, 4294901760
    %3992 = vmatpush.msra.mxu0 %v3991
    %v3993 = vand.u32 %v3704, 4294901760
    %3994 = vmatmul.f32.gmra.mxu0 %v3993
    %v3995 = vpop.f32.mrf.mxu0
    %v3996 = vadd.f32 %v3974, %v3995
    %3997 = vdwg.mxu0
    %3998 = vmatpush.msra.mxu0 0.0
    %3999 = vmatpush.msra.mxu0 0.0
    %4000 = vmatpush.msra.mxu0 0.0
    %4001 = vmatpush.msra.mxu0 0.0
    %4002 = vmatpush.msra.mxu0 0.0
    %4003 = vmatpush.msra.mxu0 0.0
    %4004 = vmatpush.msra.mxu0 0.0
    %4005 = vmatpush.msra.mxu0 0.0
    %4006 = vmatpush.msra.mxu0 0.0
    %4007 = vmatpush.msra.mxu0 0.0
    %4008 = vmatpush.msra.mxu0 0.0
    %4009 = vmatpush.msra.mxu0 0.0
    %4010 = vmatpush.msra.mxu0 0.0
    %4011 = vmatpush.msra.mxu0 0.0
    %4012 = vmatpush.msra.mxu0 0.0
    %v4013 = vand.u32 %v3698, 4294901760
    %4014 = vmatpush.msra.mxu0 %v4013
    %v4015 = vand.u32 %v3704, 4294901760
    %v4016 = vsub.f32 %v3704, %v4015
    %v4017 = vand.u32 %v4016, 4294901760
    %v4018 = vsub.f32 %v4016, %v4017
    %v4019 = vand.u32 %v4018, 4294901760
    %4020 = vmatmul.f32.gmra.mxu0 %v4019
    %v4021 = vpop.f32.mrf.mxu0
    %v4022 = vadd.f32 0.0, %v4021
    %4023 = vdwg.mxu0
    %4024 = vmatpush.msra.mxu0 0.0
    %4025 = vmatpush.msra.mxu0 0.0
    %4026 = vmatpush.msra.mxu0 0.0
    %4027 = vmatpush.msra.mxu0 0.0
    %4028 = vmatpush.msra.mxu0 0.0
    %4029 = vmatpush.msra.mxu0 0.0
    %4030 = vmatpush.msra.mxu0 0.0
    %4031 = vmatpush.msra.mxu0 0.0
    %4032 = vmatpush.msra.mxu0 0.0
    %4033 = vmatpush.msra.mxu0 0.0
    %4034 = vmatpush.msra.mxu0 0.0
    %4035 = vmatpush.msra.mxu0 0.0
    %4036 = vmatpush.msra.mxu0 0.0
    %4037 = vmatpush.msra.mxu0 0.0
    %4038 = vmatpush.msra.mxu0 0.0
    %v4039 = vand.u32 %v3698, 4294901760
    %v4040 = vsub.f32 %v3698, %v4039
    %v4041 = vand.u32 %v4040, 4294901760
    %v4042 = vsub.f32 %v4040, %v4041
    %v4043 = vand.u32 %v4042, 4294901760
    %4044 = vmatpush.msra.mxu0 %v4043
    %v4045 = vand.u32 %v3704, 4294901760
    %4046 = vmatmul.f32.gmra.mxu0 %v4045
    %v4047 = vpop.f32.mrf.mxu0
    %v4048 = vadd.f32 %v4022, %v4047
    %4049 = vdwg.mxu0
    %4050 = vmatpush.msra.mxu0 0.0
    %4051 = vmatpush.msra.mxu0 0.0
    %4052 = vmatpush.msra.mxu0 0.0
    %4053 = vmatpush.msra.mxu0 0.0
    %4054 = vmatpush.msra.mxu0 0.0
    %4055 = vmatpush.msra.mxu0 0.0
    %4056 = vmatpush.msra.mxu0 0.0
    %4057 = vmatpush.msra.mxu0 0.0
    %4058 = vmatpush.msra.mxu0 0.0
    %4059 = vmatpush.msra.mxu0 0.0
    %4060 = vmatpush.msra.mxu0 0.0
    %4061 = vmatpush.msra.mxu0 0.0
    %4062 = vmatpush.msra.mxu0 0.0
    %4063 = vmatpush.msra.mxu0 0.0
    %4064 = vmatpush.msra.mxu0 0.0
    %v4065 = vand.u32 %v3698, 4294901760
    %v4066 = vsub.f32 %v3698, %v4065
    %4067 = vmatpush.msra.mxu0 %v4066
    %v4068 = vand.u32 %v3704, 4294901760
    %v4069 = vsub.f32 %v3704, %v4068
    %4070 = vmatmul.f32.gmra.mxu0 %v4069
    %v4071 = vpop.f32.mrf.mxu0
    %v4072 = vadd.f32 %v4048, %v4071
    %4073 = vdwg.mxu0
    %4074 = vmatpush.msra.mxu0 0.0
    %4075 = vmatpush.msra.mxu0 0.0
    %4076 = vmatpush.msra.mxu0 0.0
    %4077 = vmatpush.msra.mxu0 0.0
    %4078 = vmatpush.msra.mxu0 0.0
    %4079 = vmatpush.msra.mxu0 0.0
    %4080 = vmatpush.msra.mxu0 0.0
    %4081 = vmatpush.msra.mxu0 0.0
    %4082 = vmatpush.msra.mxu0 0.0
    %4083 = vmatpush.msra.mxu0 0.0
    %4084 = vmatpush.msra.mxu0 0.0
    %4085 = vmatpush.msra.mxu0 0.0
    %4086 = vmatpush.msra.mxu0 0.0
    %4087 = vmatpush.msra.mxu0 0.0
    %4088 = vmatpush.msra.mxu0 0.0
    %v4089 = vand.u32 %v3698, 4294901760
    %4090 = vmatpush.msra.mxu0 %v4089
    %v4091 = vand.u32 %v3704, 4294901760
    %v4092 = vsub.f32 %v3704, %v4091
    %v4093 = vand.u32 %v4092, 4294901760
    %4094 = vmatmul.f32.gmra.mxu0 %v4093
    %v4095 = vpop.f32.mrf.mxu0
    %v4096 = vadd.f32 %v4072, %v4095
    %4097 = vdwg.mxu0
    %4098 = vmatpush.msra.mxu0 0.0
    %4099 = vmatpush.msra.mxu0 0.0
    %4100 = vmatpush.msra.mxu0 0.0
    %4101 = vmatpush.msra.mxu0 0.0
    %4102 = vmatpush.msra.mxu0 0.0
    %4103 = vmatpush.msra.mxu0 0.0
    %4104 = vmatpush.msra.mxu0 0.0
    %4105 = vmatpush.msra.mxu0 0.0
    %4106 = vmatpush.msra.mxu0 0.0
    %4107 = vmatpush.msra.mxu0 0.0
    %4108 = vmatpush.msra.mxu0 0.0
    %4109 = vmatpush.msra.mxu0 0.0
    %4110 = vmatpush.msra.mxu0 0.0
    %4111 = vmatpush.msra.mxu0 0.0
    %4112 = vmatpush.msra.mxu0 0.0
    %v4113 = vand.u32 %v3698, 4294901760
    %v4114 = vsub.f32 %v3698, %v4113
    %v4115 = vand.u32 %v4114, 4294901760
    %4116 = vmatpush.msra.mxu0 %v4115
    %v4117 = vand.u32 %v3704, 4294901760
    %4118 = vmatmul.f32.gmra.mxu0 %v4117
    %v4119 = vpop.f32.mrf.mxu0
    %v4120 = vadd.f32 %v4096, %v4119
    %4121 = vdwg.mxu0
    %4122 = vmatpush.msra.mxu0 0.0
    %4123 = vmatpush.msra.mxu0 0.0
    %4124 = vmatpush.msra.mxu0 0.0
    %4125 = vmatpush.msra.mxu0 0.0
    %4126 = vmatpush.msra.mxu0 0.0
    %4127 = vmatpush.msra.mxu0 0.0
    %4128 = vmatpush.msra.mxu0 0.0
    %4129 = vmatpush.msra.mxu0 0.0
    %4130 = vmatpush.msra.mxu0 0.0
    %4131 = vmatpush.msra.mxu0 0.0
    %4132 = vmatpush.msra.mxu0 0.0
    %4133 = vmatpush.msra.mxu0 0.0
    %4134 = vmatpush.msra.mxu0 0.0
    %4135 = vmatpush.msra.mxu0 0.0
    %4136 = vmatpush.msra.mxu0 0.0
    %v4137 = vand.u32 %v3698, 4294901760
    %4138 = vmatpush.msra.mxu0 %v4137
    %v4139 = vand.u32 %v3704, 4294901760
    %4140 = vmatmul.f32.gmra.mxu0 %v4139
    %v4141 = vpop.f32.mrf.mxu0
    %v4142 = vadd.f32 %v4120, %v4141
    %4143 = vdwg.mxu0
    %v4144 = vadd.f32 %v3686, %v3850
    %v4145 = vadd.f32 %v3687, %v3996
    %v4146 = vadd.f32 %v3688, %v4142
    %v4147 = vmax.f32 %v4144, 0.0
    %v4148 = vmax.f32 %v4145, 0.0
    %v4149 = vmax.f32 %v4146, 0.0
    %v4150 = vmul.f32 %v4147, %v29
    %v4151 = vmul.f32 %v4148, %v30
    %v4152 = vmul.f32 %v4149, %v31
    %v4153 = vld [vmem:[%s4] sm:$0xff]
    %v4154 = vld [vmem:[%s4 + $0x8] sm:$0xff]
    %v4155 = vld [vmem:[%s4 + $0x10] sm:$0xff]
    %4156 = vrot.lane.b32.xlu0 0.0, 19
    %v4157 = vpop.permute.xlu0 %4156
    %4158 = vrot.lane.b32.xlu0 %v4150, 19
    %v4159 = vpop.permute.xlu0 %4158
    %4160 = vrot.lane.b32.xlu0 %v4151, 19
    %v4161 = vpop.permute.xlu0 %4160
    %4162 = vrot.lane.b32.xlu0 %v4152, 19
    %v4163 = vpop.permute.xlu0 %4162
    %v4164 = vsel %vm45, %v4161, %v4163
    %v4165 = vsel %vm45, %v4159, %v4161
    %v4166 = vsel %vm45, %v4157, %v4159
    %v4167 = vld [vmem:[%s3] sm:$0xff]
    %v4169 = vsel %vm50, %v4167, 0
    %4171 = vmatpush.msra.mxu0 0.0
    %4172 = vmatpush.msra.mxu0 0.0
    %4173 = vmatpush.msra.mxu0 0.0
    %4174 = vmatpush.msra.mxu0 0.0
    %4175 = vmatpush.msra.mxu0 0.0
    %4176 = vmatpush.msra.mxu0 0.0
    %4177 = vmatpush.msra.mxu0 0.0
    %4178 = vmatpush.msra.mxu0 0.0
    %4179 = vmatpush.msra.mxu0 0.0
    %4180 = vmatpush.msra.mxu0 0.0
    %4181 = vmatpush.msra.mxu0 0.0
    %4182 = vmatpush.msra.mxu0 0.0
    %4183 = vmatpush.msra.mxu0 0.0
    %4184 = vmatpush.msra.mxu0 0.0
    %4185 = vmatpush.msra.mxu0 0.0
    %v4186 = vand.u32 %v4166, 4294901760
    %4187 = vmatpush.msra.mxu0 %v4186
    %v4188 = vand.u32 %v4169, 4294901760
    %v4189 = vsub.f32 %v4169, %v4188
    %v4190 = vand.u32 %v4189, 4294901760
    %v4191 = vsub.f32 %v4189, %v4190
    %v4192 = vand.u32 %v4191, 4294901760
    %4193 = vmatmul.f32.gmra.mxu0 %v4192
    %v4194 = vpop.f32.mrf.mxu0
    %v4195 = vadd.f32 0.0, %v4194
    %4196 = vdwg.mxu0
    %4197 = vmatpush.msra.mxu0 0.0
    %4198 = vmatpush.msra.mxu0 0.0
    %4199 = vmatpush.msra.mxu0 0.0
    %4200 = vmatpush.msra.mxu0 0.0
    %4201 = vmatpush.msra.mxu0 0.0
    %4202 = vmatpush.msra.mxu0 0.0
    %4203 = vmatpush.msra.mxu0 0.0
    %4204 = vmatpush.msra.mxu0 0.0
    %4205 = vmatpush.msra.mxu0 0.0
    %4206 = vmatpush.msra.mxu0 0.0
    %4207 = vmatpush.msra.mxu0 0.0
    %4208 = vmatpush.msra.mxu0 0.0
    %4209 = vmatpush.msra.mxu0 0.0
    %4210 = vmatpush.msra.mxu0 0.0
    %4211 = vmatpush.msra.mxu0 0.0
    %v4212 = vand.u32 %v4166, 4294901760
    %v4213 = vsub.f32 %v4166, %v4212
    %v4214 = vand.u32 %v4213, 4294901760
    %v4215 = vsub.f32 %v4213, %v4214
    %v4216 = vand.u32 %v4215, 4294901760
    %4217 = vmatpush.msra.mxu0 %v4216
    %v4218 = vand.u32 %v4169, 4294901760
    %4219 = vmatmul.f32.gmra.mxu0 %v4218
    %v4220 = vpop.f32.mrf.mxu0
    %v4221 = vadd.f32 %v4195, %v4220
    %4222 = vdwg.mxu0
    %4223 = vmatpush.msra.mxu0 0.0
    %4224 = vmatpush.msra.mxu0 0.0
    %4225 = vmatpush.msra.mxu0 0.0
    %4226 = vmatpush.msra.mxu0 0.0
    %4227 = vmatpush.msra.mxu0 0.0
    %4228 = vmatpush.msra.mxu0 0.0
    %4229 = vmatpush.msra.mxu0 0.0
    %4230 = vmatpush.msra.mxu0 0.0
    %4231 = vmatpush.msra.mxu0 0.0
    %4232 = vmatpush.msra.mxu0 0.0
    %4233 = vmatpush.msra.mxu0 0.0
    %4234 = vmatpush.msra.mxu0 0.0
    %4235 = vmatpush.msra.mxu0 0.0
    %4236 = vmatpush.msra.mxu0 0.0
    %4237 = vmatpush.msra.mxu0 0.0
    %v4238 = vand.u32 %v4166, 4294901760
    %v4239 = vsub.f32 %v4166, %v4238
    %4240 = vmatpush.msra.mxu0 %v4239
    %v4241 = vand.u32 %v4169, 4294901760
    %v4242 = vsub.f32 %v4169, %v4241
    %4243 = vmatmul.f32.gmra.mxu0 %v4242
    %v4244 = vpop.f32.mrf.mxu0
    %v4245 = vadd.f32 %v4221, %v4244
    %4246 = vdwg.mxu0
    %4247 = vmatpush.msra.mxu0 0.0
    %4248 = vmatpush.msra.mxu0 0.0
    %4249 = vmatpush.msra.mxu0 0.0
    %4250 = vmatpush.msra.mxu0 0.0
    %4251 = vmatpush.msra.mxu0 0.0
    %4252 = vmatpush.msra.mxu0 0.0
    %4253 = vmatpush.msra.mxu0 0.0
    %4254 = vmatpush.msra.mxu0 0.0
    %4255 = vmatpush.msra.mxu0 0.0
    %4256 = vmatpush.msra.mxu0 0.0
    %4257 = vmatpush.msra.mxu0 0.0
    %4258 = vmatpush.msra.mxu0 0.0
    %4259 = vmatpush.msra.mxu0 0.0
    %4260 = vmatpush.msra.mxu0 0.0
    %4261 = vmatpush.msra.mxu0 0.0
    %v4262 = vand.u32 %v4166, 4294901760
    %4263 = vmatpush.msra.mxu0 %v4262
    %v4264 = vand.u32 %v4169, 4294901760
    %v4265 = vsub.f32 %v4169, %v4264
    %v4266 = vand.u32 %v4265, 4294901760
    %4267 = vmatmul.f32.gmra.mxu0 %v4266
    %v4268 = vpop.f32.mrf.mxu0
    %v4269 = vadd.f32 %v4245, %v4268
    %4270 = vdwg.mxu0
    %4271 = vmatpush.msra.mxu0 0.0
    %4272 = vmatpush.msra.mxu0 0.0
    %4273 = vmatpush.msra.mxu0 0.0
    %4274 = vmatpush.msra.mxu0 0.0
    %4275 = vmatpush.msra.mxu0 0.0
    %4276 = vmatpush.msra.mxu0 0.0
    %4277 = vmatpush.msra.mxu0 0.0
    %4278 = vmatpush.msra.mxu0 0.0
    %4279 = vmatpush.msra.mxu0 0.0
    %4280 = vmatpush.msra.mxu0 0.0
    %4281 = vmatpush.msra.mxu0 0.0
    %4282 = vmatpush.msra.mxu0 0.0
    %4283 = vmatpush.msra.mxu0 0.0
    %4284 = vmatpush.msra.mxu0 0.0
    %4285 = vmatpush.msra.mxu0 0.0
    %v4286 = vand.u32 %v4166, 4294901760
    %v4287 = vsub.f32 %v4166, %v4286
    %v4288 = vand.u32 %v4287, 4294901760
    %4289 = vmatpush.msra.mxu0 %v4288
    %v4290 = vand.u32 %v4169, 4294901760
    %4291 = vmatmul.f32.gmra.mxu0 %v4290
    %v4292 = vpop.f32.mrf.mxu0
    %v4293 = vadd.f32 %v4269, %v4292
    %4294 = vdwg.mxu0
    %4295 = vmatpush.msra.mxu0 0.0
    %4296 = vmatpush.msra.mxu0 0.0
    %4297 = vmatpush.msra.mxu0 0.0
    %4298 = vmatpush.msra.mxu0 0.0
    %4299 = vmatpush.msra.mxu0 0.0
    %4300 = vmatpush.msra.mxu0 0.0
    %4301 = vmatpush.msra.mxu0 0.0
    %4302 = vmatpush.msra.mxu0 0.0
    %4303 = vmatpush.msra.mxu0 0.0
    %4304 = vmatpush.msra.mxu0 0.0
    %4305 = vmatpush.msra.mxu0 0.0
    %4306 = vmatpush.msra.mxu0 0.0
    %4307 = vmatpush.msra.mxu0 0.0
    %4308 = vmatpush.msra.mxu0 0.0
    %4309 = vmatpush.msra.mxu0 0.0
    %v4310 = vand.u32 %v4166, 4294901760
    %4311 = vmatpush.msra.mxu0 %v4310
    %v4312 = vand.u32 %v4169, 4294901760
    %4313 = vmatmul.f32.gmra.mxu0 %v4312
    %v4314 = vpop.f32.mrf.mxu0
    %v4315 = vadd.f32 %v4293, %v4314
    %4316 = vdwg.mxu0
    %4317 = vmatpush.msra.mxu0 0.0
    %4318 = vmatpush.msra.mxu0 0.0
    %4319 = vmatpush.msra.mxu0 0.0
    %4320 = vmatpush.msra.mxu0 0.0
    %4321 = vmatpush.msra.mxu0 0.0
    %4322 = vmatpush.msra.mxu0 0.0
    %4323 = vmatpush.msra.mxu0 0.0
    %4324 = vmatpush.msra.mxu0 0.0
    %4325 = vmatpush.msra.mxu0 0.0
    %4326 = vmatpush.msra.mxu0 0.0
    %4327 = vmatpush.msra.mxu0 0.0
    %4328 = vmatpush.msra.mxu0 0.0
    %4329 = vmatpush.msra.mxu0 0.0
    %4330 = vmatpush.msra.mxu0 0.0
    %4331 = vmatpush.msra.mxu0 0.0
    %v4332 = vand.u32 %v4165, 4294901760
    %4333 = vmatpush.msra.mxu0 %v4332
    %v4334 = vand.u32 %v4169, 4294901760
    %v4335 = vsub.f32 %v4169, %v4334
    %v4336 = vand.u32 %v4335, 4294901760
    %v4337 = vsub.f32 %v4335, %v4336
    %v4338 = vand.u32 %v4337, 4294901760
    %4339 = vmatmul.f32.gmra.mxu0 %v4338
    %v4340 = vpop.f32.mrf.mxu0
    %v4341 = vadd.f32 0.0, %v4340
    %4342 = vdwg.mxu0
    %4343 = vmatpush.msra.mxu0 0.0
    %4344 = vmatpush.msra.mxu0 0.0
    %4345 = vmatpush.msra.mxu0 0.0
    %4346 = vmatpush.msra.mxu0 0.0
    %4347 = vmatpush.msra.mxu0 0.0
    %4348 = vmatpush.msra.mxu0 0.0
    %4349 = vmatpush.msra.mxu0 0.0
    %4350 = vmatpush.msra.mxu0 0.0
    %4351 = vmatpush.msra.mxu0 0.0
    %4352 = vmatpush.msra.mxu0 0.0
    %4353 = vmatpush.msra.mxu0 0.0
    %4354 = vmatpush.msra.mxu0 0.0
    %4355 = vmatpush.msra.mxu0 0.0
    %4356 = vmatpush.msra.mxu0 0.0
    %4357 = vmatpush.msra.mxu0 0.0
    %v4358 = vand.u32 %v4165, 4294901760
    %v4359 = vsub.f32 %v4165, %v4358
    %v4360 = vand.u32 %v4359, 4294901760
    %v4361 = vsub.f32 %v4359, %v4360
    %v4362 = vand.u32 %v4361, 4294901760
    %4363 = vmatpush.msra.mxu0 %v4362
    %v4364 = vand.u32 %v4169, 4294901760
    %4365 = vmatmul.f32.gmra.mxu0 %v4364
    %v4366 = vpop.f32.mrf.mxu0
    %v4367 = vadd.f32 %v4341, %v4366
    %4368 = vdwg.mxu0
    %4369 = vmatpush.msra.mxu0 0.0
    %4370 = vmatpush.msra.mxu0 0.0
    %4371 = vmatpush.msra.mxu0 0.0
    %4372 = vmatpush.msra.mxu0 0.0
    %4373 = vmatpush.msra.mxu0 0.0
    %4374 = vmatpush.msra.mxu0 0.0
    %4375 = vmatpush.msra.mxu0 0.0
    %4376 = vmatpush.msra.mxu0 0.0
    %4377 = vmatpush.msra.mxu0 0.0
    %4378 = vmatpush.msra.mxu0 0.0
    %4379 = vmatpush.msra.mxu0 0.0
    %4380 = vmatpush.msra.mxu0 0.0
    %4381 = vmatpush.msra.mxu0 0.0
    %4382 = vmatpush.msra.mxu0 0.0
    %4383 = vmatpush.msra.mxu0 0.0
    %v4384 = vand.u32 %v4165, 4294901760
    %v4385 = vsub.f32 %v4165, %v4384
    %4386 = vmatpush.msra.mxu0 %v4385
    %v4387 = vand.u32 %v4169, 4294901760
    %v4388 = vsub.f32 %v4169, %v4387
    %4389 = vmatmul.f32.gmra.mxu0 %v4388
    %v4390 = vpop.f32.mrf.mxu0
    %v4391 = vadd.f32 %v4367, %v4390
    %4392 = vdwg.mxu0
    %4393 = vmatpush.msra.mxu0 0.0
    %4394 = vmatpush.msra.mxu0 0.0
    %4395 = vmatpush.msra.mxu0 0.0
    %4396 = vmatpush.msra.mxu0 0.0
    %4397 = vmatpush.msra.mxu0 0.0
    %4398 = vmatpush.msra.mxu0 0.0
    %4399 = vmatpush.msra.mxu0 0.0
    %4400 = vmatpush.msra.mxu0 0.0
    %4401 = vmatpush.msra.mxu0 0.0
    %4402 = vmatpush.msra.mxu0 0.0
    %4403 = vmatpush.msra.mxu0 0.0
    %4404 = vmatpush.msra.mxu0 0.0
    %4405 = vmatpush.msra.mxu0 0.0
    %4406 = vmatpush.msra.mxu0 0.0
    %4407 = vmatpush.msra.mxu0 0.0
    %v4408 = vand.u32 %v4165, 4294901760
    %4409 = vmatpush.msra.mxu0 %v4408
    %v4410 = vand.u32 %v4169, 4294901760
    %v4411 = vsub.f32 %v4169, %v4410
    %v4412 = vand.u32 %v4411, 4294901760
    %4413 = vmatmul.f32.gmra.mxu0 %v4412
    %v4414 = vpop.f32.mrf.mxu0
    %v4415 = vadd.f32 %v4391, %v4414
    %4416 = vdwg.mxu0
    %4417 = vmatpush.msra.mxu0 0.0
    %4418 = vmatpush.msra.mxu0 0.0
    %4419 = vmatpush.msra.mxu0 0.0
    %4420 = vmatpush.msra.mxu0 0.0
    %4421 = vmatpush.msra.mxu0 0.0
    %4422 = vmatpush.msra.mxu0 0.0
    %4423 = vmatpush.msra.mxu0 0.0
    %4424 = vmatpush.msra.mxu0 0.0
    %4425 = vmatpush.msra.mxu0 0.0
    %4426 = vmatpush.msra.mxu0 0.0
    %4427 = vmatpush.msra.mxu0 0.0
    %4428 = vmatpush.msra.mxu0 0.0
    %4429 = vmatpush.msra.mxu0 0.0
    %4430 = vmatpush.msra.mxu0 0.0
    %4431 = vmatpush.msra.mxu0 0.0
    %v4432 = vand.u32 %v4165, 4294901760
    %v4433 = vsub.f32 %v4165, %v4432
    %v4434 = vand.u32 %v4433, 4294901760
    %4435 = vmatpush.msra.mxu0 %v4434
    %v4436 = vand.u32 %v4169, 4294901760
    %4437 = vmatmul.f32.gmra.mxu0 %v4436
    %v4438 = vpop.f32.mrf.mxu0
    %v4439 = vadd.f32 %v4415, %v4438
    %4440 = vdwg.mxu0
    %4441 = vmatpush.msra.mxu0 0.0
    %4442 = vmatpush.msra.mxu0 0.0
    %4443 = vmatpush.msra.mxu0 0.0
    %4444 = vmatpush.msra.mxu0 0.0
    %4445 = vmatpush.msra.mxu0 0.0
    %4446 = vmatpush.msra.mxu0 0.0
    %4447 = vmatpush.msra.mxu0 0.0
    %4448 = vmatpush.msra.mxu0 0.0
    %4449 = vmatpush.msra.mxu0 0.0
    %4450 = vmatpush.msra.mxu0 0.0
    %4451 = vmatpush.msra.mxu0 0.0
    %4452 = vmatpush.msra.mxu0 0.0
    %4453 = vmatpush.msra.mxu0 0.0
    %4454 = vmatpush.msra.mxu0 0.0
    %4455 = vmatpush.msra.mxu0 0.0
    %v4456 = vand.u32 %v4165, 4294901760
    %4457 = vmatpush.msra.mxu0 %v4456
    %v4458 = vand.u32 %v4169, 4294901760
    %4459 = vmatmul.f32.gmra.mxu0 %v4458
    %v4460 = vpop.f32.mrf.mxu0
    %v4461 = vadd.f32 %v4439, %v4460
    %4462 = vdwg.mxu0
    %4463 = vmatpush.msra.mxu0 0.0
    %4464 = vmatpush.msra.mxu0 0.0
    %4465 = vmatpush.msra.mxu0 0.0
    %4466 = vmatpush.msra.mxu0 0.0
    %4467 = vmatpush.msra.mxu0 0.0
    %4468 = vmatpush.msra.mxu0 0.0
    %4469 = vmatpush.msra.mxu0 0.0
    %4470 = vmatpush.msra.mxu0 0.0
    %4471 = vmatpush.msra.mxu0 0.0
    %4472 = vmatpush.msra.mxu0 0.0
    %4473 = vmatpush.msra.mxu0 0.0
    %4474 = vmatpush.msra.mxu0 0.0
    %4475 = vmatpush.msra.mxu0 0.0
    %4476 = vmatpush.msra.mxu0 0.0
    %4477 = vmatpush.msra.mxu0 0.0
    %v4478 = vand.u32 %v4164, 4294901760
    %4479 = vmatpush.msra.mxu0 %v4478
    %v4480 = vand.u32 %v4169, 4294901760
    %v4481 = vsub.f32 %v4169, %v4480
    %v4482 = vand.u32 %v4481, 4294901760
    %v4483 = vsub.f32 %v4481, %v4482
    %v4484 = vand.u32 %v4483, 4294901760
    %4485 = vmatmul.f32.gmra.mxu0 %v4484
    %v4486 = vpop.f32.mrf.mxu0
    %v4487 = vadd.f32 0.0, %v4486
    %4488 = vdwg.mxu0
    %4489 = vmatpush.msra.mxu0 0.0
    %4490 = vmatpush.msra.mxu0 0.0
    %4491 = vmatpush.msra.mxu0 0.0
    %4492 = vmatpush.msra.mxu0 0.0
    %4493 = vmatpush.msra.mxu0 0.0
    %4494 = vmatpush.msra.mxu0 0.0
    %4495 = vmatpush.msra.mxu0 0.0
    %4496 = vmatpush.msra.mxu0 0.0
    %4497 = vmatpush.msra.mxu0 0.0
    %4498 = vmatpush.msra.mxu0 0.0
    %4499 = vmatpush.msra.mxu0 0.0
    %4500 = vmatpush.msra.mxu0 0.0
    %4501 = vmatpush.msra.mxu0 0.0
    %4502 = vmatpush.msra.mxu0 0.0
    %4503 = vmatpush.msra.mxu0 0.0
    %v4504 = vand.u32 %v4164, 4294901760
    %v4505 = vsub.f32 %v4164, %v4504
    %v4506 = vand.u32 %v4505, 4294901760
    %v4507 = vsub.f32 %v4505, %v4506
    %v4508 = vand.u32 %v4507, 4294901760
    %4509 = vmatpush.msra.mxu0 %v4508
    %v4510 = vand.u32 %v4169, 4294901760
    %4511 = vmatmul.f32.gmra.mxu0 %v4510
    %v4512 = vpop.f32.mrf.mxu0
    %v4513 = vadd.f32 %v4487, %v4512
    %4514 = vdwg.mxu0
    %4515 = vmatpush.msra.mxu0 0.0
    %4516 = vmatpush.msra.mxu0 0.0
    %4517 = vmatpush.msra.mxu0 0.0
    %4518 = vmatpush.msra.mxu0 0.0
    %4519 = vmatpush.msra.mxu0 0.0
    %4520 = vmatpush.msra.mxu0 0.0
    %4521 = vmatpush.msra.mxu0 0.0
    %4522 = vmatpush.msra.mxu0 0.0
    %4523 = vmatpush.msra.mxu0 0.0
    %4524 = vmatpush.msra.mxu0 0.0
    %4525 = vmatpush.msra.mxu0 0.0
    %4526 = vmatpush.msra.mxu0 0.0
    %4527 = vmatpush.msra.mxu0 0.0
    %4528 = vmatpush.msra.mxu0 0.0
    %4529 = vmatpush.msra.mxu0 0.0
    %v4530 = vand.u32 %v4164, 4294901760
    %v4531 = vsub.f32 %v4164, %v4530
    %4532 = vmatpush.msra.mxu0 %v4531
    %v4533 = vand.u32 %v4169, 4294901760
    %v4534 = vsub.f32 %v4169, %v4533
    %4535 = vmatmul.f32.gmra.mxu0 %v4534
    %v4536 = vpop.f32.mrf.mxu0
    %v4537 = vadd.f32 %v4513, %v4536
    %4538 = vdwg.mxu0
    %4539 = vmatpush.msra.mxu0 0.0
    %4540 = vmatpush.msra.mxu0 0.0
    %4541 = vmatpush.msra.mxu0 0.0
    %4542 = vmatpush.msra.mxu0 0.0
    %4543 = vmatpush.msra.mxu0 0.0
    %4544 = vmatpush.msra.mxu0 0.0
    %4545 = vmatpush.msra.mxu0 0.0
    %4546 = vmatpush.msra.mxu0 0.0
    %4547 = vmatpush.msra.mxu0 0.0
    %4548 = vmatpush.msra.mxu0 0.0
    %4549 = vmatpush.msra.mxu0 0.0
    %4550 = vmatpush.msra.mxu0 0.0
    %4551 = vmatpush.msra.mxu0 0.0
    %4552 = vmatpush.msra.mxu0 0.0
    %4553 = vmatpush.msra.mxu0 0.0
    %v4554 = vand.u32 %v4164, 4294901760
    %4555 = vmatpush.msra.mxu0 %v4554
    %v4556 = vand.u32 %v4169, 4294901760
    %v4557 = vsub.f32 %v4169, %v4556
    %v4558 = vand.u32 %v4557, 4294901760
    %4559 = vmatmul.f32.gmra.mxu0 %v4558
    %v4560 = vpop.f32.mrf.mxu0
    %v4561 = vadd.f32 %v4537, %v4560
    %4562 = vdwg.mxu0
    %4563 = vmatpush.msra.mxu0 0.0
    %4564 = vmatpush.msra.mxu0 0.0
    %4565 = vmatpush.msra.mxu0 0.0
    %4566 = vmatpush.msra.mxu0 0.0
    %4567 = vmatpush.msra.mxu0 0.0
    %4568 = vmatpush.msra.mxu0 0.0
    %4569 = vmatpush.msra.mxu0 0.0
    %4570 = vmatpush.msra.mxu0 0.0
    %4571 = vmatpush.msra.mxu0 0.0
    %4572 = vmatpush.msra.mxu0 0.0
    %4573 = vmatpush.msra.mxu0 0.0
    %4574 = vmatpush.msra.mxu0 0.0
    %4575 = vmatpush.msra.mxu0 0.0
    %4576 = vmatpush.msra.mxu0 0.0
    %4577 = vmatpush.msra.mxu0 0.0
    %v4578 = vand.u32 %v4164, 4294901760
    %v4579 = vsub.f32 %v4164, %v4578
    %v4580 = vand.u32 %v4579, 4294901760
    %4581 = vmatpush.msra.mxu0 %v4580
    %v4582 = vand.u32 %v4169, 4294901760
    %4583 = vmatmul.f32.gmra.mxu0 %v4582
    %v4584 = vpop.f32.mrf.mxu0
    %v4585 = vadd.f32 %v4561, %v4584
    %4586 = vdwg.mxu0
    %4587 = vmatpush.msra.mxu0 0.0
    %4588 = vmatpush.msra.mxu0 0.0
    %4589 = vmatpush.msra.mxu0 0.0
    %4590 = vmatpush.msra.mxu0 0.0
    %4591 = vmatpush.msra.mxu0 0.0
    %4592 = vmatpush.msra.mxu0 0.0
    %4593 = vmatpush.msra.mxu0 0.0
    %4594 = vmatpush.msra.mxu0 0.0
    %4595 = vmatpush.msra.mxu0 0.0
    %4596 = vmatpush.msra.mxu0 0.0
    %4597 = vmatpush.msra.mxu0 0.0
    %4598 = vmatpush.msra.mxu0 0.0
    %4599 = vmatpush.msra.mxu0 0.0
    %4600 = vmatpush.msra.mxu0 0.0
    %4601 = vmatpush.msra.mxu0 0.0
    %v4602 = vand.u32 %v4164, 4294901760
    %4603 = vmatpush.msra.mxu0 %v4602
    %v4604 = vand.u32 %v4169, 4294901760
    %4605 = vmatmul.f32.gmra.mxu0 %v4604
    %v4606 = vpop.f32.mrf.mxu0
    %v4607 = vadd.f32 %v4585, %v4606
    %4608 = vdwg.mxu0
    %v4609 = vadd.f32 %v4153, %v4315
    %v4610 = vadd.f32 %v4154, %v4461
    %v4611 = vadd.f32 %v4155, %v4607
    %4612 = vrot.lane.b32.xlu0 0.0, 18
    %v4613 = vpop.permute.xlu0 %4612
    %4614 = vrot.lane.b32.xlu0 %v4150, 18
    %v4615 = vpop.permute.xlu0 %4614
    %4616 = vrot.lane.b32.xlu0 %v4151, 18
    %v4617 = vpop.permute.xlu0 %4616
    %4618 = vrot.lane.b32.xlu0 %v4152, 18
    %v4619 = vpop.permute.xlu0 %4618
    %v4620 = vsel %vm503, %v4617, %v4619
    %v4621 = vsel %vm503, %v4615, %v4617
    %v4622 = vsel %vm503, %v4613, %v4615
    %s4623 = scalar_lea.vmem %s3, 8
    %v4624 = vld [vmem:[%s4623] sm:$0xff]
    %v4626 = vsel %vm50, %v4624, 0
    %4628 = vmatpush.msra.mxu0 0.0
    %4629 = vmatpush.msra.mxu0 0.0
    %4630 = vmatpush.msra.mxu0 0.0
    %4631 = vmatpush.msra.mxu0 0.0
    %4632 = vmatpush.msra.mxu0 0.0
    %4633 = vmatpush.msra.mxu0 0.0
    %4634 = vmatpush.msra.mxu0 0.0
    %4635 = vmatpush.msra.mxu0 0.0
    %4636 = vmatpush.msra.mxu0 0.0
    %4637 = vmatpush.msra.mxu0 0.0
    %4638 = vmatpush.msra.mxu0 0.0
    %4639 = vmatpush.msra.mxu0 0.0
    %4640 = vmatpush.msra.mxu0 0.0
    %4641 = vmatpush.msra.mxu0 0.0
    %4642 = vmatpush.msra.mxu0 0.0
    %v4643 = vand.u32 %v4622, 4294901760
    %4644 = vmatpush.msra.mxu0 %v4643
    %v4645 = vand.u32 %v4626, 4294901760
    %v4646 = vsub.f32 %v4626, %v4645
    %v4647 = vand.u32 %v4646, 4294901760
    %v4648 = vsub.f32 %v4646, %v4647
    %v4649 = vand.u32 %v4648, 4294901760
    %4650 = vmatmul.f32.gmra.mxu0 %v4649
    %v4651 = vpop.f32.mrf.mxu0
    %v4652 = vadd.f32 0.0, %v4651
    %4653 = vdwg.mxu0
    %4654 = vmatpush.msra.mxu0 0.0
    %4655 = vmatpush.msra.mxu0 0.0
    %4656 = vmatpush.msra.mxu0 0.0
    %4657 = vmatpush.msra.mxu0 0.0
    %4658 = vmatpush.msra.mxu0 0.0
    %4659 = vmatpush.msra.mxu0 0.0
    %4660 = vmatpush.msra.mxu0 0.0
    %4661 = vmatpush.msra.mxu0 0.0
    %4662 = vmatpush.msra.mxu0 0.0
    %4663 = vmatpush.msra.mxu0 0.0
    %4664 = vmatpush.msra.mxu0 0.0
    %4665 = vmatpush.msra.mxu0 0.0
    %4666 = vmatpush.msra.mxu0 0.0
    %4667 = vmatpush.msra.mxu0 0.0
    %4668 = vmatpush.msra.mxu0 0.0
    %v4669 = vand.u32 %v4622, 4294901760
    %v4670 = vsub.f32 %v4622, %v4669
    %v4671 = vand.u32 %v4670, 4294901760
    %v4672 = vsub.f32 %v4670, %v4671
    %v4673 = vand.u32 %v4672, 4294901760
    %4674 = vmatpush.msra.mxu0 %v4673
    %v4675 = vand.u32 %v4626, 4294901760
    %4676 = vmatmul.f32.gmra.mxu0 %v4675
    %v4677 = vpop.f32.mrf.mxu0
    %v4678 = vadd.f32 %v4652, %v4677
    %4679 = vdwg.mxu0
    %4680 = vmatpush.msra.mxu0 0.0
    %4681 = vmatpush.msra.mxu0 0.0
    %4682 = vmatpush.msra.mxu0 0.0
    %4683 = vmatpush.msra.mxu0 0.0
    %4684 = vmatpush.msra.mxu0 0.0
    %4685 = vmatpush.msra.mxu0 0.0
    %4686 = vmatpush.msra.mxu0 0.0
    %4687 = vmatpush.msra.mxu0 0.0
    %4688 = vmatpush.msra.mxu0 0.0
    %4689 = vmatpush.msra.mxu0 0.0
    %4690 = vmatpush.msra.mxu0 0.0
    %4691 = vmatpush.msra.mxu0 0.0
    %4692 = vmatpush.msra.mxu0 0.0
    %4693 = vmatpush.msra.mxu0 0.0
    %4694 = vmatpush.msra.mxu0 0.0
    %v4695 = vand.u32 %v4622, 4294901760
    %v4696 = vsub.f32 %v4622, %v4695
    %4697 = vmatpush.msra.mxu0 %v4696
    %v4698 = vand.u32 %v4626, 4294901760
    %v4699 = vsub.f32 %v4626, %v4698
    %4700 = vmatmul.f32.gmra.mxu0 %v4699
    %v4701 = vpop.f32.mrf.mxu0
    %v4702 = vadd.f32 %v4678, %v4701
    %4703 = vdwg.mxu0
    %4704 = vmatpush.msra.mxu0 0.0
    %4705 = vmatpush.msra.mxu0 0.0
    %4706 = vmatpush.msra.mxu0 0.0
    %4707 = vmatpush.msra.mxu0 0.0
    %4708 = vmatpush.msra.mxu0 0.0
    %4709 = vmatpush.msra.mxu0 0.0
    %4710 = vmatpush.msra.mxu0 0.0
    %4711 = vmatpush.msra.mxu0 0.0
    %4712 = vmatpush.msra.mxu0 0.0
    %4713 = vmatpush.msra.mxu0 0.0
    %4714 = vmatpush.msra.mxu0 0.0
    %4715 = vmatpush.msra.mxu0 0.0
    %4716 = vmatpush.msra.mxu0 0.0
    %4717 = vmatpush.msra.mxu0 0.0
    %4718 = vmatpush.msra.mxu0 0.0
    %v4719 = vand.u32 %v4622, 4294901760
    %4720 = vmatpush.msra.mxu0 %v4719
    %v4721 = vand.u32 %v4626, 4294901760
    %v4722 = vsub.f32 %v4626, %v4721
    %v4723 = vand.u32 %v4722, 4294901760
    %4724 = vmatmul.f32.gmra.mxu0 %v4723
    %v4725 = vpop.f32.mrf.mxu0
    %v4726 = vadd.f32 %v4702, %v4725
    %4727 = vdwg.mxu0
    %4728 = vmatpush.msra.mxu0 0.0
    %4729 = vmatpush.msra.mxu0 0.0
    %4730 = vmatpush.msra.mxu0 0.0
    %4731 = vmatpush.msra.mxu0 0.0
    %4732 = vmatpush.msra.mxu0 0.0
    %4733 = vmatpush.msra.mxu0 0.0
    %4734 = vmatpush.msra.mxu0 0.0
    %4735 = vmatpush.msra.mxu0 0.0
    %4736 = vmatpush.msra.mxu0 0.0
    %4737 = vmatpush.msra.mxu0 0.0
    %4738 = vmatpush.msra.mxu0 0.0
    %4739 = vmatpush.msra.mxu0 0.0
    %4740 = vmatpush.msra.mxu0 0.0
    %4741 = vmatpush.msra.mxu0 0.0
    %4742 = vmatpush.msra.mxu0 0.0
    %v4743 = vand.u32 %v4622, 4294901760
    %v4744 = vsub.f32 %v4622, %v4743
    %v4745 = vand.u32 %v4744, 4294901760
    %4746 = vmatpush.msra.mxu0 %v4745
    %v4747 = vand.u32 %v4626, 4294901760
    %4748 = vmatmul.f32.gmra.mxu0 %v4747
    %v4749 = vpop.f32.mrf.mxu0
    %v4750 = vadd.f32 %v4726, %v4749
    %4751 = vdwg.mxu0
    %4752 = vmatpush.msra.mxu0 0.0
    %4753 = vmatpush.msra.mxu0 0.0
    %4754 = vmatpush.msra.mxu0 0.0
    %4755 = vmatpush.msra.mxu0 0.0
    %4756 = vmatpush.msra.mxu0 0.0
    %4757 = vmatpush.msra.mxu0 0.0
    %4758 = vmatpush.msra.mxu0 0.0
    %4759 = vmatpush.msra.mxu0 0.0
    %4760 = vmatpush.msra.mxu0 0.0
    %4761 = vmatpush.msra.mxu0 0.0
    %4762 = vmatpush.msra.mxu0 0.0
    %4763 = vmatpush.msra.mxu0 0.0
    %4764 = vmatpush.msra.mxu0 0.0
    %4765 = vmatpush.msra.mxu0 0.0
    %4766 = vmatpush.msra.mxu0 0.0
    %v4767 = vand.u32 %v4622, 4294901760
    %4768 = vmatpush.msra.mxu0 %v4767
    %v4769 = vand.u32 %v4626, 4294901760
    %4770 = vmatmul.f32.gmra.mxu0 %v4769
    %v4771 = vpop.f32.mrf.mxu0
    %v4772 = vadd.f32 %v4750, %v4771
    %4773 = vdwg.mxu0
    %4774 = vmatpush.msra.mxu0 0.0
    %4775 = vmatpush.msra.mxu0 0.0
    %4776 = vmatpush.msra.mxu0 0.0
    %4777 = vmatpush.msra.mxu0 0.0
    %4778 = vmatpush.msra.mxu0 0.0
    %4779 = vmatpush.msra.mxu0 0.0
    %4780 = vmatpush.msra.mxu0 0.0
    %4781 = vmatpush.msra.mxu0 0.0
    %4782 = vmatpush.msra.mxu0 0.0
    %4783 = vmatpush.msra.mxu0 0.0
    %4784 = vmatpush.msra.mxu0 0.0
    %4785 = vmatpush.msra.mxu0 0.0
    %4786 = vmatpush.msra.mxu0 0.0
    %4787 = vmatpush.msra.mxu0 0.0
    %4788 = vmatpush.msra.mxu0 0.0
    %v4789 = vand.u32 %v4621, 4294901760
    %4790 = vmatpush.msra.mxu0 %v4789
    %v4791 = vand.u32 %v4626, 4294901760
    %v4792 = vsub.f32 %v4626, %v4791
    %v4793 = vand.u32 %v4792, 4294901760
    %v4794 = vsub.f32 %v4792, %v4793
    %v4795 = vand.u32 %v4794, 4294901760
    %4796 = vmatmul.f32.gmra.mxu0 %v4795
    %v4797 = vpop.f32.mrf.mxu0
    %v4798 = vadd.f32 0.0, %v4797
    %4799 = vdwg.mxu0
    %4800 = vmatpush.msra.mxu0 0.0
    %4801 = vmatpush.msra.mxu0 0.0
    %4802 = vmatpush.msra.mxu0 0.0
    %4803 = vmatpush.msra.mxu0 0.0
    %4804 = vmatpush.msra.mxu0 0.0
    %4805 = vmatpush.msra.mxu0 0.0
    %4806 = vmatpush.msra.mxu0 0.0
    %4807 = vmatpush.msra.mxu0 0.0
    %4808 = vmatpush.msra.mxu0 0.0
    %4809 = vmatpush.msra.mxu0 0.0
    %4810 = vmatpush.msra.mxu0 0.0
    %4811 = vmatpush.msra.mxu0 0.0
    %4812 = vmatpush.msra.mxu0 0.0
    %4813 = vmatpush.msra.mxu0 0.0
    %4814 = vmatpush.msra.mxu0 0.0
    %v4815 = vand.u32 %v4621, 4294901760
    %v4816 = vsub.f32 %v4621, %v4815
    %v4817 = vand.u32 %v4816, 4294901760
    %v4818 = vsub.f32 %v4816, %v4817
    %v4819 = vand.u32 %v4818, 4294901760
    %4820 = vmatpush.msra.mxu0 %v4819
    %v4821 = vand.u32 %v4626, 4294901760
    %4822 = vmatmul.f32.gmra.mxu0 %v4821
    %v4823 = vpop.f32.mrf.mxu0
    %v4824 = vadd.f32 %v4798, %v4823
    %4825 = vdwg.mxu0
    %4826 = vmatpush.msra.mxu0 0.0
    %4827 = vmatpush.msra.mxu0 0.0
    %4828 = vmatpush.msra.mxu0 0.0
    %4829 = vmatpush.msra.mxu0 0.0
    %4830 = vmatpush.msra.mxu0 0.0
    %4831 = vmatpush.msra.mxu0 0.0
    %4832 = vmatpush.msra.mxu0 0.0
    %4833 = vmatpush.msra.mxu0 0.0
    %4834 = vmatpush.msra.mxu0 0.0
    %4835 = vmatpush.msra.mxu0 0.0
    %4836 = vmatpush.msra.mxu0 0.0
    %4837 = vmatpush.msra.mxu0 0.0
    %4838 = vmatpush.msra.mxu0 0.0
    %4839 = vmatpush.msra.mxu0 0.0
    %4840 = vmatpush.msra.mxu0 0.0
    %v4841 = vand.u32 %v4621, 4294901760
    %v4842 = vsub.f32 %v4621, %v4841
    %4843 = vmatpush.msra.mxu0 %v4842
    %v4844 = vand.u32 %v4626, 4294901760
    %v4845 = vsub.f32 %v4626, %v4844
    %4846 = vmatmul.f32.gmra.mxu0 %v4845
    %v4847 = vpop.f32.mrf.mxu0
    %v4848 = vadd.f32 %v4824, %v4847
    %4849 = vdwg.mxu0
    %4850 = vmatpush.msra.mxu0 0.0
    %4851 = vmatpush.msra.mxu0 0.0
    %4852 = vmatpush.msra.mxu0 0.0
    %4853 = vmatpush.msra.mxu0 0.0
    %4854 = vmatpush.msra.mxu0 0.0
    %4855 = vmatpush.msra.mxu0 0.0
    %4856 = vmatpush.msra.mxu0 0.0
    %4857 = vmatpush.msra.mxu0 0.0
    %4858 = vmatpush.msra.mxu0 0.0
    %4859 = vmatpush.msra.mxu0 0.0
    %4860 = vmatpush.msra.mxu0 0.0
    %4861 = vmatpush.msra.mxu0 0.0
    %4862 = vmatpush.msra.mxu0 0.0
    %4863 = vmatpush.msra.mxu0 0.0
    %4864 = vmatpush.msra.mxu0 0.0
    %v4865 = vand.u32 %v4621, 4294901760
    %4866 = vmatpush.msra.mxu0 %v4865
    %v4867 = vand.u32 %v4626, 4294901760
    %v4868 = vsub.f32 %v4626, %v4867
    %v4869 = vand.u32 %v4868, 4294901760
    %4870 = vmatmul.f32.gmra.mxu0 %v4869
    %v4871 = vpop.f32.mrf.mxu0
    %v4872 = vadd.f32 %v4848, %v4871
    %4873 = vdwg.mxu0
    %4874 = vmatpush.msra.mxu0 0.0
    %4875 = vmatpush.msra.mxu0 0.0
    %4876 = vmatpush.msra.mxu0 0.0
    %4877 = vmatpush.msra.mxu0 0.0
    %4878 = vmatpush.msra.mxu0 0.0
    %4879 = vmatpush.msra.mxu0 0.0
    %4880 = vmatpush.msra.mxu0 0.0
    %4881 = vmatpush.msra.mxu0 0.0
    %4882 = vmatpush.msra.mxu0 0.0
    %4883 = vmatpush.msra.mxu0 0.0
    %4884 = vmatpush.msra.mxu0 0.0
    %4885 = vmatpush.msra.mxu0 0.0
    %4886 = vmatpush.msra.mxu0 0.0
    %4887 = vmatpush.msra.mxu0 0.0
    %4888 = vmatpush.msra.mxu0 0.0
    %v4889 = vand.u32 %v4621, 4294901760
    %v4890 = vsub.f32 %v4621, %v4889
    %v4891 = vand.u32 %v4890, 4294901760
    %4892 = vmatpush.msra.mxu0 %v4891
    %v4893 = vand.u32 %v4626, 4294901760
    %4894 = vmatmul.f32.gmra.mxu0 %v4893
    %v4895 = vpop.f32.mrf.mxu0
    %v4896 = vadd.f32 %v4872, %v4895
    %4897 = vdwg.mxu0
    %4898 = vmatpush.msra.mxu0 0.0
    %4899 = vmatpush.msra.mxu0 0.0
    %4900 = vmatpush.msra.mxu0 0.0
    %4901 = vmatpush.msra.mxu0 0.0
    %4902 = vmatpush.msra.mxu0 0.0
    %4903 = vmatpush.msra.mxu0 0.0
    %4904 = vmatpush.msra.mxu0 0.0
    %4905 = vmatpush.msra.mxu0 0.0
    %4906 = vmatpush.msra.mxu0 0.0
    %4907 = vmatpush.msra.mxu0 0.0
    %4908 = vmatpush.msra.mxu0 0.0
    %4909 = vmatpush.msra.mxu0 0.0
    %4910 = vmatpush.msra.mxu0 0.0
    %4911 = vmatpush.msra.mxu0 0.0
    %4912 = vmatpush.msra.mxu0 0.0
    %v4913 = vand.u32 %v4621, 4294901760
    %4914 = vmatpush.msra.mxu0 %v4913
    %v4915 = vand.u32 %v4626, 4294901760
    %4916 = vmatmul.f32.gmra.mxu0 %v4915
    %v4917 = vpop.f32.mrf.mxu0
    %v4918 = vadd.f32 %v4896, %v4917
    %4919 = vdwg.mxu0
    %4920 = vmatpush.msra.mxu0 0.0
    %4921 = vmatpush.msra.mxu0 0.0
    %4922 = vmatpush.msra.mxu0 0.0
    %4923 = vmatpush.msra.mxu0 0.0
    %4924 = vmatpush.msra.mxu0 0.0
    %4925 = vmatpush.msra.mxu0 0.0
    %4926 = vmatpush.msra.mxu0 0.0
    %4927 = vmatpush.msra.mxu0 0.0
    %4928 = vmatpush.msra.mxu0 0.0
    %4929 = vmatpush.msra.mxu0 0.0
    %4930 = vmatpush.msra.mxu0 0.0
    %4931 = vmatpush.msra.mxu0 0.0
    %4932 = vmatpush.msra.mxu0 0.0
    %4933 = vmatpush.msra.mxu0 0.0
    %4934 = vmatpush.msra.mxu0 0.0
    %v4935 = vand.u32 %v4620, 4294901760
    %4936 = vmatpush.msra.mxu0 %v4935
    %v4937 = vand.u32 %v4626, 4294901760
    %v4938 = vsub.f32 %v4626, %v4937
    %v4939 = vand.u32 %v4938, 4294901760
    %v4940 = vsub.f32 %v4938, %v4939
    %v4941 = vand.u32 %v4940, 4294901760
    %4942 = vmatmul.f32.gmra.mxu0 %v4941
    %v4943 = vpop.f32.mrf.mxu0
    %v4944 = vadd.f32 0.0, %v4943
    %4945 = vdwg.mxu0
    %4946 = vmatpush.msra.mxu0 0.0
    %4947 = vmatpush.msra.mxu0 0.0
    %4948 = vmatpush.msra.mxu0 0.0
    %4949 = vmatpush.msra.mxu0 0.0
    %4950 = vmatpush.msra.mxu0 0.0
    %4951 = vmatpush.msra.mxu0 0.0
    %4952 = vmatpush.msra.mxu0 0.0
    %4953 = vmatpush.msra.mxu0 0.0
    %4954 = vmatpush.msra.mxu0 0.0
    %4955 = vmatpush.msra.mxu0 0.0
    %4956 = vmatpush.msra.mxu0 0.0
    %4957 = vmatpush.msra.mxu0 0.0
    %4958 = vmatpush.msra.mxu0 0.0
    %4959 = vmatpush.msra.mxu0 0.0
    %4960 = vmatpush.msra.mxu0 0.0
    %v4961 = vand.u32 %v4620, 4294901760
    %v4962 = vsub.f32 %v4620, %v4961
    %v4963 = vand.u32 %v4962, 4294901760
    %v4964 = vsub.f32 %v4962, %v4963
    %v4965 = vand.u32 %v4964, 4294901760
    %4966 = vmatpush.msra.mxu0 %v4965
    %v4967 = vand.u32 %v4626, 4294901760
    %4968 = vmatmul.f32.gmra.mxu0 %v4967
    %v4969 = vpop.f32.mrf.mxu0
    %v4970 = vadd.f32 %v4944, %v4969
    %4971 = vdwg.mxu0
    %4972 = vmatpush.msra.mxu0 0.0
    %4973 = vmatpush.msra.mxu0 0.0
    %4974 = vmatpush.msra.mxu0 0.0
    %4975 = vmatpush.msra.mxu0 0.0
    %4976 = vmatpush.msra.mxu0 0.0
    %4977 = vmatpush.msra.mxu0 0.0
    %4978 = vmatpush.msra.mxu0 0.0
    %4979 = vmatpush.msra.mxu0 0.0
    %4980 = vmatpush.msra.mxu0 0.0
    %4981 = vmatpush.msra.mxu0 0.0
    %4982 = vmatpush.msra.mxu0 0.0
    %4983 = vmatpush.msra.mxu0 0.0
    %4984 = vmatpush.msra.mxu0 0.0
    %4985 = vmatpush.msra.mxu0 0.0
    %4986 = vmatpush.msra.mxu0 0.0
    %v4987 = vand.u32 %v4620, 4294901760
    %v4988 = vsub.f32 %v4620, %v4987
    %4989 = vmatpush.msra.mxu0 %v4988
    %v4990 = vand.u32 %v4626, 4294901760
    %v4991 = vsub.f32 %v4626, %v4990
    %4992 = vmatmul.f32.gmra.mxu0 %v4991
    %v4993 = vpop.f32.mrf.mxu0
    %v4994 = vadd.f32 %v4970, %v4993
    %4995 = vdwg.mxu0
    %4996 = vmatpush.msra.mxu0 0.0
    %4997 = vmatpush.msra.mxu0 0.0
    %4998 = vmatpush.msra.mxu0 0.0
    %4999 = vmatpush.msra.mxu0 0.0
    %5000 = vmatpush.msra.mxu0 0.0
    %5001 = vmatpush.msra.mxu0 0.0
    %5002 = vmatpush.msra.mxu0 0.0
    %5003 = vmatpush.msra.mxu0 0.0
    %5004 = vmatpush.msra.mxu0 0.0
    %5005 = vmatpush.msra.mxu0 0.0
    %5006 = vmatpush.msra.mxu0 0.0
    %5007 = vmatpush.msra.mxu0 0.0
    %5008 = vmatpush.msra.mxu0 0.0
    %5009 = vmatpush.msra.mxu0 0.0
    %5010 = vmatpush.msra.mxu0 0.0
    %v5011 = vand.u32 %v4620, 4294901760
    %5012 = vmatpush.msra.mxu0 %v5011
    %v5013 = vand.u32 %v4626, 4294901760
    %v5014 = vsub.f32 %v4626, %v5013
    %v5015 = vand.u32 %v5014, 4294901760
    %5016 = vmatmul.f32.gmra.mxu0 %v5015
    %v5017 = vpop.f32.mrf.mxu0
    %v5018 = vadd.f32 %v4994, %v5017
    %5019 = vdwg.mxu0
    %5020 = vmatpush.msra.mxu0 0.0
    %5021 = vmatpush.msra.mxu0 0.0
    %5022 = vmatpush.msra.mxu0 0.0
    %5023 = vmatpush.msra.mxu0 0.0
    %5024 = vmatpush.msra.mxu0 0.0
    %5025 = vmatpush.msra.mxu0 0.0
    %5026 = vmatpush.msra.mxu0 0.0
    %5027 = vmatpush.msra.mxu0 0.0
    %5028 = vmatpush.msra.mxu0 0.0
    %5029 = vmatpush.msra.mxu0 0.0
    %5030 = vmatpush.msra.mxu0 0.0
    %5031 = vmatpush.msra.mxu0 0.0
    %5032 = vmatpush.msra.mxu0 0.0
    %5033 = vmatpush.msra.mxu0 0.0
    %5034 = vmatpush.msra.mxu0 0.0
    %v5035 = vand.u32 %v4620, 4294901760
    %v5036 = vsub.f32 %v4620, %v5035
    %v5037 = vand.u32 %v5036, 4294901760
    %5038 = vmatpush.msra.mxu0 %v5037
    %v5039 = vand.u32 %v4626, 4294901760
    %5040 = vmatmul.f32.gmra.mxu0 %v5039
    %v5041 = vpop.f32.mrf.mxu0
    %v5042 = vadd.f32 %v5018, %v5041
    %5043 = vdwg.mxu0
    %5044 = vmatpush.msra.mxu0 0.0
    %5045 = vmatpush.msra.mxu0 0.0
    %5046 = vmatpush.msra.mxu0 0.0
    %5047 = vmatpush.msra.mxu0 0.0
    %5048 = vmatpush.msra.mxu0 0.0
    %5049 = vmatpush.msra.mxu0 0.0
    %5050 = vmatpush.msra.mxu0 0.0
    %5051 = vmatpush.msra.mxu0 0.0
    %5052 = vmatpush.msra.mxu0 0.0
    %5053 = vmatpush.msra.mxu0 0.0
    %5054 = vmatpush.msra.mxu0 0.0
    %5055 = vmatpush.msra.mxu0 0.0
    %5056 = vmatpush.msra.mxu0 0.0
    %5057 = vmatpush.msra.mxu0 0.0
    %5058 = vmatpush.msra.mxu0 0.0
    %v5059 = vand.u32 %v4620, 4294901760
    %5060 = vmatpush.msra.mxu0 %v5059
    %v5061 = vand.u32 %v4626, 4294901760
    %5062 = vmatmul.f32.gmra.mxu0 %v5061
    %v5063 = vpop.f32.mrf.mxu0
    %v5064 = vadd.f32 %v5042, %v5063
    %5065 = vdwg.mxu0
    %v5066 = vadd.f32 %v4609, %v4772
    %v5067 = vadd.f32 %v4610, %v4918
    %v5068 = vadd.f32 %v4611, %v5064
    %5069 = vrot.lane.b32.xlu0 0.0, 17
    %v5070 = vpop.permute.xlu0 %5069
    %5071 = vrot.lane.b32.xlu0 %v4150, 17
    %v5072 = vpop.permute.xlu0 %5071
    %5073 = vrot.lane.b32.xlu0 %v4151, 17
    %v5074 = vpop.permute.xlu0 %5073
    %5075 = vrot.lane.b32.xlu0 %v4152, 17
    %v5076 = vpop.permute.xlu0 %5075
    %v5077 = vsel %vm961, %v5074, %v5076
    %v5078 = vsel %vm961, %v5072, %v5074
    %v5079 = vsel %vm961, %v5070, %v5072
    %s5080 = scalar_lea.vmem %s3, 16
    %v5081 = vld [vmem:[%s5080] sm:$0xff]
    %v5083 = vsel %vm50, %v5081, 0
    %5085 = vmatpush.msra.mxu0 0.0
    %5086 = vmatpush.msra.mxu0 0.0
    %5087 = vmatpush.msra.mxu0 0.0
    %5088 = vmatpush.msra.mxu0 0.0
    %5089 = vmatpush.msra.mxu0 0.0
    %5090 = vmatpush.msra.mxu0 0.0
    %5091 = vmatpush.msra.mxu0 0.0
    %5092 = vmatpush.msra.mxu0 0.0
    %5093 = vmatpush.msra.mxu0 0.0
    %5094 = vmatpush.msra.mxu0 0.0
    %5095 = vmatpush.msra.mxu0 0.0
    %5096 = vmatpush.msra.mxu0 0.0
    %5097 = vmatpush.msra.mxu0 0.0
    %5098 = vmatpush.msra.mxu0 0.0
    %5099 = vmatpush.msra.mxu0 0.0
    %v5100 = vand.u32 %v5079, 4294901760
    %5101 = vmatpush.msra.mxu0 %v5100
    %v5102 = vand.u32 %v5083, 4294901760
    %v5103 = vsub.f32 %v5083, %v5102
    %v5104 = vand.u32 %v5103, 4294901760
    %v5105 = vsub.f32 %v5103, %v5104
    %v5106 = vand.u32 %v5105, 4294901760
    %5107 = vmatmul.f32.gmra.mxu0 %v5106
    %v5108 = vpop.f32.mrf.mxu0
    %v5109 = vadd.f32 0.0, %v5108
    %5110 = vdwg.mxu0
    %5111 = vmatpush.msra.mxu0 0.0
    %5112 = vmatpush.msra.mxu0 0.0
    %5113 = vmatpush.msra.mxu0 0.0
    %5114 = vmatpush.msra.mxu0 0.0
    %5115 = vmatpush.msra.mxu0 0.0
    %5116 = vmatpush.msra.mxu0 0.0
    %5117 = vmatpush.msra.mxu0 0.0
    %5118 = vmatpush.msra.mxu0 0.0
    %5119 = vmatpush.msra.mxu0 0.0
    %5120 = vmatpush.msra.mxu0 0.0
    %5121 = vmatpush.msra.mxu0 0.0
    %5122 = vmatpush.msra.mxu0 0.0
    %5123 = vmatpush.msra.mxu0 0.0
    %5124 = vmatpush.msra.mxu0 0.0
    %5125 = vmatpush.msra.mxu0 0.0
    %v5126 = vand.u32 %v5079, 4294901760
    %v5127 = vsub.f32 %v5079, %v5126
    %v5128 = vand.u32 %v5127, 4294901760
    %v5129 = vsub.f32 %v5127, %v5128
    %v5130 = vand.u32 %v5129, 4294901760
    %5131 = vmatpush.msra.mxu0 %v5130
    %v5132 = vand.u32 %v5083, 4294901760
    %5133 = vmatmul.f32.gmra.mxu0 %v5132
    %v5134 = vpop.f32.mrf.mxu0
    %v5135 = vadd.f32 %v5109, %v5134
    %5136 = vdwg.mxu0
    %5137 = vmatpush.msra.mxu0 0.0
    %5138 = vmatpush.msra.mxu0 0.0
    %5139 = vmatpush.msra.mxu0 0.0
    %5140 = vmatpush.msra.mxu0 0.0
    %5141 = vmatpush.msra.mxu0 0.0
    %5142 = vmatpush.msra.mxu0 0.0
    %5143 = vmatpush.msra.mxu0 0.0
    %5144 = vmatpush.msra.mxu0 0.0
    %5145 = vmatpush.msra.mxu0 0.0
    %5146 = vmatpush.msra.mxu0 0.0
    %5147 = vmatpush.msra.mxu0 0.0
    %5148 = vmatpush.msra.mxu0 0.0
    %5149 = vmatpush.msra.mxu0 0.0
    %5150 = vmatpush.msra.mxu0 0.0
    %5151 = vmatpush.msra.mxu0 0.0
    %v5152 = vand.u32 %v5079, 4294901760
    %v5153 = vsub.f32 %v5079, %v5152
    %5154 = vmatpush.msra.mxu0 %v5153
    %v5155 = vand.u32 %v5083, 4294901760
    %v5156 = vsub.f32 %v5083, %v5155
    %5157 = vmatmul.f32.gmra.mxu0 %v5156
    %v5158 = vpop.f32.mrf.mxu0
    %v5159 = vadd.f32 %v5135, %v5158
    %5160 = vdwg.mxu0
    %5161 = vmatpush.msra.mxu0 0.0
    %5162 = vmatpush.msra.mxu0 0.0
    %5163 = vmatpush.msra.mxu0 0.0
    %5164 = vmatpush.msra.mxu0 0.0
    %5165 = vmatpush.msra.mxu0 0.0
    %5166 = vmatpush.msra.mxu0 0.0
    %5167 = vmatpush.msra.mxu0 0.0
    %5168 = vmatpush.msra.mxu0 0.0
    %5169 = vmatpush.msra.mxu0 0.0
    %5170 = vmatpush.msra.mxu0 0.0
    %5171 = vmatpush.msra.mxu0 0.0
    %5172 = vmatpush.msra.mxu0 0.0
    %5173 = vmatpush.msra.mxu0 0.0
    %5174 = vmatpush.msra.mxu0 0.0
    %5175 = vmatpush.msra.mxu0 0.0
    %v5176 = vand.u32 %v5079, 4294901760
    %5177 = vmatpush.msra.mxu0 %v5176
    %v5178 = vand.u32 %v5083, 4294901760
    %v5179 = vsub.f32 %v5083, %v5178
    %v5180 = vand.u32 %v5179, 4294901760
    %5181 = vmatmul.f32.gmra.mxu0 %v5180
    %v5182 = vpop.f32.mrf.mxu0
    %v5183 = vadd.f32 %v5159, %v5182
    %5184 = vdwg.mxu0
    %5185 = vmatpush.msra.mxu0 0.0
    %5186 = vmatpush.msra.mxu0 0.0
    %5187 = vmatpush.msra.mxu0 0.0
    %5188 = vmatpush.msra.mxu0 0.0
    %5189 = vmatpush.msra.mxu0 0.0
    %5190 = vmatpush.msra.mxu0 0.0
    %5191 = vmatpush.msra.mxu0 0.0
    %5192 = vmatpush.msra.mxu0 0.0
    %5193 = vmatpush.msra.mxu0 0.0
    %5194 = vmatpush.msra.mxu0 0.0
    %5195 = vmatpush.msra.mxu0 0.0
    %5196 = vmatpush.msra.mxu0 0.0
    %5197 = vmatpush.msra.mxu0 0.0
    %5198 = vmatpush.msra.mxu0 0.0
    %5199 = vmatpush.msra.mxu0 0.0
    %v5200 = vand.u32 %v5079, 4294901760
    %v5201 = vsub.f32 %v5079, %v5200
    %v5202 = vand.u32 %v5201, 4294901760
    %5203 = vmatpush.msra.mxu0 %v5202
    %v5204 = vand.u32 %v5083, 4294901760
    %5205 = vmatmul.f32.gmra.mxu0 %v5204
    %v5206 = vpop.f32.mrf.mxu0
    %v5207 = vadd.f32 %v5183, %v5206
    %5208 = vdwg.mxu0
    %5209 = vmatpush.msra.mxu0 0.0
    %5210 = vmatpush.msra.mxu0 0.0
    %5211 = vmatpush.msra.mxu0 0.0
    %5212 = vmatpush.msra.mxu0 0.0
    %5213 = vmatpush.msra.mxu0 0.0
    %5214 = vmatpush.msra.mxu0 0.0
    %5215 = vmatpush.msra.mxu0 0.0
    %5216 = vmatpush.msra.mxu0 0.0
    %5217 = vmatpush.msra.mxu0 0.0
    %5218 = vmatpush.msra.mxu0 0.0
    %5219 = vmatpush.msra.mxu0 0.0
    %5220 = vmatpush.msra.mxu0 0.0
    %5221 = vmatpush.msra.mxu0 0.0
    %5222 = vmatpush.msra.mxu0 0.0
    %5223 = vmatpush.msra.mxu0 0.0
    %v5224 = vand.u32 %v5079, 4294901760
    %5225 = vmatpush.msra.mxu0 %v5224
    %v5226 = vand.u32 %v5083, 4294901760
    %5227 = vmatmul.f32.gmra.mxu0 %v5226
    %v5228 = vpop.f32.mrf.mxu0
    %v5229 = vadd.f32 %v5207, %v5228
    %5230 = vdwg.mxu0
    %5231 = vmatpush.msra.mxu0 0.0
    %5232 = vmatpush.msra.mxu0 0.0
    %5233 = vmatpush.msra.mxu0 0.0
    %5234 = vmatpush.msra.mxu0 0.0
    %5235 = vmatpush.msra.mxu0 0.0
    %5236 = vmatpush.msra.mxu0 0.0
    %5237 = vmatpush.msra.mxu0 0.0
    %5238 = vmatpush.msra.mxu0 0.0
    %5239 = vmatpush.msra.mxu0 0.0
    %5240 = vmatpush.msra.mxu0 0.0
    %5241 = vmatpush.msra.mxu0 0.0
    %5242 = vmatpush.msra.mxu0 0.0
    %5243 = vmatpush.msra.mxu0 0.0
    %5244 = vmatpush.msra.mxu0 0.0
    %5245 = vmatpush.msra.mxu0 0.0
    %v5246 = vand.u32 %v5078, 4294901760
    %5247 = vmatpush.msra.mxu0 %v5246
    %v5248 = vand.u32 %v5083, 4294901760
    %v5249 = vsub.f32 %v5083, %v5248
    %v5250 = vand.u32 %v5249, 4294901760
    %v5251 = vsub.f32 %v5249, %v5250
    %v5252 = vand.u32 %v5251, 4294901760
    %5253 = vmatmul.f32.gmra.mxu0 %v5252
    %v5254 = vpop.f32.mrf.mxu0
    %v5255 = vadd.f32 0.0, %v5254
    %5256 = vdwg.mxu0
    %5257 = vmatpush.msra.mxu0 0.0
    %5258 = vmatpush.msra.mxu0 0.0
    %5259 = vmatpush.msra.mxu0 0.0
    %5260 = vmatpush.msra.mxu0 0.0
    %5261 = vmatpush.msra.mxu0 0.0
    %5262 = vmatpush.msra.mxu0 0.0
    %5263 = vmatpush.msra.mxu0 0.0
    %5264 = vmatpush.msra.mxu0 0.0
    %5265 = vmatpush.msra.mxu0 0.0
    %5266 = vmatpush.msra.mxu0 0.0
    %5267 = vmatpush.msra.mxu0 0.0
    %5268 = vmatpush.msra.mxu0 0.0
    %5269 = vmatpush.msra.mxu0 0.0
    %5270 = vmatpush.msra.mxu0 0.0
    %5271 = vmatpush.msra.mxu0 0.0
    %v5272 = vand.u32 %v5078, 4294901760
    %v5273 = vsub.f32 %v5078, %v5272
    %v5274 = vand.u32 %v5273, 4294901760
    %v5275 = vsub.f32 %v5273, %v5274
    %v5276 = vand.u32 %v5275, 4294901760
    %5277 = vmatpush.msra.mxu0 %v5276
    %v5278 = vand.u32 %v5083, 4294901760
    %5279 = vmatmul.f32.gmra.mxu0 %v5278
    %v5280 = vpop.f32.mrf.mxu0
    %v5281 = vadd.f32 %v5255, %v5280
    %5282 = vdwg.mxu0
    %5283 = vmatpush.msra.mxu0 0.0
    %5284 = vmatpush.msra.mxu0 0.0
    %5285 = vmatpush.msra.mxu0 0.0
    %5286 = vmatpush.msra.mxu0 0.0
    %5287 = vmatpush.msra.mxu0 0.0
    %5288 = vmatpush.msra.mxu0 0.0
    %5289 = vmatpush.msra.mxu0 0.0
    %5290 = vmatpush.msra.mxu0 0.0
    %5291 = vmatpush.msra.mxu0 0.0
    %5292 = vmatpush.msra.mxu0 0.0
    %5293 = vmatpush.msra.mxu0 0.0
    %5294 = vmatpush.msra.mxu0 0.0
    %5295 = vmatpush.msra.mxu0 0.0
    %5296 = vmatpush.msra.mxu0 0.0
    %5297 = vmatpush.msra.mxu0 0.0
    %v5298 = vand.u32 %v5078, 4294901760
    %v5299 = vsub.f32 %v5078, %v5298
    %5300 = vmatpush.msra.mxu0 %v5299
    %v5301 = vand.u32 %v5083, 4294901760
    %v5302 = vsub.f32 %v5083, %v5301
    %5303 = vmatmul.f32.gmra.mxu0 %v5302
    %v5304 = vpop.f32.mrf.mxu0
    %v5305 = vadd.f32 %v5281, %v5304
    %5306 = vdwg.mxu0
    %5307 = vmatpush.msra.mxu0 0.0
    %5308 = vmatpush.msra.mxu0 0.0
    %5309 = vmatpush.msra.mxu0 0.0
    %5310 = vmatpush.msra.mxu0 0.0
    %5311 = vmatpush.msra.mxu0 0.0
    %5312 = vmatpush.msra.mxu0 0.0
    %5313 = vmatpush.msra.mxu0 0.0
    %5314 = vmatpush.msra.mxu0 0.0
    %5315 = vmatpush.msra.mxu0 0.0
    %5316 = vmatpush.msra.mxu0 0.0
    %5317 = vmatpush.msra.mxu0 0.0
    %5318 = vmatpush.msra.mxu0 0.0
    %5319 = vmatpush.msra.mxu0 0.0
    %5320 = vmatpush.msra.mxu0 0.0
    %5321 = vmatpush.msra.mxu0 0.0
    %v5322 = vand.u32 %v5078, 4294901760
    %5323 = vmatpush.msra.mxu0 %v5322
    %v5324 = vand.u32 %v5083, 4294901760
    %v5325 = vsub.f32 %v5083, %v5324
    %v5326 = vand.u32 %v5325, 4294901760
    %5327 = vmatmul.f32.gmra.mxu0 %v5326
    %v5328 = vpop.f32.mrf.mxu0
    %v5329 = vadd.f32 %v5305, %v5328
    %5330 = vdwg.mxu0
    %5331 = vmatpush.msra.mxu0 0.0
    %5332 = vmatpush.msra.mxu0 0.0
    %5333 = vmatpush.msra.mxu0 0.0
    %5334 = vmatpush.msra.mxu0 0.0
    %5335 = vmatpush.msra.mxu0 0.0
    %5336 = vmatpush.msra.mxu0 0.0
    %5337 = vmatpush.msra.mxu0 0.0
    %5338 = vmatpush.msra.mxu0 0.0
    %5339 = vmatpush.msra.mxu0 0.0
    %5340 = vmatpush.msra.mxu0 0.0
    %5341 = vmatpush.msra.mxu0 0.0
    %5342 = vmatpush.msra.mxu0 0.0
    %5343 = vmatpush.msra.mxu0 0.0
    %5344 = vmatpush.msra.mxu0 0.0
    %5345 = vmatpush.msra.mxu0 0.0
    %v5346 = vand.u32 %v5078, 4294901760
    %v5347 = vsub.f32 %v5078, %v5346
    %v5348 = vand.u32 %v5347, 4294901760
    %5349 = vmatpush.msra.mxu0 %v5348
    %v5350 = vand.u32 %v5083, 4294901760
    %5351 = vmatmul.f32.gmra.mxu0 %v5350
    %v5352 = vpop.f32.mrf.mxu0
    %v5353 = vadd.f32 %v5329, %v5352
    %5354 = vdwg.mxu0
    %5355 = vmatpush.msra.mxu0 0.0
    %5356 = vmatpush.msra.mxu0 0.0
    %5357 = vmatpush.msra.mxu0 0.0
    %5358 = vmatpush.msra.mxu0 0.0
    %5359 = vmatpush.msra.mxu0 0.0
    %5360 = vmatpush.msra.mxu0 0.0
    %5361 = vmatpush.msra.mxu0 0.0
    %5362 = vmatpush.msra.mxu0 0.0
    %5363 = vmatpush.msra.mxu0 0.0
    %5364 = vmatpush.msra.mxu0 0.0
    %5365 = vmatpush.msra.mxu0 0.0
    %5366 = vmatpush.msra.mxu0 0.0
    %5367 = vmatpush.msra.mxu0 0.0
    %5368 = vmatpush.msra.mxu0 0.0
    %5369 = vmatpush.msra.mxu0 0.0
    %v5370 = vand.u32 %v5078, 4294901760
    %5371 = vmatpush.msra.mxu0 %v5370
    %v5372 = vand.u32 %v5083, 4294901760
    %5373 = vmatmul.f32.gmra.mxu0 %v5372
    %v5374 = vpop.f32.mrf.mxu0
    %v5375 = vadd.f32 %v5353, %v5374
    %5376 = vdwg.mxu0
    %5377 = vmatpush.msra.mxu0 0.0
    %5378 = vmatpush.msra.mxu0 0.0
    %5379 = vmatpush.msra.mxu0 0.0
    %5380 = vmatpush.msra.mxu0 0.0
    %5381 = vmatpush.msra.mxu0 0.0
    %5382 = vmatpush.msra.mxu0 0.0
    %5383 = vmatpush.msra.mxu0 0.0
    %5384 = vmatpush.msra.mxu0 0.0
    %5385 = vmatpush.msra.mxu0 0.0
    %5386 = vmatpush.msra.mxu0 0.0
    %5387 = vmatpush.msra.mxu0 0.0
    %5388 = vmatpush.msra.mxu0 0.0
    %5389 = vmatpush.msra.mxu0 0.0
    %5390 = vmatpush.msra.mxu0 0.0
    %5391 = vmatpush.msra.mxu0 0.0
    %v5392 = vand.u32 %v5077, 4294901760
    %5393 = vmatpush.msra.mxu0 %v5392
    %v5394 = vand.u32 %v5083, 4294901760
    %v5395 = vsub.f32 %v5083, %v5394
    %v5396 = vand.u32 %v5395, 4294901760
    %v5397 = vsub.f32 %v5395, %v5396
    %v5398 = vand.u32 %v5397, 4294901760
    %5399 = vmatmul.f32.gmra.mxu0 %v5398
    %v5400 = vpop.f32.mrf.mxu0
    %v5401 = vadd.f32 0.0, %v5400
    %5402 = vdwg.mxu0
    %5403 = vmatpush.msra.mxu0 0.0
    %5404 = vmatpush.msra.mxu0 0.0
    %5405 = vmatpush.msra.mxu0 0.0
    %5406 = vmatpush.msra.mxu0 0.0
    %5407 = vmatpush.msra.mxu0 0.0
    %5408 = vmatpush.msra.mxu0 0.0
    %5409 = vmatpush.msra.mxu0 0.0
    %5410 = vmatpush.msra.mxu0 0.0
    %5411 = vmatpush.msra.mxu0 0.0
    %5412 = vmatpush.msra.mxu0 0.0
    %5413 = vmatpush.msra.mxu0 0.0
    %5414 = vmatpush.msra.mxu0 0.0
    %5415 = vmatpush.msra.mxu0 0.0
    %5416 = vmatpush.msra.mxu0 0.0
    %5417 = vmatpush.msra.mxu0 0.0
    %v5418 = vand.u32 %v5077, 4294901760
    %v5419 = vsub.f32 %v5077, %v5418
    %v5420 = vand.u32 %v5419, 4294901760
    %v5421 = vsub.f32 %v5419, %v5420
    %v5422 = vand.u32 %v5421, 4294901760
    %5423 = vmatpush.msra.mxu0 %v5422
    %v5424 = vand.u32 %v5083, 4294901760
    %5425 = vmatmul.f32.gmra.mxu0 %v5424
    %v5426 = vpop.f32.mrf.mxu0
    %v5427 = vadd.f32 %v5401, %v5426
    %5428 = vdwg.mxu0
    %5429 = vmatpush.msra.mxu0 0.0
    %5430 = vmatpush.msra.mxu0 0.0
    %5431 = vmatpush.msra.mxu0 0.0
    %5432 = vmatpush.msra.mxu0 0.0
    %5433 = vmatpush.msra.mxu0 0.0
    %5434 = vmatpush.msra.mxu0 0.0
    %5435 = vmatpush.msra.mxu0 0.0
    %5436 = vmatpush.msra.mxu0 0.0
    %5437 = vmatpush.msra.mxu0 0.0
    %5438 = vmatpush.msra.mxu0 0.0
    %5439 = vmatpush.msra.mxu0 0.0
    %5440 = vmatpush.msra.mxu0 0.0
    %5441 = vmatpush.msra.mxu0 0.0
    %5442 = vmatpush.msra.mxu0 0.0
    %5443 = vmatpush.msra.mxu0 0.0
    %v5444 = vand.u32 %v5077, 4294901760
    %v5445 = vsub.f32 %v5077, %v5444
    %5446 = vmatpush.msra.mxu0 %v5445
    %v5447 = vand.u32 %v5083, 4294901760
    %v5448 = vsub.f32 %v5083, %v5447
    %5449 = vmatmul.f32.gmra.mxu0 %v5448
    %v5450 = vpop.f32.mrf.mxu0
    %v5451 = vadd.f32 %v5427, %v5450
    %5452 = vdwg.mxu0
    %5453 = vmatpush.msra.mxu0 0.0
    %5454 = vmatpush.msra.mxu0 0.0
    %5455 = vmatpush.msra.mxu0 0.0
    %5456 = vmatpush.msra.mxu0 0.0
    %5457 = vmatpush.msra.mxu0 0.0
    %5458 = vmatpush.msra.mxu0 0.0
    %5459 = vmatpush.msra.mxu0 0.0
    %5460 = vmatpush.msra.mxu0 0.0
    %5461 = vmatpush.msra.mxu0 0.0
    %5462 = vmatpush.msra.mxu0 0.0
    %5463 = vmatpush.msra.mxu0 0.0
    %5464 = vmatpush.msra.mxu0 0.0
    %5465 = vmatpush.msra.mxu0 0.0
    %5466 = vmatpush.msra.mxu0 0.0
    %5467 = vmatpush.msra.mxu0 0.0
    %v5468 = vand.u32 %v5077, 4294901760
    %5469 = vmatpush.msra.mxu0 %v5468
    %v5470 = vand.u32 %v5083, 4294901760
    %v5471 = vsub.f32 %v5083, %v5470
    %v5472 = vand.u32 %v5471, 4294901760
    %5473 = vmatmul.f32.gmra.mxu0 %v5472
    %v5474 = vpop.f32.mrf.mxu0
    %v5475 = vadd.f32 %v5451, %v5474
    %5476 = vdwg.mxu0
    %5477 = vmatpush.msra.mxu0 0.0
    %5478 = vmatpush.msra.mxu0 0.0
    %5479 = vmatpush.msra.mxu0 0.0
    %5480 = vmatpush.msra.mxu0 0.0
    %5481 = vmatpush.msra.mxu0 0.0
    %5482 = vmatpush.msra.mxu0 0.0
    %5483 = vmatpush.msra.mxu0 0.0
    %5484 = vmatpush.msra.mxu0 0.0
    %5485 = vmatpush.msra.mxu0 0.0
    %5486 = vmatpush.msra.mxu0 0.0
    %5487 = vmatpush.msra.mxu0 0.0
    %5488 = vmatpush.msra.mxu0 0.0
    %5489 = vmatpush.msra.mxu0 0.0
    %5490 = vmatpush.msra.mxu0 0.0
    %5491 = vmatpush.msra.mxu0 0.0
    %v5492 = vand.u32 %v5077, 4294901760
    %v5493 = vsub.f32 %v5077, %v5492
    %v5494 = vand.u32 %v5493, 4294901760
    %5495 = vmatpush.msra.mxu0 %v5494
    %v5496 = vand.u32 %v5083, 4294901760
    %5497 = vmatmul.f32.gmra.mxu0 %v5496
    %v5498 = vpop.f32.mrf.mxu0
    %v5499 = vadd.f32 %v5475, %v5498
    %5500 = vdwg.mxu0
    %5501 = vmatpush.msra.mxu0 0.0
    %5502 = vmatpush.msra.mxu0 0.0
    %5503 = vmatpush.msra.mxu0 0.0
    %5504 = vmatpush.msra.mxu0 0.0
    %5505 = vmatpush.msra.mxu0 0.0
    %5506 = vmatpush.msra.mxu0 0.0
    %5507 = vmatpush.msra.mxu0 0.0
    %5508 = vmatpush.msra.mxu0 0.0
    %5509 = vmatpush.msra.mxu0 0.0
    %5510 = vmatpush.msra.mxu0 0.0
    %5511 = vmatpush.msra.mxu0 0.0
    %5512 = vmatpush.msra.mxu0 0.0
    %5513 = vmatpush.msra.mxu0 0.0
    %5514 = vmatpush.msra.mxu0 0.0
    %5515 = vmatpush.msra.mxu0 0.0
    %v5516 = vand.u32 %v5077, 4294901760
    %5517 = vmatpush.msra.mxu0 %v5516
    %v5518 = vand.u32 %v5083, 4294901760
    %5519 = vmatmul.f32.gmra.mxu0 %v5518
    %v5520 = vpop.f32.mrf.mxu0
    %v5521 = vadd.f32 %v5499, %v5520
    %5522 = vdwg.mxu0
    %v5523 = vadd.f32 %v5066, %v5229
    %v5524 = vadd.f32 %v5067, %v5375
    %v5525 = vadd.f32 %v5068, %v5521
    %5526 = vrot.lane.b32.xlu0 0.0, 1
    %v5527 = vpop.permute.xlu0 %5526
    %5528 = vrot.lane.b32.xlu0 %v4150, 1
    %v5529 = vpop.permute.xlu0 %5528
    %5530 = vrot.lane.b32.xlu0 %v4151, 1
    %v5531 = vpop.permute.xlu0 %5530
    %5532 = vrot.lane.b32.xlu0 %v4152, 1
    %v5533 = vpop.permute.xlu0 %5532
    %v5534 = vsel %vm1419, %v5531, %v5533
    %v5535 = vsel %vm1419, %v5529, %v5531
    %v5536 = vsel %vm1419, %v5527, %v5529
    %s5537 = scalar_lea.vmem %s3, 24
    %v5538 = vld [vmem:[%s5537] sm:$0xff]
    %v5540 = vsel %vm50, %v5538, 0
    %5542 = vmatpush.msra.mxu0 0.0
    %5543 = vmatpush.msra.mxu0 0.0
    %5544 = vmatpush.msra.mxu0 0.0
    %5545 = vmatpush.msra.mxu0 0.0
    %5546 = vmatpush.msra.mxu0 0.0
    %5547 = vmatpush.msra.mxu0 0.0
    %5548 = vmatpush.msra.mxu0 0.0
    %5549 = vmatpush.msra.mxu0 0.0
    %5550 = vmatpush.msra.mxu0 0.0
    %5551 = vmatpush.msra.mxu0 0.0
    %5552 = vmatpush.msra.mxu0 0.0
    %5553 = vmatpush.msra.mxu0 0.0
    %5554 = vmatpush.msra.mxu0 0.0
    %5555 = vmatpush.msra.mxu0 0.0
    %5556 = vmatpush.msra.mxu0 0.0
    %v5557 = vand.u32 %v5536, 4294901760
    %5558 = vmatpush.msra.mxu0 %v5557
    %v5559 = vand.u32 %v5540, 4294901760
    %v5560 = vsub.f32 %v5540, %v5559
    %v5561 = vand.u32 %v5560, 4294901760
    %v5562 = vsub.f32 %v5560, %v5561
    %v5563 = vand.u32 %v5562, 4294901760
    %5564 = vmatmul.f32.gmra.mxu0 %v5563
    %v5565 = vpop.f32.mrf.mxu0
    %v5566 = vadd.f32 0.0, %v5565
    %5567 = vdwg.mxu0
    %5568 = vmatpush.msra.mxu0 0.0
    %5569 = vmatpush.msra.mxu0 0.0
    %5570 = vmatpush.msra.mxu0 0.0
    %5571 = vmatpush.msra.mxu0 0.0
    %5572 = vmatpush.msra.mxu0 0.0
    %5573 = vmatpush.msra.mxu0 0.0
    %5574 = vmatpush.msra.mxu0 0.0
    %5575 = vmatpush.msra.mxu0 0.0
    %5576 = vmatpush.msra.mxu0 0.0
    %5577 = vmatpush.msra.mxu0 0.0
    %5578 = vmatpush.msra.mxu0 0.0
    %5579 = vmatpush.msra.mxu0 0.0
    %5580 = vmatpush.msra.mxu0 0.0
    %5581 = vmatpush.msra.mxu0 0.0
    %5582 = vmatpush.msra.mxu0 0.0
    %v5583 = vand.u32 %v5536, 4294901760
    %v5584 = vsub.f32 %v5536, %v5583
    %v5585 = vand.u32 %v5584, 4294901760
    %v5586 = vsub.f32 %v5584, %v5585
    %v5587 = vand.u32 %v5586, 4294901760
    %5588 = vmatpush.msra.mxu0 %v5587
    %v5589 = vand.u32 %v5540, 4294901760
    %5590 = vmatmul.f32.gmra.mxu0 %v5589
    %v5591 = vpop.f32.mrf.mxu0
    %v5592 = vadd.f32 %v5566, %v5591
    %5593 = vdwg.mxu0
    %5594 = vmatpush.msra.mxu0 0.0
    %5595 = vmatpush.msra.mxu0 0.0
    %5596 = vmatpush.msra.mxu0 0.0
    %5597 = vmatpush.msra.mxu0 0.0
    %5598 = vmatpush.msra.mxu0 0.0
    %5599 = vmatpush.msra.mxu0 0.0
    %5600 = vmatpush.msra.mxu0 0.0
    %5601 = vmatpush.msra.mxu0 0.0
    %5602 = vmatpush.msra.mxu0 0.0
    %5603 = vmatpush.msra.mxu0 0.0
    %5604 = vmatpush.msra.mxu0 0.0
    %5605 = vmatpush.msra.mxu0 0.0
    %5606 = vmatpush.msra.mxu0 0.0
    %5607 = vmatpush.msra.mxu0 0.0
    %5608 = vmatpush.msra.mxu0 0.0
    %v5609 = vand.u32 %v5536, 4294901760
    %v5610 = vsub.f32 %v5536, %v5609
    %5611 = vmatpush.msra.mxu0 %v5610
    %v5612 = vand.u32 %v5540, 4294901760
    %v5613 = vsub.f32 %v5540, %v5612
    %5614 = vmatmul.f32.gmra.mxu0 %v5613
    %v5615 = vpop.f32.mrf.mxu0
    %v5616 = vadd.f32 %v5592, %v5615
    %5617 = vdwg.mxu0
    %5618 = vmatpush.msra.mxu0 0.0
    %5619 = vmatpush.msra.mxu0 0.0
    %5620 = vmatpush.msra.mxu0 0.0
    %5621 = vmatpush.msra.mxu0 0.0
    %5622 = vmatpush.msra.mxu0 0.0
    %5623 = vmatpush.msra.mxu0 0.0
    %5624 = vmatpush.msra.mxu0 0.0
    %5625 = vmatpush.msra.mxu0 0.0
    %5626 = vmatpush.msra.mxu0 0.0
    %5627 = vmatpush.msra.mxu0 0.0
    %5628 = vmatpush.msra.mxu0 0.0
    %5629 = vmatpush.msra.mxu0 0.0
    %5630 = vmatpush.msra.mxu0 0.0
    %5631 = vmatpush.msra.mxu0 0.0
    %5632 = vmatpush.msra.mxu0 0.0
    %v5633 = vand.u32 %v5536, 4294901760
    %5634 = vmatpush.msra.mxu0 %v5633
    %v5635 = vand.u32 %v5540, 4294901760
    %v5636 = vsub.f32 %v5540, %v5635
    %v5637 = vand.u32 %v5636, 4294901760
    %5638 = vmatmul.f32.gmra.mxu0 %v5637
    %v5639 = vpop.f32.mrf.mxu0
    %v5640 = vadd.f32 %v5616, %v5639
    %5641 = vdwg.mxu0
    %5642 = vmatpush.msra.mxu0 0.0
    %5643 = vmatpush.msra.mxu0 0.0
    %5644 = vmatpush.msra.mxu0 0.0
    %5645 = vmatpush.msra.mxu0 0.0
    %5646 = vmatpush.msra.mxu0 0.0
    %5647 = vmatpush.msra.mxu0 0.0
    %5648 = vmatpush.msra.mxu0 0.0
    %5649 = vmatpush.msra.mxu0 0.0
    %5650 = vmatpush.msra.mxu0 0.0
    %5651 = vmatpush.msra.mxu0 0.0
    %5652 = vmatpush.msra.mxu0 0.0
    %5653 = vmatpush.msra.mxu0 0.0
    %5654 = vmatpush.msra.mxu0 0.0
    %5655 = vmatpush.msra.mxu0 0.0
    %5656 = vmatpush.msra.mxu0 0.0
    %v5657 = vand.u32 %v5536, 4294901760
    %v5658 = vsub.f32 %v5536, %v5657
    %v5659 = vand.u32 %v5658, 4294901760
    %5660 = vmatpush.msra.mxu0 %v5659
    %v5661 = vand.u32 %v5540, 4294901760
    %5662 = vmatmul.f32.gmra.mxu0 %v5661
    %v5663 = vpop.f32.mrf.mxu0
    %v5664 = vadd.f32 %v5640, %v5663
    %5665 = vdwg.mxu0
    %5666 = vmatpush.msra.mxu0 0.0
    %5667 = vmatpush.msra.mxu0 0.0
    %5668 = vmatpush.msra.mxu0 0.0
    %5669 = vmatpush.msra.mxu0 0.0
    %5670 = vmatpush.msra.mxu0 0.0
    %5671 = vmatpush.msra.mxu0 0.0
    %5672 = vmatpush.msra.mxu0 0.0
    %5673 = vmatpush.msra.mxu0 0.0
    %5674 = vmatpush.msra.mxu0 0.0
    %5675 = vmatpush.msra.mxu0 0.0
    %5676 = vmatpush.msra.mxu0 0.0
    %5677 = vmatpush.msra.mxu0 0.0
    %5678 = vmatpush.msra.mxu0 0.0
    %5679 = vmatpush.msra.mxu0 0.0
    %5680 = vmatpush.msra.mxu0 0.0
    %v5681 = vand.u32 %v5536, 4294901760
    %5682 = vmatpush.msra.mxu0 %v5681
    %v5683 = vand.u32 %v5540, 4294901760
    %5684 = vmatmul.f32.gmra.mxu0 %v5683
    %v5685 = vpop.f32.mrf.mxu0
    %v5686 = vadd.f32 %v5664, %v5685
    %5687 = vdwg.mxu0
    %5688 = vmatpush.msra.mxu0 0.0
    %5689 = vmatpush.msra.mxu0 0.0
    %5690 = vmatpush.msra.mxu0 0.0
    %5691 = vmatpush.msra.mxu0 0.0
    %5692 = vmatpush.msra.mxu0 0.0
    %5693 = vmatpush.msra.mxu0 0.0
    %5694 = vmatpush.msra.mxu0 0.0
    %5695 = vmatpush.msra.mxu0 0.0
    %5696 = vmatpush.msra.mxu0 0.0
    %5697 = vmatpush.msra.mxu0 0.0
    %5698 = vmatpush.msra.mxu0 0.0
    %5699 = vmatpush.msra.mxu0 0.0
    %5700 = vmatpush.msra.mxu0 0.0
    %5701 = vmatpush.msra.mxu0 0.0
    %5702 = vmatpush.msra.mxu0 0.0
    %v5703 = vand.u32 %v5535, 4294901760
    %5704 = vmatpush.msra.mxu0 %v5703
    %v5705 = vand.u32 %v5540, 4294901760
    %v5706 = vsub.f32 %v5540, %v5705
    %v5707 = vand.u32 %v5706, 4294901760
    %v5708 = vsub.f32 %v5706, %v5707
    %v5709 = vand.u32 %v5708, 4294901760
    %5710 = vmatmul.f32.gmra.mxu0 %v5709
    %v5711 = vpop.f32.mrf.mxu0
    %v5712 = vadd.f32 0.0, %v5711
    %5713 = vdwg.mxu0
    %5714 = vmatpush.msra.mxu0 0.0
    %5715 = vmatpush.msra.mxu0 0.0
    %5716 = vmatpush.msra.mxu0 0.0
    %5717 = vmatpush.msra.mxu0 0.0
    %5718 = vmatpush.msra.mxu0 0.0
    %5719 = vmatpush.msra.mxu0 0.0
    %5720 = vmatpush.msra.mxu0 0.0
    %5721 = vmatpush.msra.mxu0 0.0
    %5722 = vmatpush.msra.mxu0 0.0
    %5723 = vmatpush.msra.mxu0 0.0
    %5724 = vmatpush.msra.mxu0 0.0
    %5725 = vmatpush.msra.mxu0 0.0
    %5726 = vmatpush.msra.mxu0 0.0
    %5727 = vmatpush.msra.mxu0 0.0
    %5728 = vmatpush.msra.mxu0 0.0
    %v5729 = vand.u32 %v5535, 4294901760
    %v5730 = vsub.f32 %v5535, %v5729
    %v5731 = vand.u32 %v5730, 4294901760
    %v5732 = vsub.f32 %v5730, %v5731
    %v5733 = vand.u32 %v5732, 4294901760
    %5734 = vmatpush.msra.mxu0 %v5733
    %v5735 = vand.u32 %v5540, 4294901760
    %5736 = vmatmul.f32.gmra.mxu0 %v5735
    %v5737 = vpop.f32.mrf.mxu0
    %v5738 = vadd.f32 %v5712, %v5737
    %5739 = vdwg.mxu0
    %5740 = vmatpush.msra.mxu0 0.0
    %5741 = vmatpush.msra.mxu0 0.0
    %5742 = vmatpush.msra.mxu0 0.0
    %5743 = vmatpush.msra.mxu0 0.0
    %5744 = vmatpush.msra.mxu0 0.0
    %5745 = vmatpush.msra.mxu0 0.0
    %5746 = vmatpush.msra.mxu0 0.0
    %5747 = vmatpush.msra.mxu0 0.0
    %5748 = vmatpush.msra.mxu0 0.0
    %5749 = vmatpush.msra.mxu0 0.0
    %5750 = vmatpush.msra.mxu0 0.0
    %5751 = vmatpush.msra.mxu0 0.0
    %5752 = vmatpush.msra.mxu0 0.0
    %5753 = vmatpush.msra.mxu0 0.0
    %5754 = vmatpush.msra.mxu0 0.0
    %v5755 = vand.u32 %v5535, 4294901760
    %v5756 = vsub.f32 %v5535, %v5755
    %5757 = vmatpush.msra.mxu0 %v5756
    %v5758 = vand.u32 %v5540, 4294901760
    %v5759 = vsub.f32 %v5540, %v5758
    %5760 = vmatmul.f32.gmra.mxu0 %v5759
    %v5761 = vpop.f32.mrf.mxu0
    %v5762 = vadd.f32 %v5738, %v5761
    %5763 = vdwg.mxu0
    %5764 = vmatpush.msra.mxu0 0.0
    %5765 = vmatpush.msra.mxu0 0.0
    %5766 = vmatpush.msra.mxu0 0.0
    %5767 = vmatpush.msra.mxu0 0.0
    %5768 = vmatpush.msra.mxu0 0.0
    %5769 = vmatpush.msra.mxu0 0.0
    %5770 = vmatpush.msra.mxu0 0.0
    %5771 = vmatpush.msra.mxu0 0.0
    %5772 = vmatpush.msra.mxu0 0.0
    %5773 = vmatpush.msra.mxu0 0.0
    %5774 = vmatpush.msra.mxu0 0.0
    %5775 = vmatpush.msra.mxu0 0.0
    %5776 = vmatpush.msra.mxu0 0.0
    %5777 = vmatpush.msra.mxu0 0.0
    %5778 = vmatpush.msra.mxu0 0.0
    %v5779 = vand.u32 %v5535, 4294901760
    %5780 = vmatpush.msra.mxu0 %v5779
    %v5781 = vand.u32 %v5540, 4294901760
    %v5782 = vsub.f32 %v5540, %v5781
    %v5783 = vand.u32 %v5782, 4294901760
    %5784 = vmatmul.f32.gmra.mxu0 %v5783
    %v5785 = vpop.f32.mrf.mxu0
    %v5786 = vadd.f32 %v5762, %v5785
    %5787 = vdwg.mxu0
    %5788 = vmatpush.msra.mxu0 0.0
    %5789 = vmatpush.msra.mxu0 0.0
    %5790 = vmatpush.msra.mxu0 0.0
    %5791 = vmatpush.msra.mxu0 0.0
    %5792 = vmatpush.msra.mxu0 0.0
    %5793 = vmatpush.msra.mxu0 0.0
    %5794 = vmatpush.msra.mxu0 0.0
    %5795 = vmatpush.msra.mxu0 0.0
    %5796 = vmatpush.msra.mxu0 0.0
    %5797 = vmatpush.msra.mxu0 0.0
    %5798 = vmatpush.msra.mxu0 0.0
    %5799 = vmatpush.msra.mxu0 0.0
    %5800 = vmatpush.msra.mxu0 0.0
    %5801 = vmatpush.msra.mxu0 0.0
    %5802 = vmatpush.msra.mxu0 0.0
    %v5803 = vand.u32 %v5535, 4294901760
    %v5804 = vsub.f32 %v5535, %v5803
    %v5805 = vand.u32 %v5804, 4294901760
    %5806 = vmatpush.msra.mxu0 %v5805
    %v5807 = vand.u32 %v5540, 4294901760
    %5808 = vmatmul.f32.gmra.mxu0 %v5807
    %v5809 = vpop.f32.mrf.mxu0
    %v5810 = vadd.f32 %v5786, %v5809
    %5811 = vdwg.mxu0
    %5812 = vmatpush.msra.mxu0 0.0
    %5813 = vmatpush.msra.mxu0 0.0
    %5814 = vmatpush.msra.mxu0 0.0
    %5815 = vmatpush.msra.mxu0 0.0
    %5816 = vmatpush.msra.mxu0 0.0
    %5817 = vmatpush.msra.mxu0 0.0
    %5818 = vmatpush.msra.mxu0 0.0
    %5819 = vmatpush.msra.mxu0 0.0
    %5820 = vmatpush.msra.mxu0 0.0
    %5821 = vmatpush.msra.mxu0 0.0
    %5822 = vmatpush.msra.mxu0 0.0
    %5823 = vmatpush.msra.mxu0 0.0
    %5824 = vmatpush.msra.mxu0 0.0
    %5825 = vmatpush.msra.mxu0 0.0
    %5826 = vmatpush.msra.mxu0 0.0
    %v5827 = vand.u32 %v5535, 4294901760
    %5828 = vmatpush.msra.mxu0 %v5827
    %v5829 = vand.u32 %v5540, 4294901760
    %5830 = vmatmul.f32.gmra.mxu0 %v5829
    %v5831 = vpop.f32.mrf.mxu0
    %v5832 = vadd.f32 %v5810, %v5831
    %5833 = vdwg.mxu0
    %5834 = vmatpush.msra.mxu0 0.0
    %5835 = vmatpush.msra.mxu0 0.0
    %5836 = vmatpush.msra.mxu0 0.0
    %5837 = vmatpush.msra.mxu0 0.0
    %5838 = vmatpush.msra.mxu0 0.0
    %5839 = vmatpush.msra.mxu0 0.0
    %5840 = vmatpush.msra.mxu0 0.0
    %5841 = vmatpush.msra.mxu0 0.0
    %5842 = vmatpush.msra.mxu0 0.0
    %5843 = vmatpush.msra.mxu0 0.0
    %5844 = vmatpush.msra.mxu0 0.0
    %5845 = vmatpush.msra.mxu0 0.0
    %5846 = vmatpush.msra.mxu0 0.0
    %5847 = vmatpush.msra.mxu0 0.0
    %5848 = vmatpush.msra.mxu0 0.0
    %v5849 = vand.u32 %v5534, 4294901760
    %5850 = vmatpush.msra.mxu0 %v5849
    %v5851 = vand.u32 %v5540, 4294901760
    %v5852 = vsub.f32 %v5540, %v5851
    %v5853 = vand.u32 %v5852, 4294901760
    %v5854 = vsub.f32 %v5852, %v5853
    %v5855 = vand.u32 %v5854, 4294901760
    %5856 = vmatmul.f32.gmra.mxu0 %v5855
    %v5857 = vpop.f32.mrf.mxu0
    %v5858 = vadd.f32 0.0, %v5857
    %5859 = vdwg.mxu0
    %5860 = vmatpush.msra.mxu0 0.0
    %5861 = vmatpush.msra.mxu0 0.0
    %5862 = vmatpush.msra.mxu0 0.0
    %5863 = vmatpush.msra.mxu0 0.0
    %5864 = vmatpush.msra.mxu0 0.0
    %5865 = vmatpush.msra.mxu0 0.0
    %5866 = vmatpush.msra.mxu0 0.0
    %5867 = vmatpush.msra.mxu0 0.0
    %5868 = vmatpush.msra.mxu0 0.0
    %5869 = vmatpush.msra.mxu0 0.0
    %5870 = vmatpush.msra.mxu0 0.0
    %5871 = vmatpush.msra.mxu0 0.0
    %5872 = vmatpush.msra.mxu0 0.0
    %5873 = vmatpush.msra.mxu0 0.0
    %5874 = vmatpush.msra.mxu0 0.0
    %v5875 = vand.u32 %v5534, 4294901760
    %v5876 = vsub.f32 %v5534, %v5875
    %v5877 = vand.u32 %v5876, 4294901760
    %v5878 = vsub.f32 %v5876, %v5877
    %v5879 = vand.u32 %v5878, 4294901760
    %5880 = vmatpush.msra.mxu0 %v5879
    %v5881 = vand.u32 %v5540, 4294901760
    %5882 = vmatmul.f32.gmra.mxu0 %v5881
    %v5883 = vpop.f32.mrf.mxu0
    %v5884 = vadd.f32 %v5858, %v5883
    %5885 = vdwg.mxu0
    %5886 = vmatpush.msra.mxu0 0.0
    %5887 = vmatpush.msra.mxu0 0.0
    %5888 = vmatpush.msra.mxu0 0.0
    %5889 = vmatpush.msra.mxu0 0.0
    %5890 = vmatpush.msra.mxu0 0.0
    %5891 = vmatpush.msra.mxu0 0.0
    %5892 = vmatpush.msra.mxu0 0.0
    %5893 = vmatpush.msra.mxu0 0.0
    %5894 = vmatpush.msra.mxu0 0.0
    %5895 = vmatpush.msra.mxu0 0.0
    %5896 = vmatpush.msra.mxu0 0.0
    %5897 = vmatpush.msra.mxu0 0.0
    %5898 = vmatpush.msra.mxu0 0.0
    %5899 = vmatpush.msra.mxu0 0.0
    %5900 = vmatpush.msra.mxu0 0.0
    %v5901 = vand.u32 %v5534, 4294901760
    %v5902 = vsub.f32 %v5534, %v5901
    %5903 = vmatpush.msra.mxu0 %v5902
    %v5904 = vand.u32 %v5540, 4294901760
    %v5905 = vsub.f32 %v5540, %v5904
    %5906 = vmatmul.f32.gmra.mxu0 %v5905
    %v5907 = vpop.f32.mrf.mxu0
    %v5908 = vadd.f32 %v5884, %v5907
    %5909 = vdwg.mxu0
    %5910 = vmatpush.msra.mxu0 0.0
    %5911 = vmatpush.msra.mxu0 0.0
    %5912 = vmatpush.msra.mxu0 0.0
    %5913 = vmatpush.msra.mxu0 0.0
    %5914 = vmatpush.msra.mxu0 0.0
    %5915 = vmatpush.msra.mxu0 0.0
    %5916 = vmatpush.msra.mxu0 0.0
    %5917 = vmatpush.msra.mxu0 0.0
    %5918 = vmatpush.msra.mxu0 0.0
    %5919 = vmatpush.msra.mxu0 0.0
    %5920 = vmatpush.msra.mxu0 0.0
    %5921 = vmatpush.msra.mxu0 0.0
    %5922 = vmatpush.msra.mxu0 0.0
    %5923 = vmatpush.msra.mxu0 0.0
    %5924 = vmatpush.msra.mxu0 0.0
    %v5925 = vand.u32 %v5534, 4294901760
    %5926 = vmatpush.msra.mxu0 %v5925
    %v5927 = vand.u32 %v5540, 4294901760
    %v5928 = vsub.f32 %v5540, %v5927
    %v5929 = vand.u32 %v5928, 4294901760
    %5930 = vmatmul.f32.gmra.mxu0 %v5929
    %v5931 = vpop.f32.mrf.mxu0
    %v5932 = vadd.f32 %v5908, %v5931
    %5933 = vdwg.mxu0
    %5934 = vmatpush.msra.mxu0 0.0
    %5935 = vmatpush.msra.mxu0 0.0
    %5936 = vmatpush.msra.mxu0 0.0
    %5937 = vmatpush.msra.mxu0 0.0
    %5938 = vmatpush.msra.mxu0 0.0
    %5939 = vmatpush.msra.mxu0 0.0
    %5940 = vmatpush.msra.mxu0 0.0
    %5941 = vmatpush.msra.mxu0 0.0
    %5942 = vmatpush.msra.mxu0 0.0
    %5943 = vmatpush.msra.mxu0 0.0
    %5944 = vmatpush.msra.mxu0 0.0
    %5945 = vmatpush.msra.mxu0 0.0
    %5946 = vmatpush.msra.mxu0 0.0
    %5947 = vmatpush.msra.mxu0 0.0
    %5948 = vmatpush.msra.mxu0 0.0
    %v5949 = vand.u32 %v5534, 4294901760
    %v5950 = vsub.f32 %v5534, %v5949
    %v5951 = vand.u32 %v5950, 4294901760
    %5952 = vmatpush.msra.mxu0 %v5951
    %v5953 = vand.u32 %v5540, 4294901760
    %5954 = vmatmul.f32.gmra.mxu0 %v5953
    %v5955 = vpop.f32.mrf.mxu0
    %v5956 = vadd.f32 %v5932, %v5955
    %5957 = vdwg.mxu0
    %5958 = vmatpush.msra.mxu0 0.0
    %5959 = vmatpush.msra.mxu0 0.0
    %5960 = vmatpush.msra.mxu0 0.0
    %5961 = vmatpush.msra.mxu0 0.0
    %5962 = vmatpush.msra.mxu0 0.0
    %5963 = vmatpush.msra.mxu0 0.0
    %5964 = vmatpush.msra.mxu0 0.0
    %5965 = vmatpush.msra.mxu0 0.0
    %5966 = vmatpush.msra.mxu0 0.0
    %5967 = vmatpush.msra.mxu0 0.0
    %5968 = vmatpush.msra.mxu0 0.0
    %5969 = vmatpush.msra.mxu0 0.0
    %5970 = vmatpush.msra.mxu0 0.0
    %5971 = vmatpush.msra.mxu0 0.0
    %5972 = vmatpush.msra.mxu0 0.0
    %v5973 = vand.u32 %v5534, 4294901760
    %5974 = vmatpush.msra.mxu0 %v5973
    %v5975 = vand.u32 %v5540, 4294901760
    %5976 = vmatmul.f32.gmra.mxu0 %v5975
    %v5977 = vpop.f32.mrf.mxu0
    %v5978 = vadd.f32 %v5956, %v5977
    %5979 = vdwg.mxu0
    %v5980 = vadd.f32 %v5523, %v5686
    %v5981 = vadd.f32 %v5524, %v5832
    %v5982 = vadd.f32 %v5525, %v5978
    %s5983 = scalar_lea.vmem %s3, 32
    %v5984 = vld [vmem:[%s5983] sm:$0xff]
    %v5986 = vsel %vm50, %v5984, 0
    %5988 = vmatpush.msra.mxu0 0.0
    %5989 = vmatpush.msra.mxu0 0.0
    %5990 = vmatpush.msra.mxu0 0.0
    %5991 = vmatpush.msra.mxu0 0.0
    %5992 = vmatpush.msra.mxu0 0.0
    %5993 = vmatpush.msra.mxu0 0.0
    %5994 = vmatpush.msra.mxu0 0.0
    %5995 = vmatpush.msra.mxu0 0.0
    %5996 = vmatpush.msra.mxu0 0.0
    %5997 = vmatpush.msra.mxu0 0.0
    %5998 = vmatpush.msra.mxu0 0.0
    %5999 = vmatpush.msra.mxu0 0.0
    %6000 = vmatpush.msra.mxu0 0.0
    %6001 = vmatpush.msra.mxu0 0.0
    %6002 = vmatpush.msra.mxu0 0.0
    %v6003 = vand.u32 %v4150, 4294901760
    %6004 = vmatpush.msra.mxu0 %v6003
    %v6005 = vand.u32 %v5986, 4294901760
    %v6006 = vsub.f32 %v5986, %v6005
    %v6007 = vand.u32 %v6006, 4294901760
    %v6008 = vsub.f32 %v6006, %v6007
    %v6009 = vand.u32 %v6008, 4294901760
    %6010 = vmatmul.f32.gmra.mxu0 %v6009
    %v6011 = vpop.f32.mrf.mxu0
    %v6012 = vadd.f32 0.0, %v6011
    %6013 = vdwg.mxu0
    %6014 = vmatpush.msra.mxu0 0.0
    %6015 = vmatpush.msra.mxu0 0.0
    %6016 = vmatpush.msra.mxu0 0.0
    %6017 = vmatpush.msra.mxu0 0.0
    %6018 = vmatpush.msra.mxu0 0.0
    %6019 = vmatpush.msra.mxu0 0.0
    %6020 = vmatpush.msra.mxu0 0.0
    %6021 = vmatpush.msra.mxu0 0.0
    %6022 = vmatpush.msra.mxu0 0.0
    %6023 = vmatpush.msra.mxu0 0.0
    %6024 = vmatpush.msra.mxu0 0.0
    %6025 = vmatpush.msra.mxu0 0.0
    %6026 = vmatpush.msra.mxu0 0.0
    %6027 = vmatpush.msra.mxu0 0.0
    %6028 = vmatpush.msra.mxu0 0.0
    %v6029 = vand.u32 %v4150, 4294901760
    %v6030 = vsub.f32 %v4150, %v6029
    %v6031 = vand.u32 %v6030, 4294901760
    %v6032 = vsub.f32 %v6030, %v6031
    %v6033 = vand.u32 %v6032, 4294901760
    %6034 = vmatpush.msra.mxu0 %v6033
    %v6035 = vand.u32 %v5986, 4294901760
    %6036 = vmatmul.f32.gmra.mxu0 %v6035
    %v6037 = vpop.f32.mrf.mxu0
    %v6038 = vadd.f32 %v6012, %v6037
    %6039 = vdwg.mxu0
    %6040 = vmatpush.msra.mxu0 0.0
    %6041 = vmatpush.msra.mxu0 0.0
    %6042 = vmatpush.msra.mxu0 0.0
    %6043 = vmatpush.msra.mxu0 0.0
    %6044 = vmatpush.msra.mxu0 0.0
    %6045 = vmatpush.msra.mxu0 0.0
    %6046 = vmatpush.msra.mxu0 0.0
    %6047 = vmatpush.msra.mxu0 0.0
    %6048 = vmatpush.msra.mxu0 0.0
    %6049 = vmatpush.msra.mxu0 0.0
    %6050 = vmatpush.msra.mxu0 0.0
    %6051 = vmatpush.msra.mxu0 0.0
    %6052 = vmatpush.msra.mxu0 0.0
    %6053 = vmatpush.msra.mxu0 0.0
    %6054 = vmatpush.msra.mxu0 0.0
    %v6055 = vand.u32 %v4150, 4294901760
    %v6056 = vsub.f32 %v4150, %v6055
    %6057 = vmatpush.msra.mxu0 %v6056
    %v6058 = vand.u32 %v5986, 4294901760
    %v6059 = vsub.f32 %v5986, %v6058
    %6060 = vmatmul.f32.gmra.mxu0 %v6059
    %v6061 = vpop.f32.mrf.mxu0
    %v6062 = vadd.f32 %v6038, %v6061
    %6063 = vdwg.mxu0
    %6064 = vmatpush.msra.mxu0 0.0
    %6065 = vmatpush.msra.mxu0 0.0
    %6066 = vmatpush.msra.mxu0 0.0
    %6067 = vmatpush.msra.mxu0 0.0
    %6068 = vmatpush.msra.mxu0 0.0
    %6069 = vmatpush.msra.mxu0 0.0
    %6070 = vmatpush.msra.mxu0 0.0
    %6071 = vmatpush.msra.mxu0 0.0
    %6072 = vmatpush.msra.mxu0 0.0
    %6073 = vmatpush.msra.mxu0 0.0
    %6074 = vmatpush.msra.mxu0 0.0
    %6075 = vmatpush.msra.mxu0 0.0
    %6076 = vmatpush.msra.mxu0 0.0
    %6077 = vmatpush.msra.mxu0 0.0
    %6078 = vmatpush.msra.mxu0 0.0
    %v6079 = vand.u32 %v4150, 4294901760
    %6080 = vmatpush.msra.mxu0 %v6079
    %v6081 = vand.u32 %v5986, 4294901760
    %v6082 = vsub.f32 %v5986, %v6081
    %v6083 = vand.u32 %v6082, 4294901760
    %6084 = vmatmul.f32.gmra.mxu0 %v6083
    %v6085 = vpop.f32.mrf.mxu0
    %v6086 = vadd.f32 %v6062, %v6085
    %6087 = vdwg.mxu0
    %6088 = vmatpush.msra.mxu0 0.0
    %6089 = vmatpush.msra.mxu0 0.0
    %6090 = vmatpush.msra.mxu0 0.0
    %6091 = vmatpush.msra.mxu0 0.0
    %6092 = vmatpush.msra.mxu0 0.0
    %6093 = vmatpush.msra.mxu0 0.0
    %6094 = vmatpush.msra.mxu0 0.0
    %6095 = vmatpush.msra.mxu0 0.0
    %6096 = vmatpush.msra.mxu0 0.0
    %6097 = vmatpush.msra.mxu0 0.0
    %6098 = vmatpush.msra.mxu0 0.0
    %6099 = vmatpush.msra.mxu0 0.0
    %6100 = vmatpush.msra.mxu0 0.0
    %6101 = vmatpush.msra.mxu0 0.0
    %6102 = vmatpush.msra.mxu0 0.0
    %v6103 = vand.u32 %v4150, 4294901760
    %v6104 = vsub.f32 %v4150, %v6103
    %v6105 = vand.u32 %v6104, 4294901760
    %6106 = vmatpush.msra.mxu0 %v6105
    %v6107 = vand.u32 %v5986, 4294901760
    %6108 = vmatmul.f32.gmra.mxu0 %v6107
    %v6109 = vpop.f32.mrf.mxu0
    %v6110 = vadd.f32 %v6086, %v6109
    %6111 = vdwg.mxu0
    %6112 = vmatpush.msra.mxu0 0.0
    %6113 = vmatpush.msra.mxu0 0.0
    %6114 = vmatpush.msra.mxu0 0.0
    %6115 = vmatpush.msra.mxu0 0.0
    %6116 = vmatpush.msra.mxu0 0.0
    %6117 = vmatpush.msra.mxu0 0.0
    %6118 = vmatpush.msra.mxu0 0.0
    %6119 = vmatpush.msra.mxu0 0.0
    %6120 = vmatpush.msra.mxu0 0.0
    %6121 = vmatpush.msra.mxu0 0.0
    %6122 = vmatpush.msra.mxu0 0.0
    %6123 = vmatpush.msra.mxu0 0.0
    %6124 = vmatpush.msra.mxu0 0.0
    %6125 = vmatpush.msra.mxu0 0.0
    %6126 = vmatpush.msra.mxu0 0.0
    %v6127 = vand.u32 %v4150, 4294901760
    %6128 = vmatpush.msra.mxu0 %v6127
    %v6129 = vand.u32 %v5986, 4294901760
    %6130 = vmatmul.f32.gmra.mxu0 %v6129
    %v6131 = vpop.f32.mrf.mxu0
    %v6132 = vadd.f32 %v6110, %v6131
    %6133 = vdwg.mxu0
    %6134 = vmatpush.msra.mxu0 0.0
    %6135 = vmatpush.msra.mxu0 0.0
    %6136 = vmatpush.msra.mxu0 0.0
    %6137 = vmatpush.msra.mxu0 0.0
    %6138 = vmatpush.msra.mxu0 0.0
    %6139 = vmatpush.msra.mxu0 0.0
    %6140 = vmatpush.msra.mxu0 0.0
    %6141 = vmatpush.msra.mxu0 0.0
    %6142 = vmatpush.msra.mxu0 0.0
    %6143 = vmatpush.msra.mxu0 0.0
    %6144 = vmatpush.msra.mxu0 0.0
    %6145 = vmatpush.msra.mxu0 0.0
    %6146 = vmatpush.msra.mxu0 0.0
    %6147 = vmatpush.msra.mxu0 0.0
    %6148 = vmatpush.msra.mxu0 0.0
    %v6149 = vand.u32 %v4151, 4294901760
    %6150 = vmatpush.msra.mxu0 %v6149
    %v6151 = vand.u32 %v5986, 4294901760
    %v6152 = vsub.f32 %v5986, %v6151
    %v6153 = vand.u32 %v6152, 4294901760
    %v6154 = vsub.f32 %v6152, %v6153
    %v6155 = vand.u32 %v6154, 4294901760
    %6156 = vmatmul.f32.gmra.mxu0 %v6155
    %v6157 = vpop.f32.mrf.mxu0
    %v6158 = vadd.f32 0.0, %v6157
    %6159 = vdwg.mxu0
    %6160 = vmatpush.msra.mxu0 0.0
    %6161 = vmatpush.msra.mxu0 0.0
    %6162 = vmatpush.msra.mxu0 0.0
    %6163 = vmatpush.msra.mxu0 0.0
    %6164 = vmatpush.msra.mxu0 0.0
    %6165 = vmatpush.msra.mxu0 0.0
    %6166 = vmatpush.msra.mxu0 0.0
    %6167 = vmatpush.msra.mxu0 0.0
    %6168 = vmatpush.msra.mxu0 0.0
    %6169 = vmatpush.msra.mxu0 0.0
    %6170 = vmatpush.msra.mxu0 0.0
    %6171 = vmatpush.msra.mxu0 0.0
    %6172 = vmatpush.msra.mxu0 0.0
    %6173 = vmatpush.msra.mxu0 0.0
    %6174 = vmatpush.msra.mxu0 0.0
    %v6175 = vand.u32 %v4151, 4294901760
    %v6176 = vsub.f32 %v4151, %v6175
    %v6177 = vand.u32 %v6176, 4294901760
    %v6178 = vsub.f32 %v6176, %v6177
    %v6179 = vand.u32 %v6178, 4294901760
    %6180 = vmatpush.msra.mxu0 %v6179
    %v6181 = vand.u32 %v5986, 4294901760
    %6182 = vmatmul.f32.gmra.mxu0 %v6181
    %v6183 = vpop.f32.mrf.mxu0
    %v6184 = vadd.f32 %v6158, %v6183
    %6185 = vdwg.mxu0
    %6186 = vmatpush.msra.mxu0 0.0
    %6187 = vmatpush.msra.mxu0 0.0
    %6188 = vmatpush.msra.mxu0 0.0
    %6189 = vmatpush.msra.mxu0 0.0
    %6190 = vmatpush.msra.mxu0 0.0
    %6191 = vmatpush.msra.mxu0 0.0
    %6192 = vmatpush.msra.mxu0 0.0
    %6193 = vmatpush.msra.mxu0 0.0
    %6194 = vmatpush.msra.mxu0 0.0
    %6195 = vmatpush.msra.mxu0 0.0
    %6196 = vmatpush.msra.mxu0 0.0
    %6197 = vmatpush.msra.mxu0 0.0
    %6198 = vmatpush.msra.mxu0 0.0
    %6199 = vmatpush.msra.mxu0 0.0
    %6200 = vmatpush.msra.mxu0 0.0
    %v6201 = vand.u32 %v4151, 4294901760
    %v6202 = vsub.f32 %v4151, %v6201
    %6203 = vmatpush.msra.mxu0 %v6202
    %v6204 = vand.u32 %v5986, 4294901760
    %v6205 = vsub.f32 %v5986, %v6204
    %6206 = vmatmul.f32.gmra.mxu0 %v6205
    %v6207 = vpop.f32.mrf.mxu0
    %v6208 = vadd.f32 %v6184, %v6207
    %6209 = vdwg.mxu0
    %6210 = vmatpush.msra.mxu0 0.0
    %6211 = vmatpush.msra.mxu0 0.0
    %6212 = vmatpush.msra.mxu0 0.0
    %6213 = vmatpush.msra.mxu0 0.0
    %6214 = vmatpush.msra.mxu0 0.0
    %6215 = vmatpush.msra.mxu0 0.0
    %6216 = vmatpush.msra.mxu0 0.0
    %6217 = vmatpush.msra.mxu0 0.0
    %6218 = vmatpush.msra.mxu0 0.0
    %6219 = vmatpush.msra.mxu0 0.0
    %6220 = vmatpush.msra.mxu0 0.0
    %6221 = vmatpush.msra.mxu0 0.0
    %6222 = vmatpush.msra.mxu0 0.0
    %6223 = vmatpush.msra.mxu0 0.0
    %6224 = vmatpush.msra.mxu0 0.0
    %v6225 = vand.u32 %v4151, 4294901760
    %6226 = vmatpush.msra.mxu0 %v6225
    %v6227 = vand.u32 %v5986, 4294901760
    %v6228 = vsub.f32 %v5986, %v6227
    %v6229 = vand.u32 %v6228, 4294901760
    %6230 = vmatmul.f32.gmra.mxu0 %v6229
    %v6231 = vpop.f32.mrf.mxu0
    %v6232 = vadd.f32 %v6208, %v6231
    %6233 = vdwg.mxu0
    %6234 = vmatpush.msra.mxu0 0.0
    %6235 = vmatpush.msra.mxu0 0.0
    %6236 = vmatpush.msra.mxu0 0.0
    %6237 = vmatpush.msra.mxu0 0.0
    %6238 = vmatpush.msra.mxu0 0.0
    %6239 = vmatpush.msra.mxu0 0.0
    %6240 = vmatpush.msra.mxu0 0.0
    %6241 = vmatpush.msra.mxu0 0.0
    %6242 = vmatpush.msra.mxu0 0.0
    %6243 = vmatpush.msra.mxu0 0.0
    %6244 = vmatpush.msra.mxu0 0.0
    %6245 = vmatpush.msra.mxu0 0.0
    %6246 = vmatpush.msra.mxu0 0.0
    %6247 = vmatpush.msra.mxu0 0.0
    %6248 = vmatpush.msra.mxu0 0.0
    %v6249 = vand.u32 %v4151, 4294901760
    %v6250 = vsub.f32 %v4151, %v6249
    %v6251 = vand.u32 %v6250, 4294901760
    %6252 = vmatpush.msra.mxu0 %v6251
    %v6253 = vand.u32 %v5986, 4294901760
    %6254 = vmatmul.f32.gmra.mxu0 %v6253
    %v6255 = vpop.f32.mrf.mxu0
    %v6256 = vadd.f32 %v6232, %v6255
    %6257 = vdwg.mxu0
    %6258 = vmatpush.msra.mxu0 0.0
    %6259 = vmatpush.msra.mxu0 0.0
    %6260 = vmatpush.msra.mxu0 0.0
    %6261 = vmatpush.msra.mxu0 0.0
    %6262 = vmatpush.msra.mxu0 0.0
    %6263 = vmatpush.msra.mxu0 0.0
    %6264 = vmatpush.msra.mxu0 0.0
    %6265 = vmatpush.msra.mxu0 0.0
    %6266 = vmatpush.msra.mxu0 0.0
    %6267 = vmatpush.msra.mxu0 0.0
    %6268 = vmatpush.msra.mxu0 0.0
    %6269 = vmatpush.msra.mxu0 0.0
    %6270 = vmatpush.msra.mxu0 0.0
    %6271 = vmatpush.msra.mxu0 0.0
    %6272 = vmatpush.msra.mxu0 0.0
    %v6273 = vand.u32 %v4151, 4294901760
    %6274 = vmatpush.msra.mxu0 %v6273
    %v6275 = vand.u32 %v5986, 4294901760
    %6276 = vmatmul.f32.gmra.mxu0 %v6275
    %v6277 = vpop.f32.mrf.mxu0
    %v6278 = vadd.f32 %v6256, %v6277
    %6279 = vdwg.mxu0
    %6280 = vmatpush.msra.mxu0 0.0
    %6281 = vmatpush.msra.mxu0 0.0
    %6282 = vmatpush.msra.mxu0 0.0
    %6283 = vmatpush.msra.mxu0 0.0
    %6284 = vmatpush.msra.mxu0 0.0
    %6285 = vmatpush.msra.mxu0 0.0
    %6286 = vmatpush.msra.mxu0 0.0
    %6287 = vmatpush.msra.mxu0 0.0
    %6288 = vmatpush.msra.mxu0 0.0
    %6289 = vmatpush.msra.mxu0 0.0
    %6290 = vmatpush.msra.mxu0 0.0
    %6291 = vmatpush.msra.mxu0 0.0
    %6292 = vmatpush.msra.mxu0 0.0
    %6293 = vmatpush.msra.mxu0 0.0
    %6294 = vmatpush.msra.mxu0 0.0
    %v6295 = vand.u32 %v4152, 4294901760
    %6296 = vmatpush.msra.mxu0 %v6295
    %v6297 = vand.u32 %v5986, 4294901760
    %v6298 = vsub.f32 %v5986, %v6297
    %v6299 = vand.u32 %v6298, 4294901760
    %v6300 = vsub.f32 %v6298, %v6299
    %v6301 = vand.u32 %v6300, 4294901760
    %6302 = vmatmul.f32.gmra.mxu0 %v6301
    %v6303 = vpop.f32.mrf.mxu0
    %v6304 = vadd.f32 0.0, %v6303
    %6305 = vdwg.mxu0
    %6306 = vmatpush.msra.mxu0 0.0
    %6307 = vmatpush.msra.mxu0 0.0
    %6308 = vmatpush.msra.mxu0 0.0
    %6309 = vmatpush.msra.mxu0 0.0
    %6310 = vmatpush.msra.mxu0 0.0
    %6311 = vmatpush.msra.mxu0 0.0
    %6312 = vmatpush.msra.mxu0 0.0
    %6313 = vmatpush.msra.mxu0 0.0
    %6314 = vmatpush.msra.mxu0 0.0
    %6315 = vmatpush.msra.mxu0 0.0
    %6316 = vmatpush.msra.mxu0 0.0
    %6317 = vmatpush.msra.mxu0 0.0
    %6318 = vmatpush.msra.mxu0 0.0
    %6319 = vmatpush.msra.mxu0 0.0
    %6320 = vmatpush.msra.mxu0 0.0
    %v6321 = vand.u32 %v4152, 4294901760
    %v6322 = vsub.f32 %v4152, %v6321
    %v6323 = vand.u32 %v6322, 4294901760
    %v6324 = vsub.f32 %v6322, %v6323
    %v6325 = vand.u32 %v6324, 4294901760
    %6326 = vmatpush.msra.mxu0 %v6325
    %v6327 = vand.u32 %v5986, 4294901760
    %6328 = vmatmul.f32.gmra.mxu0 %v6327
    %v6329 = vpop.f32.mrf.mxu0
    %v6330 = vadd.f32 %v6304, %v6329
    %6331 = vdwg.mxu0
    %6332 = vmatpush.msra.mxu0 0.0
    %6333 = vmatpush.msra.mxu0 0.0
    %6334 = vmatpush.msra.mxu0 0.0
    %6335 = vmatpush.msra.mxu0 0.0
    %6336 = vmatpush.msra.mxu0 0.0
    %6337 = vmatpush.msra.mxu0 0.0
    %6338 = vmatpush.msra.mxu0 0.0
    %6339 = vmatpush.msra.mxu0 0.0
    %6340 = vmatpush.msra.mxu0 0.0
    %6341 = vmatpush.msra.mxu0 0.0
    %6342 = vmatpush.msra.mxu0 0.0
    %6343 = vmatpush.msra.mxu0 0.0
    %6344 = vmatpush.msra.mxu0 0.0
    %6345 = vmatpush.msra.mxu0 0.0
    %6346 = vmatpush.msra.mxu0 0.0
    %v6347 = vand.u32 %v4152, 4294901760
    %v6348 = vsub.f32 %v4152, %v6347
    %6349 = vmatpush.msra.mxu0 %v6348
    %v6350 = vand.u32 %v5986, 4294901760
    %v6351 = vsub.f32 %v5986, %v6350
    %6352 = vmatmul.f32.gmra.mxu0 %v6351
    %v6353 = vpop.f32.mrf.mxu0
    %v6354 = vadd.f32 %v6330, %v6353
    %6355 = vdwg.mxu0
    %6356 = vmatpush.msra.mxu0 0.0
    %6357 = vmatpush.msra.mxu0 0.0
    %6358 = vmatpush.msra.mxu0 0.0
    %6359 = vmatpush.msra.mxu0 0.0
    %6360 = vmatpush.msra.mxu0 0.0
    %6361 = vmatpush.msra.mxu0 0.0
    %6362 = vmatpush.msra.mxu0 0.0
    %6363 = vmatpush.msra.mxu0 0.0
    %6364 = vmatpush.msra.mxu0 0.0
    %6365 = vmatpush.msra.mxu0 0.0
    %6366 = vmatpush.msra.mxu0 0.0
    %6367 = vmatpush.msra.mxu0 0.0
    %6368 = vmatpush.msra.mxu0 0.0
    %6369 = vmatpush.msra.mxu0 0.0
    %6370 = vmatpush.msra.mxu0 0.0
    %v6371 = vand.u32 %v4152, 4294901760
    %6372 = vmatpush.msra.mxu0 %v6371
    %v6373 = vand.u32 %v5986, 4294901760
    %v6374 = vsub.f32 %v5986, %v6373
    %v6375 = vand.u32 %v6374, 4294901760
    %6376 = vmatmul.f32.gmra.mxu0 %v6375
    %v6377 = vpop.f32.mrf.mxu0
    %v6378 = vadd.f32 %v6354, %v6377
    %6379 = vdwg.mxu0
    %6380 = vmatpush.msra.mxu0 0.0
    %6381 = vmatpush.msra.mxu0 0.0
    %6382 = vmatpush.msra.mxu0 0.0
    %6383 = vmatpush.msra.mxu0 0.0
    %6384 = vmatpush.msra.mxu0 0.0
    %6385 = vmatpush.msra.mxu0 0.0
    %6386 = vmatpush.msra.mxu0 0.0
    %6387 = vmatpush.msra.mxu0 0.0
    %6388 = vmatpush.msra.mxu0 0.0
    %6389 = vmatpush.msra.mxu0 0.0
    %6390 = vmatpush.msra.mxu0 0.0
    %6391 = vmatpush.msra.mxu0 0.0
    %6392 = vmatpush.msra.mxu0 0.0
    %6393 = vmatpush.msra.mxu0 0.0
    %6394 = vmatpush.msra.mxu0 0.0
    %v6395 = vand.u32 %v4152, 4294901760
    %v6396 = vsub.f32 %v4152, %v6395
    %v6397 = vand.u32 %v6396, 4294901760
    %6398 = vmatpush.msra.mxu0 %v6397
    %v6399 = vand.u32 %v5986, 4294901760
    %6400 = vmatmul.f32.gmra.mxu0 %v6399
    %v6401 = vpop.f32.mrf.mxu0
    %v6402 = vadd.f32 %v6378, %v6401
    %6403 = vdwg.mxu0
    %6404 = vmatpush.msra.mxu0 0.0
    %6405 = vmatpush.msra.mxu0 0.0
    %6406 = vmatpush.msra.mxu0 0.0
    %6407 = vmatpush.msra.mxu0 0.0
    %6408 = vmatpush.msra.mxu0 0.0
    %6409 = vmatpush.msra.mxu0 0.0
    %6410 = vmatpush.msra.mxu0 0.0
    %6411 = vmatpush.msra.mxu0 0.0
    %6412 = vmatpush.msra.mxu0 0.0
    %6413 = vmatpush.msra.mxu0 0.0
    %6414 = vmatpush.msra.mxu0 0.0
    %6415 = vmatpush.msra.mxu0 0.0
    %6416 = vmatpush.msra.mxu0 0.0
    %6417 = vmatpush.msra.mxu0 0.0
    %6418 = vmatpush.msra.mxu0 0.0
    %v6419 = vand.u32 %v4152, 4294901760
    %6420 = vmatpush.msra.mxu0 %v6419
    %v6421 = vand.u32 %v5986, 4294901760
    %6422 = vmatmul.f32.gmra.mxu0 %v6421
    %v6423 = vpop.f32.mrf.mxu0
    %v6424 = vadd.f32 %v6402, %v6423
    %6425 = vdwg.mxu0
    %v6426 = vadd.f32 %v5980, %v6132
    %v6427 = vadd.f32 %v5981, %v6278
    %v6428 = vadd.f32 %v5982, %v6424
    %6429 = vrot.lane.b32.xlu0 %v4150, 127
    %v6430 = vpop.permute.xlu0 %6429
    %6431 = vrot.lane.b32.xlu0 %v4151, 127
    %v6432 = vpop.permute.xlu0 %6431
    %6433 = vrot.lane.b32.xlu0 %v4152, 127
    %v6434 = vpop.permute.xlu0 %6433
    %6435 = vrot.lane.b32.xlu0 0.0, 127
    %v6436 = vpop.permute.xlu0 %6435
    %v6437 = vsel %vm2323, %v6434, %v6436
    %v6438 = vsel %vm2323, %v6432, %v6434
    %v6439 = vsel %vm2323, %v6430, %v6432
    %s6440 = scalar_lea.vmem %s3, 40
    %v6441 = vld [vmem:[%s6440] sm:$0xff]
    %v6443 = vsel %vm50, %v6441, 0
    %6445 = vmatpush.msra.mxu0 0.0
    %6446 = vmatpush.msra.mxu0 0.0
    %6447 = vmatpush.msra.mxu0 0.0
    %6448 = vmatpush.msra.mxu0 0.0
    %6449 = vmatpush.msra.mxu0 0.0
    %6450 = vmatpush.msra.mxu0 0.0
    %6451 = vmatpush.msra.mxu0 0.0
    %6452 = vmatpush.msra.mxu0 0.0
    %6453 = vmatpush.msra.mxu0 0.0
    %6454 = vmatpush.msra.mxu0 0.0
    %6455 = vmatpush.msra.mxu0 0.0
    %6456 = vmatpush.msra.mxu0 0.0
    %6457 = vmatpush.msra.mxu0 0.0
    %6458 = vmatpush.msra.mxu0 0.0
    %6459 = vmatpush.msra.mxu0 0.0
    %v6460 = vand.u32 %v6439, 4294901760
    %6461 = vmatpush.msra.mxu0 %v6460
    %v6462 = vand.u32 %v6443, 4294901760
    %v6463 = vsub.f32 %v6443, %v6462
    %v6464 = vand.u32 %v6463, 4294901760
    %v6465 = vsub.f32 %v6463, %v6464
    %v6466 = vand.u32 %v6465, 4294901760
    %6467 = vmatmul.f32.gmra.mxu0 %v6466
    %v6468 = vpop.f32.mrf.mxu0
    %v6469 = vadd.f32 0.0, %v6468
    %6470 = vdwg.mxu0
    %6471 = vmatpush.msra.mxu0 0.0
    %6472 = vmatpush.msra.mxu0 0.0
    %6473 = vmatpush.msra.mxu0 0.0
    %6474 = vmatpush.msra.mxu0 0.0
    %6475 = vmatpush.msra.mxu0 0.0
    %6476 = vmatpush.msra.mxu0 0.0
    %6477 = vmatpush.msra.mxu0 0.0
    %6478 = vmatpush.msra.mxu0 0.0
    %6479 = vmatpush.msra.mxu0 0.0
    %6480 = vmatpush.msra.mxu0 0.0
    %6481 = vmatpush.msra.mxu0 0.0
    %6482 = vmatpush.msra.mxu0 0.0
    %6483 = vmatpush.msra.mxu0 0.0
    %6484 = vmatpush.msra.mxu0 0.0
    %6485 = vmatpush.msra.mxu0 0.0
    %v6486 = vand.u32 %v6439, 4294901760
    %v6487 = vsub.f32 %v6439, %v6486
    %v6488 = vand.u32 %v6487, 4294901760
    %v6489 = vsub.f32 %v6487, %v6488
    %v6490 = vand.u32 %v6489, 4294901760
    %6491 = vmatpush.msra.mxu0 %v6490
    %v6492 = vand.u32 %v6443, 4294901760
    %6493 = vmatmul.f32.gmra.mxu0 %v6492
    %v6494 = vpop.f32.mrf.mxu0
    %v6495 = vadd.f32 %v6469, %v6494
    %6496 = vdwg.mxu0
    %6497 = vmatpush.msra.mxu0 0.0
    %6498 = vmatpush.msra.mxu0 0.0
    %6499 = vmatpush.msra.mxu0 0.0
    %6500 = vmatpush.msra.mxu0 0.0
    %6501 = vmatpush.msra.mxu0 0.0
    %6502 = vmatpush.msra.mxu0 0.0
    %6503 = vmatpush.msra.mxu0 0.0
    %6504 = vmatpush.msra.mxu0 0.0
    %6505 = vmatpush.msra.mxu0 0.0
    %6506 = vmatpush.msra.mxu0 0.0
    %6507 = vmatpush.msra.mxu0 0.0
    %6508 = vmatpush.msra.mxu0 0.0
    %6509 = vmatpush.msra.mxu0 0.0
    %6510 = vmatpush.msra.mxu0 0.0
    %6511 = vmatpush.msra.mxu0 0.0
    %v6512 = vand.u32 %v6439, 4294901760
    %v6513 = vsub.f32 %v6439, %v6512
    %6514 = vmatpush.msra.mxu0 %v6513
    %v6515 = vand.u32 %v6443, 4294901760
    %v6516 = vsub.f32 %v6443, %v6515
    %6517 = vmatmul.f32.gmra.mxu0 %v6516
    %v6518 = vpop.f32.mrf.mxu0
    %v6519 = vadd.f32 %v6495, %v6518
    %6520 = vdwg.mxu0
    %6521 = vmatpush.msra.mxu0 0.0
    %6522 = vmatpush.msra.mxu0 0.0
    %6523 = vmatpush.msra.mxu0 0.0
    %6524 = vmatpush.msra.mxu0 0.0
    %6525 = vmatpush.msra.mxu0 0.0
    %6526 = vmatpush.msra.mxu0 0.0
    %6527 = vmatpush.msra.mxu0 0.0
    %6528 = vmatpush.msra.mxu0 0.0
    %6529 = vmatpush.msra.mxu0 0.0
    %6530 = vmatpush.msra.mxu0 0.0
    %6531 = vmatpush.msra.mxu0 0.0
    %6532 = vmatpush.msra.mxu0 0.0
    %6533 = vmatpush.msra.mxu0 0.0
    %6534 = vmatpush.msra.mxu0 0.0
    %6535 = vmatpush.msra.mxu0 0.0
    %v6536 = vand.u32 %v6439, 4294901760
    %6537 = vmatpush.msra.mxu0 %v6536
    %v6538 = vand.u32 %v6443, 4294901760
    %v6539 = vsub.f32 %v6443, %v6538
    %v6540 = vand.u32 %v6539, 4294901760
    %6541 = vmatmul.f32.gmra.mxu0 %v6540
    %v6542 = vpop.f32.mrf.mxu0
    %v6543 = vadd.f32 %v6519, %v6542
    %6544 = vdwg.mxu0
    %6545 = vmatpush.msra.mxu0 0.0
    %6546 = vmatpush.msra.mxu0 0.0
    %6547 = vmatpush.msra.mxu0 0.0
    %6548 = vmatpush.msra.mxu0 0.0
    %6549 = vmatpush.msra.mxu0 0.0
    %6550 = vmatpush.msra.mxu0 0.0
    %6551 = vmatpush.msra.mxu0 0.0
    %6552 = vmatpush.msra.mxu0 0.0
    %6553 = vmatpush.msra.mxu0 0.0
    %6554 = vmatpush.msra.mxu0 0.0
    %6555 = vmatpush.msra.mxu0 0.0
    %6556 = vmatpush.msra.mxu0 0.0
    %6557 = vmatpush.msra.mxu0 0.0
    %6558 = vmatpush.msra.mxu0 0.0
    %6559 = vmatpush.msra.mxu0 0.0
    %v6560 = vand.u32 %v6439, 4294901760
    %v6561 = vsub.f32 %v6439, %v6560
    %v6562 = vand.u32 %v6561, 4294901760
    %6563 = vmatpush.msra.mxu0 %v6562
    %v6564 = vand.u32 %v6443, 4294901760
    %6565 = vmatmul.f32.gmra.mxu0 %v6564
    %v6566 = vpop.f32.mrf.mxu0
    %v6567 = vadd.f32 %v6543, %v6566
    %6568 = vdwg.mxu0
    %6569 = vmatpush.msra.mxu0 0.0
    %6570 = vmatpush.msra.mxu0 0.0
    %6571 = vmatpush.msra.mxu0 0.0
    %6572 = vmatpush.msra.mxu0 0.0
    %6573 = vmatpush.msra.mxu0 0.0
    %6574 = vmatpush.msra.mxu0 0.0
    %6575 = vmatpush.msra.mxu0 0.0
    %6576 = vmatpush.msra.mxu0 0.0
    %6577 = vmatpush.msra.mxu0 0.0
    %6578 = vmatpush.msra.mxu0 0.0
    %6579 = vmatpush.msra.mxu0 0.0
    %6580 = vmatpush.msra.mxu0 0.0
    %6581 = vmatpush.msra.mxu0 0.0
    %6582 = vmatpush.msra.mxu0 0.0
    %6583 = vmatpush.msra.mxu0 0.0
    %v6584 = vand.u32 %v6439, 4294901760
    %6585 = vmatpush.msra.mxu0 %v6584
    %v6586 = vand.u32 %v6443, 4294901760
    %6587 = vmatmul.f32.gmra.mxu0 %v6586
    %v6588 = vpop.f32.mrf.mxu0
    %v6589 = vadd.f32 %v6567, %v6588
    %6590 = vdwg.mxu0
    %6591 = vmatpush.msra.mxu0 0.0
    %6592 = vmatpush.msra.mxu0 0.0
    %6593 = vmatpush.msra.mxu0 0.0
    %6594 = vmatpush.msra.mxu0 0.0
    %6595 = vmatpush.msra.mxu0 0.0
    %6596 = vmatpush.msra.mxu0 0.0
    %6597 = vmatpush.msra.mxu0 0.0
    %6598 = vmatpush.msra.mxu0 0.0
    %6599 = vmatpush.msra.mxu0 0.0
    %6600 = vmatpush.msra.mxu0 0.0
    %6601 = vmatpush.msra.mxu0 0.0
    %6602 = vmatpush.msra.mxu0 0.0
    %6603 = vmatpush.msra.mxu0 0.0
    %6604 = vmatpush.msra.mxu0 0.0
    %6605 = vmatpush.msra.mxu0 0.0
    %v6606 = vand.u32 %v6438, 4294901760
    %6607 = vmatpush.msra.mxu0 %v6606
    %v6608 = vand.u32 %v6443, 4294901760
    %v6609 = vsub.f32 %v6443, %v6608
    %v6610 = vand.u32 %v6609, 4294901760
    %v6611 = vsub.f32 %v6609, %v6610
    %v6612 = vand.u32 %v6611, 4294901760
    %6613 = vmatmul.f32.gmra.mxu0 %v6612
    %v6614 = vpop.f32.mrf.mxu0
    %v6615 = vadd.f32 0.0, %v6614
    %6616 = vdwg.mxu0
    %6617 = vmatpush.msra.mxu0 0.0
    %6618 = vmatpush.msra.mxu0 0.0
    %6619 = vmatpush.msra.mxu0 0.0
    %6620 = vmatpush.msra.mxu0 0.0
    %6621 = vmatpush.msra.mxu0 0.0
    %6622 = vmatpush.msra.mxu0 0.0
    %6623 = vmatpush.msra.mxu0 0.0
    %6624 = vmatpush.msra.mxu0 0.0
    %6625 = vmatpush.msra.mxu0 0.0
    %6626 = vmatpush.msra.mxu0 0.0
    %6627 = vmatpush.msra.mxu0 0.0
    %6628 = vmatpush.msra.mxu0 0.0
    %6629 = vmatpush.msra.mxu0 0.0
    %6630 = vmatpush.msra.mxu0 0.0
    %6631 = vmatpush.msra.mxu0 0.0
    %v6632 = vand.u32 %v6438, 4294901760
    %v6633 = vsub.f32 %v6438, %v6632
    %v6634 = vand.u32 %v6633, 4294901760
    %v6635 = vsub.f32 %v6633, %v6634
    %v6636 = vand.u32 %v6635, 4294901760
    %6637 = vmatpush.msra.mxu0 %v6636
    %v6638 = vand.u32 %v6443, 4294901760
    %6639 = vmatmul.f32.gmra.mxu0 %v6638
    %v6640 = vpop.f32.mrf.mxu0
    %v6641 = vadd.f32 %v6615, %v6640
    %6642 = vdwg.mxu0
    %6643 = vmatpush.msra.mxu0 0.0
    %6644 = vmatpush.msra.mxu0 0.0
    %6645 = vmatpush.msra.mxu0 0.0
    %6646 = vmatpush.msra.mxu0 0.0
    %6647 = vmatpush.msra.mxu0 0.0
    %6648 = vmatpush.msra.mxu0 0.0
    %6649 = vmatpush.msra.mxu0 0.0
    %6650 = vmatpush.msra.mxu0 0.0
    %6651 = vmatpush.msra.mxu0 0.0
    %6652 = vmatpush.msra.mxu0 0.0
    %6653 = vmatpush.msra.mxu0 0.0
    %6654 = vmatpush.msra.mxu0 0.0
    %6655 = vmatpush.msra.mxu0 0.0
    %6656 = vmatpush.msra.mxu0 0.0
    %6657 = vmatpush.msra.mxu0 0.0
    %v6658 = vand.u32 %v6438, 4294901760
    %v6659 = vsub.f32 %v6438, %v6658
    %6660 = vmatpush.msra.mxu0 %v6659
    %v6661 = vand.u32 %v6443, 4294901760
    %v6662 = vsub.f32 %v6443, %v6661
    %6663 = vmatmul.f32.gmra.mxu0 %v6662
    %v6664 = vpop.f32.mrf.mxu0
    %v6665 = vadd.f32 %v6641, %v6664
    %6666 = vdwg.mxu0
    %6667 = vmatpush.msra.mxu0 0.0
    %6668 = vmatpush.msra.mxu0 0.0
    %6669 = vmatpush.msra.mxu0 0.0
    %6670 = vmatpush.msra.mxu0 0.0
    %6671 = vmatpush.msra.mxu0 0.0
    %6672 = vmatpush.msra.mxu0 0.0
    %6673 = vmatpush.msra.mxu0 0.0
    %6674 = vmatpush.msra.mxu0 0.0
    %6675 = vmatpush.msra.mxu0 0.0
    %6676 = vmatpush.msra.mxu0 0.0
    %6677 = vmatpush.msra.mxu0 0.0
    %6678 = vmatpush.msra.mxu0 0.0
    %6679 = vmatpush.msra.mxu0 0.0
    %6680 = vmatpush.msra.mxu0 0.0
    %6681 = vmatpush.msra.mxu0 0.0
    %v6682 = vand.u32 %v6438, 4294901760
    %6683 = vmatpush.msra.mxu0 %v6682
    %v6684 = vand.u32 %v6443, 4294901760
    %v6685 = vsub.f32 %v6443, %v6684
    %v6686 = vand.u32 %v6685, 4294901760
    %6687 = vmatmul.f32.gmra.mxu0 %v6686
    %v6688 = vpop.f32.mrf.mxu0
    %v6689 = vadd.f32 %v6665, %v6688
    %6690 = vdwg.mxu0
    %6691 = vmatpush.msra.mxu0 0.0
    %6692 = vmatpush.msra.mxu0 0.0
    %6693 = vmatpush.msra.mxu0 0.0
    %6694 = vmatpush.msra.mxu0 0.0
    %6695 = vmatpush.msra.mxu0 0.0
    %6696 = vmatpush.msra.mxu0 0.0
    %6697 = vmatpush.msra.mxu0 0.0
    %6698 = vmatpush.msra.mxu0 0.0
    %6699 = vmatpush.msra.mxu0 0.0
    %6700 = vmatpush.msra.mxu0 0.0
    %6701 = vmatpush.msra.mxu0 0.0
    %6702 = vmatpush.msra.mxu0 0.0
    %6703 = vmatpush.msra.mxu0 0.0
    %6704 = vmatpush.msra.mxu0 0.0
    %6705 = vmatpush.msra.mxu0 0.0
    %v6706 = vand.u32 %v6438, 4294901760
    %v6707 = vsub.f32 %v6438, %v6706
    %v6708 = vand.u32 %v6707, 4294901760
    %6709 = vmatpush.msra.mxu0 %v6708
    %v6710 = vand.u32 %v6443, 4294901760
    %6711 = vmatmul.f32.gmra.mxu0 %v6710
    %v6712 = vpop.f32.mrf.mxu0
    %v6713 = vadd.f32 %v6689, %v6712
    %6714 = vdwg.mxu0
    %6715 = vmatpush.msra.mxu0 0.0
    %6716 = vmatpush.msra.mxu0 0.0
    %6717 = vmatpush.msra.mxu0 0.0
    %6718 = vmatpush.msra.mxu0 0.0
    %6719 = vmatpush.msra.mxu0 0.0
    %6720 = vmatpush.msra.mxu0 0.0
    %6721 = vmatpush.msra.mxu0 0.0
    %6722 = vmatpush.msra.mxu0 0.0
    %6723 = vmatpush.msra.mxu0 0.0
    %6724 = vmatpush.msra.mxu0 0.0
    %6725 = vmatpush.msra.mxu0 0.0
    %6726 = vmatpush.msra.mxu0 0.0
    %6727 = vmatpush.msra.mxu0 0.0
    %6728 = vmatpush.msra.mxu0 0.0
    %6729 = vmatpush.msra.mxu0 0.0
    %v6730 = vand.u32 %v6438, 4294901760
    %6731 = vmatpush.msra.mxu0 %v6730
    %v6732 = vand.u32 %v6443, 4294901760
    %6733 = vmatmul.f32.gmra.mxu0 %v6732
    %v6734 = vpop.f32.mrf.mxu0
    %v6735 = vadd.f32 %v6713, %v6734
    %6736 = vdwg.mxu0
    %6737 = vmatpush.msra.mxu0 0.0
    %6738 = vmatpush.msra.mxu0 0.0
    %6739 = vmatpush.msra.mxu0 0.0
    %6740 = vmatpush.msra.mxu0 0.0
    %6741 = vmatpush.msra.mxu0 0.0
    %6742 = vmatpush.msra.mxu0 0.0
    %6743 = vmatpush.msra.mxu0 0.0
    %6744 = vmatpush.msra.mxu0 0.0
    %6745 = vmatpush.msra.mxu0 0.0
    %6746 = vmatpush.msra.mxu0 0.0
    %6747 = vmatpush.msra.mxu0 0.0
    %6748 = vmatpush.msra.mxu0 0.0
    %6749 = vmatpush.msra.mxu0 0.0
    %6750 = vmatpush.msra.mxu0 0.0
    %6751 = vmatpush.msra.mxu0 0.0
    %v6752 = vand.u32 %v6437, 4294901760
    %6753 = vmatpush.msra.mxu0 %v6752
    %v6754 = vand.u32 %v6443, 4294901760
    %v6755 = vsub.f32 %v6443, %v6754
    %v6756 = vand.u32 %v6755, 4294901760
    %v6757 = vsub.f32 %v6755, %v6756
    %v6758 = vand.u32 %v6757, 4294901760
    %6759 = vmatmul.f32.gmra.mxu0 %v6758
    %v6760 = vpop.f32.mrf.mxu0
    %v6761 = vadd.f32 0.0, %v6760
    %6762 = vdwg.mxu0
    %6763 = vmatpush.msra.mxu0 0.0
    %6764 = vmatpush.msra.mxu0 0.0
    %6765 = vmatpush.msra.mxu0 0.0
    %6766 = vmatpush.msra.mxu0 0.0
    %6767 = vmatpush.msra.mxu0 0.0
    %6768 = vmatpush.msra.mxu0 0.0
    %6769 = vmatpush.msra.mxu0 0.0
    %6770 = vmatpush.msra.mxu0 0.0
    %6771 = vmatpush.msra.mxu0 0.0
    %6772 = vmatpush.msra.mxu0 0.0
    %6773 = vmatpush.msra.mxu0 0.0
    %6774 = vmatpush.msra.mxu0 0.0
    %6775 = vmatpush.msra.mxu0 0.0
    %6776 = vmatpush.msra.mxu0 0.0
    %6777 = vmatpush.msra.mxu0 0.0
    %v6778 = vand.u32 %v6437, 4294901760
    %v6779 = vsub.f32 %v6437, %v6778
    %v6780 = vand.u32 %v6779, 4294901760
    %v6781 = vsub.f32 %v6779, %v6780
    %v6782 = vand.u32 %v6781, 4294901760
    %6783 = vmatpush.msra.mxu0 %v6782
    %v6784 = vand.u32 %v6443, 4294901760
    %6785 = vmatmul.f32.gmra.mxu0 %v6784
    %v6786 = vpop.f32.mrf.mxu0
    %v6787 = vadd.f32 %v6761, %v6786
    %6788 = vdwg.mxu0
    %6789 = vmatpush.msra.mxu0 0.0
    %6790 = vmatpush.msra.mxu0 0.0
    %6791 = vmatpush.msra.mxu0 0.0
    %6792 = vmatpush.msra.mxu0 0.0
    %6793 = vmatpush.msra.mxu0 0.0
    %6794 = vmatpush.msra.mxu0 0.0
    %6795 = vmatpush.msra.mxu0 0.0
    %6796 = vmatpush.msra.mxu0 0.0
    %6797 = vmatpush.msra.mxu0 0.0
    %6798 = vmatpush.msra.mxu0 0.0
    %6799 = vmatpush.msra.mxu0 0.0
    %6800 = vmatpush.msra.mxu0 0.0
    %6801 = vmatpush.msra.mxu0 0.0
    %6802 = vmatpush.msra.mxu0 0.0
    %6803 = vmatpush.msra.mxu0 0.0
    %v6804 = vand.u32 %v6437, 4294901760
    %v6805 = vsub.f32 %v6437, %v6804
    %6806 = vmatpush.msra.mxu0 %v6805
    %v6807 = vand.u32 %v6443, 4294901760
    %v6808 = vsub.f32 %v6443, %v6807
    %6809 = vmatmul.f32.gmra.mxu0 %v6808
    %v6810 = vpop.f32.mrf.mxu0
    %v6811 = vadd.f32 %v6787, %v6810
    %6812 = vdwg.mxu0
    %6813 = vmatpush.msra.mxu0 0.0
    %6814 = vmatpush.msra.mxu0 0.0
    %6815 = vmatpush.msra.mxu0 0.0
    %6816 = vmatpush.msra.mxu0 0.0
    %6817 = vmatpush.msra.mxu0 0.0
    %6818 = vmatpush.msra.mxu0 0.0
    %6819 = vmatpush.msra.mxu0 0.0
    %6820 = vmatpush.msra.mxu0 0.0
    %6821 = vmatpush.msra.mxu0 0.0
    %6822 = vmatpush.msra.mxu0 0.0
    %6823 = vmatpush.msra.mxu0 0.0
    %6824 = vmatpush.msra.mxu0 0.0
    %6825 = vmatpush.msra.mxu0 0.0
    %6826 = vmatpush.msra.mxu0 0.0
    %6827 = vmatpush.msra.mxu0 0.0
    %v6828 = vand.u32 %v6437, 4294901760
    %6829 = vmatpush.msra.mxu0 %v6828
    %v6830 = vand.u32 %v6443, 4294901760
    %v6831 = vsub.f32 %v6443, %v6830
    %v6832 = vand.u32 %v6831, 4294901760
    %6833 = vmatmul.f32.gmra.mxu0 %v6832
    %v6834 = vpop.f32.mrf.mxu0
    %v6835 = vadd.f32 %v6811, %v6834
    %6836 = vdwg.mxu0
    %6837 = vmatpush.msra.mxu0 0.0
    %6838 = vmatpush.msra.mxu0 0.0
    %6839 = vmatpush.msra.mxu0 0.0
    %6840 = vmatpush.msra.mxu0 0.0
    %6841 = vmatpush.msra.mxu0 0.0
    %6842 = vmatpush.msra.mxu0 0.0
    %6843 = vmatpush.msra.mxu0 0.0
    %6844 = vmatpush.msra.mxu0 0.0
    %6845 = vmatpush.msra.mxu0 0.0
    %6846 = vmatpush.msra.mxu0 0.0
    %6847 = vmatpush.msra.mxu0 0.0
    %6848 = vmatpush.msra.mxu0 0.0
    %6849 = vmatpush.msra.mxu0 0.0
    %6850 = vmatpush.msra.mxu0 0.0
    %6851 = vmatpush.msra.mxu0 0.0
    %v6852 = vand.u32 %v6437, 4294901760
    %v6853 = vsub.f32 %v6437, %v6852
    %v6854 = vand.u32 %v6853, 4294901760
    %6855 = vmatpush.msra.mxu0 %v6854
    %v6856 = vand.u32 %v6443, 4294901760
    %6857 = vmatmul.f32.gmra.mxu0 %v6856
    %v6858 = vpop.f32.mrf.mxu0
    %v6859 = vadd.f32 %v6835, %v6858
    %6860 = vdwg.mxu0
    %6861 = vmatpush.msra.mxu0 0.0
    %6862 = vmatpush.msra.mxu0 0.0
    %6863 = vmatpush.msra.mxu0 0.0
    %6864 = vmatpush.msra.mxu0 0.0
    %6865 = vmatpush.msra.mxu0 0.0
    %6866 = vmatpush.msra.mxu0 0.0
    %6867 = vmatpush.msra.mxu0 0.0
    %6868 = vmatpush.msra.mxu0 0.0
    %6869 = vmatpush.msra.mxu0 0.0
    %6870 = vmatpush.msra.mxu0 0.0
    %6871 = vmatpush.msra.mxu0 0.0
    %6872 = vmatpush.msra.mxu0 0.0
    %6873 = vmatpush.msra.mxu0 0.0
    %6874 = vmatpush.msra.mxu0 0.0
    %6875 = vmatpush.msra.mxu0 0.0
    %v6876 = vand.u32 %v6437, 4294901760
    %6877 = vmatpush.msra.mxu0 %v6876
    %v6878 = vand.u32 %v6443, 4294901760
    %6879 = vmatmul.f32.gmra.mxu0 %v6878
    %v6880 = vpop.f32.mrf.mxu0
    %v6881 = vadd.f32 %v6859, %v6880
    %6882 = vdwg.mxu0
    %v6883 = vadd.f32 %v6426, %v6589
    %v6884 = vadd.f32 %v6427, %v6735
    %v6885 = vadd.f32 %v6428, %v6881
    %6886 = vrot.lane.b32.xlu0 %v4150, 111
    %v6887 = vpop.permute.xlu0 %6886
    %6888 = vrot.lane.b32.xlu0 %v4151, 111
    %v6889 = vpop.permute.xlu0 %6888
    %6890 = vrot.lane.b32.xlu0 %v4152, 111
    %v6891 = vpop.permute.xlu0 %6890
    %6892 = vrot.lane.b32.xlu0 0.0, 111
    %v6893 = vpop.permute.xlu0 %6892
    %v6894 = vsel %vm2781, %v6891, %v6893
    %v6895 = vsel %vm2781, %v6889, %v6891
    %v6896 = vsel %vm2781, %v6887, %v6889
    %s6897 = scalar_lea.vmem %s3, 48
    %v6898 = vld [vmem:[%s6897] sm:$0xff]
    %v6900 = vsel %vm50, %v6898, 0
    %6902 = vmatpush.msra.mxu0 0.0
    %6903 = vmatpush.msra.mxu0 0.0
    %6904 = vmatpush.msra.mxu0 0.0
    %6905 = vmatpush.msra.mxu0 0.0
    %6906 = vmatpush.msra.mxu0 0.0
    %6907 = vmatpush.msra.mxu0 0.0
    %6908 = vmatpush.msra.mxu0 0.0
    %6909 = vmatpush.msra.mxu0 0.0
    %6910 = vmatpush.msra.mxu0 0.0
    %6911 = vmatpush.msra.mxu0 0.0
    %6912 = vmatpush.msra.mxu0 0.0
    %6913 = vmatpush.msra.mxu0 0.0
    %6914 = vmatpush.msra.mxu0 0.0
    %6915 = vmatpush.msra.mxu0 0.0
    %6916 = vmatpush.msra.mxu0 0.0
    %v6917 = vand.u32 %v6896, 4294901760
    %6918 = vmatpush.msra.mxu0 %v6917
    %v6919 = vand.u32 %v6900, 4294901760
    %v6920 = vsub.f32 %v6900, %v6919
    %v6921 = vand.u32 %v6920, 4294901760
    %v6922 = vsub.f32 %v6920, %v6921
    %v6923 = vand.u32 %v6922, 4294901760
    %6924 = vmatmul.f32.gmra.mxu0 %v6923
    %v6925 = vpop.f32.mrf.mxu0
    %v6926 = vadd.f32 0.0, %v6925
    %6927 = vdwg.mxu0
    %6928 = vmatpush.msra.mxu0 0.0
    %6929 = vmatpush.msra.mxu0 0.0
    %6930 = vmatpush.msra.mxu0 0.0
    %6931 = vmatpush.msra.mxu0 0.0
    %6932 = vmatpush.msra.mxu0 0.0
    %6933 = vmatpush.msra.mxu0 0.0
    %6934 = vmatpush.msra.mxu0 0.0
    %6935 = vmatpush.msra.mxu0 0.0
    %6936 = vmatpush.msra.mxu0 0.0
    %6937 = vmatpush.msra.mxu0 0.0
    %6938 = vmatpush.msra.mxu0 0.0
    %6939 = vmatpush.msra.mxu0 0.0
    %6940 = vmatpush.msra.mxu0 0.0
    %6941 = vmatpush.msra.mxu0 0.0
    %6942 = vmatpush.msra.mxu0 0.0
    %v6943 = vand.u32 %v6896, 4294901760
    %v6944 = vsub.f32 %v6896, %v6943
    %v6945 = vand.u32 %v6944, 4294901760
    %v6946 = vsub.f32 %v6944, %v6945
    %v6947 = vand.u32 %v6946, 4294901760
    %6948 = vmatpush.msra.mxu0 %v6947
    %v6949 = vand.u32 %v6900, 4294901760
    %6950 = vmatmul.f32.gmra.mxu0 %v6949
    %v6951 = vpop.f32.mrf.mxu0
    %v6952 = vadd.f32 %v6926, %v6951
    %6953 = vdwg.mxu0
    %6954 = vmatpush.msra.mxu0 0.0
    %6955 = vmatpush.msra.mxu0 0.0
    %6956 = vmatpush.msra.mxu0 0.0
    %6957 = vmatpush.msra.mxu0 0.0
    %6958 = vmatpush.msra.mxu0 0.0
    %6959 = vmatpush.msra.mxu0 0.0
    %6960 = vmatpush.msra.mxu0 0.0
    %6961 = vmatpush.msra.mxu0 0.0
    %6962 = vmatpush.msra.mxu0 0.0
    %6963 = vmatpush.msra.mxu0 0.0
    %6964 = vmatpush.msra.mxu0 0.0
    %6965 = vmatpush.msra.mxu0 0.0
    %6966 = vmatpush.msra.mxu0 0.0
    %6967 = vmatpush.msra.mxu0 0.0
    %6968 = vmatpush.msra.mxu0 0.0
    %v6969 = vand.u32 %v6896, 4294901760
    %v6970 = vsub.f32 %v6896, %v6969
    %6971 = vmatpush.msra.mxu0 %v6970
    %v6972 = vand.u32 %v6900, 4294901760
    %v6973 = vsub.f32 %v6900, %v6972
    %6974 = vmatmul.f32.gmra.mxu0 %v6973
    %v6975 = vpop.f32.mrf.mxu0
    %v6976 = vadd.f32 %v6952, %v6975
    %6977 = vdwg.mxu0
    %6978 = vmatpush.msra.mxu0 0.0
    %6979 = vmatpush.msra.mxu0 0.0
    %6980 = vmatpush.msra.mxu0 0.0
    %6981 = vmatpush.msra.mxu0 0.0
    %6982 = vmatpush.msra.mxu0 0.0
    %6983 = vmatpush.msra.mxu0 0.0
    %6984 = vmatpush.msra.mxu0 0.0
    %6985 = vmatpush.msra.mxu0 0.0
    %6986 = vmatpush.msra.mxu0 0.0
    %6987 = vmatpush.msra.mxu0 0.0
    %6988 = vmatpush.msra.mxu0 0.0
    %6989 = vmatpush.msra.mxu0 0.0
    %6990 = vmatpush.msra.mxu0 0.0
    %6991 = vmatpush.msra.mxu0 0.0
    %6992 = vmatpush.msra.mxu0 0.0
    %v6993 = vand.u32 %v6896, 4294901760
    %6994 = vmatpush.msra.mxu0 %v6993
    %v6995 = vand.u32 %v6900, 4294901760
    %v6996 = vsub.f32 %v6900, %v6995
    %v6997 = vand.u32 %v6996, 4294901760
    %6998 = vmatmul.f32.gmra.mxu0 %v6997
    %v6999 = vpop.f32.mrf.mxu0
    %v7000 = vadd.f32 %v6976, %v6999
    %7001 = vdwg.mxu0
    %7002 = vmatpush.msra.mxu0 0.0
    %7003 = vmatpush.msra.mxu0 0.0
    %7004 = vmatpush.msra.mxu0 0.0
    %7005 = vmatpush.msra.mxu0 0.0
    %7006 = vmatpush.msra.mxu0 0.0
    %7007 = vmatpush.msra.mxu0 0.0
    %7008 = vmatpush.msra.mxu0 0.0
    %7009 = vmatpush.msra.mxu0 0.0
    %7010 = vmatpush.msra.mxu0 0.0
    %7011 = vmatpush.msra.mxu0 0.0
    %7012 = vmatpush.msra.mxu0 0.0
    %7013 = vmatpush.msra.mxu0 0.0
    %7014 = vmatpush.msra.mxu0 0.0
    %7015 = vmatpush.msra.mxu0 0.0
    %7016 = vmatpush.msra.mxu0 0.0
    %v7017 = vand.u32 %v6896, 4294901760
    %v7018 = vsub.f32 %v6896, %v7017
    %v7019 = vand.u32 %v7018, 4294901760
    %7020 = vmatpush.msra.mxu0 %v7019
    %v7021 = vand.u32 %v6900, 4294901760
    %7022 = vmatmul.f32.gmra.mxu0 %v7021
    %v7023 = vpop.f32.mrf.mxu0
    %v7024 = vadd.f32 %v7000, %v7023
    %7025 = vdwg.mxu0
    %7026 = vmatpush.msra.mxu0 0.0
    %7027 = vmatpush.msra.mxu0 0.0
    %7028 = vmatpush.msra.mxu0 0.0
    %7029 = vmatpush.msra.mxu0 0.0
    %7030 = vmatpush.msra.mxu0 0.0
    %7031 = vmatpush.msra.mxu0 0.0
    %7032 = vmatpush.msra.mxu0 0.0
    %7033 = vmatpush.msra.mxu0 0.0
    %7034 = vmatpush.msra.mxu0 0.0
    %7035 = vmatpush.msra.mxu0 0.0
    %7036 = vmatpush.msra.mxu0 0.0
    %7037 = vmatpush.msra.mxu0 0.0
    %7038 = vmatpush.msra.mxu0 0.0
    %7039 = vmatpush.msra.mxu0 0.0
    %7040 = vmatpush.msra.mxu0 0.0
    %v7041 = vand.u32 %v6896, 4294901760
    %7042 = vmatpush.msra.mxu0 %v7041
    %v7043 = vand.u32 %v6900, 4294901760
    %7044 = vmatmul.f32.gmra.mxu0 %v7043
    %v7045 = vpop.f32.mrf.mxu0
    %v7046 = vadd.f32 %v7024, %v7045
    %7047 = vdwg.mxu0
    %7048 = vmatpush.msra.mxu0 0.0
    %7049 = vmatpush.msra.mxu0 0.0
    %7050 = vmatpush.msra.mxu0 0.0
    %7051 = vmatpush.msra.mxu0 0.0
    %7052 = vmatpush.msra.mxu0 0.0
    %7053 = vmatpush.msra.mxu0 0.0
    %7054 = vmatpush.msra.mxu0 0.0
    %7055 = vmatpush.msra.mxu0 0.0
    %7056 = vmatpush.msra.mxu0 0.0
    %7057 = vmatpush.msra.mxu0 0.0
    %7058 = vmatpush.msra.mxu0 0.0
    %7059 = vmatpush.msra.mxu0 0.0
    %7060 = vmatpush.msra.mxu0 0.0
    %7061 = vmatpush.msra.mxu0 0.0
    %7062 = vmatpush.msra.mxu0 0.0
    %v7063 = vand.u32 %v6895, 4294901760
    %7064 = vmatpush.msra.mxu0 %v7063
    %v7065 = vand.u32 %v6900, 4294901760
    %v7066 = vsub.f32 %v6900, %v7065
    %v7067 = vand.u32 %v7066, 4294901760
    %v7068 = vsub.f32 %v7066, %v7067
    %v7069 = vand.u32 %v7068, 4294901760
    %7070 = vmatmul.f32.gmra.mxu0 %v7069
    %v7071 = vpop.f32.mrf.mxu0
    %v7072 = vadd.f32 0.0, %v7071
    %7073 = vdwg.mxu0
    %7074 = vmatpush.msra.mxu0 0.0
    %7075 = vmatpush.msra.mxu0 0.0
    %7076 = vmatpush.msra.mxu0 0.0
    %7077 = vmatpush.msra.mxu0 0.0
    %7078 = vmatpush.msra.mxu0 0.0
    %7079 = vmatpush.msra.mxu0 0.0
    %7080 = vmatpush.msra.mxu0 0.0
    %7081 = vmatpush.msra.mxu0 0.0
    %7082 = vmatpush.msra.mxu0 0.0
    %7083 = vmatpush.msra.mxu0 0.0
    %7084 = vmatpush.msra.mxu0 0.0
    %7085 = vmatpush.msra.mxu0 0.0
    %7086 = vmatpush.msra.mxu0 0.0
    %7087 = vmatpush.msra.mxu0 0.0
    %7088 = vmatpush.msra.mxu0 0.0
    %v7089 = vand.u32 %v6895, 4294901760
    %v7090 = vsub.f32 %v6895, %v7089
    %v7091 = vand.u32 %v7090, 4294901760
    %v7092 = vsub.f32 %v7090, %v7091
    %v7093 = vand.u32 %v7092, 4294901760
    %7094 = vmatpush.msra.mxu0 %v7093
    %v7095 = vand.u32 %v6900, 4294901760
    %7096 = vmatmul.f32.gmra.mxu0 %v7095
    %v7097 = vpop.f32.mrf.mxu0
    %v7098 = vadd.f32 %v7072, %v7097
    %7099 = vdwg.mxu0
    %7100 = vmatpush.msra.mxu0 0.0
    %7101 = vmatpush.msra.mxu0 0.0
    %7102 = vmatpush.msra.mxu0 0.0
    %7103 = vmatpush.msra.mxu0 0.0
    %7104 = vmatpush.msra.mxu0 0.0
    %7105 = vmatpush.msra.mxu0 0.0
    %7106 = vmatpush.msra.mxu0 0.0
    %7107 = vmatpush.msra.mxu0 0.0
    %7108 = vmatpush.msra.mxu0 0.0
    %7109 = vmatpush.msra.mxu0 0.0
    %7110 = vmatpush.msra.mxu0 0.0
    %7111 = vmatpush.msra.mxu0 0.0
    %7112 = vmatpush.msra.mxu0 0.0
    %7113 = vmatpush.msra.mxu0 0.0
    %7114 = vmatpush.msra.mxu0 0.0
    %v7115 = vand.u32 %v6895, 4294901760
    %v7116 = vsub.f32 %v6895, %v7115
    %7117 = vmatpush.msra.mxu0 %v7116
    %v7118 = vand.u32 %v6900, 4294901760
    %v7119 = vsub.f32 %v6900, %v7118
    %7120 = vmatmul.f32.gmra.mxu0 %v7119
    %v7121 = vpop.f32.mrf.mxu0
    %v7122 = vadd.f32 %v7098, %v7121
    %7123 = vdwg.mxu0
    %7124 = vmatpush.msra.mxu0 0.0
    %7125 = vmatpush.msra.mxu0 0.0
    %7126 = vmatpush.msra.mxu0 0.0
    %7127 = vmatpush.msra.mxu0 0.0
    %7128 = vmatpush.msra.mxu0 0.0
    %7129 = vmatpush.msra.mxu0 0.0
    %7130 = vmatpush.msra.mxu0 0.0
    %7131 = vmatpush.msra.mxu0 0.0
    %7132 = vmatpush.msra.mxu0 0.0
    %7133 = vmatpush.msra.mxu0 0.0
    %7134 = vmatpush.msra.mxu0 0.0
    %7135 = vmatpush.msra.mxu0 0.0
    %7136 = vmatpush.msra.mxu0 0.0
    %7137 = vmatpush.msra.mxu0 0.0
    %7138 = vmatpush.msra.mxu0 0.0
    %v7139 = vand.u32 %v6895, 4294901760
    %7140 = vmatpush.msra.mxu0 %v7139
    %v7141 = vand.u32 %v6900, 4294901760
    %v7142 = vsub.f32 %v6900, %v7141
    %v7143 = vand.u32 %v7142, 4294901760
    %7144 = vmatmul.f32.gmra.mxu0 %v7143
    %v7145 = vpop.f32.mrf.mxu0
    %v7146 = vadd.f32 %v7122, %v7145
    %7147 = vdwg.mxu0
    %7148 = vmatpush.msra.mxu0 0.0
    %7149 = vmatpush.msra.mxu0 0.0
    %7150 = vmatpush.msra.mxu0 0.0
    %7151 = vmatpush.msra.mxu0 0.0
    %7152 = vmatpush.msra.mxu0 0.0
    %7153 = vmatpush.msra.mxu0 0.0
    %7154 = vmatpush.msra.mxu0 0.0
    %7155 = vmatpush.msra.mxu0 0.0
    %7156 = vmatpush.msra.mxu0 0.0
    %7157 = vmatpush.msra.mxu0 0.0
    %7158 = vmatpush.msra.mxu0 0.0
    %7159 = vmatpush.msra.mxu0 0.0
    %7160 = vmatpush.msra.mxu0 0.0
    %7161 = vmatpush.msra.mxu0 0.0
    %7162 = vmatpush.msra.mxu0 0.0
    %v7163 = vand.u32 %v6895, 4294901760
    %v7164 = vsub.f32 %v6895, %v7163
    %v7165 = vand.u32 %v7164, 4294901760
    %7166 = vmatpush.msra.mxu0 %v7165
    %v7167 = vand.u32 %v6900, 4294901760
    %7168 = vmatmul.f32.gmra.mxu0 %v7167
    %v7169 = vpop.f32.mrf.mxu0
    %v7170 = vadd.f32 %v7146, %v7169
    %7171 = vdwg.mxu0
    %7172 = vmatpush.msra.mxu0 0.0
    %7173 = vmatpush.msra.mxu0 0.0
    %7174 = vmatpush.msra.mxu0 0.0
    %7175 = vmatpush.msra.mxu0 0.0
    %7176 = vmatpush.msra.mxu0 0.0
    %7177 = vmatpush.msra.mxu0 0.0
    %7178 = vmatpush.msra.mxu0 0.0
    %7179 = vmatpush.msra.mxu0 0.0
    %7180 = vmatpush.msra.mxu0 0.0
    %7181 = vmatpush.msra.mxu0 0.0
    %7182 = vmatpush.msra.mxu0 0.0
    %7183 = vmatpush.msra.mxu0 0.0
    %7184 = vmatpush.msra.mxu0 0.0
    %7185 = vmatpush.msra.mxu0 0.0
    %7186 = vmatpush.msra.mxu0 0.0
    %v7187 = vand.u32 %v6895, 4294901760
    %7188 = vmatpush.msra.mxu0 %v7187
    %v7189 = vand.u32 %v6900, 4294901760
    %7190 = vmatmul.f32.gmra.mxu0 %v7189
    %v7191 = vpop.f32.mrf.mxu0
    %v7192 = vadd.f32 %v7170, %v7191
    %7193 = vdwg.mxu0
    %7194 = vmatpush.msra.mxu0 0.0
    %7195 = vmatpush.msra.mxu0 0.0
    %7196 = vmatpush.msra.mxu0 0.0
    %7197 = vmatpush.msra.mxu0 0.0
    %7198 = vmatpush.msra.mxu0 0.0
    %7199 = vmatpush.msra.mxu0 0.0
    %7200 = vmatpush.msra.mxu0 0.0
    %7201 = vmatpush.msra.mxu0 0.0
    %7202 = vmatpush.msra.mxu0 0.0
    %7203 = vmatpush.msra.mxu0 0.0
    %7204 = vmatpush.msra.mxu0 0.0
    %7205 = vmatpush.msra.mxu0 0.0
    %7206 = vmatpush.msra.mxu0 0.0
    %7207 = vmatpush.msra.mxu0 0.0
    %7208 = vmatpush.msra.mxu0 0.0
    %v7209 = vand.u32 %v6894, 4294901760
    %7210 = vmatpush.msra.mxu0 %v7209
    %v7211 = vand.u32 %v6900, 4294901760
    %v7212 = vsub.f32 %v6900, %v7211
    %v7213 = vand.u32 %v7212, 4294901760
    %v7214 = vsub.f32 %v7212, %v7213
    %v7215 = vand.u32 %v7214, 4294901760
    %7216 = vmatmul.f32.gmra.mxu0 %v7215
    %v7217 = vpop.f32.mrf.mxu0
    %v7218 = vadd.f32 0.0, %v7217
    %7219 = vdwg.mxu0
    %7220 = vmatpush.msra.mxu0 0.0
    %7221 = vmatpush.msra.mxu0 0.0
    %7222 = vmatpush.msra.mxu0 0.0
    %7223 = vmatpush.msra.mxu0 0.0
    %7224 = vmatpush.msra.mxu0 0.0
    %7225 = vmatpush.msra.mxu0 0.0
    %7226 = vmatpush.msra.mxu0 0.0
    %7227 = vmatpush.msra.mxu0 0.0
    %7228 = vmatpush.msra.mxu0 0.0
    %7229 = vmatpush.msra.mxu0 0.0
    %7230 = vmatpush.msra.mxu0 0.0
    %7231 = vmatpush.msra.mxu0 0.0
    %7232 = vmatpush.msra.mxu0 0.0
    %7233 = vmatpush.msra.mxu0 0.0
    %7234 = vmatpush.msra.mxu0 0.0
    %v7235 = vand.u32 %v6894, 4294901760
    %v7236 = vsub.f32 %v6894, %v7235
    %v7237 = vand.u32 %v7236, 4294901760
    %v7238 = vsub.f32 %v7236, %v7237
    %v7239 = vand.u32 %v7238, 4294901760
    %7240 = vmatpush.msra.mxu0 %v7239
    %v7241 = vand.u32 %v6900, 4294901760
    %7242 = vmatmul.f32.gmra.mxu0 %v7241
    %v7243 = vpop.f32.mrf.mxu0
    %v7244 = vadd.f32 %v7218, %v7243
    %7245 = vdwg.mxu0
    %7246 = vmatpush.msra.mxu0 0.0
    %7247 = vmatpush.msra.mxu0 0.0
    %7248 = vmatpush.msra.mxu0 0.0
    %7249 = vmatpush.msra.mxu0 0.0
    %7250 = vmatpush.msra.mxu0 0.0
    %7251 = vmatpush.msra.mxu0 0.0
    %7252 = vmatpush.msra.mxu0 0.0
    %7253 = vmatpush.msra.mxu0 0.0
    %7254 = vmatpush.msra.mxu0 0.0
    %7255 = vmatpush.msra.mxu0 0.0
    %7256 = vmatpush.msra.mxu0 0.0
    %7257 = vmatpush.msra.mxu0 0.0
    %7258 = vmatpush.msra.mxu0 0.0
    %7259 = vmatpush.msra.mxu0 0.0
    %7260 = vmatpush.msra.mxu0 0.0
    %v7261 = vand.u32 %v6894, 4294901760
    %v7262 = vsub.f32 %v6894, %v7261
    %7263 = vmatpush.msra.mxu0 %v7262
    %v7264 = vand.u32 %v6900, 4294901760
    %v7265 = vsub.f32 %v6900, %v7264
    %7266 = vmatmul.f32.gmra.mxu0 %v7265
    %v7267 = vpop.f32.mrf.mxu0
    %v7268 = vadd.f32 %v7244, %v7267
    %7269 = vdwg.mxu0
    %7270 = vmatpush.msra.mxu0 0.0
    %7271 = vmatpush.msra.mxu0 0.0
    %7272 = vmatpush.msra.mxu0 0.0
    %7273 = vmatpush.msra.mxu0 0.0
    %7274 = vmatpush.msra.mxu0 0.0
    %7275 = vmatpush.msra.mxu0 0.0
    %7276 = vmatpush.msra.mxu0 0.0
    %7277 = vmatpush.msra.mxu0 0.0
    %7278 = vmatpush.msra.mxu0 0.0
    %7279 = vmatpush.msra.mxu0 0.0
    %7280 = vmatpush.msra.mxu0 0.0
    %7281 = vmatpush.msra.mxu0 0.0
    %7282 = vmatpush.msra.mxu0 0.0
    %7283 = vmatpush.msra.mxu0 0.0
    %7284 = vmatpush.msra.mxu0 0.0
    %v7285 = vand.u32 %v6894, 4294901760
    %7286 = vmatpush.msra.mxu0 %v7285
    %v7287 = vand.u32 %v6900, 4294901760
    %v7288 = vsub.f32 %v6900, %v7287
    %v7289 = vand.u32 %v7288, 4294901760
    %7290 = vmatmul.f32.gmra.mxu0 %v7289
    %v7291 = vpop.f32.mrf.mxu0
    %v7292 = vadd.f32 %v7268, %v7291
    %7293 = vdwg.mxu0
    %7294 = vmatpush.msra.mxu0 0.0
    %7295 = vmatpush.msra.mxu0 0.0
    %7296 = vmatpush.msra.mxu0 0.0
    %7297 = vmatpush.msra.mxu0 0.0
    %7298 = vmatpush.msra.mxu0 0.0
    %7299 = vmatpush.msra.mxu0 0.0
    %7300 = vmatpush.msra.mxu0 0.0
    %7301 = vmatpush.msra.mxu0 0.0
    %7302 = vmatpush.msra.mxu0 0.0
    %7303 = vmatpush.msra.mxu0 0.0
    %7304 = vmatpush.msra.mxu0 0.0
    %7305 = vmatpush.msra.mxu0 0.0
    %7306 = vmatpush.msra.mxu0 0.0
    %7307 = vmatpush.msra.mxu0 0.0
    %7308 = vmatpush.msra.mxu0 0.0
    %v7309 = vand.u32 %v6894, 4294901760
    %v7310 = vsub.f32 %v6894, %v7309
    %v7311 = vand.u32 %v7310, 4294901760
    %7312 = vmatpush.msra.mxu0 %v7311
    %v7313 = vand.u32 %v6900, 4294901760
    %7314 = vmatmul.f32.gmra.mxu0 %v7313
    %v7315 = vpop.f32.mrf.mxu0
    %v7316 = vadd.f32 %v7292, %v7315
    %7317 = vdwg.mxu0
    %7318 = vmatpush.msra.mxu0 0.0
    %7319 = vmatpush.msra.mxu0 0.0
    %7320 = vmatpush.msra.mxu0 0.0
    %7321 = vmatpush.msra.mxu0 0.0
    %7322 = vmatpush.msra.mxu0 0.0
    %7323 = vmatpush.msra.mxu0 0.0
    %7324 = vmatpush.msra.mxu0 0.0
    %7325 = vmatpush.msra.mxu0 0.0
    %7326 = vmatpush.msra.mxu0 0.0
    %7327 = vmatpush.msra.mxu0 0.0
    %7328 = vmatpush.msra.mxu0 0.0
    %7329 = vmatpush.msra.mxu0 0.0
    %7330 = vmatpush.msra.mxu0 0.0
    %7331 = vmatpush.msra.mxu0 0.0
    %7332 = vmatpush.msra.mxu0 0.0
    %v7333 = vand.u32 %v6894, 4294901760
    %7334 = vmatpush.msra.mxu0 %v7333
    %v7335 = vand.u32 %v6900, 4294901760
    %7336 = vmatmul.f32.gmra.mxu0 %v7335
    %v7337 = vpop.f32.mrf.mxu0
    %v7338 = vadd.f32 %v7316, %v7337
    %7339 = vdwg.mxu0
    %v7340 = vadd.f32 %v6883, %v7046
    %v7341 = vadd.f32 %v6884, %v7192
    %v7342 = vadd.f32 %v6885, %v7338
    %7343 = vrot.lane.b32.xlu0 %v4150, 110
    %v7344 = vpop.permute.xlu0 %7343
    %7345 = vrot.lane.b32.xlu0 %v4151, 110
    %v7346 = vpop.permute.xlu0 %7345
    %7347 = vrot.lane.b32.xlu0 %v4152, 110
    %v7348 = vpop.permute.xlu0 %7347
    %7349 = vrot.lane.b32.xlu0 0.0, 110
    %v7350 = vpop.permute.xlu0 %7349
    %v7351 = vsel %vm3239, %v7348, %v7350
    %v7352 = vsel %vm3239, %v7346, %v7348
    %v7353 = vsel %vm3239, %v7344, %v7346
    %s7354 = scalar_lea.vmem %s3, 56
    %v7355 = vld [vmem:[%s7354] sm:$0xff]
    %v7357 = vsel %vm50, %v7355, 0
    %7359 = vmatpush.msra.mxu0 0.0
    %7360 = vmatpush.msra.mxu0 0.0
    %7361 = vmatpush.msra.mxu0 0.0
    %7362 = vmatpush.msra.mxu0 0.0
    %7363 = vmatpush.msra.mxu0 0.0
    %7364 = vmatpush.msra.mxu0 0.0
    %7365 = vmatpush.msra.mxu0 0.0
    %7366 = vmatpush.msra.mxu0 0.0
    %7367 = vmatpush.msra.mxu0 0.0
    %7368 = vmatpush.msra.mxu0 0.0
    %7369 = vmatpush.msra.mxu0 0.0
    %7370 = vmatpush.msra.mxu0 0.0
    %7371 = vmatpush.msra.mxu0 0.0
    %7372 = vmatpush.msra.mxu0 0.0
    %7373 = vmatpush.msra.mxu0 0.0
    %v7374 = vand.u32 %v7353, 4294901760
    %7375 = vmatpush.msra.mxu0 %v7374
    %v7376 = vand.u32 %v7357, 4294901760
    %v7377 = vsub.f32 %v7357, %v7376
    %v7378 = vand.u32 %v7377, 4294901760
    %v7379 = vsub.f32 %v7377, %v7378
    %v7380 = vand.u32 %v7379, 4294901760
    %7381 = vmatmul.f32.gmra.mxu0 %v7380
    %v7382 = vpop.f32.mrf.mxu0
    %v7383 = vadd.f32 0.0, %v7382
    %7384 = vdwg.mxu0
    %7385 = vmatpush.msra.mxu0 0.0
    %7386 = vmatpush.msra.mxu0 0.0
    %7387 = vmatpush.msra.mxu0 0.0
    %7388 = vmatpush.msra.mxu0 0.0
    %7389 = vmatpush.msra.mxu0 0.0
    %7390 = vmatpush.msra.mxu0 0.0
    %7391 = vmatpush.msra.mxu0 0.0
    %7392 = vmatpush.msra.mxu0 0.0
    %7393 = vmatpush.msra.mxu0 0.0
    %7394 = vmatpush.msra.mxu0 0.0
    %7395 = vmatpush.msra.mxu0 0.0
    %7396 = vmatpush.msra.mxu0 0.0
    %7397 = vmatpush.msra.mxu0 0.0
    %7398 = vmatpush.msra.mxu0 0.0
    %7399 = vmatpush.msra.mxu0 0.0
    %v7400 = vand.u32 %v7353, 4294901760
    %v7401 = vsub.f32 %v7353, %v7400
    %v7402 = vand.u32 %v7401, 4294901760
    %v7403 = vsub.f32 %v7401, %v7402
    %v7404 = vand.u32 %v7403, 4294901760
    %7405 = vmatpush.msra.mxu0 %v7404
    %v7406 = vand.u32 %v7357, 4294901760
    %7407 = vmatmul.f32.gmra.mxu0 %v7406
    %v7408 = vpop.f32.mrf.mxu0
    %v7409 = vadd.f32 %v7383, %v7408
    %7410 = vdwg.mxu0
    %7411 = vmatpush.msra.mxu0 0.0
    %7412 = vmatpush.msra.mxu0 0.0
    %7413 = vmatpush.msra.mxu0 0.0
    %7414 = vmatpush.msra.mxu0 0.0
    %7415 = vmatpush.msra.mxu0 0.0
    %7416 = vmatpush.msra.mxu0 0.0
    %7417 = vmatpush.msra.mxu0 0.0
    %7418 = vmatpush.msra.mxu0 0.0
    %7419 = vmatpush.msra.mxu0 0.0
    %7420 = vmatpush.msra.mxu0 0.0
    %7421 = vmatpush.msra.mxu0 0.0
    %7422 = vmatpush.msra.mxu0 0.0
    %7423 = vmatpush.msra.mxu0 0.0
    %7424 = vmatpush.msra.mxu0 0.0
    %7425 = vmatpush.msra.mxu0 0.0
    %v7426 = vand.u32 %v7353, 4294901760
    %v7427 = vsub.f32 %v7353, %v7426
    %7428 = vmatpush.msra.mxu0 %v7427
    %v7429 = vand.u32 %v7357, 4294901760
    %v7430 = vsub.f32 %v7357, %v7429
    %7431 = vmatmul.f32.gmra.mxu0 %v7430
    %v7432 = vpop.f32.mrf.mxu0
    %v7433 = vadd.f32 %v7409, %v7432
    %7434 = vdwg.mxu0
    %7435 = vmatpush.msra.mxu0 0.0
    %7436 = vmatpush.msra.mxu0 0.0
    %7437 = vmatpush.msra.mxu0 0.0
    %7438 = vmatpush.msra.mxu0 0.0
    %7439 = vmatpush.msra.mxu0 0.0
    %7440 = vmatpush.msra.mxu0 0.0
    %7441 = vmatpush.msra.mxu0 0.0
    %7442 = vmatpush.msra.mxu0 0.0
    %7443 = vmatpush.msra.mxu0 0.0
    %7444 = vmatpush.msra.mxu0 0.0
    %7445 = vmatpush.msra.mxu0 0.0
    %7446 = vmatpush.msra.mxu0 0.0
    %7447 = vmatpush.msra.mxu0 0.0
    %7448 = vmatpush.msra.mxu0 0.0
    %7449 = vmatpush.msra.mxu0 0.0
    %v7450 = vand.u32 %v7353, 4294901760
    %7451 = vmatpush.msra.mxu0 %v7450
    %v7452 = vand.u32 %v7357, 4294901760
    %v7453 = vsub.f32 %v7357, %v7452
    %v7454 = vand.u32 %v7453, 4294901760
    %7455 = vmatmul.f32.gmra.mxu0 %v7454
    %v7456 = vpop.f32.mrf.mxu0
    %v7457 = vadd.f32 %v7433, %v7456
    %7458 = vdwg.mxu0
    %7459 = vmatpush.msra.mxu0 0.0
    %7460 = vmatpush.msra.mxu0 0.0
    %7461 = vmatpush.msra.mxu0 0.0
    %7462 = vmatpush.msra.mxu0 0.0
    %7463 = vmatpush.msra.mxu0 0.0
    %7464 = vmatpush.msra.mxu0 0.0
    %7465 = vmatpush.msra.mxu0 0.0
    %7466 = vmatpush.msra.mxu0 0.0
    %7467 = vmatpush.msra.mxu0 0.0
    %7468 = vmatpush.msra.mxu0 0.0
    %7469 = vmatpush.msra.mxu0 0.0
    %7470 = vmatpush.msra.mxu0 0.0
    %7471 = vmatpush.msra.mxu0 0.0
    %7472 = vmatpush.msra.mxu0 0.0
    %7473 = vmatpush.msra.mxu0 0.0
    %v7474 = vand.u32 %v7353, 4294901760
    %v7475 = vsub.f32 %v7353, %v7474
    %v7476 = vand.u32 %v7475, 4294901760
    %7477 = vmatpush.msra.mxu0 %v7476
    %v7478 = vand.u32 %v7357, 4294901760
    %7479 = vmatmul.f32.gmra.mxu0 %v7478
    %v7480 = vpop.f32.mrf.mxu0
    %v7481 = vadd.f32 %v7457, %v7480
    %7482 = vdwg.mxu0
    %7483 = vmatpush.msra.mxu0 0.0
    %7484 = vmatpush.msra.mxu0 0.0
    %7485 = vmatpush.msra.mxu0 0.0
    %7486 = vmatpush.msra.mxu0 0.0
    %7487 = vmatpush.msra.mxu0 0.0
    %7488 = vmatpush.msra.mxu0 0.0
    %7489 = vmatpush.msra.mxu0 0.0
    %7490 = vmatpush.msra.mxu0 0.0
    %7491 = vmatpush.msra.mxu0 0.0
    %7492 = vmatpush.msra.mxu0 0.0
    %7493 = vmatpush.msra.mxu0 0.0
    %7494 = vmatpush.msra.mxu0 0.0
    %7495 = vmatpush.msra.mxu0 0.0
    %7496 = vmatpush.msra.mxu0 0.0
    %7497 = vmatpush.msra.mxu0 0.0
    %v7498 = vand.u32 %v7353, 4294901760
    %7499 = vmatpush.msra.mxu0 %v7498
    %v7500 = vand.u32 %v7357, 4294901760
    %7501 = vmatmul.f32.gmra.mxu0 %v7500
    %v7502 = vpop.f32.mrf.mxu0
    %v7503 = vadd.f32 %v7481, %v7502
    %7504 = vdwg.mxu0
    %7505 = vmatpush.msra.mxu0 0.0
    %7506 = vmatpush.msra.mxu0 0.0
    %7507 = vmatpush.msra.mxu0 0.0
    %7508 = vmatpush.msra.mxu0 0.0
    %7509 = vmatpush.msra.mxu0 0.0
    %7510 = vmatpush.msra.mxu0 0.0
    %7511 = vmatpush.msra.mxu0 0.0
    %7512 = vmatpush.msra.mxu0 0.0
    %7513 = vmatpush.msra.mxu0 0.0
    %7514 = vmatpush.msra.mxu0 0.0
    %7515 = vmatpush.msra.mxu0 0.0
    %7516 = vmatpush.msra.mxu0 0.0
    %7517 = vmatpush.msra.mxu0 0.0
    %7518 = vmatpush.msra.mxu0 0.0
    %7519 = vmatpush.msra.mxu0 0.0
    %v7520 = vand.u32 %v7352, 4294901760
    %7521 = vmatpush.msra.mxu0 %v7520
    %v7522 = vand.u32 %v7357, 4294901760
    %v7523 = vsub.f32 %v7357, %v7522
    %v7524 = vand.u32 %v7523, 4294901760
    %v7525 = vsub.f32 %v7523, %v7524
    %v7526 = vand.u32 %v7525, 4294901760
    %7527 = vmatmul.f32.gmra.mxu0 %v7526
    %v7528 = vpop.f32.mrf.mxu0
    %v7529 = vadd.f32 0.0, %v7528
    %7530 = vdwg.mxu0
    %7531 = vmatpush.msra.mxu0 0.0
    %7532 = vmatpush.msra.mxu0 0.0
    %7533 = vmatpush.msra.mxu0 0.0
    %7534 = vmatpush.msra.mxu0 0.0
    %7535 = vmatpush.msra.mxu0 0.0
    %7536 = vmatpush.msra.mxu0 0.0
    %7537 = vmatpush.msra.mxu0 0.0
    %7538 = vmatpush.msra.mxu0 0.0
    %7539 = vmatpush.msra.mxu0 0.0
    %7540 = vmatpush.msra.mxu0 0.0
    %7541 = vmatpush.msra.mxu0 0.0
    %7542 = vmatpush.msra.mxu0 0.0
    %7543 = vmatpush.msra.mxu0 0.0
    %7544 = vmatpush.msra.mxu0 0.0
    %7545 = vmatpush.msra.mxu0 0.0
    %v7546 = vand.u32 %v7352, 4294901760
    %v7547 = vsub.f32 %v7352, %v7546
    %v7548 = vand.u32 %v7547, 4294901760
    %v7549 = vsub.f32 %v7547, %v7548
    %v7550 = vand.u32 %v7549, 4294901760
    %7551 = vmatpush.msra.mxu0 %v7550
    %v7552 = vand.u32 %v7357, 4294901760
    %7553 = vmatmul.f32.gmra.mxu0 %v7552
    %v7554 = vpop.f32.mrf.mxu0
    %v7555 = vadd.f32 %v7529, %v7554
    %7556 = vdwg.mxu0
    %7557 = vmatpush.msra.mxu0 0.0
    %7558 = vmatpush.msra.mxu0 0.0
    %7559 = vmatpush.msra.mxu0 0.0
    %7560 = vmatpush.msra.mxu0 0.0
    %7561 = vmatpush.msra.mxu0 0.0
    %7562 = vmatpush.msra.mxu0 0.0
    %7563 = vmatpush.msra.mxu0 0.0
    %7564 = vmatpush.msra.mxu0 0.0
    %7565 = vmatpush.msra.mxu0 0.0
    %7566 = vmatpush.msra.mxu0 0.0
    %7567 = vmatpush.msra.mxu0 0.0
    %7568 = vmatpush.msra.mxu0 0.0
    %7569 = vmatpush.msra.mxu0 0.0
    %7570 = vmatpush.msra.mxu0 0.0
    %7571 = vmatpush.msra.mxu0 0.0
    %v7572 = vand.u32 %v7352, 4294901760
    %v7573 = vsub.f32 %v7352, %v7572
    %7574 = vmatpush.msra.mxu0 %v7573
    %v7575 = vand.u32 %v7357, 4294901760
    %v7576 = vsub.f32 %v7357, %v7575
    %7577 = vmatmul.f32.gmra.mxu0 %v7576
    %v7578 = vpop.f32.mrf.mxu0
    %v7579 = vadd.f32 %v7555, %v7578
    %7580 = vdwg.mxu0
    %7581 = vmatpush.msra.mxu0 0.0
    %7582 = vmatpush.msra.mxu0 0.0
    %7583 = vmatpush.msra.mxu0 0.0
    %7584 = vmatpush.msra.mxu0 0.0
    %7585 = vmatpush.msra.mxu0 0.0
    %7586 = vmatpush.msra.mxu0 0.0
    %7587 = vmatpush.msra.mxu0 0.0
    %7588 = vmatpush.msra.mxu0 0.0
    %7589 = vmatpush.msra.mxu0 0.0
    %7590 = vmatpush.msra.mxu0 0.0
    %7591 = vmatpush.msra.mxu0 0.0
    %7592 = vmatpush.msra.mxu0 0.0
    %7593 = vmatpush.msra.mxu0 0.0
    %7594 = vmatpush.msra.mxu0 0.0
    %7595 = vmatpush.msra.mxu0 0.0
    %v7596 = vand.u32 %v7352, 4294901760
    %7597 = vmatpush.msra.mxu0 %v7596
    %v7598 = vand.u32 %v7357, 4294901760
    %v7599 = vsub.f32 %v7357, %v7598
    %v7600 = vand.u32 %v7599, 4294901760
    %7601 = vmatmul.f32.gmra.mxu0 %v7600
    %v7602 = vpop.f32.mrf.mxu0
    %v7603 = vadd.f32 %v7579, %v7602
    %7604 = vdwg.mxu0
    %7605 = vmatpush.msra.mxu0 0.0
    %7606 = vmatpush.msra.mxu0 0.0
    %7607 = vmatpush.msra.mxu0 0.0
    %7608 = vmatpush.msra.mxu0 0.0
    %7609 = vmatpush.msra.mxu0 0.0
    %7610 = vmatpush.msra.mxu0 0.0
    %7611 = vmatpush.msra.mxu0 0.0
    %7612 = vmatpush.msra.mxu0 0.0
    %7613 = vmatpush.msra.mxu0 0.0
    %7614 = vmatpush.msra.mxu0 0.0
    %7615 = vmatpush.msra.mxu0 0.0
    %7616 = vmatpush.msra.mxu0 0.0
    %7617 = vmatpush.msra.mxu0 0.0
    %7618 = vmatpush.msra.mxu0 0.0
    %7619 = vmatpush.msra.mxu0 0.0
    %v7620 = vand.u32 %v7352, 4294901760
    %v7621 = vsub.f32 %v7352, %v7620
    %v7622 = vand.u32 %v7621, 4294901760
    %7623 = vmatpush.msra.mxu0 %v7622
    %v7624 = vand.u32 %v7357, 4294901760
    %7625 = vmatmul.f32.gmra.mxu0 %v7624
    %v7626 = vpop.f32.mrf.mxu0
    %v7627 = vadd.f32 %v7603, %v7626
    %7628 = vdwg.mxu0
    %7629 = vmatpush.msra.mxu0 0.0
    %7630 = vmatpush.msra.mxu0 0.0
    %7631 = vmatpush.msra.mxu0 0.0
    %7632 = vmatpush.msra.mxu0 0.0
    %7633 = vmatpush.msra.mxu0 0.0
    %7634 = vmatpush.msra.mxu0 0.0
    %7635 = vmatpush.msra.mxu0 0.0
    %7636 = vmatpush.msra.mxu0 0.0
    %7637 = vmatpush.msra.mxu0 0.0
    %7638 = vmatpush.msra.mxu0 0.0
    %7639 = vmatpush.msra.mxu0 0.0
    %7640 = vmatpush.msra.mxu0 0.0
    %7641 = vmatpush.msra.mxu0 0.0
    %7642 = vmatpush.msra.mxu0 0.0
    %7643 = vmatpush.msra.mxu0 0.0
    %v7644 = vand.u32 %v7352, 4294901760
    %7645 = vmatpush.msra.mxu0 %v7644
    %v7646 = vand.u32 %v7357, 4294901760
    %7647 = vmatmul.f32.gmra.mxu0 %v7646
    %v7648 = vpop.f32.mrf.mxu0
    %v7649 = vadd.f32 %v7627, %v7648
    %7650 = vdwg.mxu0
    %7651 = vmatpush.msra.mxu0 0.0
    %7652 = vmatpush.msra.mxu0 0.0
    %7653 = vmatpush.msra.mxu0 0.0
    %7654 = vmatpush.msra.mxu0 0.0
    %7655 = vmatpush.msra.mxu0 0.0
    %7656 = vmatpush.msra.mxu0 0.0
    %7657 = vmatpush.msra.mxu0 0.0
    %7658 = vmatpush.msra.mxu0 0.0
    %7659 = vmatpush.msra.mxu0 0.0
    %7660 = vmatpush.msra.mxu0 0.0
    %7661 = vmatpush.msra.mxu0 0.0
    %7662 = vmatpush.msra.mxu0 0.0
    %7663 = vmatpush.msra.mxu0 0.0
    %7664 = vmatpush.msra.mxu0 0.0
    %7665 = vmatpush.msra.mxu0 0.0
    %v7666 = vand.u32 %v7351, 4294901760
    %7667 = vmatpush.msra.mxu0 %v7666
    %v7668 = vand.u32 %v7357, 4294901760
    %v7669 = vsub.f32 %v7357, %v7668
    %v7670 = vand.u32 %v7669, 4294901760
    %v7671 = vsub.f32 %v7669, %v7670
    %v7672 = vand.u32 %v7671, 4294901760
    %7673 = vmatmul.f32.gmra.mxu0 %v7672
    %v7674 = vpop.f32.mrf.mxu0
    %v7675 = vadd.f32 0.0, %v7674
    %7676 = vdwg.mxu0
    %7677 = vmatpush.msra.mxu0 0.0
    %7678 = vmatpush.msra.mxu0 0.0
    %7679 = vmatpush.msra.mxu0 0.0
    %7680 = vmatpush.msra.mxu0 0.0
    %7681 = vmatpush.msra.mxu0 0.0
    %7682 = vmatpush.msra.mxu0 0.0
    %7683 = vmatpush.msra.mxu0 0.0
    %7684 = vmatpush.msra.mxu0 0.0
    %7685 = vmatpush.msra.mxu0 0.0
    %7686 = vmatpush.msra.mxu0 0.0
    %7687 = vmatpush.msra.mxu0 0.0
    %7688 = vmatpush.msra.mxu0 0.0
    %7689 = vmatpush.msra.mxu0 0.0
    %7690 = vmatpush.msra.mxu0 0.0
    %7691 = vmatpush.msra.mxu0 0.0
    %v7692 = vand.u32 %v7351, 4294901760
    %v7693 = vsub.f32 %v7351, %v7692
    %v7694 = vand.u32 %v7693, 4294901760
    %v7695 = vsub.f32 %v7693, %v7694
    %v7696 = vand.u32 %v7695, 4294901760
    %7697 = vmatpush.msra.mxu0 %v7696
    %v7698 = vand.u32 %v7357, 4294901760
    %7699 = vmatmul.f32.gmra.mxu0 %v7698
    %v7700 = vpop.f32.mrf.mxu0
    %v7701 = vadd.f32 %v7675, %v7700
    %7702 = vdwg.mxu0
    %7703 = vmatpush.msra.mxu0 0.0
    %7704 = vmatpush.msra.mxu0 0.0
    %7705 = vmatpush.msra.mxu0 0.0
    %7706 = vmatpush.msra.mxu0 0.0
    %7707 = vmatpush.msra.mxu0 0.0
    %7708 = vmatpush.msra.mxu0 0.0
    %7709 = vmatpush.msra.mxu0 0.0
    %7710 = vmatpush.msra.mxu0 0.0
    %7711 = vmatpush.msra.mxu0 0.0
    %7712 = vmatpush.msra.mxu0 0.0
    %7713 = vmatpush.msra.mxu0 0.0
    %7714 = vmatpush.msra.mxu0 0.0
    %7715 = vmatpush.msra.mxu0 0.0
    %7716 = vmatpush.msra.mxu0 0.0
    %7717 = vmatpush.msra.mxu0 0.0
    %v7718 = vand.u32 %v7351, 4294901760
    %v7719 = vsub.f32 %v7351, %v7718
    %7720 = vmatpush.msra.mxu0 %v7719
    %v7721 = vand.u32 %v7357, 4294901760
    %v7722 = vsub.f32 %v7357, %v7721
    %7723 = vmatmul.f32.gmra.mxu0 %v7722
    %v7724 = vpop.f32.mrf.mxu0
    %v7725 = vadd.f32 %v7701, %v7724
    %7726 = vdwg.mxu0
    %7727 = vmatpush.msra.mxu0 0.0
    %7728 = vmatpush.msra.mxu0 0.0
    %7729 = vmatpush.msra.mxu0 0.0
    %7730 = vmatpush.msra.mxu0 0.0
    %7731 = vmatpush.msra.mxu0 0.0
    %7732 = vmatpush.msra.mxu0 0.0
    %7733 = vmatpush.msra.mxu0 0.0
    %7734 = vmatpush.msra.mxu0 0.0
    %7735 = vmatpush.msra.mxu0 0.0
    %7736 = vmatpush.msra.mxu0 0.0
    %7737 = vmatpush.msra.mxu0 0.0
    %7738 = vmatpush.msra.mxu0 0.0
    %7739 = vmatpush.msra.mxu0 0.0
    %7740 = vmatpush.msra.mxu0 0.0
    %7741 = vmatpush.msra.mxu0 0.0
    %v7742 = vand.u32 %v7351, 4294901760
    %7743 = vmatpush.msra.mxu0 %v7742
    %v7744 = vand.u32 %v7357, 4294901760
    %v7745 = vsub.f32 %v7357, %v7744
    %v7746 = vand.u32 %v7745, 4294901760
    %7747 = vmatmul.f32.gmra.mxu0 %v7746
    %v7748 = vpop.f32.mrf.mxu0
    %v7749 = vadd.f32 %v7725, %v7748
    %7750 = vdwg.mxu0
    %7751 = vmatpush.msra.mxu0 0.0
    %7752 = vmatpush.msra.mxu0 0.0
    %7753 = vmatpush.msra.mxu0 0.0
    %7754 = vmatpush.msra.mxu0 0.0
    %7755 = vmatpush.msra.mxu0 0.0
    %7756 = vmatpush.msra.mxu0 0.0
    %7757 = vmatpush.msra.mxu0 0.0
    %7758 = vmatpush.msra.mxu0 0.0
    %7759 = vmatpush.msra.mxu0 0.0
    %7760 = vmatpush.msra.mxu0 0.0
    %7761 = vmatpush.msra.mxu0 0.0
    %7762 = vmatpush.msra.mxu0 0.0
    %7763 = vmatpush.msra.mxu0 0.0
    %7764 = vmatpush.msra.mxu0 0.0
    %7765 = vmatpush.msra.mxu0 0.0
    %v7766 = vand.u32 %v7351, 4294901760
    %v7767 = vsub.f32 %v7351, %v7766
    %v7768 = vand.u32 %v7767, 4294901760
    %7769 = vmatpush.msra.mxu0 %v7768
    %v7770 = vand.u32 %v7357, 4294901760
    %7771 = vmatmul.f32.gmra.mxu0 %v7770
    %v7772 = vpop.f32.mrf.mxu0
    %v7773 = vadd.f32 %v7749, %v7772
    %7774 = vdwg.mxu0
    %7775 = vmatpush.msra.mxu0 0.0
    %7776 = vmatpush.msra.mxu0 0.0
    %7777 = vmatpush.msra.mxu0 0.0
    %7778 = vmatpush.msra.mxu0 0.0
    %7779 = vmatpush.msra.mxu0 0.0
    %7780 = vmatpush.msra.mxu0 0.0
    %7781 = vmatpush.msra.mxu0 0.0
    %7782 = vmatpush.msra.mxu0 0.0
    %7783 = vmatpush.msra.mxu0 0.0
    %7784 = vmatpush.msra.mxu0 0.0
    %7785 = vmatpush.msra.mxu0 0.0
    %7786 = vmatpush.msra.mxu0 0.0
    %7787 = vmatpush.msra.mxu0 0.0
    %7788 = vmatpush.msra.mxu0 0.0
    %7789 = vmatpush.msra.mxu0 0.0
    %v7790 = vand.u32 %v7351, 4294901760
    %7791 = vmatpush.msra.mxu0 %v7790
    %v7792 = vand.u32 %v7357, 4294901760
    %7793 = vmatmul.f32.gmra.mxu0 %v7792
    %v7794 = vpop.f32.mrf.mxu0
    %v7795 = vadd.f32 %v7773, %v7794
    %7796 = vdwg.mxu0
    %v7797 = vadd.f32 %v7340, %v7503
    %v7798 = vadd.f32 %v7341, %v7649
    %v7799 = vadd.f32 %v7342, %v7795
    %7800 = vrot.lane.b32.xlu0 %v4150, 109
    %v7801 = vpop.permute.xlu0 %7800
    %7802 = vrot.lane.b32.xlu0 %v4151, 109
    %v7803 = vpop.permute.xlu0 %7802
    %7804 = vrot.lane.b32.xlu0 %v4152, 109
    %v7805 = vpop.permute.xlu0 %7804
    %7806 = vrot.lane.b32.xlu0 0.0, 109
    %v7807 = vpop.permute.xlu0 %7806
    %v7808 = vsel %vm3697, %v7805, %v7807
    %v7809 = vsel %vm3697, %v7803, %v7805
    %v7810 = vsel %vm3697, %v7801, %v7803
    %s7811 = scalar_lea.vmem %s3, 64
    %v7812 = vld [vmem:[%s7811] sm:$0xff]
    %v7814 = vsel %vm50, %v7812, 0
    %7816 = vmatpush.msra.mxu0 0.0
    %7817 = vmatpush.msra.mxu0 0.0
    %7818 = vmatpush.msra.mxu0 0.0
    %7819 = vmatpush.msra.mxu0 0.0
    %7820 = vmatpush.msra.mxu0 0.0
    %7821 = vmatpush.msra.mxu0 0.0
    %7822 = vmatpush.msra.mxu0 0.0
    %7823 = vmatpush.msra.mxu0 0.0
    %7824 = vmatpush.msra.mxu0 0.0
    %7825 = vmatpush.msra.mxu0 0.0
    %7826 = vmatpush.msra.mxu0 0.0
    %7827 = vmatpush.msra.mxu0 0.0
    %7828 = vmatpush.msra.mxu0 0.0
    %7829 = vmatpush.msra.mxu0 0.0
    %7830 = vmatpush.msra.mxu0 0.0
    %v7831 = vand.u32 %v7810, 4294901760
    %7832 = vmatpush.msra.mxu0 %v7831
    %v7833 = vand.u32 %v7814, 4294901760
    %v7834 = vsub.f32 %v7814, %v7833
    %v7835 = vand.u32 %v7834, 4294901760
    %v7836 = vsub.f32 %v7834, %v7835
    %v7837 = vand.u32 %v7836, 4294901760
    %7838 = vmatmul.f32.gmra.mxu0 %v7837
    %v7839 = vpop.f32.mrf.mxu0
    %v7840 = vadd.f32 0.0, %v7839
    %7841 = vdwg.mxu0
    %7842 = vmatpush.msra.mxu0 0.0
    %7843 = vmatpush.msra.mxu0 0.0
    %7844 = vmatpush.msra.mxu0 0.0
    %7845 = vmatpush.msra.mxu0 0.0
    %7846 = vmatpush.msra.mxu0 0.0
    %7847 = vmatpush.msra.mxu0 0.0
    %7848 = vmatpush.msra.mxu0 0.0
    %7849 = vmatpush.msra.mxu0 0.0
    %7850 = vmatpush.msra.mxu0 0.0
    %7851 = vmatpush.msra.mxu0 0.0
    %7852 = vmatpush.msra.mxu0 0.0
    %7853 = vmatpush.msra.mxu0 0.0
    %7854 = vmatpush.msra.mxu0 0.0
    %7855 = vmatpush.msra.mxu0 0.0
    %7856 = vmatpush.msra.mxu0 0.0
    %v7857 = vand.u32 %v7810, 4294901760
    %v7858 = vsub.f32 %v7810, %v7857
    %v7859 = vand.u32 %v7858, 4294901760
    %v7860 = vsub.f32 %v7858, %v7859
    %v7861 = vand.u32 %v7860, 4294901760
    %7862 = vmatpush.msra.mxu0 %v7861
    %v7863 = vand.u32 %v7814, 4294901760
    %7864 = vmatmul.f32.gmra.mxu0 %v7863
    %v7865 = vpop.f32.mrf.mxu0
    %v7866 = vadd.f32 %v7840, %v7865
    %7867 = vdwg.mxu0
    %7868 = vmatpush.msra.mxu0 0.0
    %7869 = vmatpush.msra.mxu0 0.0
    %7870 = vmatpush.msra.mxu0 0.0
    %7871 = vmatpush.msra.mxu0 0.0
    %7872 = vmatpush.msra.mxu0 0.0
    %7873 = vmatpush.msra.mxu0 0.0
    %7874 = vmatpush.msra.mxu0 0.0
    %7875 = vmatpush.msra.mxu0 0.0
    %7876 = vmatpush.msra.mxu0 0.0
    %7877 = vmatpush.msra.mxu0 0.0
    %7878 = vmatpush.msra.mxu0 0.0
    %7879 = vmatpush.msra.mxu0 0.0
    %7880 = vmatpush.msra.mxu0 0.0
    %7881 = vmatpush.msra.mxu0 0.0
    %7882 = vmatpush.msra.mxu0 0.0
    %v7883 = vand.u32 %v7810, 4294901760
    %v7884 = vsub.f32 %v7810, %v7883
    %7885 = vmatpush.msra.mxu0 %v7884
    %v7886 = vand.u32 %v7814, 4294901760
    %v7887 = vsub.f32 %v7814, %v7886
    %7888 = vmatmul.f32.gmra.mxu0 %v7887
    %v7889 = vpop.f32.mrf.mxu0
    %v7890 = vadd.f32 %v7866, %v7889
    %7891 = vdwg.mxu0
    %7892 = vmatpush.msra.mxu0 0.0
    %7893 = vmatpush.msra.mxu0 0.0
    %7894 = vmatpush.msra.mxu0 0.0
    %7895 = vmatpush.msra.mxu0 0.0
    %7896 = vmatpush.msra.mxu0 0.0
    %7897 = vmatpush.msra.mxu0 0.0
    %7898 = vmatpush.msra.mxu0 0.0
    %7899 = vmatpush.msra.mxu0 0.0
    %7900 = vmatpush.msra.mxu0 0.0
    %7901 = vmatpush.msra.mxu0 0.0
    %7902 = vmatpush.msra.mxu0 0.0
    %7903 = vmatpush.msra.mxu0 0.0
    %7904 = vmatpush.msra.mxu0 0.0
    %7905 = vmatpush.msra.mxu0 0.0
    %7906 = vmatpush.msra.mxu0 0.0
    %v7907 = vand.u32 %v7810, 4294901760
    %7908 = vmatpush.msra.mxu0 %v7907
    %v7909 = vand.u32 %v7814, 4294901760
    %v7910 = vsub.f32 %v7814, %v7909
    %v7911 = vand.u32 %v7910, 4294901760
    %7912 = vmatmul.f32.gmra.mxu0 %v7911
    %v7913 = vpop.f32.mrf.mxu0
    %v7914 = vadd.f32 %v7890, %v7913
    %7915 = vdwg.mxu0
    %7916 = vmatpush.msra.mxu0 0.0
    %7917 = vmatpush.msra.mxu0 0.0
    %7918 = vmatpush.msra.mxu0 0.0
    %7919 = vmatpush.msra.mxu0 0.0
    %7920 = vmatpush.msra.mxu0 0.0
    %7921 = vmatpush.msra.mxu0 0.0
    %7922 = vmatpush.msra.mxu0 0.0
    %7923 = vmatpush.msra.mxu0 0.0
    %7924 = vmatpush.msra.mxu0 0.0
    %7925 = vmatpush.msra.mxu0 0.0
    %7926 = vmatpush.msra.mxu0 0.0
    %7927 = vmatpush.msra.mxu0 0.0
    %7928 = vmatpush.msra.mxu0 0.0
    %7929 = vmatpush.msra.mxu0 0.0
    %7930 = vmatpush.msra.mxu0 0.0
    %v7931 = vand.u32 %v7810, 4294901760
    %v7932 = vsub.f32 %v7810, %v7931
    %v7933 = vand.u32 %v7932, 4294901760
    %7934 = vmatpush.msra.mxu0 %v7933
    %v7935 = vand.u32 %v7814, 4294901760
    %7936 = vmatmul.f32.gmra.mxu0 %v7935
    %v7937 = vpop.f32.mrf.mxu0
    %v7938 = vadd.f32 %v7914, %v7937
    %7939 = vdwg.mxu0
    %7940 = vmatpush.msra.mxu0 0.0
    %7941 = vmatpush.msra.mxu0 0.0
    %7942 = vmatpush.msra.mxu0 0.0
    %7943 = vmatpush.msra.mxu0 0.0
    %7944 = vmatpush.msra.mxu0 0.0
    %7945 = vmatpush.msra.mxu0 0.0
    %7946 = vmatpush.msra.mxu0 0.0
    %7947 = vmatpush.msra.mxu0 0.0
    %7948 = vmatpush.msra.mxu0 0.0
    %7949 = vmatpush.msra.mxu0 0.0
    %7950 = vmatpush.msra.mxu0 0.0
    %7951 = vmatpush.msra.mxu0 0.0
    %7952 = vmatpush.msra.mxu0 0.0
    %7953 = vmatpush.msra.mxu0 0.0
    %7954 = vmatpush.msra.mxu0 0.0
    %v7955 = vand.u32 %v7810, 4294901760
    %7956 = vmatpush.msra.mxu0 %v7955
    %v7957 = vand.u32 %v7814, 4294901760
    %7958 = vmatmul.f32.gmra.mxu0 %v7957
    %v7959 = vpop.f32.mrf.mxu0
    %v7960 = vadd.f32 %v7938, %v7959
    %7961 = vdwg.mxu0
    %7962 = vmatpush.msra.mxu0 0.0
    %7963 = vmatpush.msra.mxu0 0.0
    %7964 = vmatpush.msra.mxu0 0.0
    %7965 = vmatpush.msra.mxu0 0.0
    %7966 = vmatpush.msra.mxu0 0.0
    %7967 = vmatpush.msra.mxu0 0.0
    %7968 = vmatpush.msra.mxu0 0.0
    %7969 = vmatpush.msra.mxu0 0.0
    %7970 = vmatpush.msra.mxu0 0.0
    %7971 = vmatpush.msra.mxu0 0.0
    %7972 = vmatpush.msra.mxu0 0.0
    %7973 = vmatpush.msra.mxu0 0.0
    %7974 = vmatpush.msra.mxu0 0.0
    %7975 = vmatpush.msra.mxu0 0.0
    %7976 = vmatpush.msra.mxu0 0.0
    %v7977 = vand.u32 %v7809, 4294901760
    %7978 = vmatpush.msra.mxu0 %v7977
    %v7979 = vand.u32 %v7814, 4294901760
    %v7980 = vsub.f32 %v7814, %v7979
    %v7981 = vand.u32 %v7980, 4294901760
    %v7982 = vsub.f32 %v7980, %v7981
    %v7983 = vand.u32 %v7982, 4294901760
    %7984 = vmatmul.f32.gmra.mxu0 %v7983
    %v7985 = vpop.f32.mrf.mxu0
    %v7986 = vadd.f32 0.0, %v7985
    %7987 = vdwg.mxu0
    %7988 = vmatpush.msra.mxu0 0.0
    %7989 = vmatpush.msra.mxu0 0.0
    %7990 = vmatpush.msra.mxu0 0.0
    %7991 = vmatpush.msra.mxu0 0.0
    %7992 = vmatpush.msra.mxu0 0.0
    %7993 = vmatpush.msra.mxu0 0.0
    %7994 = vmatpush.msra.mxu0 0.0
    %7995 = vmatpush.msra.mxu0 0.0
    %7996 = vmatpush.msra.mxu0 0.0
    %7997 = vmatpush.msra.mxu0 0.0
    %7998 = vmatpush.msra.mxu0 0.0
    %7999 = vmatpush.msra.mxu0 0.0
    %8000 = vmatpush.msra.mxu0 0.0
    %8001 = vmatpush.msra.mxu0 0.0
    %8002 = vmatpush.msra.mxu0 0.0
    %v8003 = vand.u32 %v7809, 4294901760
    %v8004 = vsub.f32 %v7809, %v8003
    %v8005 = vand.u32 %v8004, 4294901760
    %v8006 = vsub.f32 %v8004, %v8005
    %v8007 = vand.u32 %v8006, 4294901760
    %8008 = vmatpush.msra.mxu0 %v8007
    %v8009 = vand.u32 %v7814, 4294901760
    %8010 = vmatmul.f32.gmra.mxu0 %v8009
    %v8011 = vpop.f32.mrf.mxu0
    %v8012 = vadd.f32 %v7986, %v8011
    %8013 = vdwg.mxu0
    %8014 = vmatpush.msra.mxu0 0.0
    %8015 = vmatpush.msra.mxu0 0.0
    %8016 = vmatpush.msra.mxu0 0.0
    %8017 = vmatpush.msra.mxu0 0.0
    %8018 = vmatpush.msra.mxu0 0.0
    %8019 = vmatpush.msra.mxu0 0.0
    %8020 = vmatpush.msra.mxu0 0.0
    %8021 = vmatpush.msra.mxu0 0.0
    %8022 = vmatpush.msra.mxu0 0.0
    %8023 = vmatpush.msra.mxu0 0.0
    %8024 = vmatpush.msra.mxu0 0.0
    %8025 = vmatpush.msra.mxu0 0.0
    %8026 = vmatpush.msra.mxu0 0.0
    %8027 = vmatpush.msra.mxu0 0.0
    %8028 = vmatpush.msra.mxu0 0.0
    %v8029 = vand.u32 %v7809, 4294901760
    %v8030 = vsub.f32 %v7809, %v8029
    %8031 = vmatpush.msra.mxu0 %v8030
    %v8032 = vand.u32 %v7814, 4294901760
    %v8033 = vsub.f32 %v7814, %v8032
    %8034 = vmatmul.f32.gmra.mxu0 %v8033
    %v8035 = vpop.f32.mrf.mxu0
    %v8036 = vadd.f32 %v8012, %v8035
    %8037 = vdwg.mxu0
    %8038 = vmatpush.msra.mxu0 0.0
    %8039 = vmatpush.msra.mxu0 0.0
    %8040 = vmatpush.msra.mxu0 0.0
    %8041 = vmatpush.msra.mxu0 0.0
    %8042 = vmatpush.msra.mxu0 0.0
    %8043 = vmatpush.msra.mxu0 0.0
    %8044 = vmatpush.msra.mxu0 0.0
    %8045 = vmatpush.msra.mxu0 0.0
    %8046 = vmatpush.msra.mxu0 0.0
    %8047 = vmatpush.msra.mxu0 0.0
    %8048 = vmatpush.msra.mxu0 0.0
    %8049 = vmatpush.msra.mxu0 0.0
    %8050 = vmatpush.msra.mxu0 0.0
    %8051 = vmatpush.msra.mxu0 0.0
    %8052 = vmatpush.msra.mxu0 0.0
    %v8053 = vand.u32 %v7809, 4294901760
    %8054 = vmatpush.msra.mxu0 %v8053
    %v8055 = vand.u32 %v7814, 4294901760
    %v8056 = vsub.f32 %v7814, %v8055
    %v8057 = vand.u32 %v8056, 4294901760
    %8058 = vmatmul.f32.gmra.mxu0 %v8057
    %v8059 = vpop.f32.mrf.mxu0
    %v8060 = vadd.f32 %v8036, %v8059
    %8061 = vdwg.mxu0
    %8062 = vmatpush.msra.mxu0 0.0
    %8063 = vmatpush.msra.mxu0 0.0
    %8064 = vmatpush.msra.mxu0 0.0
    %8065 = vmatpush.msra.mxu0 0.0
    %8066 = vmatpush.msra.mxu0 0.0
    %8067 = vmatpush.msra.mxu0 0.0
    %8068 = vmatpush.msra.mxu0 0.0
    %8069 = vmatpush.msra.mxu0 0.0
    %8070 = vmatpush.msra.mxu0 0.0
    %8071 = vmatpush.msra.mxu0 0.0
    %8072 = vmatpush.msra.mxu0 0.0
    %8073 = vmatpush.msra.mxu0 0.0
    %8074 = vmatpush.msra.mxu0 0.0
    %8075 = vmatpush.msra.mxu0 0.0
    %8076 = vmatpush.msra.mxu0 0.0
    %v8077 = vand.u32 %v7809, 4294901760
    %v8078 = vsub.f32 %v7809, %v8077
    %v8079 = vand.u32 %v8078, 4294901760
    %8080 = vmatpush.msra.mxu0 %v8079
    %v8081 = vand.u32 %v7814, 4294901760
    %8082 = vmatmul.f32.gmra.mxu0 %v8081
    %v8083 = vpop.f32.mrf.mxu0
    %v8084 = vadd.f32 %v8060, %v8083
    %8085 = vdwg.mxu0
    %8086 = vmatpush.msra.mxu0 0.0
    %8087 = vmatpush.msra.mxu0 0.0
    %8088 = vmatpush.msra.mxu0 0.0
    %8089 = vmatpush.msra.mxu0 0.0
    %8090 = vmatpush.msra.mxu0 0.0
    %8091 = vmatpush.msra.mxu0 0.0
    %8092 = vmatpush.msra.mxu0 0.0
    %8093 = vmatpush.msra.mxu0 0.0
    %8094 = vmatpush.msra.mxu0 0.0
    %8095 = vmatpush.msra.mxu0 0.0
    %8096 = vmatpush.msra.mxu0 0.0
    %8097 = vmatpush.msra.mxu0 0.0
    %8098 = vmatpush.msra.mxu0 0.0
    %8099 = vmatpush.msra.mxu0 0.0
    %8100 = vmatpush.msra.mxu0 0.0
    %v8101 = vand.u32 %v7809, 4294901760
    %8102 = vmatpush.msra.mxu0 %v8101
    %v8103 = vand.u32 %v7814, 4294901760
    %8104 = vmatmul.f32.gmra.mxu0 %v8103
    %v8105 = vpop.f32.mrf.mxu0
    %v8106 = vadd.f32 %v8084, %v8105
    %8107 = vdwg.mxu0
    %8108 = vmatpush.msra.mxu0 0.0
    %8109 = vmatpush.msra.mxu0 0.0
    %8110 = vmatpush.msra.mxu0 0.0
    %8111 = vmatpush.msra.mxu0 0.0
    %8112 = vmatpush.msra.mxu0 0.0
    %8113 = vmatpush.msra.mxu0 0.0
    %8114 = vmatpush.msra.mxu0 0.0
    %8115 = vmatpush.msra.mxu0 0.0
    %8116 = vmatpush.msra.mxu0 0.0
    %8117 = vmatpush.msra.mxu0 0.0
    %8118 = vmatpush.msra.mxu0 0.0
    %8119 = vmatpush.msra.mxu0 0.0
    %8120 = vmatpush.msra.mxu0 0.0
    %8121 = vmatpush.msra.mxu0 0.0
    %8122 = vmatpush.msra.mxu0 0.0
    %v8123 = vand.u32 %v7808, 4294901760
    %8124 = vmatpush.msra.mxu0 %v8123
    %v8125 = vand.u32 %v7814, 4294901760
    %v8126 = vsub.f32 %v7814, %v8125
    %v8127 = vand.u32 %v8126, 4294901760
    %v8128 = vsub.f32 %v8126, %v8127
    %v8129 = vand.u32 %v8128, 4294901760
    %8130 = vmatmul.f32.gmra.mxu0 %v8129
    %v8131 = vpop.f32.mrf.mxu0
    %v8132 = vadd.f32 0.0, %v8131
    %8133 = vdwg.mxu0
    %8134 = vmatpush.msra.mxu0 0.0
    %8135 = vmatpush.msra.mxu0 0.0
    %8136 = vmatpush.msra.mxu0 0.0
    %8137 = vmatpush.msra.mxu0 0.0
    %8138 = vmatpush.msra.mxu0 0.0
    %8139 = vmatpush.msra.mxu0 0.0
    %8140 = vmatpush.msra.mxu0 0.0
    %8141 = vmatpush.msra.mxu0 0.0
    %8142 = vmatpush.msra.mxu0 0.0
    %8143 = vmatpush.msra.mxu0 0.0
    %8144 = vmatpush.msra.mxu0 0.0
    %8145 = vmatpush.msra.mxu0 0.0
    %8146 = vmatpush.msra.mxu0 0.0
    %8147 = vmatpush.msra.mxu0 0.0
    %8148 = vmatpush.msra.mxu0 0.0
    %v8149 = vand.u32 %v7808, 4294901760
    %v8150 = vsub.f32 %v7808, %v8149
    %v8151 = vand.u32 %v8150, 4294901760
    %v8152 = vsub.f32 %v8150, %v8151
    %v8153 = vand.u32 %v8152, 4294901760
    %8154 = vmatpush.msra.mxu0 %v8153
    %v8155 = vand.u32 %v7814, 4294901760
    %8156 = vmatmul.f32.gmra.mxu0 %v8155
    %v8157 = vpop.f32.mrf.mxu0
    %v8158 = vadd.f32 %v8132, %v8157
    %8159 = vdwg.mxu0
    %8160 = vmatpush.msra.mxu0 0.0
    %8161 = vmatpush.msra.mxu0 0.0
    %8162 = vmatpush.msra.mxu0 0.0
    %8163 = vmatpush.msra.mxu0 0.0
    %8164 = vmatpush.msra.mxu0 0.0
    %8165 = vmatpush.msra.mxu0 0.0
    %8166 = vmatpush.msra.mxu0 0.0
    %8167 = vmatpush.msra.mxu0 0.0
    %8168 = vmatpush.msra.mxu0 0.0
    %8169 = vmatpush.msra.mxu0 0.0
    %8170 = vmatpush.msra.mxu0 0.0
    %8171 = vmatpush.msra.mxu0 0.0
    %8172 = vmatpush.msra.mxu0 0.0
    %8173 = vmatpush.msra.mxu0 0.0
    %8174 = vmatpush.msra.mxu0 0.0
    %v8175 = vand.u32 %v7808, 4294901760
    %v8176 = vsub.f32 %v7808, %v8175
    %8177 = vmatpush.msra.mxu0 %v8176
    %v8178 = vand.u32 %v7814, 4294901760
    %v8179 = vsub.f32 %v7814, %v8178
    %8180 = vmatmul.f32.gmra.mxu0 %v8179
    %v8181 = vpop.f32.mrf.mxu0
    %v8182 = vadd.f32 %v8158, %v8181
    %8183 = vdwg.mxu0
    %8184 = vmatpush.msra.mxu0 0.0
    %8185 = vmatpush.msra.mxu0 0.0
    %8186 = vmatpush.msra.mxu0 0.0
    %8187 = vmatpush.msra.mxu0 0.0
    %8188 = vmatpush.msra.mxu0 0.0
    %8189 = vmatpush.msra.mxu0 0.0
    %8190 = vmatpush.msra.mxu0 0.0
    %8191 = vmatpush.msra.mxu0 0.0
    %8192 = vmatpush.msra.mxu0 0.0
    %8193 = vmatpush.msra.mxu0 0.0
    %8194 = vmatpush.msra.mxu0 0.0
    %8195 = vmatpush.msra.mxu0 0.0
    %8196 = vmatpush.msra.mxu0 0.0
    %8197 = vmatpush.msra.mxu0 0.0
    %8198 = vmatpush.msra.mxu0 0.0
    %v8199 = vand.u32 %v7808, 4294901760
    %8200 = vmatpush.msra.mxu0 %v8199
    %v8201 = vand.u32 %v7814, 4294901760
    %v8202 = vsub.f32 %v7814, %v8201
    %v8203 = vand.u32 %v8202, 4294901760
    %8204 = vmatmul.f32.gmra.mxu0 %v8203
    %v8205 = vpop.f32.mrf.mxu0
    %v8206 = vadd.f32 %v8182, %v8205
    %8207 = vdwg.mxu0
    %8208 = vmatpush.msra.mxu0 0.0
    %8209 = vmatpush.msra.mxu0 0.0
    %8210 = vmatpush.msra.mxu0 0.0
    %8211 = vmatpush.msra.mxu0 0.0
    %8212 = vmatpush.msra.mxu0 0.0
    %8213 = vmatpush.msra.mxu0 0.0
    %8214 = vmatpush.msra.mxu0 0.0
    %8215 = vmatpush.msra.mxu0 0.0
    %8216 = vmatpush.msra.mxu0 0.0
    %8217 = vmatpush.msra.mxu0 0.0
    %8218 = vmatpush.msra.mxu0 0.0
    %8219 = vmatpush.msra.mxu0 0.0
    %8220 = vmatpush.msra.mxu0 0.0
    %8221 = vmatpush.msra.mxu0 0.0
    %8222 = vmatpush.msra.mxu0 0.0
    %v8223 = vand.u32 %v7808, 4294901760
    %v8224 = vsub.f32 %v7808, %v8223
    %v8225 = vand.u32 %v8224, 4294901760
    %8226 = vmatpush.msra.mxu0 %v8225
    %v8227 = vand.u32 %v7814, 4294901760
    %8228 = vmatmul.f32.gmra.mxu0 %v8227
    %v8229 = vpop.f32.mrf.mxu0
    %v8230 = vadd.f32 %v8206, %v8229
    %8231 = vdwg.mxu0
    %8232 = vmatpush.msra.mxu0 0.0
    %8233 = vmatpush.msra.mxu0 0.0
    %8234 = vmatpush.msra.mxu0 0.0
    %8235 = vmatpush.msra.mxu0 0.0
    %8236 = vmatpush.msra.mxu0 0.0
    %8237 = vmatpush.msra.mxu0 0.0
    %8238 = vmatpush.msra.mxu0 0.0
    %8239 = vmatpush.msra.mxu0 0.0
    %8240 = vmatpush.msra.mxu0 0.0
    %8241 = vmatpush.msra.mxu0 0.0
    %8242 = vmatpush.msra.mxu0 0.0
    %8243 = vmatpush.msra.mxu0 0.0
    %8244 = vmatpush.msra.mxu0 0.0
    %8245 = vmatpush.msra.mxu0 0.0
    %8246 = vmatpush.msra.mxu0 0.0
    %v8247 = vand.u32 %v7808, 4294901760
    %8248 = vmatpush.msra.mxu0 %v8247
    %v8249 = vand.u32 %v7814, 4294901760
    %8250 = vmatmul.f32.gmra.mxu0 %v8249
    %v8251 = vpop.f32.mrf.mxu0
    %v8252 = vadd.f32 %v8230, %v8251
    %8253 = vdwg.mxu0
    %v8254 = vadd.f32 %v7797, %v7960
    %v8255 = vadd.f32 %v7798, %v8106
    %v8256 = vadd.f32 %v7799, %v8252
    %v8257 = vadd.f32 %v8254, %v25
    %v8258 = vadd.f32 %v8255, %v26
    %v8259 = vadd.f32 %v8256, %v27
    %v8260 = vmax.f32 %v8257, 0.0
    %v8261 = vmax.f32 %v8258, 0.0
    %v8262 = vmax.f32 %v8259, 0.0
    %8263 = vst [vmem:[#allocation2] sm:$0xff] %v8260
    %8264 = vst [vmem:[#allocation2 + $0x8] sm:$0xff] %v8261
    %8265 = vst [vmem:[#allocation2 + $0x10] sm:$0xff] %v8262
    // Predicated region
    $region26: #{tpu_custom_call.1} parent=1 // pred_check
      _
    $region27: #{tpu_custom_call.1} parent=1 // pred_check_branch
      %8267 = sbr.rel (0) target = $region29
    $region28: #{tpu_custom_call.1} parent=1 // pred_region
      %8269 = vsyncadd [#allocation3], 0
      %s8271 = sshll.u32 [#allocation2], 4
      %s8272 = int_to_ptr.vmem [resolvable:$true] %s8271
      %s8273 = sshll.u32 %s6, 4
      %s8274 = int_to_ptr.hbm [resolvable:$true] %s8273
      %8276 = dma.vmem_to_hbm [thread:$0]  %s8272, 384, %s8274, [#allocation3]
    $region29: #{tpu_custom_call.1} parent=1 // pred_fallthru
      _
    // Predicated region
    $region30: #{tpu_custom_call.1} parent=1 // pred_check
      _
    $region31: #{tpu_custom_call.1} parent=1 // pred_check_branch
      %8278 = sbr.rel (0) target = $region33
    $region32: #{tpu_custom_call.1} parent=1 // pred_region
      %8280 = dma.done [#allocation3], 384
    $region33: #{tpu_custom_call.1} parent=1 // pred_fallthru
      _
    %8281 = vsyncpa [#allocation3], 1

</llo_original>
